<compile_context>
chip_gen: v6e
topology: v6e:2x2x1
jax: 0.10.0
libtpu: 0.0.40
codegen_flags: <defaults>
</compile_context>

<pallas_src>
import numpy as np
import jax
import jax.numpy as jnp
from jax.experimental import pallas as pl
from jax.experimental.pallas import tpu as pltpu


def _round_up(n, m):
    return ((n + m - 1) // m) * m


def cfair_kernel(x_ref, ys_ref, w1_ref, wadv_ref, whh_ref, whc_ref, scal_ref,
                 out_ref, acc_ref):
    """One row-tile of the CFairNet forward loss.

    Grid = (num_cores [parallel], tiles_per_core [arbitrary]).

    x_ref   : (TILE, DP)  bf16   [x | 1 | 0-pad]
    ys_ref  : (TILE, 2)   int32  [y, ss[:,1]]   (padded rows carry y = 2)
    w1_ref  : (DP, HA)    bf16   [[W1; b1] | ones-col | 0-pad]
    wadv_ref: (HA, AA)    bf16   [[Wadv0 | Wadv1 ; badv0 | badv1] | ones-col | 0-pad]
    whh_ref : (HA, 8)     bf16   head weights fed by h_aug   (Wsoft + bsoft rows)
    whc_ref : (AA, 8)     bf16   head weights fed by c_h_aug (Wcls0/Wcls1 + bias rows)
    scal_ref: (6,)        f32    [wt0, wt1, wa00, wa01, wa10, wa11]   (SMEM)
    out_ref : (8, 128)    f32    per-core partial sums, row 0 lanes 0..5
    acc_ref : (1, 6)      f32    VMEM accumulator scratch
    """
    t = pl.program_id(1)

    @pl.when(t == 0)
    def _init():
        acc_ref[...] = jnp.zeros_like(acc_ref)

    f32, bf16 = jnp.float32, jnp.bfloat16

    # hidden layer, biases folded via the propagated ones-column (relu(1) = 1)
    h_aug = jnp.maximum(
        jnp.dot(x_ref[...], w1_ref[...], preferred_element_type=f32), 0.0)
    # both adversary hidden layers fused along N (grad_reverse is identity fwd)
    c_h_aug = jnp.maximum(
        jnp.dot(h_aug.astype(bf16), wadv_ref[...], preferred_element_type=f32), 0.0)
    # split head matmul (no lane-misaligned concat): [main | adv0 | adv1] logits
    logits = (jnp.dot(h_aug.astype(bf16), whh_ref[...], preferred_element_type=f32)
              + jnp.dot(c_h_aug.astype(bf16), whc_ref[...], preferred_element_type=f32))

    y = ys_ref[:, 0:1]
    s = ys_ref[:, 1:2]
    m0 = (y == 0).astype(f32)          # padded rows (y == 2) -> m0 = m1 = 0
    m1 = (y == 1).astype(f32)
    s0 = (s == 0).astype(f32)

    def softplus(z):                   # stable: max(z,0) + log(1 + exp(-|z|)), EUP ops
        return jnp.maximum(z, 0.0) + jnp.log(1.0 + jnp.exp(-jnp.abs(z)))

    # main head weighted NLL: -logprob[y] = softplus((1-2y) * (l1 - l0))
    w_y = scal_ref[0] * m0 + scal_ref[1] * m1
    num_m = w_y * softplus((m0 - m1) * (logits[:, 1:2] - logits[:, 0:1]))
    den_m = w_y

    # per-class adversaries; boolean row-selection h[y==j] replaced by masking at
    # the reduction (identical: every op between h and the loss is row-wise)
    sign_s = 2.0 * s0 - 1.0
    num_a, den_a = [], []
    for j, mj in enumerate((m0, m1)):
        d = logits[:, 2 * j + 3:2 * j + 4] - logits[:, 2 * j + 2:2 * j + 3]
        w_t = scal_ref[2 + 2 * j] * s0 + scal_ref[3 + 2 * j] * (1.0 - s0)
        num_a.append(mj * w_t * softplus(sign_s * d))
        den_a.append(mj * w_t)

    # single fused batch-axis reduction of all six partial sums
    cols = jnp.concatenate(
        [num_m, num_a[0], num_a[1], den_m, den_a[0], den_a[1]], axis=1)   # (TILE, 6)
    acc_ref[...] += jnp.sum(cols, axis=0, keepdims=True)

    @pl.when(t == pl.num_programs(1) - 1)
    def _finalize():
        out_ref[...] = jnp.zeros_like(out_ref)
        out_ref[0:1, 0:6] = acc_ref[...]


def pack_cfair_weights(params, w_target, w_attr):
    """Fold biases into the weights (ones-column trick), fuse the adversary
    matmuls along N, split the block-diagonal heads, consolidate scalars."""
    W1, b1, Wsoft, bsoft, Wadv, badv, Wcls, bcls = params
    D, H = W1.shape
    C = Wsoft.shape[1]
    assert C == 2, "CFairNet is a 2-class / 2-group model"

    DP = _round_up(D + 1, 16)        # [x | 1 | pad]
    HA = _round_up(H + 1, 16)        # [h | 1 | pad]
    AA = _round_up(2 * H + 1, 16)    # [c_h0 | c_h1 | 1 | pad]
    NH = 8                           # [main l0,l1 | adv0 l0,l1 | adv1 l0,l1 | pad]

    f32, bf16 = jnp.float32, jnp.bfloat16

    W1a = (jnp.zeros((DP, HA), f32)
           .at[:D, :H].set(W1).at[D, :H].set(b1[0]).at[D, H].set(1.0))
    Wadva = (jnp.zeros((HA, AA), f32)
             .at[:H, :H].set(Wadv[0]).at[:H, H:2 * H].set(Wadv[1])
             .at[H, :H].set(badv[0, 0]).at[H, H:2 * H].set(badv[1, 0])
             .at[H, 2 * H].set(1.0))
    # heads split by which activation feeds them (no concat needed in-kernel)
    Whh = (jnp.zeros((HA, NH), f32)
           .at[:H, 0:C].set(Wsoft).at[H, 0:C].set(bsoft[0]))
    Whc = (jnp.zeros((AA, NH), f32)
           .at[:H, C:2 * C].set(Wcls[0]).at[H:2 * H, 2 * C:3 * C].set(Wcls[1])
           .at[2 * H, C:2 * C].set(bcls[0, 0]).at[2 * H, 2 * C:3 * C].set(bcls[1, 0]))

    scal = jnp.concatenate(
        [jnp.asarray(w_target, f32).reshape(-1),
         jnp.asarray(w_attr, f32).reshape(-1)])                       # (6,)

    return (W1a.astype(bf16), Wadva.astype(bf16), Whh.astype(bf16),
            Whc.astype(bf16), scal, (DP, HA, AA, NH))


def cfair_forward(x, y, ss, params, w_target, w_attr, mu, *, tile=512, num_cores=2):
    B, D = x.shape
    W1a, Wadva, Whh, Whc, scal, (DP, HA, AA, NH) = pack_cfair_weights(
        params, w_target, w_attr)

    # Row tiling: tile rows per grid step, num_cores * tiles_per_core steps total.
    tiles = -(-B // tile)
    tpc = -(-tiles // num_cores)
    Bpad = num_cores * tpc * tile

    f32 = jnp.float32
    x_pad = (jnp.zeros((Bpad, DP), f32)
             .at[:B, :D].set(x).at[:B, D].set(1.0)).astype(jnp.bfloat16)
    # sentinel y = 2 on padded rows -> masked out of every numerator/denominator
    y_pad = jnp.full((Bpad,), 2, jnp.int32).at[:B].set(y.astype(jnp.int32))
    s_pad = jnp.zeros((Bpad,), jnp.int32).at[:B].set(ss[:, 1].astype(jnp.int32))
    ys = jnp.stack([y_pad, s_pad], axis=1)

    row_map = lambda c, t: (c * tpc + t, 0)
    const_map = lambda c, t: (0, 0)          # weights stay VMEM-resident across steps

    out = pl.pallas_call(
        cfair_kernel,
        out_shape=jax.ShapeDtypeStruct((num_cores * 8, 128), f32),
        grid=(num_cores, tpc),
        in_specs=[
            pl.BlockSpec((tile, DP), row_map),
            pl.BlockSpec((tile, 2), row_map),
            pl.BlockSpec((DP, HA), const_map),
            pl.BlockSpec((HA, AA), const_map),
            pl.BlockSpec((HA, NH), const_map),
            pl.BlockSpec((AA, NH), const_map),
            pl.BlockSpec(memory_space=pltpu.MemorySpace.SMEM),
        ],
        out_specs=pl.BlockSpec((8, 128), lambda c, t: (c, 0)),
        scratch_shapes=[pltpu.VMEM((1, 6), jnp.float32)],
        compiler_params=pltpu.CompilerParams(
            dimension_semantics=("parallel", "arbitrary")),
    )(x_pad, ys, W1a, Wadva, Whh, Whc, scal)

    # Tiny cross-core epilogue: the two TensorCores each produced 6 partial sums;
    # combine them and form the weighted-mean losses (~10 flops in plain JAX).
    sums = out.reshape(num_cores, 8, 128)[:, 0, :6].sum(axis=0)
    ratios = sums[:3] / sums[3:]             # [main, adv0, adv1]
    adv_loss = 0.5 * (ratios[1] + ratios[2])
    loss = ratios[0] + mu * adv_loss
    return loss, adv_loss


def reference_numpy(x, y, ss, params, w_target, w_attr, mu):
    """Pure numpy reference following the PyTorch code (true boolean indexing)."""
    (W1, b1, Wsoft, bsoft, Wadv, badv, Wcls, bcls) = [np.asarray(p, np.float64) for p in params]
    x = np.asarray(x, np.float64)
    y = np.asarray(y).astype(np.int64)
    ss = np.asarray(ss).astype(np.int64)
    wt = np.asarray(w_target, np.float64)
    wa = np.asarray(w_attr, np.float64)

    def log_softmax(z):
        m = z.max(axis=1, keepdims=True)
        return z - m - np.log(np.exp(z - m).sum(axis=1, keepdims=True))

    def nll(lp, t, w):
        wt_ = w[t]
        return (-wt_ * lp[np.arange(len(t)), t]).sum() / wt_.sum()

    h = np.maximum(x @ W1 + b1, 0.0)
    logprobs = log_softmax(h @ Wsoft + bsoft)
    loss = nll(logprobs, y, wt)

    adv = []
    for j in range(2):
        idx = (y == j)
        c_h = np.maximum(h[idx] @ Wadv[j] + badv[j], 0.0)
        c_lp = log_softmax(c_h @ Wcls[j] + bcls[j])
        adv.append(nll(c_lp, ss[idx, 1], wa[j]))
    adv_loss = np.mean(adv)
    return loss + mu * adv_loss, adv_loss


if __name__ == "__main__":
    B, D, H, C = 4096, 16, 32, 2
    MU = 10.0  # args.get('mu', 10.0) default in the PyTorch module

    key = jax.random.PRNGKey(0)
    k = jax.random.split(key, 12)

    # inputs (large-ish batch so the grid / streaming path is actually exercised)
    x = jax.random.normal(k[0], (B, D), dtype=jnp.float32)
    y = (jax.random.uniform(k[9], (B,)) < 0.6).astype(jnp.int32)
    s0_col = jax.random.bernoulli(k[10], 0.5, (B,)).astype(jnp.int32)
    s1_col = jax.random.bernoulli(k[11], 0.5, (B,)).astype(jnp.int32)
    ss = jnp.stack([s0_col, s1_col], axis=1)                        # (B, 2)

    # parameters (deterministic synthetic init, shapes per __init__)
    W1 = 0.1 * jax.random.normal(k[1], (D, H), dtype=jnp.float32)
    b1 = 0.05 * jax.random.normal(k[2], (1, H), dtype=jnp.float32)
    Wsoft = 0.1 * jax.random.normal(k[3], (H, C), dtype=jnp.float32)
    bsoft = 0.05 * jax.random.normal(k[4], (1, C), dtype=jnp.float32)
    Wadv = 0.1 * jax.random.normal(k[5], (C, H, H), dtype=jnp.float32)
    badv = 0.05 * jax.random.normal(k[6], (C, 1, H), dtype=jnp.float32)
    Wcls = 0.1 * jax.random.normal(k[7], (C, H, C), dtype=jnp.float32)
    bcls = 0.05 * jax.random.normal(k[8], (C, 1, C), dtype=jnp.float32)
    params = (W1, b1, Wsoft, bsoft, Wadv, badv, Wcls, bcls)

    # reweight tensors (CFairNet.get_W logic)
    y_np, s_np = np.asarray(y), np.asarray(ss)
    mean_y = y_np.mean()
    idx0 = s_np[:, 0] == 0
    base0, base1 = y_np[idx0].mean(), y_np[~idx0].mean()
    w_target = jnp.array([1.0 / (1.0 - mean_y), 1.0 / mean_y], dtype=jnp.float32)
    w_attr = jnp.array(
        [[1.0 / (1.0 - base0), 1.0 / base0],
         [1.0 / (1.0 - base1), 1.0 / base1]],
        dtype=jnp.float32,
    )

    loss, adv_loss = cfair_forward(x, y, ss, params, w_target, w_attr, MU)
    jax.block_until_ready((loss, adv_loss))

    ref_loss, ref_adv = reference_numpy(x, y, ss, params, w_target, w_attr, MU)
    np.testing.assert_allclose(float(loss), ref_loss, rtol=5e-2, atol=5e-2)
    np.testing.assert_allclose(float(adv_loss), ref_adv, rtol=5e-2, atol=5e-2)

    print("KERNEL_OK")
</pallas_src>

<mosaic_0001>
module attributes {stable_mosaic.version = 11 : i64} {
  func.func @cfair_kernel(%arg0: i32, %arg1: i32, %arg2: memref<512x32xbf16, #tpu.memory_space<vmem>>, %arg3: memref<512x2xi32, #tpu.memory_space<vmem>>, %arg4: memref<32x48xbf16, #tpu.memory_space<vmem>>, %arg5: memref<48x80xbf16, #tpu.memory_space<vmem>>, %arg6: memref<48x8xbf16, #tpu.memory_space<vmem>>, %arg7: memref<80x8xbf16, #tpu.memory_space<vmem>>, %arg8: memref<6xf32, #tpu.memory_space<smem>>, %arg9: memref<8x128xf32, #tpu.memory_space<vmem>>, %arg10: memref<1x6xf32, #tpu.memory_space<vmem>>) attributes {dimension_semantics = [#tpu.dimension_semantics<parallel>, #tpu.dimension_semantics<arbitrary>], iteration_bounds = array<i64: 2, 4>, scalar_prefetch = 0 : i64, scratch_operands = 1 : i64, tpu.core_type = #tpu.core_type<tc>, window_params = [{transform_indices = @transform_0, window_bounds = array<i64: 512, 32>}, {transform_indices = @transform_1, window_bounds = array<i64: 512, 2>}, {pipeline_mode = #tpu.pipeline_mode<synchronous>, transform_indices = @transform_2, window_bounds = array<i64: 32, 48>}, {pipeline_mode = #tpu.pipeline_mode<synchronous>, transform_indices = @transform_3, window_bounds = array<i64: 48, 80>}, {pipeline_mode = #tpu.pipeline_mode<synchronous>, transform_indices = @transform_4, window_bounds = array<i64: 48, 8>}, {pipeline_mode = #tpu.pipeline_mode<synchronous>, transform_indices = @transform_5, window_bounds = array<i64: 80, 8>}, {transform_indices = @transform_6, window_bounds = array<i64: 6>}, {transform_indices = @transform_7, window_bounds = array<i64: 8, 128>}]} {
    %c0_i32 = arith.constant 0 : i32
    %0 = arith.cmpi eq, %arg1, %c0_i32 : i32
    %1 = arith.extui %0 : i1 to i32
    %c0_i32_0 = arith.constant 0 : i32
    %2 = arith.cmpi ne, %1, %c0_i32_0 : i32
    scf.if %2 {
      %cst_41 = arith.constant 0.000000e+00 : f32
      %122 = vector.broadcast %cst_41 : f32 to vector<1x6xf32>
      %c0_42 = arith.constant 0 : index
      %c0_43 = arith.constant 0 : index
      %123 = vector.load %arg10[%c0_42, %c0_43] : memref<1x6xf32, #tpu.memory_space<vmem>>, vector<1x6xf32>
      tpu.vector_store %arg10[%c0_42, %c0_43], %122 {strides = array<i32>} : memref<1x6xf32, #tpu.memory_space<vmem>>, vector<1x6xf32>,
    } else {
    }
    %c0 = arith.constant 0 : index
    %c0_1 = arith.constant 0 : index
    %3 = vector.load %arg2[%c0, %c0_1] : memref<512x32xbf16, #tpu.memory_space<vmem>>, vector<512x32xbf16>
    %c0_2 = arith.constant 0 : index
    %c0_3 = arith.constant 0 : index
    %4 = vector.load %arg4[%c0_2, %c0_3] : memref<32x48xbf16, #tpu.memory_space<vmem>>, vector<32x48xbf16>
    %cst = arith.constant dense<0.000000e+00> : vector<512x48xf32>
    %5 = tpu.matmul %3, %4, %cst {dimension_numbers = #tpu.dot_dimension_numbers<[1], [0], [0], [1], [0, 0, 1, 1], [], []>} : vector<512x32xbf16>, vector<32x48xbf16>, vector<512x48xf32> -> vector<512x48xf32>
    %cst_4 = arith.constant 0.000000e+00 : f32
    %6 = vector.broadcast %cst_4 : f32 to vector<512x48xf32>
    %7 = arith.maximumf %5, %6 : vector<512x48xf32>
    %8 = arith.truncf %7 : vector<512x48xf32> to vector<512x48xbf16>
    %c0_5 = arith.constant 0 : index
    %c0_6 = arith.constant 0 : index
    %9 = vector.load %arg5[%c0_5, %c0_6] : memref<48x80xbf16, #tpu.memory_space<vmem>>, vector<48x80xbf16>
    %cst_7 = arith.constant dense<0.000000e+00> : vector<512x80xf32>
    %10 = tpu.matmul %8, %9, %cst_7 {dimension_numbers = #tpu.dot_dimension_numbers<[1], [0], [0], [1], [0, 0, 1, 1], [], []>} : vector<512x48xbf16>, vector<48x80xbf16>, vector<512x80xf32> -> vector<512x80xf32>
    %cst_8 = arith.constant 0.000000e+00 : f32
    %11 = vector.broadcast %cst_8 : f32 to vector<512x80xf32>
    %12 = arith.maximumf %10, %11 : vector<512x80xf32>
    %13 = arith.truncf %7 : vector<512x48xf32> to vector<512x48xbf16>
    %c0_9 = arith.constant 0 : index
    %c0_10 = arith.constant 0 : index
    %14 = vector.load %arg6[%c0_9, %c0_10] : memref<48x8xbf16, #tpu.memory_space<vmem>>, vector<48x8xbf16>
    %cst_11 = arith.constant dense<0.000000e+00> : vector<512x8xf32>
    %15 = tpu.matmul %13, %14, %cst_11 {dimension_numbers = #tpu.dot_dimension_numbers<[1], [0], [0], [1], [0, 0, 1, 1], [], []>} : vector<512x48xbf16>, vector<48x8xbf16>, vector<512x8xf32> -> vector<512x8xf32>
    %16 = arith.truncf %12 : vector<512x80xf32> to vector<512x80xbf16>
    %c0_12 = arith.constant 0 : index
    %c0_13 = arith.constant 0 : index
    %17 = vector.load %arg7[%c0_12, %c0_13] : memref<80x8xbf16, #tpu.memory_space<vmem>>, vector<80x8xbf16>
    %cst_14 = arith.constant dense<0.000000e+00> : vector<512x8xf32>
    %18 = tpu.matmul %16, %17, %cst_14 {dimension_numbers = #tpu.dot_dimension_numbers<[1], [0], [0], [1], [0, 0, 1, 1], [], []>} : vector<512x80xbf16>, vector<80x8xbf16>, vector<512x8xf32> -> vector<512x8xf32>
    %19 = arith.addf %15, %18 : vector<512x8xf32>
    %c0_15 = arith.constant 0 : index
    %c0_16 = arith.constant 0 : index
    %20 = vector.load %arg3[%c0_15, %c0_16] : memref<512x2xi32, #tpu.memory_space<vmem>>, vector<512x1xi32>
    %c0_17 = arith.constant 0 : index
    %c1 = arith.constant 1 : index
    %21 = vector.load %arg3[%c0_17, %c1] : memref<512x2xi32, #tpu.memory_space<vmem>>, vector<512x1xi32>
    %c0_i32_18 = arith.constant 0 : i32
    %22 = vector.broadcast %c0_i32_18 : i32 to vector<512x1xi32>
    %23 = arith.cmpi eq, %20, %22 : vector<512x1xi32>
    %24 = arith.extui %23 : vector<512x1xi1> to vector<512x1xi32>
    %25 = arith.sitofp %24 : vector<512x1xi32> to vector<512x1xf32>
    %c1_i32 = arith.constant 1 : i32
    %26 = vector.broadcast %c1_i32 : i32 to vector<512x1xi32>
    %27 = arith.cmpi eq, %20, %26 : vector<512x1xi32>
    %28 = arith.extui %27 : vector<512x1xi1> to vector<512x1xi32>
    %29 = arith.sitofp %28 : vector<512x1xi32> to vector<512x1xf32>
    %c0_i32_19 = arith.constant 0 : i32
    %30 = vector.broadcast %c0_i32_19 : i32 to vector<512x1xi32>
    %31 = arith.cmpi eq, %21, %30 : vector<512x1xi32>
    %32 = arith.extui %31 : vector<512x1xi1> to vector<512x1xi32>
    %33 = arith.sitofp %32 : vector<512x1xi32> to vector<512x1xf32>
    %c0_20 = arith.constant 0 : index
    %34 = memref.load %arg8[%c0_20] : memref<6xf32, #tpu.memory_space<smem>>
    %35 = vector.broadcast %34 : f32 to vector<512x1xf32>
    %36 = arith.mulf %35, %25 : vector<512x1xf32>
    %c1_21 = arith.constant 1 : index
    %37 = memref.load %arg8[%c1_21] : memref<6xf32, #tpu.memory_space<smem>>
    %38 = vector.broadcast %37 : f32 to vector<512x1xf32>
    %39 = arith.mulf %38, %29 : vector<512x1xf32>
    %40 = arith.addf %36, %39 : vector<512x1xf32>
    %41 = arith.subf %25, %29 : vector<512x1xf32>
    %42 = vector.extract_strided_slice %19 {offsets = [0, 1], sizes = [512, 1], strides = [1, 1]} : vector<512x8xf32> to vector<512x1xf32>
    %43 = vector.extract_strided_slice %19 {offsets = [0, 0], sizes = [512, 1], strides = [1, 1]} : vector<512x8xf32> to vector<512x1xf32>
    %44 = arith.subf %42, %43 : vector<512x1xf32>
    %45 = arith.mulf %41, %44 : vector<512x1xf32>
    %cst_22 = arith.constant 0.000000e+00 : f32
    %46 = vector.broadcast %cst_22 : f32 to vector<512x1xf32>
    %47 = arith.maximumf %45, %46 : vector<512x1xf32>
    %48 = math.absf %45 : vector<512x1xf32>
    %cst_23 = arith.constant 0.000000e+00 : f32
    %49 = vector.broadcast %cst_23 : f32 to vector<512x1xf32>
    %50 = arith.subf %49, %48 : vector<512x1xf32>
    %51 = math.exp %50 : vector<512x1xf32>
    %cst_24 = arith.constant 1.000000e+00 : f32
    %52 = vector.broadcast %cst_24 : f32 to vector<512x1xf32>
    %53 = arith.addf %52, %51 : vector<512x1xf32>
    %54 = math.log %53 : vector<512x1xf32>
    %55 = arith.addf %47, %54 : vector<512x1xf32>
    %56 = arith.mulf %40, %55 : vector<512x1xf32>
    %cst_25 = arith.constant 2.000000e+00 : f32
    %57 = vector.broadcast %cst_25 : f32 to vector<512x1xf32>
    %58 = arith.mulf %57, %33 : vector<512x1xf32>
    %cst_26 = arith.constant 1.000000e+00 : f32
    %59 = vector.broadcast %cst_26 : f32 to vector<512x1xf32>
    %60 = arith.subf %58, %59 : vector<512x1xf32>
    %61 = vector.extract_strided_slice %19 {offsets = [0, 3], sizes = [512, 1], strides = [1, 1]} : vector<512x8xf32> to vector<512x1xf32>
    %62 = vector.extract_strided_slice %19 {offsets = [0, 2], sizes = [512, 1], strides = [1, 1]} : vector<512x8xf32> to vector<512x1xf32>
    %63 = arith.subf %61, %62 : vector<512x1xf32>
    %c2 = arith.constant 2 : index
    %64 = memref.load %arg8[%c2] : memref<6xf32, #tpu.memory_space<smem>>
    %65 = vector.broadcast %64 : f32 to vector<512x1xf32>
    %66 = arith.mulf %65, %33 : vector<512x1xf32>
    %c3 = arith.constant 3 : index
    %67 = memref.load %arg8[%c3] : memref<6xf32, #tpu.memory_space<smem>>
    %cst_27 = arith.constant 1.000000e+00 : f32
    %68 = vector.broadcast %cst_27 : f32 to vector<512x1xf32>
    %69 = arith.subf %68, %33 : vector<512x1xf32>
    %70 = vector.broadcast %67 : f32 to vector<512x1xf32>
    %71 = arith.mulf %70, %69 : vector<512x1xf32>
    %72 = arith.addf %66, %71 : vector<512x1xf32>
    %73 = arith.mulf %25, %72 : vector<512x1xf32>
    %74 = arith.mulf %60, %63 : vector<512x1xf32>
    %cst_28 = arith.constant 0.000000e+00 : f32
    %75 = vector.broadcast %cst_28 : f32 to vector<512x1xf32>
    %76 = arith.maximumf %74, %75 : vector<512x1xf32>
    %77 = math.absf %74 : vector<512x1xf32>
    %cst_29 = arith.constant 0.000000e+00 : f32
    %78 = vector.broadcast %cst_29 : f32 to vector<512x1xf32>
    %79 = arith.subf %78, %77 : vector<512x1xf32>
    %80 = math.exp %79 : vector<512x1xf32>
    %cst_30 = arith.constant 1.000000e+00 : f32
    %81 = vector.broadcast %cst_30 : f32 to vector<512x1xf32>
    %82 = arith.addf %81, %80 : vector<512x1xf32>
    %83 = math.log %82 : vector<512x1xf32>
    %84 = arith.addf %76, %83 : vector<512x1xf32>
    %85 = arith.mulf %73, %84 : vector<512x1xf32>
    %86 = arith.mulf %25, %72 : vector<512x1xf32>
    %87 = vector.extract_strided_slice %19 {offsets = [0, 5], sizes = [512, 1], strides = [1, 1]} : vector<512x8xf32> to vector<512x1xf32>
    %88 = vector.extract_strided_slice %19 {offsets = [0, 4], sizes = [512, 1], strides = [1, 1]} : vector<512x8xf32> to vector<512x1xf32>
    %89 = arith.subf %87, %88 : vector<512x1xf32>
    %c4 = arith.constant 4 : index
    %90 = memref.load %arg8[%c4] : memref<6xf32, #tpu.memory_space<smem>>
    %91 = vector.broadcast %90 : f32 to vector<512x1xf32>
    %92 = arith.mulf %91, %33 : vector<512x1xf32>
    %c5 = arith.constant 5 : index
    %93 = memref.load %arg8[%c5] : memref<6xf32, #tpu.memory_space<smem>>
    %cst_31 = arith.constant 1.000000e+00 : f32
    %94 = vector.broadcast %cst_31 : f32 to vector<512x1xf32>
    %95 = arith.subf %94, %33 : vector<512x1xf32>
    %96 = vector.broadcast %93 : f32 to vector<512x1xf32>
    %97 = arith.mulf %96, %95 : vector<512x1xf32>
    %98 = arith.addf %92, %97 : vector<512x1xf32>
    %99 = arith.mulf %29, %98 : vector<512x1xf32>
    %100 = arith.mulf %60, %89 : vector<512x1xf32>
    %cst_32 = arith.constant 0.000000e+00 : f32
    %101 = vector.broadcast %cst_32 : f32 to vector<512x1xf32>
    %102 = arith.maximumf %100, %101 : vector<512x1xf32>
    %103 = math.absf %100 : vector<512x1xf32>
    %cst_33 = arith.constant 0.000000e+00 : f32
    %104 = vector.broadcast %cst_33 : f32 to vector<512x1xf32>
    %105 = arith.subf %104, %103 : vector<512x1xf32>
    %106 = math.exp %105 : vector<512x1xf32>
    %cst_34 = arith.constant 1.000000e+00 : f32
    %107 = vector.broadcast %cst_34 : f32 to vector<512x1xf32>
    %108 = arith.addf %107, %106 : vector<512x1xf32>
    %109 = math.log %108 : vector<512x1xf32>
    %110 = arith.addf %102, %109 : vector<512x1xf32>
    %111 = arith.mulf %99, %110 : vector<512x1xf32>
    %112 = arith.mulf %29, %98 : vector<512x1xf32>
    %113 = tpu.concatenate %56, %85, %111, %40, %86, %112 in 1 : vector<512x1xf32>, vector<512x1xf32>, vector<512x1xf32>, vector<512x1xf32>, vector<512x1xf32>, vector<512x1xf32> -> vector<512x6xf32>
    %c0_35 = arith.constant 0 : index
    %c0_36 = arith.constant 0 : index
    %114 = vector.load %arg10[%c0_35, %c0_36] : memref<1x6xf32, #tpu.memory_space<vmem>>, vector<1x6xf32>
    %cst_37 = arith.constant dense<0.000000e+00> : vector<6xf32>
    %115 = vector.multi_reduction <add>, %113, %cst_37 [0] : vector<512x6xf32> to vector<6xf32>
    %116 = vector.shape_cast %115 : vector<6xf32> to vector<1x6xf32>
    %117 = arith.addf %114, %116 : vector<1x6xf32>
    %c0_38 = arith.constant 0 : index
    %c0_39 = arith.constant 0 : index
    %118 = vector.load %arg10[%c0_38, %c0_39] : memref<1x6xf32, #tpu.memory_space<vmem>>, vector<1x6xf32>
    tpu.vector_store %arg10[%c0_38, %c0_39], %117 {strides = array<i32>} : memref<1x6xf32, #tpu.memory_space<vmem>>, vector<1x6xf32>,
    %c3_i32 = arith.constant 3 : i32
    %119 = arith.cmpi eq, %arg1, %c3_i32 : i32
    %120 = arith.extui %119 : i1 to i32
    %c0_i32_40 = arith.constant 0 : i32
    %121 = arith.cmpi ne, %120, %c0_i32_40 : i32
    scf.if %121 {
      %cst_41 = arith.constant 0.000000e+00 : f32
      %122 = vector.broadcast %cst_41 : f32 to vector<8x128xf32>
      %c0_42 = arith.constant 0 : index
      %c0_43 = arith.constant 0 : index
      %123 = vector.load %arg9[%c0_42, %c0_43] : memref<8x128xf32, #tpu.memory_space<vmem>>, vector<8x128xf32>
      tpu.vector_store %arg9[%c0_42, %c0_43], %122 {strides = array<i32>} : memref<8x128xf32, #tpu.memory_space<vmem>>, vector<8x128xf32>,
      %c0_44 = arith.constant 0 : index
      %c0_45 = arith.constant 0 : index
      %124 = vector.load %arg10[%c0_44, %c0_45] : memref<1x6xf32, #tpu.memory_space<vmem>>, vector<1x6xf32>
      %c0_46 = arith.constant 0 : index
      %c0_47 = arith.constant 0 : index
      %125 = vector.load %arg9[%c0_46, %c0_47] : memref<8x128xf32, #tpu.memory_space<vmem>>, vector<1x6xf32>
      tpu.vector_store %arg9[%c0_46, %c0_47], %124 {strides = array<i32>} : memref<8x128xf32, #tpu.memory_space<vmem>>, vector<1x6xf32>,
    } else {
    }
    return
  }
  func.func @transform_0(%arg0: i32, %arg1: i32) -> (i32, i32) {
    %c4_i32 = arith.constant 4 : i32
    %0 = arith.muli %arg0, %c4_i32 : i32
    %1 = arith.addi %0, %arg1 : i32
    %c0_i32 = arith.constant 0 : i32
    %c0_i32_0 = arith.constant 0 : i32
    return %1, %c0_i32 : i32, i32
  }
  func.func @transform_1(%arg0: i32, %arg1: i32) -> (i32, i32) {
    %c4_i32 = arith.constant 4 : i32
    %0 = arith.muli %arg0, %c4_i32 : i32
    %1 = arith.addi %0, %arg1 : i32
    %c0_i32 = arith.constant 0 : i32
    %c0_i32_0 = arith.constant 0 : i32
    return %1, %c0_i32 : i32, i32
  }
  func.func @transform_2(%arg0: i32, %arg1: i32) -> (i32, i32) {
    %c0_i32 = arith.constant 0 : i32
    %c0_i32_0 = arith.constant 0 : i32
    %c0_i32_1 = arith.constant 0 : i32
    return %c0_i32, %c0_i32_0 : i32, i32
  }
  func.func @transform_3(%arg0: i32, %arg1: i32) -> (i32, i32) {
    %c0_i32 = arith.constant 0 : i32
    %c0_i32_0 = arith.constant 0 : i32
    %c0_i32_1 = arith.constant 0 : i32
    return %c0_i32, %c0_i32_0 : i32, i32
  }
  func.func @transform_4(%arg0: i32, %arg1: i32) -> (i32, i32) {
    %c0_i32 = arith.constant 0 : i32
    %c0_i32_0 = arith.constant 0 : i32
    %c0_i32_1 = arith.constant 0 : i32
    return %c0_i32, %c0_i32_0 : i32, i32
  }
  func.func @transform_5(%arg0: i32, %arg1: i32) -> (i32, i32) {
    %c0_i32 = arith.constant 0 : i32
    %c0_i32_0 = arith.constant 0 : i32
    %c0_i32_1 = arith.constant 0 : i32
    return %c0_i32, %c0_i32_0 : i32, i32
  }
  func.func @transform_6(%arg0: i32, %arg1: i32) -> i32 {
    %c0_i32 = arith.constant 0 : i32
    %c0_i32_0 = arith.constant 0 : i32
    return %c0_i32 : i32
  }
  func.func @transform_7(%arg0: i32, %arg1: i32) -> (i32, i32) {
    %c0_i32 = arith.constant 0 : i32
    %c0_i32_0 = arith.constant 0 : i32
    return %arg0, %c0_i32 : i32, i32
  }
}

</mosaic_0001>

<llo_original>
// kernel: tpu_custom_call.1
$region0: #{tpu_custom_call.1}
  #allocation0 [shape = 'u32[]', space=smem, size = 0x4, offset = 0x4, fixed_abs, tag = 'smem constant byte address 0x4 - core index']
  #allocation1 [shape = 'u32[144,128]{1,0:T(1,128)}', space=vmem, size = 0x12000, scoped, tag = 'internal scratch']
  #allocation2 [shape = 'f32[1,6]{1,0:T(1,128)}', space=vmem, size = 0x200, scoped, tag = 'scratch operand']
  %s0 = inlined_call_operand.vmem [shape: bf16[4096,32], index: 0, kind: input, shape index: {}]
  %s1 = inlined_call_operand.vmem [shape: s32[4096,2], index: 1, kind: input, shape index: {}]
  %s2 = inlined_call_operand.vmem [shape: bf16[32,48], index: 2, kind: input, shape index: {}]
  %s3 = inlined_call_operand.vmem [shape: bf16[48,80], index: 3, kind: input, shape index: {}]
  %s4 = inlined_call_operand.vmem [shape: bf16[48,8], index: 4, kind: input, shape index: {}]
  %s5 = inlined_call_operand.vmem [shape: bf16[80,8], index: 5, kind: input, shape index: {}]
  %s6 = inlined_call_operand.vmem [shape: f32[6], index: 6, kind: input, shape index: {}]
  %s7 = inlined_call_operand.hbm [shape: f32[16,128], index: 7, kind: output, shape index: {}]
  %s8 = sld [smem:[#allocation0]]
  $region73: #{tpu_custom_call.1} parent=0
    _
  %s10 = ssub.s32 1, %s8
  %s11 = scalar_select 0, %s10, %s8
  $region1: #{tpu_custom_call.1} parent=0
    #allocation3 [shape = 'u8[512]{0}', space=smem, size = 0x200, scoped, tag = 'input window, operand 6, single buffered']
    #allocation4 [shape = 's32[2]{0}', space=sflag, size = 0x8, scoped, tag = 'scoped memory for tpu_custom_call.1']
    #allocation5 [shape = 's32[2]{0}', space=sflag, size = 0x8, scoped, tag = 'scoped memory for tpu_custom_call.1']
    #allocation6 [shape = 'u8[8192]{0}', space=vmem, size = 0x2000, scoped, tag = 'output window, operand 0']
    %12 = vsyncpa [#allocation5], 0
    %13 = vsyncpa [#allocation4], 0
    %s14 = scalar_lea.sflag [#allocation4], 1
    %15 = vsyncpa %s14, 0
    loop: start=0, step=1, limit=10
    $region2: #{tpu_custom_call.1} parent=1 // loop_pre_header
      _
    $region3: #{tpu_custom_call.1} parent=1 // loop_header
      %s17 = sphi 0, %s21
      %p18 = scmp.ge.s32.totalorder %s17, 10
      %s24 = sphi 0, %s36
      %s25 = sphi 0, %s32
      %s26 = sphi 0, %s24
      %s27 = sphi 0, %s25
      %s28 = sphi 0, %s26
      %s29 = sphi 0, %s27
      %s43 = sphi 0, %s45
      %s46 = sphi 0, %s43
      %s47 = sphi 0, %s46
      %s63 = sphi 0, %s47
      %s73 = sphi 0, %s75
      %s76 = sphi 0, %s73
      %s77 = sphi 0, %s76
      %s93 = sphi 0, %s77
      %s97 = sphi 0, %s97
      %s99 = sphi 0, %s97
      %s100 = sphi 0, %s99
      %s114 = sphi 0, %s100
      %s118 = sphi 0, %s118
      %s120 = sphi 0, %s118
      %s121 = sphi 0, %s120
      %s135 = sphi 0, %s121
      %s139 = sphi 0, %s139
      %s141 = sphi 0, %s139
      %s142 = sphi 0, %s141
      %s156 = sphi 0, %s142
      %s160 = sphi 0, %s160
      %s162 = sphi 0, %s160
      %s163 = sphi 0, %s162
      %s177 = sphi 0, %s163
      %s181 = sphi 0, %s181
      %s183 = sphi 0, %s181
      %s184 = sphi 0, %s183
      %s198 = sphi 0, %s184
      %s204 = sphi 0, %s206
      %s207 = sphi 0, %s204
      %s208 = sphi 0, %s207
      %s224 = sphi 0, %s208
    $region4: #{tpu_custom_call.1} parent=1 // loop_header_branch
      %20 = sbr.rel (%p18) target = $region8
    $region5: #{tpu_custom_call.1} parent=1 // loop_body
      %s22 = ssub.s32 %s17, 1
      %s23 = ssub.s32 %s17, 2
      %s30 = sadd.s32 1, %s25
      %p31 = scmp.ge.s32.totalorder %s30, 4
      %s32 = scalar_select %p31, 0, %s30
      %s33 = sadd.s32 1, %s24
      %s34 = scalar_select %p31, %s33, %s24
      %p35 = scmp.ge.s32.totalorder %s34, 2
      %s36 = scalar_select %p35, 0, %s34
      %s37 = smul.u32 %s24, 4
      %s38 = sadd.s32 %s37, %s25
      %s39 = smul.u32 %s36, 4
      %s40 = sadd.s32 %s39, %s32
      %s41 = ssub.s32 %s38, %s40
      %p42 = scmp.eq.s32.totalorder %s41, 0
      %s44 = sadd.s32 %s43, 1
      %s45 = scalar_select %p42, %s43, %s44
      %p48 = pneg %p42
      %p49 = scmp.eq.s32.totalorder %s17, 7
      %p50 = por %p48, %p49
      %p51 = scmp.ne.s32.totalorder %s43, %s46
      %p52 = scmp.eq.s32.totalorder %s17, 0
      %p53 = por %p51, %p52
      %p54 = scmp.ne.s32.totalorder %s43, %s46
      %p55 = scmp.eq.s32.totalorder %s22, 7
      %p56 = por %p54, %p55
      %p57 = scmp.ne.s32.totalorder %s46, %s47
      %p58 = scmp.eq.s32.totalorder %s22, 0
      %p59 = por %p57, %p58
      %p60 = scmp.ne.s32.totalorder %s46, %s47
      %p61 = scmp.eq.s32.totalorder %s23, 7
      %p62 = por %p60, %p61
      %p64 = scmp.ne.s32.totalorder %s47, %s63
      %p65 = scmp.eq.s32.totalorder %s23, 0
      %p66 = por %p64, %p65
      %s67 = smul.u32 %s24, 4
      %s68 = sadd.s32 %s67, %s25
      %s69 = smul.u32 %s36, 4
      %s70 = sadd.s32 %s69, %s32
      %s71 = ssub.s32 %s68, %s70
      %p72 = scmp.eq.s32.totalorder %s71, 0
      %s74 = sadd.s32 %s73, 1
      %s75 = scalar_select %p72, %s73, %s74
      %p78 = pneg %p72
      %p79 = scmp.eq.s32.totalorder %s17, 7
      %p80 = por %p78, %p79
      %p81 = scmp.ne.s32.totalorder %s73, %s76
      %p82 = scmp.eq.s32.totalorder %s17, 0
      %p83 = por %p81, %p82
      %p84 = scmp.ne.s32.totalorder %s73, %s76
      %p85 = scmp.eq.s32.totalorder %s22, 7
      %p86 = por %p84, %p85
      %p87 = scmp.ne.s32.totalorder %s76, %s77
      %p88 = scmp.eq.s32.totalorder %s22, 0
      %p89 = por %p87, %p88
      %p90 = scmp.ne.s32.totalorder %s76, %s77
      %p91 = scmp.eq.s32.totalorder %s23, 7
      %p92 = por %p90, %p91
      %p94 = scmp.ne.s32.totalorder %s77, %s93
      %p95 = scmp.eq.s32.totalorder %s23, 0
      %p96 = por %p94, %p95
      %s98 = sadd.s32 %s97, 1
      %p101 = scmp.eq.s32.totalorder %s17, 7
      %p102 = scmp.ne.s32.totalorder %s97, %s99
      %p103 = scmp.eq.s32.totalorder %s17, 0
      %p104 = por %p102, %p103
      %p105 = scmp.ne.s32.totalorder %s97, %s99
      %p106 = scmp.eq.s32.totalorder %s22, 7
      %p107 = por %p105, %p106
      %p108 = scmp.ne.s32.totalorder %s99, %s100
      %p109 = scmp.eq.s32.totalorder %s22, 0
      %p110 = por %p108, %p109
      %p111 = scmp.ne.s32.totalorder %s99, %s100
      %p112 = scmp.eq.s32.totalorder %s23, 7
      %p113 = por %p111, %p112
      %p115 = scmp.ne.s32.totalorder %s100, %s114
      %p116 = scmp.eq.s32.totalorder %s23, 0
      %p117 = por %p115, %p116
      %s119 = sadd.s32 %s118, 1
      %p122 = scmp.eq.s32.totalorder %s17, 7
      %p123 = scmp.ne.s32.totalorder %s118, %s120
      %p124 = scmp.eq.s32.totalorder %s17, 0
      %p125 = por %p123, %p124
      %p126 = scmp.ne.s32.totalorder %s118, %s120
      %p127 = scmp.eq.s32.totalorder %s22, 7
      %p128 = por %p126, %p127
      %p129 = scmp.ne.s32.totalorder %s120, %s121
      %p130 = scmp.eq.s32.totalorder %s22, 0
      %p131 = por %p129, %p130
      %p132 = scmp.ne.s32.totalorder %s120, %s121
      %p133 = scmp.eq.s32.totalorder %s23, 7
      %p134 = por %p132, %p133
      %p136 = scmp.ne.s32.totalorder %s121, %s135
      %p137 = scmp.eq.s32.totalorder %s23, 0
      %p138 = por %p136, %p137
      %s140 = sadd.s32 %s139, 1
      %p143 = scmp.eq.s32.totalorder %s17, 7
      %p144 = scmp.ne.s32.totalorder %s139, %s141
      %p145 = scmp.eq.s32.totalorder %s17, 0
      %p146 = por %p144, %p145
      %p147 = scmp.ne.s32.totalorder %s139, %s141
      %p148 = scmp.eq.s32.totalorder %s22, 7
      %p149 = por %p147, %p148
      %p150 = scmp.ne.s32.totalorder %s141, %s142
      %p151 = scmp.eq.s32.totalorder %s22, 0
      %p152 = por %p150, %p151
      %p153 = scmp.ne.s32.totalorder %s141, %s142
      %p154 = scmp.eq.s32.totalorder %s23, 7
      %p155 = por %p153, %p154
      %p157 = scmp.ne.s32.totalorder %s142, %s156
      %p158 = scmp.eq.s32.totalorder %s23, 0
      %p159 = por %p157, %p158
      %s161 = sadd.s32 %s160, 1
      %p164 = scmp.eq.s32.totalorder %s17, 7
      %p165 = scmp.ne.s32.totalorder %s160, %s162
      %p166 = scmp.eq.s32.totalorder %s17, 0
      %p167 = por %p165, %p166
      %p168 = scmp.ne.s32.totalorder %s160, %s162
      %p169 = scmp.eq.s32.totalorder %s22, 7
      %p170 = por %p168, %p169
      %p171 = scmp.ne.s32.totalorder %s162, %s163
      %p172 = scmp.eq.s32.totalorder %s22, 0
      %p173 = por %p171, %p172
      %p174 = scmp.ne.s32.totalorder %s162, %s163
      %p175 = scmp.eq.s32.totalorder %s23, 7
      %p176 = por %p174, %p175
      %p178 = scmp.ne.s32.totalorder %s163, %s177
      %p179 = scmp.eq.s32.totalorder %s23, 0
      %p180 = por %p178, %p179
      %s182 = sadd.s32 %s181, 1
      %p185 = scmp.eq.s32.totalorder %s17, 7
      %p186 = scmp.ne.s32.totalorder %s181, %s183
      %p187 = scmp.eq.s32.totalorder %s17, 0
      %p188 = por %p186, %p187
      %p189 = scmp.ne.s32.totalorder %s181, %s183
      %p190 = scmp.eq.s32.totalorder %s22, 7
      %p191 = por %p189, %p190
      %p192 = scmp.ne.s32.totalorder %s183, %s184
      %p193 = scmp.eq.s32.totalorder %s22, 0
      %p194 = por %p192, %p193
      %p195 = scmp.ne.s32.totalorder %s183, %s184
      %p196 = scmp.eq.s32.totalorder %s23, 7
      %p197 = por %p195, %p196
      %p199 = scmp.ne.s32.totalorder %s184, %s198
      %p200 = scmp.eq.s32.totalorder %s23, 0
      %p201 = por %p199, %p200
      %s202 = ssub.s32 %s24, %s36
      %p203 = scmp.eq.s32.totalorder %s202, 0
      %s205 = sadd.s32 %s204, 1
      %s206 = scalar_select %p203, %s204, %s205
      %p209 = pneg %p203
      %p210 = scmp.eq.s32.totalorder %s17, 7
      %p211 = por %p209, %p210
      %p212 = scmp.ne.s32.totalorder %s204, %s207
      %p213 = scmp.eq.s32.totalorder %s17, 0
      %p214 = por %p212, %p213
      %p215 = scmp.ne.s32.totalorder %s204, %s207
      %p216 = scmp.eq.s32.totalorder %s22, 7
      %p217 = por %p215, %p216
      %p218 = scmp.ne.s32.totalorder %s207, %s208
      %p219 = scmp.eq.s32.totalorder %s22, 0
      %p220 = por %p218, %p219
      %p221 = scmp.ne.s32.totalorder %s207, %s208
      %p222 = scmp.eq.s32.totalorder %s23, 7
      %p223 = por %p221, %p222
      %p225 = scmp.ne.s32.totalorder %s208, %s224
      %p226 = scmp.eq.s32.totalorder %s23, 0
      %p227 = por %p225, %p226
      %p228 = scmp.le.s32.totalorder 1, %s17
      %p229 = scmp.lt.s32.totalorder %s17, 9
      %p230 = pnand %p228, %p229
      %p231 = pneg %p230
      // Predicated region
      $region9: #{tpu_custom_call.1} parent=5 // pred_check
        _
      $region10: #{tpu_custom_call.1} parent=5 // pred_check_branch
        %233 = sbr.rel (%p230) target = $region12
      $region11: #{tpu_custom_call.1} parent=5 // pred_region
        %s234 = ssub.s32 %s17, 1
        // Predicated region
        $region13: #{tpu_custom_call.1} parent=11 // pred_check
          %p235 = pneg %p110
        $region14: #{tpu_custom_call.1} parent=11 // pred_check_branch
          %237 = sbr.rel (%p235) target = $region16
        $region15: #{tpu_custom_call.1} parent=11 // pred_region
          _
        $region16: #{tpu_custom_call.1} parent=11 // pred_fallthru
          _
        // Predicated region
        $region17: #{tpu_custom_call.1} parent=11 // pred_check
          %p238 = pneg %p131
        $region18: #{tpu_custom_call.1} parent=11 // pred_check_branch
          %240 = sbr.rel (%p238) target = $region20
        $region19: #{tpu_custom_call.1} parent=11 // pred_region
          _
        $region20: #{tpu_custom_call.1} parent=11 // pred_fallthru
          _
        // Predicated region
        $region21: #{tpu_custom_call.1} parent=11 // pred_check
          %p241 = pneg %p152
        $region22: #{tpu_custom_call.1} parent=11 // pred_check_branch
          %243 = sbr.rel (%p241) target = $region24
        $region23: #{tpu_custom_call.1} parent=11 // pred_region
          _
        $region24: #{tpu_custom_call.1} parent=11 // pred_fallthru
          _
        // Predicated region
        $region25: #{tpu_custom_call.1} parent=11 // pred_check
          %p244 = pneg %p173
        $region26: #{tpu_custom_call.1} parent=11 // pred_check_branch
          %246 = sbr.rel (%p244) target = $region28
        $region27: #{tpu_custom_call.1} parent=11 // pred_region
          _
        $region28: #{tpu_custom_call.1} parent=11 // pred_fallthru
          _
        // Predicated region
        $region29: #{tpu_custom_call.1} parent=11 // pred_check
          %p247 = pneg %p194
        $region30: #{tpu_custom_call.1} parent=11 // pred_check_branch
          %249 = sbr.rel (%p247) target = $region32
        $region31: #{tpu_custom_call.1} parent=11 // pred_region
          %s251 = ssub.s32 16, 16
          %252 = vsyncadd [#allocation5], %s251
          %s254 = sshll.u32 %s6, 4
          %s255 = int_to_ptr.vmem [resolvable:$true] %s254
          %257 = dma.vmem_to_smem %s255, 16, [#allocation3], [#allocation5]
        $region32: #{tpu_custom_call.1} parent=11 // pred_fallthru
          _
      $region12: #{tpu_custom_call.1} parent=5 // pred_fallthru
        _
      %p258 = scmp.lt.s32.totalorder %s17, 8
      // Predicated region
      $region33: #{tpu_custom_call.1} parent=5 // pred_check
        %p259 = pneg %p258
      $region34: #{tpu_custom_call.1} parent=5 // pred_check_branch
        %261 = sbr.rel (%p259) target = $region36
      $region35: #{tpu_custom_call.1} parent=5 // pred_region
        // Predicated region
        $region37: #{tpu_custom_call.1} parent=35 // pred_check
          %p262 = pneg %p53
        $region38: #{tpu_custom_call.1} parent=35 // pred_check_branch
          %264 = sbr.rel (%p262) target = $region40
        $region39: #{tpu_custom_call.1} parent=35 // pred_region
          %s265 = smul.u32 %s24, 4
          %s266 = sadd.s32 %s265, %s25
          %s267 = smul.u32 64, %s266
          %p268 = scmp.lt.s32.totalorder %s267, 511
          %s269 = scalar_select %p268, %s267, 511
          %s270 = smul.addr %s269, 4
          %s271 = scalar_lea.vmem %s0, %s270
          %s272 = smul.u32 %s24, 4
          %s273 = sadd.s32 %s272, %s25
          %s274 = smul.u32 64, %s273
        $region40: #{tpu_custom_call.1} parent=35 // pred_fallthru
          _
        // Predicated region
        $region41: #{tpu_custom_call.1} parent=35 // pred_check
          %p275 = pneg %p83
        $region42: #{tpu_custom_call.1} parent=35 // pred_check_branch
          %277 = sbr.rel (%p275) target = $region44
        $region43: #{tpu_custom_call.1} parent=35 // pred_region
          %s278 = smul.u32 %s24, 4
          %s279 = sadd.s32 %s278, %s25
          %s280 = smul.u32 64, %s279
          %p281 = scmp.lt.s32.totalorder %s280, 511
          %s282 = scalar_select %p281, %s280, 511
          %s283 = smul.addr %s282, 8
          %s284 = scalar_lea.vmem %s1, %s283
          %s285 = smul.u32 %s24, 4
          %s286 = sadd.s32 %s285, %s25
          %s287 = smul.u32 64, %s286
        $region44: #{tpu_custom_call.1} parent=35 // pred_fallthru
          _
      $region36: #{tpu_custom_call.1} parent=5 // pred_fallthru
        _
      %p288 = scmp.le.s32.totalorder 1, %s17
      %p289 = scmp.lt.s32.totalorder %s17, 9
      %p290 = pnand %p288, %p289
      %p291 = pneg %p290
      // Predicated region
      $region45: #{tpu_custom_call.1} parent=5 // pred_check
        _
      $region46: #{tpu_custom_call.1} parent=5 // pred_check_branch
        %293 = sbr.rel (%p290) target = $region48
      $region47: #{tpu_custom_call.1} parent=5 // pred_region
        %s294 = ssub.s32 %s17, 1
        // Predicated region
        $region49: #{tpu_custom_call.1} parent=47 // pred_check
          %p295 = pneg %p194
        $region50: #{tpu_custom_call.1} parent=47 // pred_check_branch
          %297 = sbr.rel (%p295) target = $region52
        $region51: #{tpu_custom_call.1} parent=47 // pred_region
          %298 = dma.done [#allocation5], 16
        $region52: #{tpu_custom_call.1} parent=47 // pred_fallthru
          _
        %299 = sfence
        %s300 = smul.u32 %s26, 4
        %s301 = sadd.s32 %s300, %s27
        %s302 = smul.u32 64, %s301
        %p303 = scmp.lt.s32.totalorder %s302, 511
        %s304 = scalar_select %p303, %s302, 511
        %s305 = smul.addr %s304, 4
        %s306 = scalar_lea.vmem %s0, %s305
        %p307 = pneg %p59
        %p308 = pneg %p56
        %s309 = smul.u32 %s26, 4
        %s310 = sadd.s32 %s309, %s27
        %s311 = smul.u32 64, %s310
        %p312 = scmp.lt.s32.totalorder %s311, 511
        %s313 = scalar_select %p312, %s311, 511
        %s314 = smul.addr %s313, 8
        %s315 = scalar_lea.vmem %s1, %s314
        %p316 = pneg %p89
        %p317 = pneg %p86
        %p318 = pneg %p110
        %p319 = pneg %p107
        %p320 = pneg %p131
        %p321 = pneg %p128
        %p322 = pneg %p152
        %p323 = pneg %p149
        %p324 = pneg %p173
        %p325 = pneg %p170
        %p326 = pneg %p194
        %p327 = pneg %p191
        %p328 = pneg %p220
        %p329 = pneg %p217
        %s330 = sand.u32 %s207, 1
        %s331 = scalar_lea.sflag [#allocation4], %s330
        %s332 = sand.u32 %s207, 1
        %s333 = smul.addr %s332, 8
        %s334 = scalar_lea.vmem [#allocation6], %s333
        %s335 = smul.u32 %s26, 4
        %s336 = sadd.s32 %s335, %s27
        %s337 = smul.u32 64, %s336
        %p338 = scmp.lt.s32.totalorder %s337, 511
        %s339 = scalar_select %p338, %s337, 511
        %s340 = smul.addr %s339, 4
        %s341 = scalar_lea.vmem %s0, %s340
        %s342 = smul.u32 %s26, 4
        %s343 = sadd.s32 %s342, %s27
        %s344 = smul.u32 64, %s343
        %s345 = smul.u32 %s26, 4
        %s346 = sadd.s32 %s345, %s27
        %s347 = smul.u32 64, %s346
        %p348 = scmp.lt.s32.totalorder %s347, 511
        %s349 = scalar_select %p348, %s347, 511
        %s350 = smul.addr %s349, 8
        %s351 = scalar_lea.vmem %s1, %s350
        %s352 = smul.u32 %s26, 4
        %s353 = sadd.s32 %s352, %s27
        %s354 = smul.u32 64, %s353
        %p356 = scmp.eq.s32.totalorder %s27, 0
        // Predicated region
        $region53: #{tpu_custom_call.1} parent=47 // pred_check
          %p357 = pneg %p356
        $region54: #{tpu_custom_call.1} parent=47 // pred_check_branch
          %359 = sbr.rel (%p357) target = $region56
        $region55: #{tpu_custom_call.1} parent=47 // pred_region
          %vm360 = vcmask 40960
          %361 = vst.msk [vmem:[#allocation2] sm:$0x1] %vm360, 0.0
        $region56: #{tpu_custom_call.1} parent=47 // pred_fallthru
          _
        %v362 = vld [vmem:[%s341] sm:$0xf]
        %v363 = vld [vmem:[%s341 + $0x4] sm:$0xf]
        %v364 = vld [vmem:[%s341 + $0x8] sm:$0xf]
        %v365 = vld [vmem:[%s341 + $0xc] sm:$0xf]
        %v366 = vld [vmem:[%s341 + $0x10] sm:$0xf]
        %v367 = vld [vmem:[%s341 + $0x14] sm:$0xf]
        %v368 = vld [vmem:[%s341 + $0x18] sm:$0xf]
        %v369 = vld [vmem:[%s341 + $0x1c] sm:$0xf]
        %v370 = vld [vmem:[%s341 + $0x20] sm:$0xf]
        %v371 = vld [vmem:[%s341 + $0x24] sm:$0xf]
        %v372 = vld [vmem:[%s341 + $0x28] sm:$0xf]
        %v373 = vld [vmem:[%s341 + $0x2c] sm:$0xf]
        %v374 = vld [vmem:[%s341 + $0x30] sm:$0xf]
        %v375 = vld [vmem:[%s341 + $0x34] sm:$0xf]
        %v376 = vld [vmem:[%s341 + $0x38] sm:$0xf]
        %v377 = vld [vmem:[%s341 + $0x3c] sm:$0xf]
        %v378 = vld [vmem:[%s341 + $0x40] sm:$0xf]
        %v379 = vld [vmem:[%s341 + $0x44] sm:$0xf]
        %v380 = vld [vmem:[%s341 + $0x48] sm:$0xf]
        %v381 = vld [vmem:[%s341 + $0x4c] sm:$0xf]
        %v382 = vld [vmem:[%s341 + $0x50] sm:$0xf]
        %v383 = vld [vmem:[%s341 + $0x54] sm:$0xf]
        %v384 = vld [vmem:[%s341 + $0x58] sm:$0xf]
        %v385 = vld [vmem:[%s341 + $0x5c] sm:$0xf]
        %v386 = vld [vmem:[%s341 + $0x60] sm:$0xf]
        %v387 = vld [vmem:[%s341 + $0x64] sm:$0xf]
        %v388 = vld [vmem:[%s341 + $0x68] sm:$0xf]
        %v389 = vld [vmem:[%s341 + $0x6c] sm:$0xf]
        %v390 = vld [vmem:[%s341 + $0x70] sm:$0xf]
        %v391 = vld [vmem:[%s341 + $0x74] sm:$0xf]
        %v392 = vld [vmem:[%s341 + $0x78] sm:$0xf]
        %v393 = vld [vmem:[%s341 + $0x7c] sm:$0xf]
        %v394 = vld [vmem:[%s341 + $0x80] sm:$0xf]
        %v395 = vld [vmem:[%s341 + $0x84] sm:$0xf]
        %v396 = vld [vmem:[%s341 + $0x88] sm:$0xf]
        %v397 = vld [vmem:[%s341 + $0x8c] sm:$0xf]
        %v398 = vld [vmem:[%s341 + $0x90] sm:$0xf]
        %v399 = vld [vmem:[%s341 + $0x94] sm:$0xf]
        %v400 = vld [vmem:[%s341 + $0x98] sm:$0xf]
        %v401 = vld [vmem:[%s341 + $0x9c] sm:$0xf]
        %v402 = vld [vmem:[%s341 + $0xa0] sm:$0xf]
        %v403 = vld [vmem:[%s341 + $0xa4] sm:$0xf]
        %v404 = vld [vmem:[%s341 + $0xa8] sm:$0xf]
        %v405 = vld [vmem:[%s341 + $0xac] sm:$0xf]
        %v406 = vld [vmem:[%s341 + $0xb0] sm:$0xf]
        %v407 = vld [vmem:[%s341 + $0xb4] sm:$0xf]
        %v408 = vld [vmem:[%s341 + $0xb8] sm:$0xf]
        %v409 = vld [vmem:[%s341 + $0xbc] sm:$0xf]
        %v410 = vld [vmem:[%s341 + $0xc0] sm:$0xf]
        %v411 = vld [vmem:[%s341 + $0xc4] sm:$0xf]
        %v412 = vld [vmem:[%s341 + $0xc8] sm:$0xf]
        %v413 = vld [vmem:[%s341 + $0xcc] sm:$0xf]
        %v414 = vld [vmem:[%s341 + $0xd0] sm:$0xf]
        %v415 = vld [vmem:[%s341 + $0xd4] sm:$0xf]
        %v416 = vld [vmem:[%s341 + $0xd8] sm:$0xf]
        %v417 = vld [vmem:[%s341 + $0xdc] sm:$0xf]
        %v418 = vld [vmem:[%s341 + $0xe0] sm:$0xf]
        %v419 = vld [vmem:[%s341 + $0xe4] sm:$0xf]
        %v420 = vld [vmem:[%s341 + $0xe8] sm:$0xf]
        %v421 = vld [vmem:[%s341 + $0xec] sm:$0xf]
        %v422 = vld [vmem:[%s341 + $0xf0] sm:$0xf]
        %v423 = vld [vmem:[%s341 + $0xf4] sm:$0xf]
        %v424 = vld [vmem:[%s341 + $0xf8] sm:$0xf]
        %v425 = vld [vmem:[%s341 + $0xfc] sm:$0xf]
        %v426 = vld [vmem:[%s2] sm:$0xf]
        %v427 = vld [vmem:[%s2 + $0x4] sm:$0xf]
        %v428 = vld [vmem:[%s2 + $0x8] sm:$0xf]
        %v429 = vld [vmem:[%s2 + $0xc] sm:$0xf]
        %v494 = vunpack.c.l.b16 %v362
        %v495 = vunpack.c.l.b16 %v363
        %v496 = vunpack.c.l.b16 %v364
        %v497 = vunpack.c.l.b16 %v365
        %v498 = vunpack.c.l.b16 %v366
        %v499 = vunpack.c.l.b16 %v367
        %v500 = vunpack.c.l.b16 %v368
        %v501 = vunpack.c.l.b16 %v369
        %v502 = vunpack.c.l.b16 %v370
        %v503 = vunpack.c.l.b16 %v371
        %v504 = vunpack.c.l.b16 %v372
        %v505 = vunpack.c.l.b16 %v373
        %v506 = vunpack.c.l.b16 %v374
        %v507 = vunpack.c.l.b16 %v375
        %v508 = vunpack.c.l.b16 %v376
        %v509 = vunpack.c.l.b16 %v377
        %v510 = vunpack.c.l.b16 %v378
        %v511 = vunpack.c.l.b16 %v379
        %v512 = vunpack.c.l.b16 %v380
        %v513 = vunpack.c.l.b16 %v381
        %v514 = vunpack.c.l.b16 %v382
        %v515 = vunpack.c.l.b16 %v383
        %v516 = vunpack.c.l.b16 %v384
        %v517 = vunpack.c.l.b16 %v385
        %v518 = vunpack.c.l.b16 %v386
        %v519 = vunpack.c.l.b16 %v387
        %v520 = vunpack.c.l.b16 %v388
        %v521 = vunpack.c.l.b16 %v389
        %v522 = vunpack.c.l.b16 %v390
        %v523 = vunpack.c.l.b16 %v391
        %v524 = vunpack.c.l.b16 %v392
        %v525 = vunpack.c.l.b16 %v393
        %v526 = vunpack.c.l.b16 %v394
        %v527 = vunpack.c.l.b16 %v395
        %v528 = vunpack.c.l.b16 %v396
        %v529 = vunpack.c.l.b16 %v397
        %v530 = vunpack.c.l.b16 %v398
        %v531 = vunpack.c.l.b16 %v399
        %v532 = vunpack.c.l.b16 %v400
        %v533 = vunpack.c.l.b16 %v401
        %v534 = vunpack.c.l.b16 %v402
        %v535 = vunpack.c.l.b16 %v403
        %v536 = vunpack.c.l.b16 %v404
        %v537 = vunpack.c.l.b16 %v405
        %v538 = vunpack.c.l.b16 %v406
        %v539 = vunpack.c.l.b16 %v407
        %v540 = vunpack.c.l.b16 %v408
        %v541 = vunpack.c.l.b16 %v409
        %v542 = vunpack.c.l.b16 %v410
        %v543 = vunpack.c.l.b16 %v411
        %v544 = vunpack.c.l.b16 %v412
        %v545 = vunpack.c.l.b16 %v413
        %v546 = vunpack.c.l.b16 %v414
        %v547 = vunpack.c.l.b16 %v415
        %v548 = vunpack.c.l.b16 %v416
        %v549 = vunpack.c.l.b16 %v417
        %v550 = vunpack.c.l.b16 %v418
        %v551 = vunpack.c.l.b16 %v419
        %v552 = vunpack.c.l.b16 %v420
        %v553 = vunpack.c.l.b16 %v421
        %v554 = vunpack.c.l.b16 %v422
        %v555 = vunpack.c.l.b16 %v423
        %v556 = vunpack.c.l.b16 %v424
        %v557 = vunpack.c.l.b16 %v425
        %v558 = vpack.c.b16 %v495, %v494
        %v559 = vpack.c.b16 %v497, %v496
        %v560 = vpack.c.b16 %v499, %v498
        %v561 = vpack.c.b16 %v501, %v500
        %v562 = vpack.c.b16 %v503, %v502
        %v563 = vpack.c.b16 %v505, %v504
        %v564 = vpack.c.b16 %v507, %v506
        %v565 = vpack.c.b16 %v509, %v508
        %v566 = vpack.c.b16 %v511, %v510
        %v567 = vpack.c.b16 %v513, %v512
        %v568 = vpack.c.b16 %v515, %v514
        %v569 = vpack.c.b16 %v517, %v516
        %v570 = vpack.c.b16 %v519, %v518
        %v571 = vpack.c.b16 %v521, %v520
        %v572 = vpack.c.b16 %v523, %v522
        %v573 = vpack.c.b16 %v525, %v524
        %v574 = vpack.c.b16 %v527, %v526
        %v575 = vpack.c.b16 %v529, %v528
        %v576 = vpack.c.b16 %v531, %v530
        %v577 = vpack.c.b16 %v533, %v532
        %v578 = vpack.c.b16 %v535, %v534
        %v579 = vpack.c.b16 %v537, %v536
        %v580 = vpack.c.b16 %v539, %v538
        %v581 = vpack.c.b16 %v541, %v540
        %v582 = vpack.c.b16 %v543, %v542
        %v583 = vpack.c.b16 %v545, %v544
        %v584 = vpack.c.b16 %v547, %v546
        %v585 = vpack.c.b16 %v549, %v548
        %v586 = vpack.c.b16 %v551, %v550
        %v587 = vpack.c.b16 %v553, %v552
        %v588 = vpack.c.b16 %v555, %v554
        %v589 = vpack.c.b16 %v557, %v556
        %v594 = vunpack.c.l.b16 %v426
        %v595 = vunpack.c.l.b16 %v427
        %v596 = vunpack.c.l.b16 %v428
        %v597 = vunpack.c.l.b16 %v429
        %v598 = vpack.c.b16 %v595, %v594
        %v599 = vpack.c.b16 %v597, %v596
        %vm602 = vcmask 261120
        %v604 = vsel %vm602, %v558, 0
        %v607 = vsel %vm602, %v559, 0
        %v610 = vsel %vm602, %v560, 0
        %v613 = vsel %vm602, %v561, 0
        %v616 = vsel %vm602, %v562, 0
        %v619 = vsel %vm602, %v563, 0
        %v622 = vsel %vm602, %v564, 0
        %v625 = vsel %vm602, %v565, 0
        %v628 = vsel %vm602, %v566, 0
        %v631 = vsel %vm602, %v567, 0
        %v634 = vsel %vm602, %v568, 0
        %v637 = vsel %vm602, %v569, 0
        %v640 = vsel %vm602, %v570, 0
        %v643 = vsel %vm602, %v571, 0
        %v646 = vsel %vm602, %v572, 0
        %v649 = vsel %vm602, %v573, 0
        %v652 = vsel %vm602, %v574, 0
        %v655 = vsel %vm602, %v575, 0
        %v658 = vsel %vm602, %v576, 0
        %v661 = vsel %vm602, %v577, 0
        %v664 = vsel %vm602, %v578, 0
        %v667 = vsel %vm602, %v579, 0
        %v670 = vsel %vm602, %v580, 0
        %v673 = vsel %vm602, %v581, 0
        %v676 = vsel %vm602, %v582, 0
        %v679 = vsel %vm602, %v583, 0
        %v682 = vsel %vm602, %v584, 0
        %v685 = vsel %vm602, %v585, 0
        %v688 = vsel %vm602, %v586, 0
        %v691 = vsel %vm602, %v587, 0
        %v694 = vsel %vm602, %v588, 0
        %v697 = vsel %vm602, %v589, 0
        %699 = vmatprep.subr.bf16.mxu0 0
        %700 = vmatpush1.bf16.msra.mxu0 0
        %701 = vmatprep.subr.bf16.mxu0 0
        %702 = vmatpush1.bf16.msra.mxu0 0
        %703 = vmatprep.subr.bf16.mxu0 0
        %704 = vmatpush1.bf16.msra.mxu0 0
        %705 = vmatprep.subr.bf16.mxu0 0
        %706 = vmatpush1.bf16.msra.mxu0 0
        %707 = vmatprep.subr.bf16.mxu0 0
        %708 = vmatpush1.bf16.msra.mxu0 0
        %709 = vmatprep.subr.bf16.mxu0 0
        %710 = vmatpush1.bf16.msra.mxu0 0
        %711 = vmatprep.subr.bf16.mxu0 0
        %712 = vmatpush1.bf16.msra.mxu0 %v599
        %713 = vmatprep.subr.bf16.mxu0 0
        %714 = vmatpush1.bf16.msra.mxu0 %v598
        %715 = vmatprep.subr.bf16.mxu0 0
        %716 = vmatpush2.bf16.msra.mxu0 0
        %717 = vmatprep.subr.bf16.mxu0 0
        %718 = vmatpush2.bf16.msra.mxu0 0
        %719 = vmatprep.subr.bf16.mxu0 0
        %720 = vmatpush2.bf16.msra.mxu0 0
        %721 = vmatprep.subr.bf16.mxu0 0
        %722 = vmatpush2.bf16.msra.mxu0 0
        %723 = vmatprep.subr.bf16.mxu0 0
        %724 = vmatpush2.bf16.msra.mxu0 0
        %725 = vmatprep.subr.bf16.mxu0 0
        %726 = vmatpush2.bf16.msra.mxu0 0
        %727 = vmatprep.subr.bf16.mxu0 0
        %728 = vmatpush2.bf16.msra.mxu0 0
        %729 = vmatprep.subr.bf16.mxu0 0
        %730 = vmatpush2.bf16.msra.mxu0 0
        %731 = vmatprep.mubr.bf16.mxu0 0
        %732 = vmatmul.mubr.bf16.gmra.mxu0 %v604
        %v733 = vpop.f32.mrf.mxu0
        %v734 = vadd.f32 0.0, %v733
        %v735 = vpop.f32.mrf.mxu0
        %v736 = vpop.f32.mrf.mxu0
        %v737 = vadd.f32 0.0, %v736
        %v738 = vpop.f32.mrf.mxu0
        %739 = vmatprep.mubr.bf16.mxu0 0
        %740 = vmatmul.mubr.bf16.gmra.mxu0 %v607
        %v741 = vpop.f32.mrf.mxu0
        %v742 = vadd.f32 0.0, %v741
        %v743 = vpop.f32.mrf.mxu0
        %v744 = vpop.f32.mrf.mxu0
        %v745 = vadd.f32 0.0, %v744
        %v746 = vpop.f32.mrf.mxu0
        %747 = vmatprep.mubr.bf16.mxu0 0
        %748 = vmatmul.mubr.bf16.gmra.mxu0 %v610
        %v749 = vpop.f32.mrf.mxu0
        %v750 = vadd.f32 0.0, %v749
        %v751 = vpop.f32.mrf.mxu0
        %v752 = vpop.f32.mrf.mxu0
        %v753 = vadd.f32 0.0, %v752
        %v754 = vpop.f32.mrf.mxu0
        %755 = vmatprep.mubr.bf16.mxu0 0
        %756 = vmatmul.mubr.bf16.gmra.mxu0 %v613
        %v757 = vpop.f32.mrf.mxu0
        %v758 = vadd.f32 0.0, %v757
        %v759 = vpop.f32.mrf.mxu0
        %v760 = vpop.f32.mrf.mxu0
        %v761 = vadd.f32 0.0, %v760
        %v762 = vpop.f32.mrf.mxu0
        %763 = vmatprep.mubr.bf16.mxu0 0
        %764 = vmatmul.mubr.bf16.gmra.mxu0 %v616
        %v765 = vpop.f32.mrf.mxu0
        %v766 = vadd.f32 0.0, %v765
        %v767 = vpop.f32.mrf.mxu0
        %v768 = vpop.f32.mrf.mxu0
        %v769 = vadd.f32 0.0, %v768
        %v770 = vpop.f32.mrf.mxu0
        %771 = vmatprep.mubr.bf16.mxu0 0
        %772 = vmatmul.mubr.bf16.gmra.mxu0 %v619
        %v773 = vpop.f32.mrf.mxu0
        %v774 = vadd.f32 0.0, %v773
        %v775 = vpop.f32.mrf.mxu0
        %v776 = vpop.f32.mrf.mxu0
        %v777 = vadd.f32 0.0, %v776
        %v778 = vpop.f32.mrf.mxu0
        %779 = vmatprep.mubr.bf16.mxu0 0
        %780 = vmatmul.mubr.bf16.gmra.mxu0 %v622
        %v781 = vpop.f32.mrf.mxu0
        %v782 = vadd.f32 0.0, %v781
        %v783 = vpop.f32.mrf.mxu0
        %v784 = vpop.f32.mrf.mxu0
        %v785 = vadd.f32 0.0, %v784
        %v786 = vpop.f32.mrf.mxu0
        %787 = vmatprep.mubr.bf16.mxu0 0
        %788 = vmatmul.mubr.bf16.gmra.mxu0 %v625
        %v789 = vpop.f32.mrf.mxu0
        %v790 = vadd.f32 0.0, %v789
        %v791 = vpop.f32.mrf.mxu0
        %v792 = vpop.f32.mrf.mxu0
        %v793 = vadd.f32 0.0, %v792
        %v794 = vpop.f32.mrf.mxu0
        %795 = vmatprep.mubr.bf16.mxu0 0
        %796 = vmatmul.mubr.bf16.gmra.mxu0 %v628
        %v797 = vpop.f32.mrf.mxu0
        %v798 = vadd.f32 0.0, %v797
        %v799 = vpop.f32.mrf.mxu0
        %v800 = vpop.f32.mrf.mxu0
        %v801 = vadd.f32 0.0, %v800
        %v802 = vpop.f32.mrf.mxu0
        %803 = vmatprep.mubr.bf16.mxu0 0
        %804 = vmatmul.mubr.bf16.gmra.mxu0 %v631
        %v805 = vpop.f32.mrf.mxu0
        %v806 = vadd.f32 0.0, %v805
        %v807 = vpop.f32.mrf.mxu0
        %v808 = vpop.f32.mrf.mxu0
        %v809 = vadd.f32 0.0, %v808
        %v810 = vpop.f32.mrf.mxu0
        %811 = vmatprep.mubr.bf16.mxu0 0
        %812 = vmatmul.mubr.bf16.gmra.mxu0 %v634
        %v813 = vpop.f32.mrf.mxu0
        %v814 = vadd.f32 0.0, %v813
        %v815 = vpop.f32.mrf.mxu0
        %v816 = vpop.f32.mrf.mxu0
        %v817 = vadd.f32 0.0, %v816
        %v818 = vpop.f32.mrf.mxu0
        %819 = vmatprep.mubr.bf16.mxu0 0
        %820 = vmatmul.mubr.bf16.gmra.mxu0 %v637
        %v821 = vpop.f32.mrf.mxu0
        %v822 = vadd.f32 0.0, %v821
        %v823 = vpop.f32.mrf.mxu0
        %v824 = vpop.f32.mrf.mxu0
        %v825 = vadd.f32 0.0, %v824
        %v826 = vpop.f32.mrf.mxu0
        %827 = vmatprep.mubr.bf16.mxu0 0
        %828 = vmatmul.mubr.bf16.gmra.mxu0 %v640
        %v829 = vpop.f32.mrf.mxu0
        %v830 = vadd.f32 0.0, %v829
        %v831 = vpop.f32.mrf.mxu0
        %v832 = vpop.f32.mrf.mxu0
        %v833 = vadd.f32 0.0, %v832
        %v834 = vpop.f32.mrf.mxu0
        %835 = vmatprep.mubr.bf16.mxu0 0
        %836 = vmatmul.mubr.bf16.gmra.mxu0 %v643
        %v837 = vpop.f32.mrf.mxu0
        %v838 = vadd.f32 0.0, %v837
        %v839 = vpop.f32.mrf.mxu0
        %v840 = vpop.f32.mrf.mxu0
        %v841 = vadd.f32 0.0, %v840
        %v842 = vpop.f32.mrf.mxu0
        %843 = vmatprep.mubr.bf16.mxu0 0
        %844 = vmatmul.mubr.bf16.gmra.mxu0 %v646
        %v845 = vpop.f32.mrf.mxu0
        %v846 = vadd.f32 0.0, %v845
        %v847 = vpop.f32.mrf.mxu0
        %v848 = vpop.f32.mrf.mxu0
        %v849 = vadd.f32 0.0, %v848
        %v850 = vpop.f32.mrf.mxu0
        %851 = vmatprep.mubr.bf16.mxu0 0
        %852 = vmatmul.mubr.bf16.gmra.mxu0 %v649
        %v853 = vpop.f32.mrf.mxu0
        %v854 = vadd.f32 0.0, %v853
        %v855 = vpop.f32.mrf.mxu0
        %v856 = vpop.f32.mrf.mxu0
        %v857 = vadd.f32 0.0, %v856
        %v858 = vpop.f32.mrf.mxu0
        %859 = vmatprep.mubr.bf16.mxu0 0
        %860 = vmatmul.mubr.bf16.gmra.mxu0 %v652
        %v861 = vpop.f32.mrf.mxu0
        %v862 = vadd.f32 0.0, %v861
        %v863 = vpop.f32.mrf.mxu0
        %v864 = vpop.f32.mrf.mxu0
        %v865 = vadd.f32 0.0, %v864
        %v866 = vpop.f32.mrf.mxu0
        %867 = vmatprep.mubr.bf16.mxu0 0
        %868 = vmatmul.mubr.bf16.gmra.mxu0 %v655
        %v869 = vpop.f32.mrf.mxu0
        %v870 = vadd.f32 0.0, %v869
        %v871 = vpop.f32.mrf.mxu0
        %v872 = vpop.f32.mrf.mxu0
        %v873 = vadd.f32 0.0, %v872
        %v874 = vpop.f32.mrf.mxu0
        %875 = vmatprep.mubr.bf16.mxu0 0
        %876 = vmatmul.mubr.bf16.gmra.mxu0 %v658
        %v877 = vpop.f32.mrf.mxu0
        %v878 = vadd.f32 0.0, %v877
        %v879 = vpop.f32.mrf.mxu0
        %v880 = vpop.f32.mrf.mxu0
        %v881 = vadd.f32 0.0, %v880
        %v882 = vpop.f32.mrf.mxu0
        %883 = vmatprep.mubr.bf16.mxu0 0
        %884 = vmatmul.mubr.bf16.gmra.mxu0 %v661
        %v885 = vpop.f32.mrf.mxu0
        %v886 = vadd.f32 0.0, %v885
        %v887 = vpop.f32.mrf.mxu0
        %v888 = vpop.f32.mrf.mxu0
        %v889 = vadd.f32 0.0, %v888
        %v890 = vpop.f32.mrf.mxu0
        %891 = vmatprep.mubr.bf16.mxu0 0
        %892 = vmatmul.mubr.bf16.gmra.mxu0 %v664
        %v893 = vpop.f32.mrf.mxu0
        %v894 = vadd.f32 0.0, %v893
        %v895 = vpop.f32.mrf.mxu0
        %v896 = vpop.f32.mrf.mxu0
        %v897 = vadd.f32 0.0, %v896
        %v898 = vpop.f32.mrf.mxu0
        %899 = vmatprep.mubr.bf16.mxu0 0
        %900 = vmatmul.mubr.bf16.gmra.mxu0 %v667
        %v901 = vpop.f32.mrf.mxu0
        %v902 = vadd.f32 0.0, %v901
        %v903 = vpop.f32.mrf.mxu0
        %v904 = vpop.f32.mrf.mxu0
        %v905 = vadd.f32 0.0, %v904
        %v906 = vpop.f32.mrf.mxu0
        %907 = vmatprep.mubr.bf16.mxu0 0
        %908 = vmatmul.mubr.bf16.gmra.mxu0 %v670
        %v909 = vpop.f32.mrf.mxu0
        %v910 = vadd.f32 0.0, %v909
        %v911 = vpop.f32.mrf.mxu0
        %v912 = vpop.f32.mrf.mxu0
        %v913 = vadd.f32 0.0, %v912
        %v914 = vpop.f32.mrf.mxu0
        %915 = vmatprep.mubr.bf16.mxu0 0
        %916 = vmatmul.mubr.bf16.gmra.mxu0 %v673
        %v917 = vpop.f32.mrf.mxu0
        %v918 = vadd.f32 0.0, %v917
        %v919 = vpop.f32.mrf.mxu0
        %v920 = vpop.f32.mrf.mxu0
        %v921 = vadd.f32 0.0, %v920
        %v922 = vpop.f32.mrf.mxu0
        %923 = vmatprep.mubr.bf16.mxu0 0
        %924 = vmatmul.mubr.bf16.gmra.mxu0 %v676
        %v925 = vpop.f32.mrf.mxu0
        %v926 = vadd.f32 0.0, %v925
        %v927 = vpop.f32.mrf.mxu0
        %v928 = vpop.f32.mrf.mxu0
        %v929 = vadd.f32 0.0, %v928
        %v930 = vpop.f32.mrf.mxu0
        %931 = vmatprep.mubr.bf16.mxu0 0
        %932 = vmatmul.mubr.bf16.gmra.mxu0 %v679
        %v933 = vpop.f32.mrf.mxu0
        %v934 = vadd.f32 0.0, %v933
        %v935 = vpop.f32.mrf.mxu0
        %v936 = vpop.f32.mrf.mxu0
        %v937 = vadd.f32 0.0, %v936
        %v938 = vpop.f32.mrf.mxu0
        %939 = vmatprep.mubr.bf16.mxu0 0
        %940 = vmatmul.mubr.bf16.gmra.mxu0 %v682
        %v941 = vpop.f32.mrf.mxu0
        %v942 = vadd.f32 0.0, %v941
        %v943 = vpop.f32.mrf.mxu0
        %v944 = vpop.f32.mrf.mxu0
        %v945 = vadd.f32 0.0, %v944
        %v946 = vpop.f32.mrf.mxu0
        %947 = vmatprep.mubr.bf16.mxu0 0
        %948 = vmatmul.mubr.bf16.gmra.mxu0 %v685
        %v949 = vpop.f32.mrf.mxu0
        %v950 = vadd.f32 0.0, %v949
        %v951 = vpop.f32.mrf.mxu0
        %v952 = vpop.f32.mrf.mxu0
        %v953 = vadd.f32 0.0, %v952
        %v954 = vpop.f32.mrf.mxu0
        %955 = vmatprep.mubr.bf16.mxu0 0
        %956 = vmatmul.mubr.bf16.gmra.mxu0 %v688
        %v957 = vpop.f32.mrf.mxu0
        %v958 = vadd.f32 0.0, %v957
        %v959 = vpop.f32.mrf.mxu0
        %v960 = vpop.f32.mrf.mxu0
        %v961 = vadd.f32 0.0, %v960
        %v962 = vpop.f32.mrf.mxu0
        %963 = vmatprep.mubr.bf16.mxu0 0
        %964 = vmatmul.mubr.bf16.gmra.mxu0 %v691
        %v965 = vpop.f32.mrf.mxu0
        %v966 = vadd.f32 0.0, %v965
        %v967 = vpop.f32.mrf.mxu0
        %v968 = vpop.f32.mrf.mxu0
        %v969 = vadd.f32 0.0, %v968
        %v970 = vpop.f32.mrf.mxu0
        %971 = vmatprep.mubr.bf16.mxu0 0
        %972 = vmatmul.mubr.bf16.gmra.mxu0 %v694
        %v973 = vpop.f32.mrf.mxu0
        %v974 = vadd.f32 0.0, %v973
        %v975 = vpop.f32.mrf.mxu0
        %v976 = vpop.f32.mrf.mxu0
        %v977 = vadd.f32 0.0, %v976
        %v978 = vpop.f32.mrf.mxu0
        %979 = vmatprep.mubr.bf16.mxu0 0
        %980 = vmatmul.mubr.bf16.gmra.mxu0 %v697
        %v981 = vpop.f32.mrf.mxu0
        %v982 = vadd.f32 0.0, %v981
        %v983 = vpop.f32.mrf.mxu0
        %v984 = vpop.f32.mrf.mxu0
        %v985 = vadd.f32 0.0, %v984
        %v986 = vpop.f32.mrf.mxu0
        %987 = vdwg.mxu0
        %v988 = vmax.f32 %v734, 0.0
        %v989 = vmax.f32 %v737, 0.0
        %v990 = vmax.f32 %v742, 0.0
        %v991 = vmax.f32 %v745, 0.0
        %v992 = vmax.f32 %v750, 0.0
        %v993 = vmax.f32 %v753, 0.0
        %v994 = vmax.f32 %v758, 0.0
        %v995 = vmax.f32 %v761, 0.0
        %v996 = vmax.f32 %v766, 0.0
        %v997 = vmax.f32 %v769, 0.0
        %v998 = vmax.f32 %v774, 0.0
        %v999 = vmax.f32 %v777, 0.0
        %v1000 = vmax.f32 %v782, 0.0
        %v1001 = vmax.f32 %v785, 0.0
        %v1002 = vmax.f32 %v790, 0.0
        %v1003 = vmax.f32 %v793, 0.0
        %v1004 = vmax.f32 %v798, 0.0
        %v1005 = vmax.f32 %v801, 0.0
        %v1006 = vmax.f32 %v806, 0.0
        %v1007 = vmax.f32 %v809, 0.0
        %v1008 = vmax.f32 %v814, 0.0
        %v1009 = vmax.f32 %v817, 0.0
        %v1010 = vmax.f32 %v822, 0.0
        %v1011 = vmax.f32 %v825, 0.0
        %v1012 = vmax.f32 %v830, 0.0
        %v1013 = vmax.f32 %v833, 0.0
        %v1014 = vmax.f32 %v838, 0.0
        %v1015 = vmax.f32 %v841, 0.0
        %v1016 = vmax.f32 %v846, 0.0
        %v1017 = vmax.f32 %v849, 0.0
        %v1018 = vmax.f32 %v854, 0.0
        %v1019 = vmax.f32 %v857, 0.0
        %v1020 = vmax.f32 %v862, 0.0
        %v1021 = vmax.f32 %v865, 0.0
        %v1022 = vmax.f32 %v870, 0.0
        %v1023 = vmax.f32 %v873, 0.0
        %v1024 = vmax.f32 %v878, 0.0
        %v1025 = vmax.f32 %v881, 0.0
        %v1026 = vmax.f32 %v886, 0.0
        %v1027 = vmax.f32 %v889, 0.0
        %v1028 = vmax.f32 %v894, 0.0
        %v1029 = vmax.f32 %v897, 0.0
        %v1030 = vmax.f32 %v902, 0.0
        %v1031 = vmax.f32 %v905, 0.0
        %v1032 = vmax.f32 %v910, 0.0
        %v1033 = vmax.f32 %v913, 0.0
        %v1034 = vmax.f32 %v918, 0.0
        %v1035 = vmax.f32 %v921, 0.0
        %v1036 = vmax.f32 %v926, 0.0
        %v1037 = vmax.f32 %v929, 0.0
        %v1038 = vmax.f32 %v934, 0.0
        %v1039 = vmax.f32 %v937, 0.0
        %v1040 = vmax.f32 %v942, 0.0
        %v1041 = vmax.f32 %v945, 0.0
        %v1042 = vmax.f32 %v950, 0.0
        %v1043 = vmax.f32 %v953, 0.0
        %v1044 = vmax.f32 %v958, 0.0
        %v1045 = vmax.f32 %v961, 0.0
        %v1046 = vmax.f32 %v966, 0.0
        %v1047 = vmax.f32 %v969, 0.0
        %v1048 = vmax.f32 %v974, 0.0
        %v1049 = vmax.f32 %v977, 0.0
        %v1050 = vmax.f32 %v982, 0.0
        %v1051 = vmax.f32 %v985, 0.0
        %v1052 = vpack.c.bf16 %v989, %v988
        %v1053 = vpack.c.bf16 %v991, %v990
        %v1054 = vpack.c.bf16 %v993, %v992
        %v1055 = vpack.c.bf16 %v995, %v994
        %v1056 = vpack.c.bf16 %v997, %v996
        %v1057 = vpack.c.bf16 %v999, %v998
        %v1058 = vpack.c.bf16 %v1001, %v1000
        %v1059 = vpack.c.bf16 %v1003, %v1002
        %v1060 = vpack.c.bf16 %v1005, %v1004
        %v1061 = vpack.c.bf16 %v1007, %v1006
        %v1062 = vpack.c.bf16 %v1009, %v1008
        %v1063 = vpack.c.bf16 %v1011, %v1010
        %v1064 = vpack.c.bf16 %v1013, %v1012
        %v1065 = vpack.c.bf16 %v1015, %v1014
        %v1066 = vpack.c.bf16 %v1017, %v1016
        %v1067 = vpack.c.bf16 %v1019, %v1018
        %v1068 = vpack.c.bf16 %v1021, %v1020
        %v1069 = vpack.c.bf16 %v1023, %v1022
        %v1070 = vpack.c.bf16 %v1025, %v1024
        %v1071 = vpack.c.bf16 %v1027, %v1026
        %v1072 = vpack.c.bf16 %v1029, %v1028
        %v1073 = vpack.c.bf16 %v1031, %v1030
        %v1074 = vpack.c.bf16 %v1033, %v1032
        %v1075 = vpack.c.bf16 %v1035, %v1034
        %v1076 = vpack.c.bf16 %v1037, %v1036
        %v1077 = vpack.c.bf16 %v1039, %v1038
        %v1078 = vpack.c.bf16 %v1041, %v1040
        %v1079 = vpack.c.bf16 %v1043, %v1042
        %v1080 = vpack.c.bf16 %v1045, %v1044
        %v1081 = vpack.c.bf16 %v1047, %v1046
        %v1082 = vpack.c.bf16 %v1049, %v1048
        %v1083 = vpack.c.bf16 %v1051, %v1050
        %v1084 = vld [vmem:[%s3] sm:$0xf]
        %v1085 = vld [vmem:[%s3 + $0x4] sm:$0xf]
        %v1086 = vld [vmem:[%s3 + $0x8] sm:$0xf]
        %v1087 = vld [vmem:[%s3 + $0xc] sm:$0xf]
        %v1088 = vld [vmem:[%s3 + $0x10] sm:$0xf]
        %v1089 = vld [vmem:[%s3 + $0x14] sm:$0xf]
        %v1096 = vunpack.c.l.b16 %v1084
        %v1097 = vunpack.c.l.b16 %v1085
        %v1098 = vunpack.c.l.b16 %v1086
        %v1099 = vunpack.c.l.b16 %v1087
        %v1100 = vunpack.c.l.b16 %v1088
        %v1101 = vunpack.c.l.b16 %v1089
        %v1102 = vpack.c.b16 %v1097, %v1096
        %v1103 = vpack.c.b16 %v1099, %v1098
        %v1104 = vpack.c.b16 %v1101, %v1100
        %vm1108 = vcmask 392192
        %v1110 = vsel %vm1108, %v1052, 0
        %v1113 = vsel %vm1108, %v1053, 0
        %v1116 = vsel %vm1108, %v1054, 0
        %v1119 = vsel %vm1108, %v1055, 0
        %v1122 = vsel %vm1108, %v1056, 0
        %v1125 = vsel %vm1108, %v1057, 0
        %v1128 = vsel %vm1108, %v1058, 0
        %v1131 = vsel %vm1108, %v1059, 0
        %v1134 = vsel %vm1108, %v1060, 0
        %v1137 = vsel %vm1108, %v1061, 0
        %v1140 = vsel %vm1108, %v1062, 0
        %v1143 = vsel %vm1108, %v1063, 0
        %v1146 = vsel %vm1108, %v1064, 0
        %v1149 = vsel %vm1108, %v1065, 0
        %v1152 = vsel %vm1108, %v1066, 0
        %v1155 = vsel %vm1108, %v1067, 0
        %v1158 = vsel %vm1108, %v1068, 0
        %v1161 = vsel %vm1108, %v1069, 0
        %v1164 = vsel %vm1108, %v1070, 0
        %v1167 = vsel %vm1108, %v1071, 0
        %v1170 = vsel %vm1108, %v1072, 0
        %v1173 = vsel %vm1108, %v1073, 0
        %v1176 = vsel %vm1108, %v1074, 0
        %v1179 = vsel %vm1108, %v1075, 0
        %v1182 = vsel %vm1108, %v1076, 0
        %v1185 = vsel %vm1108, %v1077, 0
        %v1188 = vsel %vm1108, %v1078, 0
        %v1191 = vsel %vm1108, %v1079, 0
        %v1194 = vsel %vm1108, %v1080, 0
        %v1197 = vsel %vm1108, %v1081, 0
        %v1200 = vsel %vm1108, %v1082, 0
        %v1203 = vsel %vm1108, %v1083, 0
        %1205 = vmatprep.subr.bf16.mxu0 0
        %1206 = vmatpush1.bf16.msra.mxu0 0
        %1207 = vmatprep.subr.bf16.mxu0 0
        %1208 = vmatpush1.bf16.msra.mxu0 0
        %1209 = vmatprep.subr.bf16.mxu0 0
        %1210 = vmatpush1.bf16.msra.mxu0 0
        %1211 = vmatprep.subr.bf16.mxu0 0
        %1212 = vmatpush1.bf16.msra.mxu0 0
        %1213 = vmatprep.subr.bf16.mxu0 0
        %1214 = vmatpush1.bf16.msra.mxu0 0
        %1215 = vmatprep.subr.bf16.mxu0 0
        %1216 = vmatpush1.bf16.msra.mxu0 %v1104
        %1217 = vmatprep.subr.bf16.mxu0 0
        %1218 = vmatpush1.bf16.msra.mxu0 %v1103
        %1219 = vmatprep.subr.bf16.mxu0 0
        %1220 = vmatpush1.bf16.msra.mxu0 %v1102
        %1221 = vmatprep.subr.bf16.mxu0 0
        %1222 = vmatpush2.bf16.msra.mxu0 0
        %1223 = vmatprep.subr.bf16.mxu0 0
        %1224 = vmatpush2.bf16.msra.mxu0 0
        %1225 = vmatprep.subr.bf16.mxu0 0
        %1226 = vmatpush2.bf16.msra.mxu0 0
        %1227 = vmatprep.subr.bf16.mxu0 0
        %1228 = vmatpush2.bf16.msra.mxu0 0
        %1229 = vmatprep.subr.bf16.mxu0 0
        %1230 = vmatpush2.bf16.msra.mxu0 0
        %1231 = vmatprep.subr.bf16.mxu0 0
        %1232 = vmatpush2.bf16.msra.mxu0 0
        %1233 = vmatprep.subr.bf16.mxu0 0
        %1234 = vmatpush2.bf16.msra.mxu0 0
        %1235 = vmatprep.subr.bf16.mxu0 0
        %1236 = vmatpush2.bf16.msra.mxu0 0
        %1237 = vmatprep.mubr.bf16.mxu0 0
        %1238 = vmatmul.mubr.bf16.gmra.mxu0 %v1110
        %v1239 = vpop.f32.mrf.mxu0
        %v1240 = vadd.f32 0.0, %v1239
        %v1241 = vpop.f32.mrf.mxu0
        %v1242 = vpop.f32.mrf.mxu0
        %v1243 = vadd.f32 0.0, %v1242
        %v1244 = vpop.f32.mrf.mxu0
        %1245 = vmatprep.mubr.bf16.mxu0 0
        %1246 = vmatmul.mubr.bf16.gmra.mxu0 %v1113
        %v1247 = vpop.f32.mrf.mxu0
        %v1248 = vadd.f32 0.0, %v1247
        %v1249 = vpop.f32.mrf.mxu0
        %v1250 = vpop.f32.mrf.mxu0
        %v1251 = vadd.f32 0.0, %v1250
        %v1252 = vpop.f32.mrf.mxu0
        %1253 = vmatprep.mubr.bf16.mxu0 0
        %1254 = vmatmul.mubr.bf16.gmra.mxu0 %v1116
        %v1255 = vpop.f32.mrf.mxu0
        %v1256 = vadd.f32 0.0, %v1255
        %v1257 = vpop.f32.mrf.mxu0
        %v1258 = vpop.f32.mrf.mxu0
        %v1259 = vadd.f32 0.0, %v1258
        %v1260 = vpop.f32.mrf.mxu0
        %1261 = vmatprep.mubr.bf16.mxu0 0
        %1262 = vmatmul.mubr.bf16.gmra.mxu0 %v1119
        %v1263 = vpop.f32.mrf.mxu0
        %v1264 = vadd.f32 0.0, %v1263
        %v1265 = vpop.f32.mrf.mxu0
        %v1266 = vpop.f32.mrf.mxu0
        %v1267 = vadd.f32 0.0, %v1266
        %v1268 = vpop.f32.mrf.mxu0
        %1269 = vmatprep.mubr.bf16.mxu0 0
        %1270 = vmatmul.mubr.bf16.gmra.mxu0 %v1122
        %v1271 = vpop.f32.mrf.mxu0
        %v1272 = vadd.f32 0.0, %v1271
        %v1273 = vpop.f32.mrf.mxu0
        %v1274 = vpop.f32.mrf.mxu0
        %v1275 = vadd.f32 0.0, %v1274
        %v1276 = vpop.f32.mrf.mxu0
        %1277 = vmatprep.mubr.bf16.mxu0 0
        %1278 = vmatmul.mubr.bf16.gmra.mxu0 %v1125
        %v1279 = vpop.f32.mrf.mxu0
        %v1280 = vadd.f32 0.0, %v1279
        %v1281 = vpop.f32.mrf.mxu0
        %v1282 = vpop.f32.mrf.mxu0
        %v1283 = vadd.f32 0.0, %v1282
        %v1284 = vpop.f32.mrf.mxu0
        %1285 = vmatprep.mubr.bf16.mxu0 0
        %1286 = vmatmul.mubr.bf16.gmra.mxu0 %v1128
        %v1287 = vpop.f32.mrf.mxu0
        %v1288 = vadd.f32 0.0, %v1287
        %v1289 = vpop.f32.mrf.mxu0
        %v1290 = vpop.f32.mrf.mxu0
        %v1291 = vadd.f32 0.0, %v1290
        %v1292 = vpop.f32.mrf.mxu0
        %1293 = vmatprep.mubr.bf16.mxu0 0
        %1294 = vmatmul.mubr.bf16.gmra.mxu0 %v1131
        %v1295 = vpop.f32.mrf.mxu0
        %v1296 = vadd.f32 0.0, %v1295
        %v1297 = vpop.f32.mrf.mxu0
        %v1298 = vpop.f32.mrf.mxu0
        %v1299 = vadd.f32 0.0, %v1298
        %v1300 = vpop.f32.mrf.mxu0
        %1301 = vmatprep.mubr.bf16.mxu0 0
        %1302 = vmatmul.mubr.bf16.gmra.mxu0 %v1134
        %v1303 = vpop.f32.mrf.mxu0
        %v1304 = vadd.f32 0.0, %v1303
        %v1305 = vpop.f32.mrf.mxu0
        %v1306 = vpop.f32.mrf.mxu0
        %v1307 = vadd.f32 0.0, %v1306
        %v1308 = vpop.f32.mrf.mxu0
        %1309 = vmatprep.mubr.bf16.mxu0 0
        %1310 = vmatmul.mubr.bf16.gmra.mxu0 %v1137
        %v1311 = vpop.f32.mrf.mxu0
        %v1312 = vadd.f32 0.0, %v1311
        %v1313 = vpop.f32.mrf.mxu0
        %v1314 = vpop.f32.mrf.mxu0
        %v1315 = vadd.f32 0.0, %v1314
        %v1316 = vpop.f32.mrf.mxu0
        %1317 = vmatprep.mubr.bf16.mxu0 0
        %1318 = vmatmul.mubr.bf16.gmra.mxu0 %v1140
        %v1319 = vpop.f32.mrf.mxu0
        %v1320 = vadd.f32 0.0, %v1319
        %v1321 = vpop.f32.mrf.mxu0
        %v1322 = vpop.f32.mrf.mxu0
        %v1323 = vadd.f32 0.0, %v1322
        %v1324 = vpop.f32.mrf.mxu0
        %1325 = vmatprep.mubr.bf16.mxu0 0
        %1326 = vmatmul.mubr.bf16.gmra.mxu0 %v1143
        %v1327 = vpop.f32.mrf.mxu0
        %v1328 = vadd.f32 0.0, %v1327
        %v1329 = vpop.f32.mrf.mxu0
        %v1330 = vpop.f32.mrf.mxu0
        %v1331 = vadd.f32 0.0, %v1330
        %v1332 = vpop.f32.mrf.mxu0
        %1333 = vmatprep.mubr.bf16.mxu0 0
        %1334 = vmatmul.mubr.bf16.gmra.mxu0 %v1146
        %v1335 = vpop.f32.mrf.mxu0
        %v1336 = vadd.f32 0.0, %v1335
        %v1337 = vpop.f32.mrf.mxu0
        %v1338 = vpop.f32.mrf.mxu0
        %v1339 = vadd.f32 0.0, %v1338
        %v1340 = vpop.f32.mrf.mxu0
        %1341 = vmatprep.mubr.bf16.mxu0 0
        %1342 = vmatmul.mubr.bf16.gmra.mxu0 %v1149
        %v1343 = vpop.f32.mrf.mxu0
        %v1344 = vadd.f32 0.0, %v1343
        %v1345 = vpop.f32.mrf.mxu0
        %v1346 = vpop.f32.mrf.mxu0
        %v1347 = vadd.f32 0.0, %v1346
        %v1348 = vpop.f32.mrf.mxu0
        %1349 = vmatprep.mubr.bf16.mxu0 0
        %1350 = vmatmul.mubr.bf16.gmra.mxu0 %v1152
        %v1351 = vpop.f32.mrf.mxu0
        %v1352 = vadd.f32 0.0, %v1351
        %v1353 = vpop.f32.mrf.mxu0
        %v1354 = vpop.f32.mrf.mxu0
        %v1355 = vadd.f32 0.0, %v1354
        %v1356 = vpop.f32.mrf.mxu0
        %1357 = vmatprep.mubr.bf16.mxu0 0
        %1358 = vmatmul.mubr.bf16.gmra.mxu0 %v1155
        %v1359 = vpop.f32.mrf.mxu0
        %v1360 = vadd.f32 0.0, %v1359
        %v1361 = vpop.f32.mrf.mxu0
        %v1362 = vpop.f32.mrf.mxu0
        %v1363 = vadd.f32 0.0, %v1362
        %v1364 = vpop.f32.mrf.mxu0
        %1365 = vmatprep.mubr.bf16.mxu0 0
        %1366 = vmatmul.mubr.bf16.gmra.mxu0 %v1158
        %v1367 = vpop.f32.mrf.mxu0
        %v1368 = vadd.f32 0.0, %v1367
        %v1369 = vpop.f32.mrf.mxu0
        %v1370 = vpop.f32.mrf.mxu0
        %v1371 = vadd.f32 0.0, %v1370
        %v1372 = vpop.f32.mrf.mxu0
        %1373 = vmatprep.mubr.bf16.mxu0 0
        %1374 = vmatmul.mubr.bf16.gmra.mxu0 %v1161
        %v1375 = vpop.f32.mrf.mxu0
        %v1376 = vadd.f32 0.0, %v1375
        %v1377 = vpop.f32.mrf.mxu0
        %v1378 = vpop.f32.mrf.mxu0
        %v1379 = vadd.f32 0.0, %v1378
        %v1380 = vpop.f32.mrf.mxu0
        %1381 = vmatprep.mubr.bf16.mxu0 0
        %1382 = vmatmul.mubr.bf16.gmra.mxu0 %v1164
        %v1383 = vpop.f32.mrf.mxu0
        %v1384 = vadd.f32 0.0, %v1383
        %v1385 = vpop.f32.mrf.mxu0
        %v1386 = vpop.f32.mrf.mxu0
        %v1387 = vadd.f32 0.0, %v1386
        %v1388 = vpop.f32.mrf.mxu0
        %1389 = vmatprep.mubr.bf16.mxu0 0
        %1390 = vmatmul.mubr.bf16.gmra.mxu0 %v1167
        %v1391 = vpop.f32.mrf.mxu0
        %v1392 = vadd.f32 0.0, %v1391
        %v1393 = vpop.f32.mrf.mxu0
        %v1394 = vpop.f32.mrf.mxu0
        %v1395 = vadd.f32 0.0, %v1394
        %v1396 = vpop.f32.mrf.mxu0
        %1397 = vmatprep.mubr.bf16.mxu0 0
        %1398 = vmatmul.mubr.bf16.gmra.mxu0 %v1170
        %v1399 = vpop.f32.mrf.mxu0
        %v1400 = vadd.f32 0.0, %v1399
        %v1401 = vpop.f32.mrf.mxu0
        %v1402 = vpop.f32.mrf.mxu0
        %v1403 = vadd.f32 0.0, %v1402
        %v1404 = vpop.f32.mrf.mxu0
        %1405 = vmatprep.mubr.bf16.mxu0 0
        %1406 = vmatmul.mubr.bf16.gmra.mxu0 %v1173
        %v1407 = vpop.f32.mrf.mxu0
        %v1408 = vadd.f32 0.0, %v1407
        %v1409 = vpop.f32.mrf.mxu0
        %v1410 = vpop.f32.mrf.mxu0
        %v1411 = vadd.f32 0.0, %v1410
        %v1412 = vpop.f32.mrf.mxu0
        %1413 = vmatprep.mubr.bf16.mxu0 0
        %1414 = vmatmul.mubr.bf16.gmra.mxu0 %v1176
        %v1415 = vpop.f32.mrf.mxu0
        %v1416 = vadd.f32 0.0, %v1415
        %v1417 = vpop.f32.mrf.mxu0
        %v1418 = vpop.f32.mrf.mxu0
        %v1419 = vadd.f32 0.0, %v1418
        %v1420 = vpop.f32.mrf.mxu0
        %1421 = vmatprep.mubr.bf16.mxu0 0
        %1422 = vmatmul.mubr.bf16.gmra.mxu0 %v1179
        %v1423 = vpop.f32.mrf.mxu0
        %v1424 = vadd.f32 0.0, %v1423
        %v1425 = vpop.f32.mrf.mxu0
        %v1426 = vpop.f32.mrf.mxu0
        %v1427 = vadd.f32 0.0, %v1426
        %v1428 = vpop.f32.mrf.mxu0
        %1429 = vmatprep.mubr.bf16.mxu0 0
        %1430 = vmatmul.mubr.bf16.gmra.mxu0 %v1182
        %v1431 = vpop.f32.mrf.mxu0
        %v1432 = vadd.f32 0.0, %v1431
        %v1433 = vpop.f32.mrf.mxu0
        %v1434 = vpop.f32.mrf.mxu0
        %v1435 = vadd.f32 0.0, %v1434
        %v1436 = vpop.f32.mrf.mxu0
        %1437 = vmatprep.mubr.bf16.mxu0 0
        %1438 = vmatmul.mubr.bf16.gmra.mxu0 %v1185
        %v1439 = vpop.f32.mrf.mxu0
        %v1440 = vadd.f32 0.0, %v1439
        %v1441 = vpop.f32.mrf.mxu0
        %v1442 = vpop.f32.mrf.mxu0
        %v1443 = vadd.f32 0.0, %v1442
        %v1444 = vpop.f32.mrf.mxu0
        %1445 = vmatprep.mubr.bf16.mxu0 0
        %1446 = vmatmul.mubr.bf16.gmra.mxu0 %v1188
        %v1447 = vpop.f32.mrf.mxu0
        %v1448 = vadd.f32 0.0, %v1447
        %v1449 = vpop.f32.mrf.mxu0
        %v1450 = vpop.f32.mrf.mxu0
        %v1451 = vadd.f32 0.0, %v1450
        %v1452 = vpop.f32.mrf.mxu0
        %1453 = vmatprep.mubr.bf16.mxu0 0
        %1454 = vmatmul.mubr.bf16.gmra.mxu0 %v1191
        %v1455 = vpop.f32.mrf.mxu0
        %v1456 = vadd.f32 0.0, %v1455
        %v1457 = vpop.f32.mrf.mxu0
        %v1458 = vpop.f32.mrf.mxu0
        %v1459 = vadd.f32 0.0, %v1458
        %v1460 = vpop.f32.mrf.mxu0
        %1461 = vmatprep.mubr.bf16.mxu0 0
        %1462 = vmatmul.mubr.bf16.gmra.mxu0 %v1194
        %v1463 = vpop.f32.mrf.mxu0
        %v1464 = vadd.f32 0.0, %v1463
        %v1465 = vpop.f32.mrf.mxu0
        %v1466 = vpop.f32.mrf.mxu0
        %v1467 = vadd.f32 0.0, %v1466
        %v1468 = vpop.f32.mrf.mxu0
        %1469 = vmatprep.mubr.bf16.mxu0 0
        %1470 = vmatmul.mubr.bf16.gmra.mxu0 %v1197
        %v1471 = vpop.f32.mrf.mxu0
        %v1472 = vadd.f32 0.0, %v1471
        %v1473 = vpop.f32.mrf.mxu0
        %v1474 = vpop.f32.mrf.mxu0
        %v1475 = vadd.f32 0.0, %v1474
        %v1476 = vpop.f32.mrf.mxu0
        %1477 = vmatprep.mubr.bf16.mxu0 0
        %1478 = vmatmul.mubr.bf16.gmra.mxu0 %v1200
        %v1479 = vpop.f32.mrf.mxu0
        %v1480 = vadd.f32 0.0, %v1479
        %v1481 = vpop.f32.mrf.mxu0
        %v1482 = vpop.f32.mrf.mxu0
        %v1483 = vadd.f32 0.0, %v1482
        %v1484 = vpop.f32.mrf.mxu0
        %1485 = vmatprep.mubr.bf16.mxu0 0
        %1486 = vmatmul.mubr.bf16.gmra.mxu0 %v1203
        %v1487 = vpop.f32.mrf.mxu0
        %v1488 = vadd.f32 0.0, %v1487
        %v1489 = vpop.f32.mrf.mxu0
        %v1490 = vpop.f32.mrf.mxu0
        %v1491 = vadd.f32 0.0, %v1490
        %v1492 = vpop.f32.mrf.mxu0
        %1493 = vdwg.mxu0
        %v1494 = vmax.f32 %v1240, 0.0
        %v1495 = vmax.f32 %v1243, 0.0
        %v1496 = vmax.f32 %v1248, 0.0
        %v1497 = vmax.f32 %v1251, 0.0
        %v1498 = vmax.f32 %v1256, 0.0
        %v1499 = vmax.f32 %v1259, 0.0
        %v1500 = vmax.f32 %v1264, 0.0
        %v1501 = vmax.f32 %v1267, 0.0
        %v1502 = vmax.f32 %v1272, 0.0
        %v1503 = vmax.f32 %v1275, 0.0
        %v1504 = vmax.f32 %v1280, 0.0
        %v1505 = vmax.f32 %v1283, 0.0
        %v1506 = vmax.f32 %v1288, 0.0
        %v1507 = vmax.f32 %v1291, 0.0
        %v1508 = vmax.f32 %v1296, 0.0
        %v1509 = vmax.f32 %v1299, 0.0
        %v1510 = vmax.f32 %v1304, 0.0
        %v1511 = vmax.f32 %v1307, 0.0
        %v1512 = vmax.f32 %v1312, 0.0
        %v1513 = vmax.f32 %v1315, 0.0
        %v1514 = vmax.f32 %v1320, 0.0
        %v1515 = vmax.f32 %v1323, 0.0
        %v1516 = vmax.f32 %v1328, 0.0
        %v1517 = vmax.f32 %v1331, 0.0
        %v1518 = vmax.f32 %v1336, 0.0
        %v1519 = vmax.f32 %v1339, 0.0
        %v1520 = vmax.f32 %v1344, 0.0
        %v1521 = vmax.f32 %v1347, 0.0
        %v1522 = vmax.f32 %v1352, 0.0
        %v1523 = vmax.f32 %v1355, 0.0
        %v1524 = vmax.f32 %v1360, 0.0
        %v1525 = vmax.f32 %v1363, 0.0
        %v1526 = vmax.f32 %v1368, 0.0
        %v1527 = vmax.f32 %v1371, 0.0
        %v1528 = vmax.f32 %v1376, 0.0
        %v1529 = vmax.f32 %v1379, 0.0
        %v1530 = vmax.f32 %v1384, 0.0
        %v1531 = vmax.f32 %v1387, 0.0
        %v1532 = vmax.f32 %v1392, 0.0
        %v1533 = vmax.f32 %v1395, 0.0
        %v1534 = vmax.f32 %v1400, 0.0
        %v1535 = vmax.f32 %v1403, 0.0
        %v1536 = vmax.f32 %v1408, 0.0
        %v1537 = vmax.f32 %v1411, 0.0
        %v1538 = vmax.f32 %v1416, 0.0
        %v1539 = vmax.f32 %v1419, 0.0
        %v1540 = vmax.f32 %v1424, 0.0
        %v1541 = vmax.f32 %v1427, 0.0
        %v1542 = vmax.f32 %v1432, 0.0
        %v1543 = vmax.f32 %v1435, 0.0
        %v1544 = vmax.f32 %v1440, 0.0
        %v1545 = vmax.f32 %v1443, 0.0
        %v1546 = vmax.f32 %v1448, 0.0
        %v1547 = vmax.f32 %v1451, 0.0
        %v1548 = vmax.f32 %v1456, 0.0
        %v1549 = vmax.f32 %v1459, 0.0
        %v1550 = vmax.f32 %v1464, 0.0
        %v1551 = vmax.f32 %v1467, 0.0
        %v1552 = vmax.f32 %v1472, 0.0
        %v1553 = vmax.f32 %v1475, 0.0
        %v1554 = vmax.f32 %v1480, 0.0
        %v1555 = vmax.f32 %v1483, 0.0
        %v1556 = vmax.f32 %v1488, 0.0
        %v1557 = vmax.f32 %v1491, 0.0
        %v1558 = vld [vmem:[%s4] sm:$0xf]
        %v1559 = vld [vmem:[%s4 + $0x4] sm:$0xf]
        %v1560 = vld [vmem:[%s4 + $0x8] sm:$0xf]
        %v1561 = vld [vmem:[%s4 + $0xc] sm:$0xf]
        %v1562 = vld [vmem:[%s4 + $0x10] sm:$0xf]
        %v1563 = vld [vmem:[%s4 + $0x14] sm:$0xf]
        %v1564 = vpack.c.bf16 %v1495, %v1494
        %v1565 = vpack.c.bf16 %v1497, %v1496
        %v1566 = vpack.c.bf16 %v1499, %v1498
        %v1567 = vpack.c.bf16 %v1501, %v1500
        %v1568 = vpack.c.bf16 %v1503, %v1502
        %v1569 = vpack.c.bf16 %v1505, %v1504
        %v1570 = vpack.c.bf16 %v1507, %v1506
        %v1571 = vpack.c.bf16 %v1509, %v1508
        %v1572 = vpack.c.bf16 %v1511, %v1510
        %v1573 = vpack.c.bf16 %v1513, %v1512
        %v1574 = vpack.c.bf16 %v1515, %v1514
        %v1575 = vpack.c.bf16 %v1517, %v1516
        %v1576 = vpack.c.bf16 %v1519, %v1518
        %v1577 = vpack.c.bf16 %v1521, %v1520
        %v1578 = vpack.c.bf16 %v1523, %v1522
        %v1579 = vpack.c.bf16 %v1525, %v1524
        %v1580 = vpack.c.bf16 %v1527, %v1526
        %v1581 = vpack.c.bf16 %v1529, %v1528
        %v1582 = vpack.c.bf16 %v1531, %v1530
        %v1583 = vpack.c.bf16 %v1533, %v1532
        %v1584 = vpack.c.bf16 %v1535, %v1534
        %v1585 = vpack.c.bf16 %v1537, %v1536
        %v1586 = vpack.c.bf16 %v1539, %v1538
        %v1587 = vpack.c.bf16 %v1541, %v1540
        %v1588 = vpack.c.bf16 %v1543, %v1542
        %v1589 = vpack.c.bf16 %v1545, %v1544
        %v1590 = vpack.c.bf16 %v1547, %v1546
        %v1591 = vpack.c.bf16 %v1549, %v1548
        %v1592 = vpack.c.bf16 %v1551, %v1550
        %v1593 = vpack.c.bf16 %v1553, %v1552
        %v1594 = vpack.c.bf16 %v1555, %v1554
        %v1595 = vpack.c.bf16 %v1557, %v1556
        %v1596 = vld [vmem:[%s5] sm:$0xf]
        %v1597 = vld [vmem:[%s5 + $0x4] sm:$0xf]
        %v1598 = vld [vmem:[%s5 + $0x8] sm:$0xf]
        %v1599 = vld [vmem:[%s5 + $0xc] sm:$0xf]
        %v1600 = vld [vmem:[%s5 + $0x10] sm:$0xf]
        %v1601 = vld [vmem:[%s5 + $0x14] sm:$0xf]
        %v1602 = vld [vmem:[%s5 + $0x18] sm:$0xf]
        %v1603 = vld [vmem:[%s5 + $0x1c] sm:$0xf]
        %v1604 = vld [vmem:[%s5 + $0x20] sm:$0xf]
        %v1605 = vld [vmem:[%s5 + $0x24] sm:$0xf]
        %v1616 = vunpack.c.l.b16 %v1596
        %v1617 = vunpack.c.l.b16 %v1597
        %v1618 = vunpack.c.l.b16 %v1598
        %v1619 = vunpack.c.l.b16 %v1599
        %v1620 = vunpack.c.l.b16 %v1600
        %v1621 = vunpack.c.l.b16 %v1601
        %v1622 = vunpack.c.l.b16 %v1602
        %v1623 = vunpack.c.l.b16 %v1603
        %v1624 = vunpack.c.l.b16 %v1604
        %v1625 = vunpack.c.l.b16 %v1605
        %v1626 = vpack.c.b16 %v1617, %v1616
        %v1627 = vpack.c.b16 %v1619, %v1618
        %v1628 = vpack.c.b16 %v1621, %v1620
        %v1629 = vpack.c.b16 %v1623, %v1622
        %v1630 = vpack.c.b16 %v1625, %v1624
        %vm1636 = vcmask 654336
        %v1638 = vsel %vm1636, %v1564, 0
        %v1641 = vsel %vm1636, %v1565, 0
        %v1644 = vsel %vm1636, %v1566, 0
        %v1647 = vsel %vm1636, %v1567, 0
        %v1650 = vsel %vm1636, %v1568, 0
        %v1653 = vsel %vm1636, %v1569, 0
        %v1656 = vsel %vm1636, %v1570, 0
        %v1659 = vsel %vm1636, %v1571, 0
        %v1662 = vsel %vm1636, %v1572, 0
        %v1665 = vsel %vm1636, %v1573, 0
        %v1668 = vsel %vm1636, %v1574, 0
        %v1671 = vsel %vm1636, %v1575, 0
        %v1674 = vsel %vm1636, %v1576, 0
        %v1677 = vsel %vm1636, %v1577, 0
        %v1680 = vsel %vm1636, %v1578, 0
        %v1683 = vsel %vm1636, %v1579, 0
        %v1686 = vsel %vm1636, %v1580, 0
        %v1689 = vsel %vm1636, %v1581, 0
        %v1692 = vsel %vm1636, %v1582, 0
        %v1695 = vsel %vm1636, %v1583, 0
        %v1698 = vsel %vm1636, %v1584, 0
        %v1701 = vsel %vm1636, %v1585, 0
        %v1704 = vsel %vm1636, %v1586, 0
        %v1707 = vsel %vm1636, %v1587, 0
        %v1710 = vsel %vm1636, %v1588, 0
        %v1713 = vsel %vm1636, %v1589, 0
        %v1716 = vsel %vm1636, %v1590, 0
        %v1719 = vsel %vm1636, %v1591, 0
        %v1722 = vsel %vm1636, %v1592, 0
        %v1725 = vsel %vm1636, %v1593, 0
        %v1728 = vsel %vm1636, %v1594, 0
        %v1731 = vsel %vm1636, %v1595, 0
        %1733 = vmatprep.subr.bf16.mxu0 0
        %1734 = vmatpush1.bf16.msra.mxu0 0
        %1735 = vmatprep.subr.bf16.mxu0 0
        %1736 = vmatpush1.bf16.msra.mxu0 0
        %1737 = vmatprep.subr.bf16.mxu0 0
        %1738 = vmatpush1.bf16.msra.mxu0 0
        %1739 = vmatprep.subr.bf16.mxu0 0
        %1740 = vmatpush1.bf16.msra.mxu0 %v1630
        %1741 = vmatprep.subr.bf16.mxu0 0
        %1742 = vmatpush1.bf16.msra.mxu0 %v1629
        %1743 = vmatprep.subr.bf16.mxu0 0
        %1744 = vmatpush1.bf16.msra.mxu0 %v1628
        %1745 = vmatprep.subr.bf16.mxu0 0
        %1746 = vmatpush1.bf16.msra.mxu0 %v1627
        %1747 = vmatprep.subr.bf16.mxu0 0
        %1748 = vmatpush1.bf16.msra.mxu0 %v1626
        %1749 = vmatprep.subr.bf16.mxu0 0
        %1750 = vmatpush2.bf16.msra.mxu0 0
        %1751 = vmatprep.subr.bf16.mxu0 0
        %1752 = vmatpush2.bf16.msra.mxu0 0
        %1753 = vmatprep.subr.bf16.mxu0 0
        %1754 = vmatpush2.bf16.msra.mxu0 0
        %1755 = vmatprep.subr.bf16.mxu0 0
        %1756 = vmatpush2.bf16.msra.mxu0 0
        %1757 = vmatprep.subr.bf16.mxu0 0
        %1758 = vmatpush2.bf16.msra.mxu0 0
        %1759 = vmatprep.subr.bf16.mxu0 0
        %1760 = vmatpush2.bf16.msra.mxu0 0
        %1761 = vmatprep.subr.bf16.mxu0 0
        %1762 = vmatpush2.bf16.msra.mxu0 0
        %1763 = vmatprep.subr.bf16.mxu0 0
        %1764 = vmatpush2.bf16.msra.mxu0 0
        %1765 = vmatprep.mubr.bf16.mxu0 0
        %1766 = vmatmul.mubr.bf16.gmra.mxu0 %v1638
        %v1767 = vpop.f32.mrf.mxu0
        %v1768 = vadd.f32 0.0, %v1767
        %v1769 = vpop.f32.mrf.mxu0
        %v1770 = vpop.f32.mrf.mxu0
        %v1771 = vadd.f32 0.0, %v1770
        %v1772 = vpop.f32.mrf.mxu0
        %1773 = vmatprep.mubr.bf16.mxu0 0
        %1774 = vmatmul.mubr.bf16.gmra.mxu0 %v1641
        %v1775 = vpop.f32.mrf.mxu0
        %v1776 = vadd.f32 0.0, %v1775
        %v1777 = vpop.f32.mrf.mxu0
        %v1778 = vpop.f32.mrf.mxu0
        %v1779 = vadd.f32 0.0, %v1778
        %v1780 = vpop.f32.mrf.mxu0
        %1781 = vmatprep.mubr.bf16.mxu0 0
        %1782 = vmatmul.mubr.bf16.gmra.mxu0 %v1644
        %v1783 = vpop.f32.mrf.mxu0
        %v1784 = vadd.f32 0.0, %v1783
        %v1785 = vpop.f32.mrf.mxu0
        %v1786 = vpop.f32.mrf.mxu0
        %v1787 = vadd.f32 0.0, %v1786
        %v1788 = vpop.f32.mrf.mxu0
        %1789 = vmatprep.mubr.bf16.mxu0 0
        %1790 = vmatmul.mubr.bf16.gmra.mxu0 %v1647
        %v1791 = vpop.f32.mrf.mxu0
        %v1792 = vadd.f32 0.0, %v1791
        %v1793 = vpop.f32.mrf.mxu0
        %v1794 = vpop.f32.mrf.mxu0
        %v1795 = vadd.f32 0.0, %v1794
        %v1796 = vpop.f32.mrf.mxu0
        %1797 = vmatprep.mubr.bf16.mxu0 0
        %1798 = vmatmul.mubr.bf16.gmra.mxu0 %v1650
        %v1799 = vpop.f32.mrf.mxu0
        %v1800 = vadd.f32 0.0, %v1799
        %v1801 = vpop.f32.mrf.mxu0
        %v1802 = vpop.f32.mrf.mxu0
        %v1803 = vadd.f32 0.0, %v1802
        %v1804 = vpop.f32.mrf.mxu0
        %1805 = vmatprep.mubr.bf16.mxu0 0
        %1806 = vmatmul.mubr.bf16.gmra.mxu0 %v1653
        %v1807 = vpop.f32.mrf.mxu0
        %v1808 = vadd.f32 0.0, %v1807
        %v1809 = vpop.f32.mrf.mxu0
        %v1810 = vpop.f32.mrf.mxu0
        %v1811 = vadd.f32 0.0, %v1810
        %v1812 = vpop.f32.mrf.mxu0
        %1813 = vmatprep.mubr.bf16.mxu0 0
        %1814 = vmatmul.mubr.bf16.gmra.mxu0 %v1656
        %v1815 = vpop.f32.mrf.mxu0
        %v1816 = vadd.f32 0.0, %v1815
        %v1817 = vpop.f32.mrf.mxu0
        %v1818 = vpop.f32.mrf.mxu0
        %v1819 = vadd.f32 0.0, %v1818
        %v1820 = vpop.f32.mrf.mxu0
        %1821 = vmatprep.mubr.bf16.mxu0 0
        %1822 = vmatmul.mubr.bf16.gmra.mxu0 %v1659
        %v1823 = vpop.f32.mrf.mxu0
        %v1824 = vadd.f32 0.0, %v1823
        %v1825 = vpop.f32.mrf.mxu0
        %v1826 = vpop.f32.mrf.mxu0
        %v1827 = vadd.f32 0.0, %v1826
        %v1828 = vpop.f32.mrf.mxu0
        %1829 = vmatprep.mubr.bf16.mxu0 0
        %1830 = vmatmul.mubr.bf16.gmra.mxu0 %v1662
        %v1831 = vpop.f32.mrf.mxu0
        %v1832 = vadd.f32 0.0, %v1831
        %v1833 = vpop.f32.mrf.mxu0
        %v1834 = vpop.f32.mrf.mxu0
        %v1835 = vadd.f32 0.0, %v1834
        %v1836 = vpop.f32.mrf.mxu0
        %1837 = vmatprep.mubr.bf16.mxu0 0
        %1838 = vmatmul.mubr.bf16.gmra.mxu0 %v1665
        %v1839 = vpop.f32.mrf.mxu0
        %v1840 = vadd.f32 0.0, %v1839
        %v1841 = vpop.f32.mrf.mxu0
        %v1842 = vpop.f32.mrf.mxu0
        %v1843 = vadd.f32 0.0, %v1842
        %v1844 = vpop.f32.mrf.mxu0
        %1845 = vmatprep.mubr.bf16.mxu0 0
        %1846 = vmatmul.mubr.bf16.gmra.mxu0 %v1668
        %v1847 = vpop.f32.mrf.mxu0
        %v1848 = vadd.f32 0.0, %v1847
        %v1849 = vpop.f32.mrf.mxu0
        %v1850 = vpop.f32.mrf.mxu0
        %v1851 = vadd.f32 0.0, %v1850
        %v1852 = vpop.f32.mrf.mxu0
        %1853 = vmatprep.mubr.bf16.mxu0 0
        %1854 = vmatmul.mubr.bf16.gmra.mxu0 %v1671
        %v1855 = vpop.f32.mrf.mxu0
        %v1856 = vadd.f32 0.0, %v1855
        %v1857 = vpop.f32.mrf.mxu0
        %v1858 = vpop.f32.mrf.mxu0
        %v1859 = vadd.f32 0.0, %v1858
        %v1860 = vpop.f32.mrf.mxu0
        %1861 = vmatprep.mubr.bf16.mxu0 0
        %1862 = vmatmul.mubr.bf16.gmra.mxu0 %v1674
        %v1863 = vpop.f32.mrf.mxu0
        %v1864 = vadd.f32 0.0, %v1863
        %v1865 = vpop.f32.mrf.mxu0
        %v1866 = vpop.f32.mrf.mxu0
        %v1867 = vadd.f32 0.0, %v1866
        %v1868 = vpop.f32.mrf.mxu0
        %1869 = vmatprep.mubr.bf16.mxu0 0
        %1870 = vmatmul.mubr.bf16.gmra.mxu0 %v1677
        %v1871 = vpop.f32.mrf.mxu0
        %v1872 = vadd.f32 0.0, %v1871
        %v1873 = vpop.f32.mrf.mxu0
        %v1874 = vpop.f32.mrf.mxu0
        %v1875 = vadd.f32 0.0, %v1874
        %v1876 = vpop.f32.mrf.mxu0
        %1877 = vmatprep.mubr.bf16.mxu0 0
        %1878 = vmatmul.mubr.bf16.gmra.mxu0 %v1680
        %v1879 = vpop.f32.mrf.mxu0
        %v1880 = vadd.f32 0.0, %v1879
        %v1881 = vpop.f32.mrf.mxu0
        %v1882 = vpop.f32.mrf.mxu0
        %v1883 = vadd.f32 0.0, %v1882
        %v1884 = vpop.f32.mrf.mxu0
        %1885 = vmatprep.mubr.bf16.mxu0 0
        %1886 = vmatmul.mubr.bf16.gmra.mxu0 %v1683
        %v1887 = vpop.f32.mrf.mxu0
        %v1888 = vadd.f32 0.0, %v1887
        %v1889 = vpop.f32.mrf.mxu0
        %v1890 = vpop.f32.mrf.mxu0
        %v1891 = vadd.f32 0.0, %v1890
        %v1892 = vpop.f32.mrf.mxu0
        %1893 = vmatprep.mubr.bf16.mxu0 0
        %1894 = vmatmul.mubr.bf16.gmra.mxu0 %v1686
        %v1895 = vpop.f32.mrf.mxu0
        %v1896 = vadd.f32 0.0, %v1895
        %v1897 = vpop.f32.mrf.mxu0
        %v1898 = vpop.f32.mrf.mxu0
        %v1899 = vadd.f32 0.0, %v1898
        %v1900 = vpop.f32.mrf.mxu0
        %1901 = vmatprep.mubr.bf16.mxu0 0
        %1902 = vmatmul.mubr.bf16.gmra.mxu0 %v1689
        %v1903 = vpop.f32.mrf.mxu0
        %v1904 = vadd.f32 0.0, %v1903
        %v1905 = vpop.f32.mrf.mxu0
        %v1906 = vpop.f32.mrf.mxu0
        %v1907 = vadd.f32 0.0, %v1906
        %v1908 = vpop.f32.mrf.mxu0
        %1909 = vmatprep.mubr.bf16.mxu0 0
        %1910 = vmatmul.mubr.bf16.gmra.mxu0 %v1692
        %v1911 = vpop.f32.mrf.mxu0
        %v1912 = vadd.f32 0.0, %v1911
        %v1913 = vpop.f32.mrf.mxu0
        %v1914 = vpop.f32.mrf.mxu0
        %v1915 = vadd.f32 0.0, %v1914
        %v1916 = vpop.f32.mrf.mxu0
        %1917 = vmatprep.mubr.bf16.mxu0 0
        %1918 = vmatmul.mubr.bf16.gmra.mxu0 %v1695
        %v1919 = vpop.f32.mrf.mxu0
        %v1920 = vadd.f32 0.0, %v1919
        %v1921 = vpop.f32.mrf.mxu0
        %v1922 = vpop.f32.mrf.mxu0
        %v1923 = vadd.f32 0.0, %v1922
        %v1924 = vpop.f32.mrf.mxu0
        %1925 = vmatprep.mubr.bf16.mxu0 0
        %1926 = vmatmul.mubr.bf16.gmra.mxu0 %v1698
        %v1927 = vpop.f32.mrf.mxu0
        %v1928 = vadd.f32 0.0, %v1927
        %v1929 = vpop.f32.mrf.mxu0
        %v1930 = vpop.f32.mrf.mxu0
        %v1931 = vadd.f32 0.0, %v1930
        %v1932 = vpop.f32.mrf.mxu0
        %1933 = vmatprep.mubr.bf16.mxu0 0
        %1934 = vmatmul.mubr.bf16.gmra.mxu0 %v1701
        %v1935 = vpop.f32.mrf.mxu0
        %v1936 = vadd.f32 0.0, %v1935
        %v1937 = vpop.f32.mrf.mxu0
        %v1938 = vpop.f32.mrf.mxu0
        %v1939 = vadd.f32 0.0, %v1938
        %v1940 = vpop.f32.mrf.mxu0
        %1941 = vmatprep.mubr.bf16.mxu0 0
        %1942 = vmatmul.mubr.bf16.gmra.mxu0 %v1704
        %v1943 = vpop.f32.mrf.mxu0
        %v1944 = vadd.f32 0.0, %v1943
        %v1945 = vpop.f32.mrf.mxu0
        %v1946 = vpop.f32.mrf.mxu0
        %v1947 = vadd.f32 0.0, %v1946
        %v1948 = vpop.f32.mrf.mxu0
        %1949 = vmatprep.mubr.bf16.mxu0 0
        %1950 = vmatmul.mubr.bf16.gmra.mxu0 %v1707
        %v1951 = vpop.f32.mrf.mxu0
        %v1952 = vadd.f32 0.0, %v1951
        %v1953 = vpop.f32.mrf.mxu0
        %v1954 = vpop.f32.mrf.mxu0
        %v1955 = vadd.f32 0.0, %v1954
        %v1956 = vpop.f32.mrf.mxu0
        %1957 = vmatprep.mubr.bf16.mxu0 0
        %1958 = vmatmul.mubr.bf16.gmra.mxu0 %v1710
        %v1959 = vpop.f32.mrf.mxu0
        %v1960 = vadd.f32 0.0, %v1959
        %v1961 = vpop.f32.mrf.mxu0
        %v1962 = vpop.f32.mrf.mxu0
        %v1963 = vadd.f32 0.0, %v1962
        %v1964 = vpop.f32.mrf.mxu0
        %1965 = vmatprep.mubr.bf16.mxu0 0
        %1966 = vmatmul.mubr.bf16.gmra.mxu0 %v1713
        %v1967 = vpop.f32.mrf.mxu0
        %v1968 = vadd.f32 0.0, %v1967
        %v1969 = vpop.f32.mrf.mxu0
        %v1970 = vpop.f32.mrf.mxu0
        %v1971 = vadd.f32 0.0, %v1970
        %v1972 = vpop.f32.mrf.mxu0
        %1973 = vmatprep.mubr.bf16.mxu0 0
        %1974 = vmatmul.mubr.bf16.gmra.mxu0 %v1716
        %v1975 = vpop.f32.mrf.mxu0
        %v1976 = vadd.f32 0.0, %v1975
        %v1977 = vpop.f32.mrf.mxu0
        %v1978 = vpop.f32.mrf.mxu0
        %v1979 = vadd.f32 0.0, %v1978
        %v1980 = vpop.f32.mrf.mxu0
        %1981 = vmatprep.mubr.bf16.mxu0 0
        %1982 = vmatmul.mubr.bf16.gmra.mxu0 %v1719
        %v1983 = vpop.f32.mrf.mxu0
        %v1984 = vadd.f32 0.0, %v1983
        %v1985 = vpop.f32.mrf.mxu0
        %v1986 = vpop.f32.mrf.mxu0
        %v1987 = vadd.f32 0.0, %v1986
        %v1988 = vpop.f32.mrf.mxu0
        %1989 = vmatprep.mubr.bf16.mxu0 0
        %1990 = vmatmul.mubr.bf16.gmra.mxu0 %v1722
        %v1991 = vpop.f32.mrf.mxu0
        %v1992 = vadd.f32 0.0, %v1991
        %v1993 = vpop.f32.mrf.mxu0
        %v1994 = vpop.f32.mrf.mxu0
        %v1995 = vadd.f32 0.0, %v1994
        %v1996 = vpop.f32.mrf.mxu0
        %1997 = vmatprep.mubr.bf16.mxu0 0
        %1998 = vmatmul.mubr.bf16.gmra.mxu0 %v1725
        %v1999 = vpop.f32.mrf.mxu0
        %v2000 = vadd.f32 0.0, %v1999
        %v2001 = vpop.f32.mrf.mxu0
        %v2002 = vpop.f32.mrf.mxu0
        %v2003 = vadd.f32 0.0, %v2002
        %v2004 = vpop.f32.mrf.mxu0
        %2005 = vmatprep.mubr.bf16.mxu0 0
        %2006 = vmatmul.mubr.bf16.gmra.mxu0 %v1728
        %v2007 = vpop.f32.mrf.mxu0
        %v2008 = vadd.f32 0.0, %v2007
        %v2009 = vpop.f32.mrf.mxu0
        %v2010 = vpop.f32.mrf.mxu0
        %v2011 = vadd.f32 0.0, %v2010
        %v2012 = vpop.f32.mrf.mxu0
        %2013 = vmatprep.mubr.bf16.mxu0 0
        %2014 = vmatmul.mubr.bf16.gmra.mxu0 %v1731
        %v2015 = vpop.f32.mrf.mxu0
        %v2016 = vadd.f32 0.0, %v2015
        %v2017 = vpop.f32.mrf.mxu0
        %v2018 = vpop.f32.mrf.mxu0
        %v2019 = vadd.f32 0.0, %v2018
        %v2020 = vpop.f32.mrf.mxu0
        %2021 = vdwg.mxu0
        %v2028 = vunpack.c.l.b16 %v1558
        %v2029 = vunpack.c.l.b16 %v1559
        %v2030 = vunpack.c.l.b16 %v1560
        %v2031 = vunpack.c.l.b16 %v1561
        %v2032 = vunpack.c.l.b16 %v1562
        %v2033 = vunpack.c.l.b16 %v1563
        %v2034 = vpack.c.b16 %v2029, %v2028
        %v2035 = vpack.c.b16 %v2031, %v2030
        %v2036 = vpack.c.b16 %v2033, %v2032
        %2040 = vmatprep.subr.bf16.mxu0 0
        %2041 = vmatpush1.bf16.msra.mxu0 0
        %2042 = vmatprep.subr.bf16.mxu0 0
        %2043 = vmatpush1.bf16.msra.mxu0 0
        %2044 = vmatprep.subr.bf16.mxu0 0
        %2045 = vmatpush1.bf16.msra.mxu0 0
        %2046 = vmatprep.subr.bf16.mxu0 0
        %2047 = vmatpush1.bf16.msra.mxu0 0
        %2048 = vmatprep.subr.bf16.mxu0 0
        %2049 = vmatpush1.bf16.msra.mxu0 0
        %2050 = vmatprep.subr.bf16.mxu0 0
        %2051 = vmatpush1.bf16.msra.mxu0 %v2036
        %2052 = vmatprep.subr.bf16.mxu0 0
        %2053 = vmatpush1.bf16.msra.mxu0 %v2035
        %2054 = vmatprep.subr.bf16.mxu0 0
        %2055 = vmatpush1.bf16.msra.mxu0 %v2034
        %2056 = vmatprep.subr.bf16.mxu0 0
        %2057 = vmatpush2.bf16.msra.mxu0 0
        %2058 = vmatprep.subr.bf16.mxu0 0
        %2059 = vmatpush2.bf16.msra.mxu0 0
        %2060 = vmatprep.subr.bf16.mxu0 0
        %2061 = vmatpush2.bf16.msra.mxu0 0
        %2062 = vmatprep.subr.bf16.mxu0 0
        %2063 = vmatpush2.bf16.msra.mxu0 0
        %2064 = vmatprep.subr.bf16.mxu0 0
        %2065 = vmatpush2.bf16.msra.mxu0 0
        %2066 = vmatprep.subr.bf16.mxu0 0
        %2067 = vmatpush2.bf16.msra.mxu0 0
        %2068 = vmatprep.subr.bf16.mxu0 0
        %2069 = vmatpush2.bf16.msra.mxu0 0
        %2070 = vmatprep.subr.bf16.mxu0 0
        %2071 = vmatpush2.bf16.msra.mxu0 0
        %2072 = vmatprep.mubr.bf16.mxu0 0
        %2073 = vmatmul.mubr.bf16.gmra.mxu0 %v1110
        %v2074 = vpop.f32.mrf.mxu0
        %v2075 = vadd.f32 %v1768, %v2074
        %v2076 = vpop.f32.mrf.mxu0
        %v2077 = vpop.f32.mrf.mxu0
        %v2078 = vadd.f32 %v1771, %v2077
        %v2079 = vpop.f32.mrf.mxu0
        %2080 = vmatprep.mubr.bf16.mxu0 0
        %2081 = vmatmul.mubr.bf16.gmra.mxu0 %v1113
        %v2082 = vpop.f32.mrf.mxu0
        %v2083 = vadd.f32 %v1776, %v2082
        %v2084 = vpop.f32.mrf.mxu0
        %v2085 = vpop.f32.mrf.mxu0
        %v2086 = vadd.f32 %v1779, %v2085
        %v2087 = vpop.f32.mrf.mxu0
        %2088 = vmatprep.mubr.bf16.mxu0 0
        %2089 = vmatmul.mubr.bf16.gmra.mxu0 %v1116
        %v2090 = vpop.f32.mrf.mxu0
        %v2091 = vadd.f32 %v1784, %v2090
        %v2092 = vpop.f32.mrf.mxu0
        %v2093 = vpop.f32.mrf.mxu0
        %v2094 = vadd.f32 %v1787, %v2093
        %v2095 = vpop.f32.mrf.mxu0
        %2096 = vmatprep.mubr.bf16.mxu0 0
        %2097 = vmatmul.mubr.bf16.gmra.mxu0 %v1119
        %v2098 = vpop.f32.mrf.mxu0
        %v2099 = vadd.f32 %v1792, %v2098
        %v2100 = vpop.f32.mrf.mxu0
        %v2101 = vpop.f32.mrf.mxu0
        %v2102 = vadd.f32 %v1795, %v2101
        %v2103 = vpop.f32.mrf.mxu0
        %2104 = vmatprep.mubr.bf16.mxu0 0
        %2105 = vmatmul.mubr.bf16.gmra.mxu0 %v1122
        %v2106 = vpop.f32.mrf.mxu0
        %v2107 = vadd.f32 %v1800, %v2106
        %v2108 = vpop.f32.mrf.mxu0
        %v2109 = vpop.f32.mrf.mxu0
        %v2110 = vadd.f32 %v1803, %v2109
        %v2111 = vpop.f32.mrf.mxu0
        %2112 = vmatprep.mubr.bf16.mxu0 0
        %2113 = vmatmul.mubr.bf16.gmra.mxu0 %v1125
        %v2114 = vpop.f32.mrf.mxu0
        %v2115 = vadd.f32 %v1808, %v2114
        %v2116 = vpop.f32.mrf.mxu0
        %v2117 = vpop.f32.mrf.mxu0
        %v2118 = vadd.f32 %v1811, %v2117
        %v2119 = vpop.f32.mrf.mxu0
        %2120 = vmatprep.mubr.bf16.mxu0 0
        %2121 = vmatmul.mubr.bf16.gmra.mxu0 %v1128
        %v2122 = vpop.f32.mrf.mxu0
        %v2123 = vadd.f32 %v1816, %v2122
        %v2124 = vpop.f32.mrf.mxu0
        %v2125 = vpop.f32.mrf.mxu0
        %v2126 = vadd.f32 %v1819, %v2125
        %v2127 = vpop.f32.mrf.mxu0
        %2128 = vmatprep.mubr.bf16.mxu0 0
        %2129 = vmatmul.mubr.bf16.gmra.mxu0 %v1131
        %v2130 = vpop.f32.mrf.mxu0
        %v2131 = vadd.f32 %v1824, %v2130
        %v2132 = vpop.f32.mrf.mxu0
        %v2133 = vpop.f32.mrf.mxu0
        %v2134 = vadd.f32 %v1827, %v2133
        %v2135 = vpop.f32.mrf.mxu0
        %2136 = vmatprep.mubr.bf16.mxu0 0
        %2137 = vmatmul.mubr.bf16.gmra.mxu0 %v1134
        %v2138 = vpop.f32.mrf.mxu0
        %v2139 = vadd.f32 %v1832, %v2138
        %v2140 = vpop.f32.mrf.mxu0
        %v2141 = vpop.f32.mrf.mxu0
        %v2142 = vadd.f32 %v1835, %v2141
        %v2143 = vpop.f32.mrf.mxu0
        %2144 = vmatprep.mubr.bf16.mxu0 0
        %2145 = vmatmul.mubr.bf16.gmra.mxu0 %v1137
        %v2146 = vpop.f32.mrf.mxu0
        %v2147 = vadd.f32 %v1840, %v2146
        %v2148 = vpop.f32.mrf.mxu0
        %v2149 = vpop.f32.mrf.mxu0
        %v2150 = vadd.f32 %v1843, %v2149
        %v2151 = vpop.f32.mrf.mxu0
        %2152 = vmatprep.mubr.bf16.mxu0 0
        %2153 = vmatmul.mubr.bf16.gmra.mxu0 %v1140
        %v2154 = vpop.f32.mrf.mxu0
        %v2155 = vadd.f32 %v1848, %v2154
        %v2156 = vpop.f32.mrf.mxu0
        %v2157 = vpop.f32.mrf.mxu0
        %v2158 = vadd.f32 %v1851, %v2157
        %v2159 = vpop.f32.mrf.mxu0
        %2160 = vmatprep.mubr.bf16.mxu0 0
        %2161 = vmatmul.mubr.bf16.gmra.mxu0 %v1143
        %v2162 = vpop.f32.mrf.mxu0
        %v2163 = vadd.f32 %v1856, %v2162
        %v2164 = vpop.f32.mrf.mxu0
        %v2165 = vpop.f32.mrf.mxu0
        %v2166 = vadd.f32 %v1859, %v2165
        %v2167 = vpop.f32.mrf.mxu0
        %2168 = vmatprep.mubr.bf16.mxu0 0
        %2169 = vmatmul.mubr.bf16.gmra.mxu0 %v1146
        %v2170 = vpop.f32.mrf.mxu0
        %v2171 = vadd.f32 %v1864, %v2170
        %v2172 = vpop.f32.mrf.mxu0
        %v2173 = vpop.f32.mrf.mxu0
        %v2174 = vadd.f32 %v1867, %v2173
        %v2175 = vpop.f32.mrf.mxu0
        %2176 = vmatprep.mubr.bf16.mxu0 0
        %2177 = vmatmul.mubr.bf16.gmra.mxu0 %v1149
        %v2178 = vpop.f32.mrf.mxu0
        %v2179 = vadd.f32 %v1872, %v2178
        %v2180 = vpop.f32.mrf.mxu0
        %v2181 = vpop.f32.mrf.mxu0
        %v2182 = vadd.f32 %v1875, %v2181
        %v2183 = vpop.f32.mrf.mxu0
        %2184 = vmatprep.mubr.bf16.mxu0 0
        %2185 = vmatmul.mubr.bf16.gmra.mxu0 %v1152
        %v2186 = vpop.f32.mrf.mxu0
        %v2187 = vadd.f32 %v1880, %v2186
        %v2188 = vpop.f32.mrf.mxu0
        %v2189 = vpop.f32.mrf.mxu0
        %v2190 = vadd.f32 %v1883, %v2189
        %v2191 = vpop.f32.mrf.mxu0
        %2192 = vmatprep.mubr.bf16.mxu0 0
        %2193 = vmatmul.mubr.bf16.gmra.mxu0 %v1155
        %v2194 = vpop.f32.mrf.mxu0
        %v2195 = vadd.f32 %v1888, %v2194
        %v2196 = vpop.f32.mrf.mxu0
        %v2197 = vpop.f32.mrf.mxu0
        %v2198 = vadd.f32 %v1891, %v2197
        %v2199 = vpop.f32.mrf.mxu0
        %2200 = vmatprep.mubr.bf16.mxu0 0
        %2201 = vmatmul.mubr.bf16.gmra.mxu0 %v1158
        %v2202 = vpop.f32.mrf.mxu0
        %v2203 = vadd.f32 %v1896, %v2202
        %v2204 = vpop.f32.mrf.mxu0
        %v2205 = vpop.f32.mrf.mxu0
        %v2206 = vadd.f32 %v1899, %v2205
        %v2207 = vpop.f32.mrf.mxu0
        %2208 = vmatprep.mubr.bf16.mxu0 0
        %2209 = vmatmul.mubr.bf16.gmra.mxu0 %v1161
        %v2210 = vpop.f32.mrf.mxu0
        %v2211 = vadd.f32 %v1904, %v2210
        %v2212 = vpop.f32.mrf.mxu0
        %v2213 = vpop.f32.mrf.mxu0
        %v2214 = vadd.f32 %v1907, %v2213
        %v2215 = vpop.f32.mrf.mxu0
        %2216 = vmatprep.mubr.bf16.mxu0 0
        %2217 = vmatmul.mubr.bf16.gmra.mxu0 %v1164
        %v2218 = vpop.f32.mrf.mxu0
        %v2219 = vadd.f32 %v1912, %v2218
        %v2220 = vpop.f32.mrf.mxu0
        %v2221 = vpop.f32.mrf.mxu0
        %v2222 = vadd.f32 %v1915, %v2221
        %v2223 = vpop.f32.mrf.mxu0
        %2224 = vmatprep.mubr.bf16.mxu0 0
        %2225 = vmatmul.mubr.bf16.gmra.mxu0 %v1167
        %v2226 = vpop.f32.mrf.mxu0
        %v2227 = vadd.f32 %v1920, %v2226
        %v2228 = vpop.f32.mrf.mxu0
        %v2229 = vpop.f32.mrf.mxu0
        %v2230 = vadd.f32 %v1923, %v2229
        %v2231 = vpop.f32.mrf.mxu0
        %2232 = vmatprep.mubr.bf16.mxu0 0
        %2233 = vmatmul.mubr.bf16.gmra.mxu0 %v1170
        %v2234 = vpop.f32.mrf.mxu0
        %v2235 = vadd.f32 %v1928, %v2234
        %v2236 = vpop.f32.mrf.mxu0
        %v2237 = vpop.f32.mrf.mxu0
        %v2238 = vadd.f32 %v1931, %v2237
        %v2239 = vpop.f32.mrf.mxu0
        %2240 = vmatprep.mubr.bf16.mxu0 0
        %2241 = vmatmul.mubr.bf16.gmra.mxu0 %v1173
        %v2242 = vpop.f32.mrf.mxu0
        %v2243 = vadd.f32 %v1936, %v2242
        %v2244 = vpop.f32.mrf.mxu0
        %v2245 = vpop.f32.mrf.mxu0
        %v2246 = vadd.f32 %v1939, %v2245
        %v2247 = vpop.f32.mrf.mxu0
        %2248 = vmatprep.mubr.bf16.mxu0 0
        %2249 = vmatmul.mubr.bf16.gmra.mxu0 %v1176
        %v2250 = vpop.f32.mrf.mxu0
        %v2251 = vadd.f32 %v1944, %v2250
        %v2252 = vpop.f32.mrf.mxu0
        %v2253 = vpop.f32.mrf.mxu0
        %v2254 = vadd.f32 %v1947, %v2253
        %v2255 = vpop.f32.mrf.mxu0
        %2256 = vmatprep.mubr.bf16.mxu0 0
        %2257 = vmatmul.mubr.bf16.gmra.mxu0 %v1179
        %v2258 = vpop.f32.mrf.mxu0
        %v2259 = vadd.f32 %v1952, %v2258
        %v2260 = vpop.f32.mrf.mxu0
        %v2261 = vpop.f32.mrf.mxu0
        %v2262 = vadd.f32 %v1955, %v2261
        %v2263 = vpop.f32.mrf.mxu0
        %2264 = vmatprep.mubr.bf16.mxu0 0
        %2265 = vmatmul.mubr.bf16.gmra.mxu0 %v1182
        %v2266 = vpop.f32.mrf.mxu0
        %v2267 = vadd.f32 %v1960, %v2266
        %v2268 = vpop.f32.mrf.mxu0
        %v2269 = vpop.f32.mrf.mxu0
        %v2270 = vadd.f32 %v1963, %v2269
        %v2271 = vpop.f32.mrf.mxu0
        %2272 = vmatprep.mubr.bf16.mxu0 0
        %2273 = vmatmul.mubr.bf16.gmra.mxu0 %v1185
        %v2274 = vpop.f32.mrf.mxu0
        %v2275 = vadd.f32 %v1968, %v2274
        %v2276 = vpop.f32.mrf.mxu0
        %v2277 = vpop.f32.mrf.mxu0
        %v2278 = vadd.f32 %v1971, %v2277
        %v2279 = vpop.f32.mrf.mxu0
        %2280 = vmatprep.mubr.bf16.mxu0 0
        %2281 = vmatmul.mubr.bf16.gmra.mxu0 %v1188
        %v2282 = vpop.f32.mrf.mxu0
        %v2283 = vadd.f32 %v1976, %v2282
        %v2284 = vpop.f32.mrf.mxu0
        %v2285 = vpop.f32.mrf.mxu0
        %v2286 = vadd.f32 %v1979, %v2285
        %v2287 = vpop.f32.mrf.mxu0
        %2288 = vmatprep.mubr.bf16.mxu0 0
        %2289 = vmatmul.mubr.bf16.gmra.mxu0 %v1191
        %v2290 = vpop.f32.mrf.mxu0
        %v2291 = vadd.f32 %v1984, %v2290
        %v2292 = vpop.f32.mrf.mxu0
        %v2293 = vpop.f32.mrf.mxu0
        %v2294 = vadd.f32 %v1987, %v2293
        %v2295 = vpop.f32.mrf.mxu0
        %2296 = vmatprep.mubr.bf16.mxu0 0
        %2297 = vmatmul.mubr.bf16.gmra.mxu0 %v1194
        %v2298 = vpop.f32.mrf.mxu0
        %v2299 = vadd.f32 %v1992, %v2298
        %v2300 = vpop.f32.mrf.mxu0
        %v2301 = vpop.f32.mrf.mxu0
        %v2302 = vadd.f32 %v1995, %v2301
        %v2303 = vpop.f32.mrf.mxu0
        %2304 = vmatprep.mubr.bf16.mxu0 0
        %2305 = vmatmul.mubr.bf16.gmra.mxu0 %v1197
        %v2306 = vpop.f32.mrf.mxu0
        %v2307 = vadd.f32 %v2000, %v2306
        %v2308 = vpop.f32.mrf.mxu0
        %v2309 = vpop.f32.mrf.mxu0
        %v2310 = vadd.f32 %v2003, %v2309
        %v2311 = vpop.f32.mrf.mxu0
        %2312 = vmatprep.mubr.bf16.mxu0 0
        %2313 = vmatmul.mubr.bf16.gmra.mxu0 %v1200
        %v2314 = vpop.f32.mrf.mxu0
        %v2315 = vadd.f32 %v2008, %v2314
        %v2316 = vpop.f32.mrf.mxu0
        %v2317 = vpop.f32.mrf.mxu0
        %v2318 = vadd.f32 %v2011, %v2317
        %v2319 = vpop.f32.mrf.mxu0
        %2320 = vmatprep.mubr.bf16.mxu0 0
        %2321 = vmatmul.mubr.bf16.gmra.mxu0 %v1203
        %v2322 = vpop.f32.mrf.mxu0
        %v2323 = vadd.f32 %v2016, %v2322
        %v2324 = vpop.f32.mrf.mxu0
        %v2325 = vpop.f32.mrf.mxu0
        %v2326 = vadd.f32 %v2019, %v2325
        %v2327 = vpop.f32.mrf.mxu0
        %2328 = vdwg.mxu0
        %v2329 = vld [vmem:[%s351] sm:$0xff]
        %v2330 = vld [vmem:[%s351 + $0x8] sm:$0xff]
        %v2331 = vld [vmem:[%s351 + $0x10] sm:$0xff]
        %v2332 = vld [vmem:[%s351 + $0x18] sm:$0xff]
        %v2333 = vld [vmem:[%s351 + $0x20] sm:$0xff]
        %v2334 = vld [vmem:[%s351 + $0x28] sm:$0xff]
        %v2335 = vld [vmem:[%s351 + $0x30] sm:$0xff]
        %v2336 = vld [vmem:[%s351 + $0x38] sm:$0xff]
        %v2337 = vld [vmem:[%s351 + $0x40] sm:$0xff]
        %v2338 = vld [vmem:[%s351 + $0x48] sm:$0xff]
        %v2339 = vld [vmem:[%s351 + $0x50] sm:$0xff]
        %v2340 = vld [vmem:[%s351 + $0x58] sm:$0xff]
        %v2341 = vld [vmem:[%s351 + $0x60] sm:$0xff]
        %v2342 = vld [vmem:[%s351 + $0x68] sm:$0xff]
        %v2343 = vld [vmem:[%s351 + $0x70] sm:$0xff]
        %v2344 = vld [vmem:[%s351 + $0x78] sm:$0xff]
        %v2345 = vld [vmem:[%s351 + $0x80] sm:$0xff]
        %v2346 = vld [vmem:[%s351 + $0x88] sm:$0xff]
        %v2347 = vld [vmem:[%s351 + $0x90] sm:$0xff]
        %v2348 = vld [vmem:[%s351 + $0x98] sm:$0xff]
        %v2349 = vld [vmem:[%s351 + $0xa0] sm:$0xff]
        %v2350 = vld [vmem:[%s351 + $0xa8] sm:$0xff]
        %v2351 = vld [vmem:[%s351 + $0xb0] sm:$0xff]
        %v2352 = vld [vmem:[%s351 + $0xb8] sm:$0xff]
        %v2353 = vld [vmem:[%s351 + $0xc0] sm:$0xff]
        %v2354 = vld [vmem:[%s351 + $0xc8] sm:$0xff]
        %v2355 = vld [vmem:[%s351 + $0xd0] sm:$0xff]
        %v2356 = vld [vmem:[%s351 + $0xd8] sm:$0xff]
        %v2357 = vld [vmem:[%s351 + $0xe0] sm:$0xff]
        %v2358 = vld [vmem:[%s351 + $0xe8] sm:$0xff]
        %v2359 = vld [vmem:[%s351 + $0xf0] sm:$0xff]
        %v2360 = vld [vmem:[%s351 + $0xf8] sm:$0xff]
        %v2361 = vld [vmem:[%s351 + $0x100] sm:$0xff]
        %v2362 = vld [vmem:[%s351 + $0x108] sm:$0xff]
        %v2363 = vld [vmem:[%s351 + $0x110] sm:$0xff]
        %v2364 = vld [vmem:[%s351 + $0x118] sm:$0xff]
        %v2365 = vld [vmem:[%s351 + $0x120] sm:$0xff]
        %v2366 = vld [vmem:[%s351 + $0x128] sm:$0xff]
        %v2367 = vld [vmem:[%s351 + $0x130] sm:$0xff]
        %v2368 = vld [vmem:[%s351 + $0x138] sm:$0xff]
        %v2369 = vld [vmem:[%s351 + $0x140] sm:$0xff]
        %v2370 = vld [vmem:[%s351 + $0x148] sm:$0xff]
        %v2371 = vld [vmem:[%s351 + $0x150] sm:$0xff]
        %v2372 = vld [vmem:[%s351 + $0x158] sm:$0xff]
        %v2373 = vld [vmem:[%s351 + $0x160] sm:$0xff]
        %v2374 = vld [vmem:[%s351 + $0x168] sm:$0xff]
        %v2375 = vld [vmem:[%s351 + $0x170] sm:$0xff]
        %v2376 = vld [vmem:[%s351 + $0x178] sm:$0xff]
        %v2377 = vld [vmem:[%s351 + $0x180] sm:$0xff]
        %v2378 = vld [vmem:[%s351 + $0x188] sm:$0xff]
        %v2379 = vld [vmem:[%s351 + $0x190] sm:$0xff]
        %v2380 = vld [vmem:[%s351 + $0x198] sm:$0xff]
        %v2381 = vld [vmem:[%s351 + $0x1a0] sm:$0xff]
        %v2382 = vld [vmem:[%s351 + $0x1a8] sm:$0xff]
        %v2383 = vld [vmem:[%s351 + $0x1b0] sm:$0xff]
        %v2384 = vld [vmem:[%s351 + $0x1b8] sm:$0xff]
        %v2385 = vld [vmem:[%s351 + $0x1c0] sm:$0xff]
        %v2386 = vld [vmem:[%s351 + $0x1c8] sm:$0xff]
        %v2387 = vld [vmem:[%s351 + $0x1d0] sm:$0xff]
        %v2388 = vld [vmem:[%s351 + $0x1d8] sm:$0xff]
        %v2389 = vld [vmem:[%s351 + $0x1e0] sm:$0xff]
        %v2390 = vld [vmem:[%s351 + $0x1e8] sm:$0xff]
        %v2391 = vld [vmem:[%s351 + $0x1f0] sm:$0xff]
        %v2392 = vld [vmem:[%s351 + $0x1f8] sm:$0xff]
        %vm2393 = vcmp.eq.s32.totalorder %v2329, 0
        %vm2394 = vcmp.eq.s32.totalorder %v2330, 0
        %vm2395 = vcmp.eq.s32.totalorder %v2331, 0
        %vm2396 = vcmp.eq.s32.totalorder %v2332, 0
        %vm2397 = vcmp.eq.s32.totalorder %v2333, 0
        %vm2398 = vcmp.eq.s32.totalorder %v2334, 0
        %vm2399 = vcmp.eq.s32.totalorder %v2335, 0
        %vm2400 = vcmp.eq.s32.totalorder %v2336, 0
        %vm2401 = vcmp.eq.s32.totalorder %v2337, 0
        %vm2402 = vcmp.eq.s32.totalorder %v2338, 0
        %vm2403 = vcmp.eq.s32.totalorder %v2339, 0
        %vm2404 = vcmp.eq.s32.totalorder %v2340, 0
        %vm2405 = vcmp.eq.s32.totalorder %v2341, 0
        %vm2406 = vcmp.eq.s32.totalorder %v2342, 0
        %vm2407 = vcmp.eq.s32.totalorder %v2343, 0
        %vm2408 = vcmp.eq.s32.totalorder %v2344, 0
        %vm2409 = vcmp.eq.s32.totalorder %v2345, 0
        %vm2410 = vcmp.eq.s32.totalorder %v2346, 0
        %vm2411 = vcmp.eq.s32.totalorder %v2347, 0
        %vm2412 = vcmp.eq.s32.totalorder %v2348, 0
        %vm2413 = vcmp.eq.s32.totalorder %v2349, 0
        %vm2414 = vcmp.eq.s32.totalorder %v2350, 0
        %vm2415 = vcmp.eq.s32.totalorder %v2351, 0
        %vm2416 = vcmp.eq.s32.totalorder %v2352, 0
        %vm2417 = vcmp.eq.s32.totalorder %v2353, 0
        %vm2418 = vcmp.eq.s32.totalorder %v2354, 0
        %vm2419 = vcmp.eq.s32.totalorder %v2355, 0
        %vm2420 = vcmp.eq.s32.totalorder %v2356, 0
        %vm2421 = vcmp.eq.s32.totalorder %v2357, 0
        %vm2422 = vcmp.eq.s32.totalorder %v2358, 0
        %vm2423 = vcmp.eq.s32.totalorder %v2359, 0
        %vm2424 = vcmp.eq.s32.totalorder %v2360, 0
        %vm2425 = vcmp.eq.s32.totalorder %v2361, 0
        %vm2426 = vcmp.eq.s32.totalorder %v2362, 0
        %vm2427 = vcmp.eq.s32.totalorder %v2363, 0
        %vm2428 = vcmp.eq.s32.totalorder %v2364, 0
        %vm2429 = vcmp.eq.s32.totalorder %v2365, 0
        %vm2430 = vcmp.eq.s32.totalorder %v2366, 0
        %vm2431 = vcmp.eq.s32.totalorder %v2367, 0
        %vm2432 = vcmp.eq.s32.totalorder %v2368, 0
        %vm2433 = vcmp.eq.s32.totalorder %v2369, 0
        %vm2434 = vcmp.eq.s32.totalorder %v2370, 0
        %vm2435 = vcmp.eq.s32.totalorder %v2371, 0
        %vm2436 = vcmp.eq.s32.totalorder %v2372, 0
        %vm2437 = vcmp.eq.s32.totalorder %v2373, 0
        %vm2438 = vcmp.eq.s32.totalorder %v2374, 0
        %vm2439 = vcmp.eq.s32.totalorder %v2375, 0
        %vm2440 = vcmp.eq.s32.totalorder %v2376, 0
        %vm2441 = vcmp.eq.s32.totalorder %v2377, 0
        %vm2442 = vcmp.eq.s32.totalorder %v2378, 0
        %vm2443 = vcmp.eq.s32.totalorder %v2379, 0
        %vm2444 = vcmp.eq.s32.totalorder %v2380, 0
        %vm2445 = vcmp.eq.s32.totalorder %v2381, 0
        %vm2446 = vcmp.eq.s32.totalorder %v2382, 0
        %vm2447 = vcmp.eq.s32.totalorder %v2383, 0
        %vm2448 = vcmp.eq.s32.totalorder %v2384, 0
        %vm2449 = vcmp.eq.s32.totalorder %v2385, 0
        %vm2450 = vcmp.eq.s32.totalorder %v2386, 0
        %vm2451 = vcmp.eq.s32.totalorder %v2387, 0
        %vm2452 = vcmp.eq.s32.totalorder %v2388, 0
        %vm2453 = vcmp.eq.s32.totalorder %v2389, 0
        %vm2454 = vcmp.eq.s32.totalorder %v2390, 0
        %vm2455 = vcmp.eq.s32.totalorder %v2391, 0
        %vm2456 = vcmp.eq.s32.totalorder %v2392, 0
        %v2457 = vsel %vm2393, 1, 0
        %v2458 = vsel %vm2394, 1, 0
        %v2459 = vsel %vm2395, 1, 0
        %v2460 = vsel %vm2396, 1, 0
        %v2461 = vsel %vm2397, 1, 0
        %v2462 = vsel %vm2398, 1, 0
        %v2463 = vsel %vm2399, 1, 0
        %v2464 = vsel %vm2400, 1, 0
        %v2465 = vsel %vm2401, 1, 0
        %v2466 = vsel %vm2402, 1, 0
        %v2467 = vsel %vm2403, 1, 0
        %v2468 = vsel %vm2404, 1, 0
        %v2469 = vsel %vm2405, 1, 0
        %v2470 = vsel %vm2406, 1, 0
        %v2471 = vsel %vm2407, 1, 0
        %v2472 = vsel %vm2408, 1, 0
        %v2473 = vsel %vm2409, 1, 0
        %v2474 = vsel %vm2410, 1, 0
        %v2475 = vsel %vm2411, 1, 0
        %v2476 = vsel %vm2412, 1, 0
        %v2477 = vsel %vm2413, 1, 0
        %v2478 = vsel %vm2414, 1, 0
        %v2479 = vsel %vm2415, 1, 0
        %v2480 = vsel %vm2416, 1, 0
        %v2481 = vsel %vm2417, 1, 0
        %v2482 = vsel %vm2418, 1, 0
        %v2483 = vsel %vm2419, 1, 0
        %v2484 = vsel %vm2420, 1, 0
        %v2485 = vsel %vm2421, 1, 0
        %v2486 = vsel %vm2422, 1, 0
        %v2487 = vsel %vm2423, 1, 0
        %v2488 = vsel %vm2424, 1, 0
        %v2489 = vsel %vm2425, 1, 0
        %v2490 = vsel %vm2426, 1, 0
        %v2491 = vsel %vm2427, 1, 0
        %v2492 = vsel %vm2428, 1, 0
        %v2493 = vsel %vm2429, 1, 0
        %v2494 = vsel %vm2430, 1, 0
        %v2495 = vsel %vm2431, 1, 0
        %v2496 = vsel %vm2432, 1, 0
        %v2497 = vsel %vm2433, 1, 0
        %v2498 = vsel %vm2434, 1, 0
        %v2499 = vsel %vm2435, 1, 0
        %v2500 = vsel %vm2436, 1, 0
        %v2501 = vsel %vm2437, 1, 0
        %v2502 = vsel %vm2438, 1, 0
        %v2503 = vsel %vm2439, 1, 0
        %v2504 = vsel %vm2440, 1, 0
        %v2505 = vsel %vm2441, 1, 0
        %v2506 = vsel %vm2442, 1, 0
        %v2507 = vsel %vm2443, 1, 0
        %v2508 = vsel %vm2444, 1, 0
        %v2509 = vsel %vm2445, 1, 0
        %v2510 = vsel %vm2446, 1, 0
        %v2511 = vsel %vm2447, 1, 0
        %v2512 = vsel %vm2448, 1, 0
        %v2513 = vsel %vm2449, 1, 0
        %v2514 = vsel %vm2450, 1, 0
        %v2515 = vsel %vm2451, 1, 0
        %v2516 = vsel %vm2452, 1, 0
        %v2517 = vsel %vm2453, 1, 0
        %v2518 = vsel %vm2454, 1, 0
        %v2519 = vsel %vm2455, 1, 0
        %v2520 = vsel %vm2456, 1, 0
        %v2521 = vcvt.s32.f32 %v2457
        %v2522 = vcvt.s32.f32 %v2458
        %v2523 = vcvt.s32.f32 %v2459
        %v2524 = vcvt.s32.f32 %v2460
        %v2525 = vcvt.s32.f32 %v2461
        %v2526 = vcvt.s32.f32 %v2462
        %v2527 = vcvt.s32.f32 %v2463
        %v2528 = vcvt.s32.f32 %v2464
        %v2529 = vcvt.s32.f32 %v2465
        %v2530 = vcvt.s32.f32 %v2466
        %v2531 = vcvt.s32.f32 %v2467
        %v2532 = vcvt.s32.f32 %v2468
        %v2533 = vcvt.s32.f32 %v2469
        %v2534 = vcvt.s32.f32 %v2470
        %v2535 = vcvt.s32.f32 %v2471
        %v2536 = vcvt.s32.f32 %v2472
        %v2537 = vcvt.s32.f32 %v2473
        %v2538 = vcvt.s32.f32 %v2474
        %v2539 = vcvt.s32.f32 %v2475
        %v2540 = vcvt.s32.f32 %v2476
        %v2541 = vcvt.s32.f32 %v2477
        %v2542 = vcvt.s32.f32 %v2478
        %v2543 = vcvt.s32.f32 %v2479
        %v2544 = vcvt.s32.f32 %v2480
        %v2545 = vcvt.s32.f32 %v2481
        %v2546 = vcvt.s32.f32 %v2482
        %v2547 = vcvt.s32.f32 %v2483
        %v2548 = vcvt.s32.f32 %v2484
        %v2549 = vcvt.s32.f32 %v2485
        %v2550 = vcvt.s32.f32 %v2486
        %v2551 = vcvt.s32.f32 %v2487
        %v2552 = vcvt.s32.f32 %v2488
        %v2553 = vcvt.s32.f32 %v2489
        %v2554 = vcvt.s32.f32 %v2490
        %v2555 = vcvt.s32.f32 %v2491
        %v2556 = vcvt.s32.f32 %v2492
        %v2557 = vcvt.s32.f32 %v2493
        %v2558 = vcvt.s32.f32 %v2494
        %v2559 = vcvt.s32.f32 %v2495
        %v2560 = vcvt.s32.f32 %v2496
        %v2561 = vcvt.s32.f32 %v2497
        %v2562 = vcvt.s32.f32 %v2498
        %v2563 = vcvt.s32.f32 %v2499
        %v2564 = vcvt.s32.f32 %v2500
        %v2565 = vcvt.s32.f32 %v2501
        %v2566 = vcvt.s32.f32 %v2502
        %v2567 = vcvt.s32.f32 %v2503
        %v2568 = vcvt.s32.f32 %v2504
        %v2569 = vcvt.s32.f32 %v2505
        %v2570 = vcvt.s32.f32 %v2506
        %v2571 = vcvt.s32.f32 %v2507
        %v2572 = vcvt.s32.f32 %v2508
        %v2573 = vcvt.s32.f32 %v2509
        %v2574 = vcvt.s32.f32 %v2510
        %v2575 = vcvt.s32.f32 %v2511
        %v2576 = vcvt.s32.f32 %v2512
        %v2577 = vcvt.s32.f32 %v2513
        %v2578 = vcvt.s32.f32 %v2514
        %v2579 = vcvt.s32.f32 %v2515
        %v2580 = vcvt.s32.f32 %v2516
        %v2581 = vcvt.s32.f32 %v2517
        %v2582 = vcvt.s32.f32 %v2518
        %v2583 = vcvt.s32.f32 %v2519
        %v2584 = vcvt.s32.f32 %v2520
        %vm2585 = vcmp.eq.s32.totalorder %v2329, 1
        %vm2586 = vcmp.eq.s32.totalorder %v2330, 1
        %vm2587 = vcmp.eq.s32.totalorder %v2331, 1
        %vm2588 = vcmp.eq.s32.totalorder %v2332, 1
        %vm2589 = vcmp.eq.s32.totalorder %v2333, 1
        %vm2590 = vcmp.eq.s32.totalorder %v2334, 1
        %vm2591 = vcmp.eq.s32.totalorder %v2335, 1
        %vm2592 = vcmp.eq.s32.totalorder %v2336, 1
        %vm2593 = vcmp.eq.s32.totalorder %v2337, 1
        %vm2594 = vcmp.eq.s32.totalorder %v2338, 1
        %vm2595 = vcmp.eq.s32.totalorder %v2339, 1
        %vm2596 = vcmp.eq.s32.totalorder %v2340, 1
        %vm2597 = vcmp.eq.s32.totalorder %v2341, 1
        %vm2598 = vcmp.eq.s32.totalorder %v2342, 1
        %vm2599 = vcmp.eq.s32.totalorder %v2343, 1
        %vm2600 = vcmp.eq.s32.totalorder %v2344, 1
        %vm2601 = vcmp.eq.s32.totalorder %v2345, 1
        %vm2602 = vcmp.eq.s32.totalorder %v2346, 1
        %vm2603 = vcmp.eq.s32.totalorder %v2347, 1
        %vm2604 = vcmp.eq.s32.totalorder %v2348, 1
        %vm2605 = vcmp.eq.s32.totalorder %v2349, 1
        %vm2606 = vcmp.eq.s32.totalorder %v2350, 1
        %vm2607 = vcmp.eq.s32.totalorder %v2351, 1
        %vm2608 = vcmp.eq.s32.totalorder %v2352, 1
        %vm2609 = vcmp.eq.s32.totalorder %v2353, 1
        %vm2610 = vcmp.eq.s32.totalorder %v2354, 1
        %vm2611 = vcmp.eq.s32.totalorder %v2355, 1
        %vm2612 = vcmp.eq.s32.totalorder %v2356, 1
        %vm2613 = vcmp.eq.s32.totalorder %v2357, 1
        %vm2614 = vcmp.eq.s32.totalorder %v2358, 1
        %vm2615 = vcmp.eq.s32.totalorder %v2359, 1
        %vm2616 = vcmp.eq.s32.totalorder %v2360, 1
        %vm2617 = vcmp.eq.s32.totalorder %v2361, 1
        %vm2618 = vcmp.eq.s32.totalorder %v2362, 1
        %vm2619 = vcmp.eq.s32.totalorder %v2363, 1
        %vm2620 = vcmp.eq.s32.totalorder %v2364, 1
        %vm2621 = vcmp.eq.s32.totalorder %v2365, 1
        %vm2622 = vcmp.eq.s32.totalorder %v2366, 1
        %vm2623 = vcmp.eq.s32.totalorder %v2367, 1
        %vm2624 = vcmp.eq.s32.totalorder %v2368, 1
        %vm2625 = vcmp.eq.s32.totalorder %v2369, 1
        %vm2626 = vcmp.eq.s32.totalorder %v2370, 1
        %vm2627 = vcmp.eq.s32.totalorder %v2371, 1
        %vm2628 = vcmp.eq.s32.totalorder %v2372, 1
        %vm2629 = vcmp.eq.s32.totalorder %v2373, 1
        %vm2630 = vcmp.eq.s32.totalorder %v2374, 1
        %vm2631 = vcmp.eq.s32.totalorder %v2375, 1
        %vm2632 = vcmp.eq.s32.totalorder %v2376, 1
        %vm2633 = vcmp.eq.s32.totalorder %v2377, 1
        %vm2634 = vcmp.eq.s32.totalorder %v2378, 1
        %vm2635 = vcmp.eq.s32.totalorder %v2379, 1
        %vm2636 = vcmp.eq.s32.totalorder %v2380, 1
        %vm2637 = vcmp.eq.s32.totalorder %v2381, 1
        %vm2638 = vcmp.eq.s32.totalorder %v2382, 1
        %vm2639 = vcmp.eq.s32.totalorder %v2383, 1
        %vm2640 = vcmp.eq.s32.totalorder %v2384, 1
        %vm2641 = vcmp.eq.s32.totalorder %v2385, 1
        %vm2642 = vcmp.eq.s32.totalorder %v2386, 1
        %vm2643 = vcmp.eq.s32.totalorder %v2387, 1
        %vm2644 = vcmp.eq.s32.totalorder %v2388, 1
        %vm2645 = vcmp.eq.s32.totalorder %v2389, 1
        %vm2646 = vcmp.eq.s32.totalorder %v2390, 1
        %vm2647 = vcmp.eq.s32.totalorder %v2391, 1
        %vm2648 = vcmp.eq.s32.totalorder %v2392, 1
        %v2649 = vsel %vm2585, 1, 0
        %v2650 = vsel %vm2586, 1, 0
        %v2651 = vsel %vm2587, 1, 0
        %v2652 = vsel %vm2588, 1, 0
        %v2653 = vsel %vm2589, 1, 0
        %v2654 = vsel %vm2590, 1, 0
        %v2655 = vsel %vm2591, 1, 0
        %v2656 = vsel %vm2592, 1, 0
        %v2657 = vsel %vm2593, 1, 0
        %v2658 = vsel %vm2594, 1, 0
        %v2659 = vsel %vm2595, 1, 0
        %v2660 = vsel %vm2596, 1, 0
        %v2661 = vsel %vm2597, 1, 0
        %v2662 = vsel %vm2598, 1, 0
        %v2663 = vsel %vm2599, 1, 0
        %v2664 = vsel %vm2600, 1, 0
        %v2665 = vsel %vm2601, 1, 0
        %v2666 = vsel %vm2602, 1, 0
        %v2667 = vsel %vm2603, 1, 0
        %v2668 = vsel %vm2604, 1, 0
        %v2669 = vsel %vm2605, 1, 0
        %v2670 = vsel %vm2606, 1, 0
        %v2671 = vsel %vm2607, 1, 0
        %v2672 = vsel %vm2608, 1, 0
        %v2673 = vsel %vm2609, 1, 0
        %v2674 = vsel %vm2610, 1, 0
        %v2675 = vsel %vm2611, 1, 0
        %v2676 = vsel %vm2612, 1, 0
        %v2677 = vsel %vm2613, 1, 0
        %v2678 = vsel %vm2614, 1, 0
        %v2679 = vsel %vm2615, 1, 0
        %v2680 = vsel %vm2616, 1, 0
        %v2681 = vsel %vm2617, 1, 0
        %v2682 = vsel %vm2618, 1, 0
        %v2683 = vsel %vm2619, 1, 0
        %v2684 = vsel %vm2620, 1, 0
        %v2685 = vsel %vm2621, 1, 0
        %v2686 = vsel %vm2622, 1, 0
        %v2687 = vsel %vm2623, 1, 0
        %v2688 = vsel %vm2624, 1, 0
        %v2689 = vsel %vm2625, 1, 0
        %v2690 = vsel %vm2626, 1, 0
        %v2691 = vsel %vm2627, 1, 0
        %v2692 = vsel %vm2628, 1, 0
        %v2693 = vsel %vm2629, 1, 0
        %v2694 = vsel %vm2630, 1, 0
        %v2695 = vsel %vm2631, 1, 0
        %v2696 = vsel %vm2632, 1, 0
        %v2697 = vsel %vm2633, 1, 0
        %v2698 = vsel %vm2634, 1, 0
        %v2699 = vsel %vm2635, 1, 0
        %v2700 = vsel %vm2636, 1, 0
        %v2701 = vsel %vm2637, 1, 0
        %v2702 = vsel %vm2638, 1, 0
        %v2703 = vsel %vm2639, 1, 0
        %v2704 = vsel %vm2640, 1, 0
        %v2705 = vsel %vm2641, 1, 0
        %v2706 = vsel %vm2642, 1, 0
        %v2707 = vsel %vm2643, 1, 0
        %v2708 = vsel %vm2644, 1, 0
        %v2709 = vsel %vm2645, 1, 0
        %v2710 = vsel %vm2646, 1, 0
        %v2711 = vsel %vm2647, 1, 0
        %v2712 = vsel %vm2648, 1, 0
        %v2713 = vcvt.s32.f32 %v2649
        %v2714 = vcvt.s32.f32 %v2650
        %v2715 = vcvt.s32.f32 %v2651
        %v2716 = vcvt.s32.f32 %v2652
        %v2717 = vcvt.s32.f32 %v2653
        %v2718 = vcvt.s32.f32 %v2654
        %v2719 = vcvt.s32.f32 %v2655
        %v2720 = vcvt.s32.f32 %v2656
        %v2721 = vcvt.s32.f32 %v2657
        %v2722 = vcvt.s32.f32 %v2658
        %v2723 = vcvt.s32.f32 %v2659
        %v2724 = vcvt.s32.f32 %v2660
        %v2725 = vcvt.s32.f32 %v2661
        %v2726 = vcvt.s32.f32 %v2662
        %v2727 = vcvt.s32.f32 %v2663
        %v2728 = vcvt.s32.f32 %v2664
        %v2729 = vcvt.s32.f32 %v2665
        %v2730 = vcvt.s32.f32 %v2666
        %v2731 = vcvt.s32.f32 %v2667
        %v2732 = vcvt.s32.f32 %v2668
        %v2733 = vcvt.s32.f32 %v2669
        %v2734 = vcvt.s32.f32 %v2670
        %v2735 = vcvt.s32.f32 %v2671
        %v2736 = vcvt.s32.f32 %v2672
        %v2737 = vcvt.s32.f32 %v2673
        %v2738 = vcvt.s32.f32 %v2674
        %v2739 = vcvt.s32.f32 %v2675
        %v2740 = vcvt.s32.f32 %v2676
        %v2741 = vcvt.s32.f32 %v2677
        %v2742 = vcvt.s32.f32 %v2678
        %v2743 = vcvt.s32.f32 %v2679
        %v2744 = vcvt.s32.f32 %v2680
        %v2745 = vcvt.s32.f32 %v2681
        %v2746 = vcvt.s32.f32 %v2682
        %v2747 = vcvt.s32.f32 %v2683
        %v2748 = vcvt.s32.f32 %v2684
        %v2749 = vcvt.s32.f32 %v2685
        %v2750 = vcvt.s32.f32 %v2686
        %v2751 = vcvt.s32.f32 %v2687
        %v2752 = vcvt.s32.f32 %v2688
        %v2753 = vcvt.s32.f32 %v2689
        %v2754 = vcvt.s32.f32 %v2690
        %v2755 = vcvt.s32.f32 %v2691
        %v2756 = vcvt.s32.f32 %v2692
        %v2757 = vcvt.s32.f32 %v2693
        %v2758 = vcvt.s32.f32 %v2694
        %v2759 = vcvt.s32.f32 %v2695
        %v2760 = vcvt.s32.f32 %v2696
        %v2761 = vcvt.s32.f32 %v2697
        %v2762 = vcvt.s32.f32 %v2698
        %v2763 = vcvt.s32.f32 %v2699
        %v2764 = vcvt.s32.f32 %v2700
        %v2765 = vcvt.s32.f32 %v2701
        %v2766 = vcvt.s32.f32 %v2702
        %v2767 = vcvt.s32.f32 %v2703
        %v2768 = vcvt.s32.f32 %v2704
        %v2769 = vcvt.s32.f32 %v2705
        %v2770 = vcvt.s32.f32 %v2706
        %v2771 = vcvt.s32.f32 %v2707
        %v2772 = vcvt.s32.f32 %v2708
        %v2773 = vcvt.s32.f32 %v2709
        %v2774 = vcvt.s32.f32 %v2710
        %v2775 = vcvt.s32.f32 %v2711
        %v2776 = vcvt.s32.f32 %v2712
        %s2777 = sld [smem:[#allocation3]]
        %v2778 = vstv %s2777
        %v2779 = vmul.f32 %v2778, %v2521
        %v2780 = vmul.f32 %v2778, %v2522
        %v2781 = vmul.f32 %v2778, %v2523
        %v2782 = vmul.f32 %v2778, %v2524
        %v2783 = vmul.f32 %v2778, %v2525
        %v2784 = vmul.f32 %v2778, %v2526
        %v2785 = vmul.f32 %v2778, %v2527
        %v2786 = vmul.f32 %v2778, %v2528
        %v2787 = vmul.f32 %v2778, %v2529
        %v2788 = vmul.f32 %v2778, %v2530
        %v2789 = vmul.f32 %v2778, %v2531
        %v2790 = vmul.f32 %v2778, %v2532
        %v2791 = vmul.f32 %v2778, %v2533
        %v2792 = vmul.f32 %v2778, %v2534
        %v2793 = vmul.f32 %v2778, %v2535
        %v2794 = vmul.f32 %v2778, %v2536
        %v2795 = vmul.f32 %v2778, %v2537
        %v2796 = vmul.f32 %v2778, %v2538
        %v2797 = vmul.f32 %v2778, %v2539
        %v2798 = vmul.f32 %v2778, %v2540
        %v2799 = vmul.f32 %v2778, %v2541
        %v2800 = vmul.f32 %v2778, %v2542
        %v2801 = vmul.f32 %v2778, %v2543
        %v2802 = vmul.f32 %v2778, %v2544
        %v2803 = vmul.f32 %v2778, %v2545
        %v2804 = vmul.f32 %v2778, %v2546
        %v2805 = vmul.f32 %v2778, %v2547
        %v2806 = vmul.f32 %v2778, %v2548
        %v2807 = vmul.f32 %v2778, %v2549
        %v2808 = vmul.f32 %v2778, %v2550
        %v2809 = vmul.f32 %v2778, %v2551
        %v2810 = vmul.f32 %v2778, %v2552
        %v2811 = vmul.f32 %v2778, %v2553
        %v2812 = vmul.f32 %v2778, %v2554
        %v2813 = vmul.f32 %v2778, %v2555
        %v2814 = vmul.f32 %v2778, %v2556
        %v2815 = vmul.f32 %v2778, %v2557
        %v2816 = vmul.f32 %v2778, %v2558
        %v2817 = vmul.f32 %v2778, %v2559
        %v2818 = vmul.f32 %v2778, %v2560
        %v2819 = vmul.f32 %v2778, %v2561
        %v2820 = vmul.f32 %v2778, %v2562
        %v2821 = vmul.f32 %v2778, %v2563
        %v2822 = vmul.f32 %v2778, %v2564
        %v2823 = vmul.f32 %v2778, %v2565
        %v2824 = vmul.f32 %v2778, %v2566
        %v2825 = vmul.f32 %v2778, %v2567
        %v2826 = vmul.f32 %v2778, %v2568
        %v2827 = vmul.f32 %v2778, %v2569
        %v2828 = vmul.f32 %v2778, %v2570
        %v2829 = vmul.f32 %v2778, %v2571
        %v2830 = vmul.f32 %v2778, %v2572
        %v2831 = vmul.f32 %v2778, %v2573
        %v2832 = vmul.f32 %v2778, %v2574
        %v2833 = vmul.f32 %v2778, %v2575
        %v2834 = vmul.f32 %v2778, %v2576
        %v2835 = vmul.f32 %v2778, %v2577
        %v2836 = vmul.f32 %v2778, %v2578
        %v2837 = vmul.f32 %v2778, %v2579
        %v2838 = vmul.f32 %v2778, %v2580
        %v2839 = vmul.f32 %v2778, %v2581
        %v2840 = vmul.f32 %v2778, %v2582
        %v2841 = vmul.f32 %v2778, %v2583
        %v2842 = vmul.f32 %v2778, %v2584
        %s2843 = sld [smem:[#allocation3 + $0x1]]
        %v2844 = vstv %s2843
        %v2845 = vmul.f32 %v2844, %v2713
        %v2846 = vmul.f32 %v2844, %v2714
        %v2847 = vmul.f32 %v2844, %v2715
        %v2848 = vmul.f32 %v2844, %v2716
        %v2849 = vmul.f32 %v2844, %v2717
        %v2850 = vmul.f32 %v2844, %v2718
        %v2851 = vmul.f32 %v2844, %v2719
        %v2852 = vmul.f32 %v2844, %v2720
        %v2853 = vmul.f32 %v2844, %v2721
        %v2854 = vmul.f32 %v2844, %v2722
        %v2855 = vmul.f32 %v2844, %v2723
        %v2856 = vmul.f32 %v2844, %v2724
        %v2857 = vmul.f32 %v2844, %v2725
        %v2858 = vmul.f32 %v2844, %v2726
        %v2859 = vmul.f32 %v2844, %v2727
        %v2860 = vmul.f32 %v2844, %v2728
        %v2861 = vmul.f32 %v2844, %v2729
        %v2862 = vmul.f32 %v2844, %v2730
        %v2863 = vmul.f32 %v2844, %v2731
        %v2864 = vmul.f32 %v2844, %v2732
        %v2865 = vmul.f32 %v2844, %v2733
        %v2866 = vmul.f32 %v2844, %v2734
        %v2867 = vmul.f32 %v2844, %v2735
        %v2868 = vmul.f32 %v2844, %v2736
        %v2869 = vmul.f32 %v2844, %v2737
        %v2870 = vmul.f32 %v2844, %v2738
        %v2871 = vmul.f32 %v2844, %v2739
        %v2872 = vmul.f32 %v2844, %v2740
        %v2873 = vmul.f32 %v2844, %v2741
        %v2874 = vmul.f32 %v2844, %v2742
        %v2875 = vmul.f32 %v2844, %v2743
        %v2876 = vmul.f32 %v2844, %v2744
        %v2877 = vmul.f32 %v2844, %v2745
        %v2878 = vmul.f32 %v2844, %v2746
        %v2879 = vmul.f32 %v2844, %v2747
        %v2880 = vmul.f32 %v2844, %v2748
        %v2881 = vmul.f32 %v2844, %v2749
        %v2882 = vmul.f32 %v2844, %v2750
        %v2883 = vmul.f32 %v2844, %v2751
        %v2884 = vmul.f32 %v2844, %v2752
        %v2885 = vmul.f32 %v2844, %v2753
        %v2886 = vmul.f32 %v2844, %v2754
        %v2887 = vmul.f32 %v2844, %v2755
        %v2888 = vmul.f32 %v2844, %v2756
        %v2889 = vmul.f32 %v2844, %v2757
        %v2890 = vmul.f32 %v2844, %v2758
        %v2891 = vmul.f32 %v2844, %v2759
        %v2892 = vmul.f32 %v2844, %v2760
        %v2893 = vmul.f32 %v2844, %v2761
        %v2894 = vmul.f32 %v2844, %v2762
        %v2895 = vmul.f32 %v2844, %v2763
        %v2896 = vmul.f32 %v2844, %v2764
        %v2897 = vmul.f32 %v2844, %v2765
        %v2898 = vmul.f32 %v2844, %v2766
        %v2899 = vmul.f32 %v2844, %v2767
        %v2900 = vmul.f32 %v2844, %v2768
        %v2901 = vmul.f32 %v2844, %v2769
        %v2902 = vmul.f32 %v2844, %v2770
        %v2903 = vmul.f32 %v2844, %v2771
        %v2904 = vmul.f32 %v2844, %v2772
        %v2905 = vmul.f32 %v2844, %v2773
        %v2906 = vmul.f32 %v2844, %v2774
        %v2907 = vmul.f32 %v2844, %v2775
        %v2908 = vmul.f32 %v2844, %v2776
        %v2909 = vadd.f32 %v2779, %v2845
        %v2910 = vadd.f32 %v2780, %v2846
        %v2911 = vadd.f32 %v2781, %v2847
        %v2912 = vadd.f32 %v2782, %v2848
        %v2913 = vadd.f32 %v2783, %v2849
        %v2914 = vadd.f32 %v2784, %v2850
        %v2915 = vadd.f32 %v2785, %v2851
        %v2916 = vadd.f32 %v2786, %v2852
        %v2917 = vadd.f32 %v2787, %v2853
        %v2918 = vadd.f32 %v2788, %v2854
        %v2919 = vadd.f32 %v2789, %v2855
        %v2920 = vadd.f32 %v2790, %v2856
        %v2921 = vadd.f32 %v2791, %v2857
        %v2922 = vadd.f32 %v2792, %v2858
        %v2923 = vadd.f32 %v2793, %v2859
        %v2924 = vadd.f32 %v2794, %v2860
        %v2925 = vadd.f32 %v2795, %v2861
        %v2926 = vadd.f32 %v2796, %v2862
        %v2927 = vadd.f32 %v2797, %v2863
        %v2928 = vadd.f32 %v2798, %v2864
        %v2929 = vadd.f32 %v2799, %v2865
        %v2930 = vadd.f32 %v2800, %v2866
        %v2931 = vadd.f32 %v2801, %v2867
        %v2932 = vadd.f32 %v2802, %v2868
        %v2933 = vadd.f32 %v2803, %v2869
        %v2934 = vadd.f32 %v2804, %v2870
        %v2935 = vadd.f32 %v2805, %v2871
        %v2936 = vadd.f32 %v2806, %v2872
        %v2937 = vadd.f32 %v2807, %v2873
        %v2938 = vadd.f32 %v2808, %v2874
        %v2939 = vadd.f32 %v2809, %v2875
        %v2940 = vadd.f32 %v2810, %v2876
        %v2941 = vadd.f32 %v2811, %v2877
        %v2942 = vadd.f32 %v2812, %v2878
        %v2943 = vadd.f32 %v2813, %v2879
        %v2944 = vadd.f32 %v2814, %v2880
        %v2945 = vadd.f32 %v2815, %v2881
        %v2946 = vadd.f32 %v2816, %v2882
        %v2947 = vadd.f32 %v2817, %v2883
        %v2948 = vadd.f32 %v2818, %v2884
        %v2949 = vadd.f32 %v2819, %v2885
        %v2950 = vadd.f32 %v2820, %v2886
        %v2951 = vadd.f32 %v2821, %v2887
        %v2952 = vadd.f32 %v2822, %v2888
        %v2953 = vadd.f32 %v2823, %v2889
        %v2954 = vadd.f32 %v2824, %v2890
        %v2955 = vadd.f32 %v2825, %v2891
        %v2956 = vadd.f32 %v2826, %v2892
        %v2957 = vadd.f32 %v2827, %v2893
        %v2958 = vadd.f32 %v2828, %v2894
        %v2959 = vadd.f32 %v2829, %v2895
        %v2960 = vadd.f32 %v2830, %v2896
        %v2961 = vadd.f32 %v2831, %v2897
        %v2962 = vadd.f32 %v2832, %v2898
        %v2963 = vadd.f32 %v2833, %v2899
        %v2964 = vadd.f32 %v2834, %v2900
        %v2965 = vadd.f32 %v2835, %v2901
        %v2966 = vadd.f32 %v2836, %v2902
        %v2967 = vadd.f32 %v2837, %v2903
        %v2968 = vadd.f32 %v2838, %v2904
        %v2969 = vadd.f32 %v2839, %v2905
        %v2970 = vadd.f32 %v2840, %v2906
        %v2971 = vadd.f32 %v2841, %v2907
        %v2972 = vadd.f32 %v2842, %v2908
        %v2973 = vsub.f32 %v2521, %v2713
        %v2974 = vsub.f32 %v2522, %v2714
        %v2975 = vsub.f32 %v2523, %v2715
        %v2976 = vsub.f32 %v2524, %v2716
        %v2977 = vsub.f32 %v2525, %v2717
        %v2978 = vsub.f32 %v2526, %v2718
        %v2979 = vsub.f32 %v2527, %v2719
        %v2980 = vsub.f32 %v2528, %v2720
        %v2981 = vsub.f32 %v2529, %v2721
        %v2982 = vsub.f32 %v2530, %v2722
        %v2983 = vsub.f32 %v2531, %v2723
        %v2984 = vsub.f32 %v2532, %v2724
        %v2985 = vsub.f32 %v2533, %v2725
        %v2986 = vsub.f32 %v2534, %v2726
        %v2987 = vsub.f32 %v2535, %v2727
        %v2988 = vsub.f32 %v2536, %v2728
        %v2989 = vsub.f32 %v2537, %v2729
        %v2990 = vsub.f32 %v2538, %v2730
        %v2991 = vsub.f32 %v2539, %v2731
        %v2992 = vsub.f32 %v2540, %v2732
        %v2993 = vsub.f32 %v2541, %v2733
        %v2994 = vsub.f32 %v2542, %v2734
        %v2995 = vsub.f32 %v2543, %v2735
        %v2996 = vsub.f32 %v2544, %v2736
        %v2997 = vsub.f32 %v2545, %v2737
        %v2998 = vsub.f32 %v2546, %v2738
        %v2999 = vsub.f32 %v2547, %v2739
        %v3000 = vsub.f32 %v2548, %v2740
        %v3001 = vsub.f32 %v2549, %v2741
        %v3002 = vsub.f32 %v2550, %v2742
        %v3003 = vsub.f32 %v2551, %v2743
        %v3004 = vsub.f32 %v2552, %v2744
        %v3005 = vsub.f32 %v2553, %v2745
        %v3006 = vsub.f32 %v2554, %v2746
        %v3007 = vsub.f32 %v2555, %v2747
        %v3008 = vsub.f32 %v2556, %v2748
        %v3009 = vsub.f32 %v2557, %v2749
        %v3010 = vsub.f32 %v2558, %v2750
        %v3011 = vsub.f32 %v2559, %v2751
        %v3012 = vsub.f32 %v2560, %v2752
        %v3013 = vsub.f32 %v2561, %v2753
        %v3014 = vsub.f32 %v2562, %v2754
        %v3015 = vsub.f32 %v2563, %v2755
        %v3016 = vsub.f32 %v2564, %v2756
        %v3017 = vsub.f32 %v2565, %v2757
        %v3018 = vsub.f32 %v2566, %v2758
        %v3019 = vsub.f32 %v2567, %v2759
        %v3020 = vsub.f32 %v2568, %v2760
        %v3021 = vsub.f32 %v2569, %v2761
        %v3022 = vsub.f32 %v2570, %v2762
        %v3023 = vsub.f32 %v2571, %v2763
        %v3024 = vsub.f32 %v2572, %v2764
        %v3025 = vsub.f32 %v2573, %v2765
        %v3026 = vsub.f32 %v2574, %v2766
        %v3027 = vsub.f32 %v2575, %v2767
        %v3028 = vsub.f32 %v2576, %v2768
        %v3029 = vsub.f32 %v2577, %v2769
        %v3030 = vsub.f32 %v2578, %v2770
        %v3031 = vsub.f32 %v2579, %v2771
        %v3032 = vsub.f32 %v2580, %v2772
        %v3033 = vsub.f32 %v2581, %v2773
        %v3034 = vsub.f32 %v2582, %v2774
        %v3035 = vsub.f32 %v2583, %v2775
        %v3036 = vsub.f32 %v2584, %v2776
        %3101 = vrot.lane.b32.xlu0 %v2075, 1
        %v3102 = vpop.permute.xlu0 %3101
        %3103 = vrot.lane.b32.xlu0 %v2078, 1
        %v3104 = vpop.permute.xlu0 %3103
        %3105 = vrot.lane.b32.xlu0 %v2083, 1
        %v3106 = vpop.permute.xlu0 %3105
        %3107 = vrot.lane.b32.xlu0 %v2086, 1
        %v3108 = vpop.permute.xlu0 %3107
        %3109 = vrot.lane.b32.xlu0 %v2091, 1
        %v3110 = vpop.permute.xlu0 %3109
        %3111 = vrot.lane.b32.xlu0 %v2094, 1
        %v3112 = vpop.permute.xlu0 %3111
        %3113 = vrot.lane.b32.xlu0 %v2099, 1
        %v3114 = vpop.permute.xlu0 %3113
        %3115 = vrot.lane.b32.xlu0 %v2102, 1
        %v3116 = vpop.permute.xlu0 %3115
        %3117 = vrot.lane.b32.xlu0 %v2107, 1
        %v3118 = vpop.permute.xlu0 %3117
        %3119 = vrot.lane.b32.xlu0 %v2110, 1
        %v3120 = vpop.permute.xlu0 %3119
        %3121 = vrot.lane.b32.xlu0 %v2115, 1
        %v3122 = vpop.permute.xlu0 %3121
        %3123 = vrot.lane.b32.xlu0 %v2118, 1
        %v3124 = vpop.permute.xlu0 %3123
        %3125 = vrot.lane.b32.xlu0 %v2123, 1
        %v3126 = vpop.permute.xlu0 %3125
        %3127 = vrot.lane.b32.xlu0 %v2126, 1
        %v3128 = vpop.permute.xlu0 %3127
        %3129 = vrot.lane.b32.xlu0 %v2131, 1
        %v3130 = vpop.permute.xlu0 %3129
        %3131 = vrot.lane.b32.xlu0 %v2134, 1
        %v3132 = vpop.permute.xlu0 %3131
        %3133 = vrot.lane.b32.xlu0 %v2139, 1
        %v3134 = vpop.permute.xlu0 %3133
        %3135 = vrot.lane.b32.xlu0 %v2142, 1
        %v3136 = vpop.permute.xlu0 %3135
        %3137 = vrot.lane.b32.xlu0 %v2147, 1
        %v3138 = vpop.permute.xlu0 %3137
        %3139 = vrot.lane.b32.xlu0 %v2150, 1
        %v3140 = vpop.permute.xlu0 %3139
        %3141 = vrot.lane.b32.xlu0 %v2155, 1
        %v3142 = vpop.permute.xlu0 %3141
        %3143 = vrot.lane.b32.xlu0 %v2158, 1
        %v3144 = vpop.permute.xlu0 %3143
        %3145 = vrot.lane.b32.xlu0 %v2163, 1
        %v3146 = vpop.permute.xlu0 %3145
        %3147 = vrot.lane.b32.xlu0 %v2166, 1
        %v3148 = vpop.permute.xlu0 %3147
        %3149 = vrot.lane.b32.xlu0 %v2171, 1
        %v3150 = vpop.permute.xlu0 %3149
        %3151 = vrot.lane.b32.xlu0 %v2174, 1
        %v3152 = vpop.permute.xlu0 %3151
        %3153 = vrot.lane.b32.xlu0 %v2179, 1
        %v3154 = vpop.permute.xlu0 %3153
        %3155 = vrot.lane.b32.xlu0 %v2182, 1
        %v3156 = vpop.permute.xlu0 %3155
        %3157 = vrot.lane.b32.xlu0 %v2187, 1
        %v3158 = vpop.permute.xlu0 %3157
        %3159 = vrot.lane.b32.xlu0 %v2190, 1
        %v3160 = vpop.permute.xlu0 %3159
        %3161 = vrot.lane.b32.xlu0 %v2195, 1
        %v3162 = vpop.permute.xlu0 %3161
        %3163 = vrot.lane.b32.xlu0 %v2198, 1
        %v3164 = vpop.permute.xlu0 %3163
        %3165 = vrot.lane.b32.xlu0 %v2203, 1
        %v3166 = vpop.permute.xlu0 %3165
        %3167 = vrot.lane.b32.xlu0 %v2206, 1
        %v3168 = vpop.permute.xlu0 %3167
        %3169 = vrot.lane.b32.xlu0 %v2211, 1
        %v3170 = vpop.permute.xlu0 %3169
        %3171 = vrot.lane.b32.xlu0 %v2214, 1
        %v3172 = vpop.permute.xlu0 %3171
        %3173 = vrot.lane.b32.xlu0 %v2219, 1
        %v3174 = vpop.permute.xlu0 %3173
        %3175 = vrot.lane.b32.xlu0 %v2222, 1
        %v3176 = vpop.permute.xlu0 %3175
        %3177 = vrot.lane.b32.xlu0 %v2227, 1
        %v3178 = vpop.permute.xlu0 %3177
        %3179 = vrot.lane.b32.xlu0 %v2230, 1
        %v3180 = vpop.permute.xlu0 %3179
        %3181 = vrot.lane.b32.xlu0 %v2235, 1
        %v3182 = vpop.permute.xlu0 %3181
        %3183 = vrot.lane.b32.xlu0 %v2238, 1
        %v3184 = vpop.permute.xlu0 %3183
        %3185 = vrot.lane.b32.xlu0 %v2243, 1
        %v3186 = vpop.permute.xlu0 %3185
        %3187 = vrot.lane.b32.xlu0 %v2246, 1
        %v3188 = vpop.permute.xlu0 %3187
        %3189 = vrot.lane.b32.xlu0 %v2251, 1
        %v3190 = vpop.permute.xlu0 %3189
        %3191 = vrot.lane.b32.xlu0 %v2254, 1
        %v3192 = vpop.permute.xlu0 %3191
        %3193 = vrot.lane.b32.xlu0 %v2259, 1
        %v3194 = vpop.permute.xlu0 %3193
        %3195 = vrot.lane.b32.xlu0 %v2262, 1
        %v3196 = vpop.permute.xlu0 %3195
        %3197 = vrot.lane.b32.xlu0 %v2267, 1
        %v3198 = vpop.permute.xlu0 %3197
        %3199 = vrot.lane.b32.xlu0 %v2270, 1
        %v3200 = vpop.permute.xlu0 %3199
        %3201 = vrot.lane.b32.xlu0 %v2275, 1
        %v3202 = vpop.permute.xlu0 %3201
        %3203 = vrot.lane.b32.xlu0 %v2278, 1
        %v3204 = vpop.permute.xlu0 %3203
        %3205 = vrot.lane.b32.xlu0 %v2283, 1
        %v3206 = vpop.permute.xlu0 %3205
        %3207 = vrot.lane.b32.xlu0 %v2286, 1
        %v3208 = vpop.permute.xlu0 %3207
        %3209 = vrot.lane.b32.xlu0 %v2291, 1
        %v3210 = vpop.permute.xlu0 %3209
        %3211 = vrot.lane.b32.xlu0 %v2294, 1
        %v3212 = vpop.permute.xlu0 %3211
        %3213 = vrot.lane.b32.xlu0 %v2299, 1
        %v3214 = vpop.permute.xlu0 %3213
        %3215 = vrot.lane.b32.xlu0 %v2302, 1
        %v3216 = vpop.permute.xlu0 %3215
        %3217 = vrot.lane.b32.xlu0 %v2307, 1
        %v3218 = vpop.permute.xlu0 %3217
        %3219 = vrot.lane.b32.xlu0 %v2310, 1
        %v3220 = vpop.permute.xlu0 %3219
        %3221 = vrot.lane.b32.xlu0 %v2315, 1
        %v3222 = vpop.permute.xlu0 %3221
        %3223 = vrot.lane.b32.xlu0 %v2318, 1
        %v3224 = vpop.permute.xlu0 %3223
        %3225 = vrot.lane.b32.xlu0 %v2323, 1
        %v3226 = vpop.permute.xlu0 %3225
        %3227 = vrot.lane.b32.xlu0 %v2326, 1
        %v3228 = vpop.permute.xlu0 %3227
        %v3293 = vsub.f32 %v2075, %v3102
        %v3294 = vsub.f32 %v2078, %v3104
        %v3295 = vsub.f32 %v2083, %v3106
        %v3296 = vsub.f32 %v2086, %v3108
        %v3297 = vsub.f32 %v2091, %v3110
        %v3298 = vsub.f32 %v2094, %v3112
        %v3299 = vsub.f32 %v2099, %v3114
        %v3300 = vsub.f32 %v2102, %v3116
        %v3301 = vsub.f32 %v2107, %v3118
        %v3302 = vsub.f32 %v2110, %v3120
        %v3303 = vsub.f32 %v2115, %v3122
        %v3304 = vsub.f32 %v2118, %v3124
        %v3305 = vsub.f32 %v2123, %v3126
        %v3306 = vsub.f32 %v2126, %v3128
        %v3307 = vsub.f32 %v2131, %v3130
        %v3308 = vsub.f32 %v2134, %v3132
        %v3309 = vsub.f32 %v2139, %v3134
        %v3310 = vsub.f32 %v2142, %v3136
        %v3311 = vsub.f32 %v2147, %v3138
        %v3312 = vsub.f32 %v2150, %v3140
        %v3313 = vsub.f32 %v2155, %v3142
        %v3314 = vsub.f32 %v2158, %v3144
        %v3315 = vsub.f32 %v2163, %v3146
        %v3316 = vsub.f32 %v2166, %v3148
        %v3317 = vsub.f32 %v2171, %v3150
        %v3318 = vsub.f32 %v2174, %v3152
        %v3319 = vsub.f32 %v2179, %v3154
        %v3320 = vsub.f32 %v2182, %v3156
        %v3321 = vsub.f32 %v2187, %v3158
        %v3322 = vsub.f32 %v2190, %v3160
        %v3323 = vsub.f32 %v2195, %v3162
        %v3324 = vsub.f32 %v2198, %v3164
        %v3325 = vsub.f32 %v2203, %v3166
        %v3326 = vsub.f32 %v2206, %v3168
        %v3327 = vsub.f32 %v2211, %v3170
        %v3328 = vsub.f32 %v2214, %v3172
        %v3329 = vsub.f32 %v2219, %v3174
        %v3330 = vsub.f32 %v2222, %v3176
        %v3331 = vsub.f32 %v2227, %v3178
        %v3332 = vsub.f32 %v2230, %v3180
        %v3333 = vsub.f32 %v2235, %v3182
        %v3334 = vsub.f32 %v2238, %v3184
        %v3335 = vsub.f32 %v2243, %v3186
        %v3336 = vsub.f32 %v2246, %v3188
        %v3337 = vsub.f32 %v2251, %v3190
        %v3338 = vsub.f32 %v2254, %v3192
        %v3339 = vsub.f32 %v2259, %v3194
        %v3340 = vsub.f32 %v2262, %v3196
        %v3341 = vsub.f32 %v2267, %v3198
        %v3342 = vsub.f32 %v2270, %v3200
        %v3343 = vsub.f32 %v2275, %v3202
        %v3344 = vsub.f32 %v2278, %v3204
        %v3345 = vsub.f32 %v2283, %v3206
        %v3346 = vsub.f32 %v2286, %v3208
        %v3347 = vsub.f32 %v2291, %v3210
        %v3348 = vsub.f32 %v2294, %v3212
        %v3349 = vsub.f32 %v2299, %v3214
        %v3350 = vsub.f32 %v2302, %v3216
        %v3351 = vsub.f32 %v2307, %v3218
        %v3352 = vsub.f32 %v2310, %v3220
        %v3353 = vsub.f32 %v2315, %v3222
        %v3354 = vsub.f32 %v2318, %v3224
        %v3355 = vsub.f32 %v2323, %v3226
        %v3356 = vsub.f32 %v2326, %v3228
        %3421 = vrot.lane.b32.xlu0 %v3293, 127
        %v3422 = vpop.permute.xlu0 %3421
        %3423 = vrot.lane.b32.xlu0 %v3294, 127
        %v3424 = vpop.permute.xlu0 %3423
        %3425 = vrot.lane.b32.xlu0 %v3295, 127
        %v3426 = vpop.permute.xlu0 %3425
        %3427 = vrot.lane.b32.xlu0 %v3296, 127
        %v3428 = vpop.permute.xlu0 %3427
        %3429 = vrot.lane.b32.xlu0 %v3297, 127
        %v3430 = vpop.permute.xlu0 %3429
        %3431 = vrot.lane.b32.xlu0 %v3298, 127
        %v3432 = vpop.permute.xlu0 %3431
        %3433 = vrot.lane.b32.xlu0 %v3299, 127
        %v3434 = vpop.permute.xlu0 %3433
        %3435 = vrot.lane.b32.xlu0 %v3300, 127
        %v3436 = vpop.permute.xlu0 %3435
        %3437 = vrot.lane.b32.xlu0 %v3301, 127
        %v3438 = vpop.permute.xlu0 %3437
        %3439 = vrot.lane.b32.xlu0 %v3302, 127
        %v3440 = vpop.permute.xlu0 %3439
        %3441 = vrot.lane.b32.xlu0 %v3303, 127
        %v3442 = vpop.permute.xlu0 %3441
        %3443 = vrot.lane.b32.xlu0 %v3304, 127
        %v3444 = vpop.permute.xlu0 %3443
        %3445 = vrot.lane.b32.xlu0 %v3305, 127
        %v3446 = vpop.permute.xlu0 %3445
        %3447 = vrot.lane.b32.xlu0 %v3306, 127
        %v3448 = vpop.permute.xlu0 %3447
        %3449 = vrot.lane.b32.xlu0 %v3307, 127
        %v3450 = vpop.permute.xlu0 %3449
        %3451 = vrot.lane.b32.xlu0 %v3308, 127
        %v3452 = vpop.permute.xlu0 %3451
        %3453 = vrot.lane.b32.xlu0 %v3309, 127
        %v3454 = vpop.permute.xlu0 %3453
        %3455 = vrot.lane.b32.xlu0 %v3310, 127
        %v3456 = vpop.permute.xlu0 %3455
        %3457 = vrot.lane.b32.xlu0 %v3311, 127
        %v3458 = vpop.permute.xlu0 %3457
        %3459 = vrot.lane.b32.xlu0 %v3312, 127
        %v3460 = vpop.permute.xlu0 %3459
        %3461 = vrot.lane.b32.xlu0 %v3313, 127
        %v3462 = vpop.permute.xlu0 %3461
        %3463 = vrot.lane.b32.xlu0 %v3314, 127
        %v3464 = vpop.permute.xlu0 %3463
        %3465 = vrot.lane.b32.xlu0 %v3315, 127
        %v3466 = vpop.permute.xlu0 %3465
        %3467 = vrot.lane.b32.xlu0 %v3316, 127
        %v3468 = vpop.permute.xlu0 %3467
        %3469 = vrot.lane.b32.xlu0 %v3317, 127
        %v3470 = vpop.permute.xlu0 %3469
        %3471 = vrot.lane.b32.xlu0 %v3318, 127
        %v3472 = vpop.permute.xlu0 %3471
        %3473 = vrot.lane.b32.xlu0 %v3319, 127
        %v3474 = vpop.permute.xlu0 %3473
        %3475 = vrot.lane.b32.xlu0 %v3320, 127
        %v3476 = vpop.permute.xlu0 %3475
        %3477 = vrot.lane.b32.xlu0 %v3321, 127
        %v3478 = vpop.permute.xlu0 %3477
        %3479 = vrot.lane.b32.xlu0 %v3322, 127
        %v3480 = vpop.permute.xlu0 %3479
        %3481 = vrot.lane.b32.xlu0 %v3323, 127
        %v3482 = vpop.permute.xlu0 %3481
        %3483 = vrot.lane.b32.xlu0 %v3324, 127
        %v3484 = vpop.permute.xlu0 %3483
        %3485 = vrot.lane.b32.xlu0 %v3325, 127
        %v3486 = vpop.permute.xlu0 %3485
        %3487 = vrot.lane.b32.xlu0 %v3326, 127
        %v3488 = vpop.permute.xlu0 %3487
        %3489 = vrot.lane.b32.xlu0 %v3327, 127
        %v3490 = vpop.permute.xlu0 %3489
        %3491 = vrot.lane.b32.xlu0 %v3328, 127
        %v3492 = vpop.permute.xlu0 %3491
        %3493 = vrot.lane.b32.xlu0 %v3329, 127
        %v3494 = vpop.permute.xlu0 %3493
        %3495 = vrot.lane.b32.xlu0 %v3330, 127
        %v3496 = vpop.permute.xlu0 %3495
        %3497 = vrot.lane.b32.xlu0 %v3331, 127
        %v3498 = vpop.permute.xlu0 %3497
        %3499 = vrot.lane.b32.xlu0 %v3332, 127
        %v3500 = vpop.permute.xlu0 %3499
        %3501 = vrot.lane.b32.xlu0 %v3333, 127
        %v3502 = vpop.permute.xlu0 %3501
        %3503 = vrot.lane.b32.xlu0 %v3334, 127
        %v3504 = vpop.permute.xlu0 %3503
        %3505 = vrot.lane.b32.xlu0 %v3335, 127
        %v3506 = vpop.permute.xlu0 %3505
        %3507 = vrot.lane.b32.xlu0 %v3336, 127
        %v3508 = vpop.permute.xlu0 %3507
        %3509 = vrot.lane.b32.xlu0 %v3337, 127
        %v3510 = vpop.permute.xlu0 %3509
        %3511 = vrot.lane.b32.xlu0 %v3338, 127
        %v3512 = vpop.permute.xlu0 %3511
        %3513 = vrot.lane.b32.xlu0 %v3339, 127
        %v3514 = vpop.permute.xlu0 %3513
        %3515 = vrot.lane.b32.xlu0 %v3340, 127
        %v3516 = vpop.permute.xlu0 %3515
        %3517 = vrot.lane.b32.xlu0 %v3341, 127
        %v3518 = vpop.permute.xlu0 %3517
        %3519 = vrot.lane.b32.xlu0 %v3342, 127
        %v3520 = vpop.permute.xlu0 %3519
        %3521 = vrot.lane.b32.xlu0 %v3343, 127
        %v3522 = vpop.permute.xlu0 %3521
        %3523 = vrot.lane.b32.xlu0 %v3344, 127
        %v3524 = vpop.permute.xlu0 %3523
        %3525 = vrot.lane.b32.xlu0 %v3345, 127
        %v3526 = vpop.permute.xlu0 %3525
        %3527 = vrot.lane.b32.xlu0 %v3346, 127
        %v3528 = vpop.permute.xlu0 %3527
        %3529 = vrot.lane.b32.xlu0 %v3347, 127
        %v3530 = vpop.permute.xlu0 %3529
        %3531 = vrot.lane.b32.xlu0 %v3348, 127
        %v3532 = vpop.permute.xlu0 %3531
        %3533 = vrot.lane.b32.xlu0 %v3349, 127
        %v3534 = vpop.permute.xlu0 %3533
        %3535 = vrot.lane.b32.xlu0 %v3350, 127
        %v3536 = vpop.permute.xlu0 %3535
        %3537 = vrot.lane.b32.xlu0 %v3351, 127
        %v3538 = vpop.permute.xlu0 %3537
        %3539 = vrot.lane.b32.xlu0 %v3352, 127
        %v3540 = vpop.permute.xlu0 %3539
        %3541 = vrot.lane.b32.xlu0 %v3353, 127
        %v3542 = vpop.permute.xlu0 %3541
        %3543 = vrot.lane.b32.xlu0 %v3354, 127
        %v3544 = vpop.permute.xlu0 %3543
        %3545 = vrot.lane.b32.xlu0 %v3355, 127
        %v3546 = vpop.permute.xlu0 %3545
        %3547 = vrot.lane.b32.xlu0 %v3356, 127
        %v3548 = vpop.permute.xlu0 %3547
        %v3613 = vmul.f32 %v2973, %v3422
        %v3614 = vmul.f32 %v2974, %v3424
        %v3615 = vmul.f32 %v2975, %v3426
        %v3616 = vmul.f32 %v2976, %v3428
        %v3617 = vmul.f32 %v2977, %v3430
        %v3618 = vmul.f32 %v2978, %v3432
        %v3619 = vmul.f32 %v2979, %v3434
        %v3620 = vmul.f32 %v2980, %v3436
        %v3621 = vmul.f32 %v2981, %v3438
        %v3622 = vmul.f32 %v2982, %v3440
        %v3623 = vmul.f32 %v2983, %v3442
        %v3624 = vmul.f32 %v2984, %v3444
        %v3625 = vmul.f32 %v2985, %v3446
        %v3626 = vmul.f32 %v2986, %v3448
        %v3627 = vmul.f32 %v2987, %v3450
        %v3628 = vmul.f32 %v2988, %v3452
        %v3629 = vmul.f32 %v2989, %v3454
        %v3630 = vmul.f32 %v2990, %v3456
        %v3631 = vmul.f32 %v2991, %v3458
        %v3632 = vmul.f32 %v2992, %v3460
        %v3633 = vmul.f32 %v2993, %v3462
        %v3634 = vmul.f32 %v2994, %v3464
        %v3635 = vmul.f32 %v2995, %v3466
        %v3636 = vmul.f32 %v2996, %v3468
        %v3637 = vmul.f32 %v2997, %v3470
        %v3638 = vmul.f32 %v2998, %v3472
        %v3639 = vmul.f32 %v2999, %v3474
        %v3640 = vmul.f32 %v3000, %v3476
        %v3641 = vmul.f32 %v3001, %v3478
        %v3642 = vmul.f32 %v3002, %v3480
        %v3643 = vmul.f32 %v3003, %v3482
        %v3644 = vmul.f32 %v3004, %v3484
        %v3645 = vmul.f32 %v3005, %v3486
        %v3646 = vmul.f32 %v3006, %v3488
        %v3647 = vmul.f32 %v3007, %v3490
        %v3648 = vmul.f32 %v3008, %v3492
        %v3649 = vmul.f32 %v3009, %v3494
        %v3650 = vmul.f32 %v3010, %v3496
        %v3651 = vmul.f32 %v3011, %v3498
        %v3652 = vmul.f32 %v3012, %v3500
        %v3653 = vmul.f32 %v3013, %v3502
        %v3654 = vmul.f32 %v3014, %v3504
        %v3655 = vmul.f32 %v3015, %v3506
        %v3656 = vmul.f32 %v3016, %v3508
        %v3657 = vmul.f32 %v3017, %v3510
        %v3658 = vmul.f32 %v3018, %v3512
        %v3659 = vmul.f32 %v3019, %v3514
        %v3660 = vmul.f32 %v3020, %v3516
        %v3661 = vmul.f32 %v3021, %v3518
        %v3662 = vmul.f32 %v3022, %v3520
        %v3663 = vmul.f32 %v3023, %v3522
        %v3664 = vmul.f32 %v3024, %v3524
        %v3665 = vmul.f32 %v3025, %v3526
        %v3666 = vmul.f32 %v3026, %v3528
        %v3667 = vmul.f32 %v3027, %v3530
        %v3668 = vmul.f32 %v3028, %v3532
        %v3669 = vmul.f32 %v3029, %v3534
        %v3670 = vmul.f32 %v3030, %v3536
        %v3671 = vmul.f32 %v3031, %v3538
        %v3672 = vmul.f32 %v3032, %v3540
        %v3673 = vmul.f32 %v3033, %v3542
        %v3674 = vmul.f32 %v3034, %v3544
        %v3675 = vmul.f32 %v3035, %v3546
        %v3676 = vmul.f32 %v3036, %v3548
        %v3677 = vmax.f32 %v3613, 0.0
        %v3678 = vmax.f32 %v3614, 0.0
        %v3679 = vmax.f32 %v3615, 0.0
        %v3680 = vmax.f32 %v3616, 0.0
        %v3681 = vmax.f32 %v3617, 0.0
        %v3682 = vmax.f32 %v3618, 0.0
        %v3683 = vmax.f32 %v3619, 0.0
        %v3684 = vmax.f32 %v3620, 0.0
        %v3685 = vmax.f32 %v3621, 0.0
        %v3686 = vmax.f32 %v3622, 0.0
        %v3687 = vmax.f32 %v3623, 0.0
        %v3688 = vmax.f32 %v3624, 0.0
        %v3689 = vmax.f32 %v3625, 0.0
        %v3690 = vmax.f32 %v3626, 0.0
        %v3691 = vmax.f32 %v3627, 0.0
        %v3692 = vmax.f32 %v3628, 0.0
        %v3693 = vmax.f32 %v3629, 0.0
        %v3694 = vmax.f32 %v3630, 0.0
        %v3695 = vmax.f32 %v3631, 0.0
        %v3696 = vmax.f32 %v3632, 0.0
        %v3697 = vmax.f32 %v3633, 0.0
        %v3698 = vmax.f32 %v3634, 0.0
        %v3699 = vmax.f32 %v3635, 0.0
        %v3700 = vmax.f32 %v3636, 0.0
        %v3701 = vmax.f32 %v3637, 0.0
        %v3702 = vmax.f32 %v3638, 0.0
        %v3703 = vmax.f32 %v3639, 0.0
        %v3704 = vmax.f32 %v3640, 0.0
        %v3705 = vmax.f32 %v3641, 0.0
        %v3706 = vmax.f32 %v3642, 0.0
        %v3707 = vmax.f32 %v3643, 0.0
        %v3708 = vmax.f32 %v3644, 0.0
        %v3709 = vmax.f32 %v3645, 0.0
        %v3710 = vmax.f32 %v3646, 0.0
        %v3711 = vmax.f32 %v3647, 0.0
        %v3712 = vmax.f32 %v3648, 0.0
        %v3713 = vmax.f32 %v3649, 0.0
        %v3714 = vmax.f32 %v3650, 0.0
        %v3715 = vmax.f32 %v3651, 0.0
        %v3716 = vmax.f32 %v3652, 0.0
        %v3717 = vmax.f32 %v3653, 0.0
        %v3718 = vmax.f32 %v3654, 0.0
        %v3719 = vmax.f32 %v3655, 0.0
        %v3720 = vmax.f32 %v3656, 0.0
        %v3721 = vmax.f32 %v3657, 0.0
        %v3722 = vmax.f32 %v3658, 0.0
        %v3723 = vmax.f32 %v3659, 0.0
        %v3724 = vmax.f32 %v3660, 0.0
        %v3725 = vmax.f32 %v3661, 0.0
        %v3726 = vmax.f32 %v3662, 0.0
        %v3727 = vmax.f32 %v3663, 0.0
        %v3728 = vmax.f32 %v3664, 0.0
        %v3729 = vmax.f32 %v3665, 0.0
        %v3730 = vmax.f32 %v3666, 0.0
        %v3731 = vmax.f32 %v3667, 0.0
        %v3732 = vmax.f32 %v3668, 0.0
        %v3733 = vmax.f32 %v3669, 0.0
        %v3734 = vmax.f32 %v3670, 0.0
        %v3735 = vmax.f32 %v3671, 0.0
        %v3736 = vmax.f32 %v3672, 0.0
        %v3737 = vmax.f32 %v3673, 0.0
        %v3738 = vmax.f32 %v3674, 0.0
        %v3739 = vmax.f32 %v3675, 0.0
        %v3740 = vmax.f32 %v3676, 0.0
        %v3741 = vand.u32 2147483647, %v3613
        %v3742 = vand.u32 2147483647, %v3614
        %v3743 = vand.u32 2147483647, %v3615
        %v3744 = vand.u32 2147483647, %v3616
        %v3745 = vand.u32 2147483647, %v3617
        %v3746 = vand.u32 2147483647, %v3618
        %v3747 = vand.u32 2147483647, %v3619
        %v3748 = vand.u32 2147483647, %v3620
        %v3749 = vand.u32 2147483647, %v3621
        %v3750 = vand.u32 2147483647, %v3622
        %v3751 = vand.u32 2147483647, %v3623
        %v3752 = vand.u32 2147483647, %v3624
        %v3753 = vand.u32 2147483647, %v3625
        %v3754 = vand.u32 2147483647, %v3626
        %v3755 = vand.u32 2147483647, %v3627
        %v3756 = vand.u32 2147483647, %v3628
        %v3757 = vand.u32 2147483647, %v3629
        %v3758 = vand.u32 2147483647, %v3630
        %v3759 = vand.u32 2147483647, %v3631
        %v3760 = vand.u32 2147483647, %v3632
        %v3761 = vand.u32 2147483647, %v3633
        %v3762 = vand.u32 2147483647, %v3634
        %v3763 = vand.u32 2147483647, %v3635
        %v3764 = vand.u32 2147483647, %v3636
        %v3765 = vand.u32 2147483647, %v3637
        %v3766 = vand.u32 2147483647, %v3638
        %v3767 = vand.u32 2147483647, %v3639
        %v3768 = vand.u32 2147483647, %v3640
        %v3769 = vand.u32 2147483647, %v3641
        %v3770 = vand.u32 2147483647, %v3642
        %v3771 = vand.u32 2147483647, %v3643
        %v3772 = vand.u32 2147483647, %v3644
        %v3773 = vand.u32 2147483647, %v3645
        %v3774 = vand.u32 2147483647, %v3646
        %v3775 = vand.u32 2147483647, %v3647
        %v3776 = vand.u32 2147483647, %v3648
        %v3777 = vand.u32 2147483647, %v3649
        %v3778 = vand.u32 2147483647, %v3650
        %v3779 = vand.u32 2147483647, %v3651
        %v3780 = vand.u32 2147483647, %v3652
        %v3781 = vand.u32 2147483647, %v3653
        %v3782 = vand.u32 2147483647, %v3654
        %v3783 = vand.u32 2147483647, %v3655
        %v3784 = vand.u32 2147483647, %v3656
        %v3785 = vand.u32 2147483647, %v3657
        %v3786 = vand.u32 2147483647, %v3658
        %v3787 = vand.u32 2147483647, %v3659
        %v3788 = vand.u32 2147483647, %v3660
        %v3789 = vand.u32 2147483647, %v3661
        %v3790 = vand.u32 2147483647, %v3662
        %v3791 = vand.u32 2147483647, %v3663
        %v3792 = vand.u32 2147483647, %v3664
        %v3793 = vand.u32 2147483647, %v3665
        %v3794 = vand.u32 2147483647, %v3666
        %v3795 = vand.u32 2147483647, %v3667
        %v3796 = vand.u32 2147483647, %v3668
        %v3797 = vand.u32 2147483647, %v3669
        %v3798 = vand.u32 2147483647, %v3670
        %v3799 = vand.u32 2147483647, %v3671
        %v3800 = vand.u32 2147483647, %v3672
        %v3801 = vand.u32 2147483647, %v3673
        %v3802 = vand.u32 2147483647, %v3674
        %v3803 = vand.u32 2147483647, %v3675
        %v3804 = vand.u32 2147483647, %v3676
        %v3805 = vsub.f32 0.0, %v3741
        %v3806 = vsub.f32 0.0, %v3742
        %v3807 = vsub.f32 0.0, %v3743
        %v3808 = vsub.f32 0.0, %v3744
        %v3809 = vsub.f32 0.0, %v3745
        %v3810 = vsub.f32 0.0, %v3746
        %v3811 = vsub.f32 0.0, %v3747
        %v3812 = vsub.f32 0.0, %v3748
        %v3813 = vsub.f32 0.0, %v3749
        %v3814 = vsub.f32 0.0, %v3750
        %v3815 = vsub.f32 0.0, %v3751
        %v3816 = vsub.f32 0.0, %v3752
        %v3817 = vsub.f32 0.0, %v3753
        %v3818 = vsub.f32 0.0, %v3754
        %v3819 = vsub.f32 0.0, %v3755
        %v3820 = vsub.f32 0.0, %v3756
        %v3821 = vsub.f32 0.0, %v3757
        %v3822 = vsub.f32 0.0, %v3758
        %v3823 = vsub.f32 0.0, %v3759
        %v3824 = vsub.f32 0.0, %v3760
        %v3825 = vsub.f32 0.0, %v3761
        %v3826 = vsub.f32 0.0, %v3762
        %v3827 = vsub.f32 0.0, %v3763
        %v3828 = vsub.f32 0.0, %v3764
        %v3829 = vsub.f32 0.0, %v3765
        %v3830 = vsub.f32 0.0, %v3766
        %v3831 = vsub.f32 0.0, %v3767
        %v3832 = vsub.f32 0.0, %v3768
        %v3833 = vsub.f32 0.0, %v3769
        %v3834 = vsub.f32 0.0, %v3770
        %v3835 = vsub.f32 0.0, %v3771
        %v3836 = vsub.f32 0.0, %v3772
        %v3837 = vsub.f32 0.0, %v3773
        %v3838 = vsub.f32 0.0, %v3774
        %v3839 = vsub.f32 0.0, %v3775
        %v3840 = vsub.f32 0.0, %v3776
        %v3841 = vsub.f32 0.0, %v3777
        %v3842 = vsub.f32 0.0, %v3778
        %v3843 = vsub.f32 0.0, %v3779
        %v3844 = vsub.f32 0.0, %v3780
        %v3845 = vsub.f32 0.0, %v3781
        %v3846 = vsub.f32 0.0, %v3782
        %v3847 = vsub.f32 0.0, %v3783
        %v3848 = vsub.f32 0.0, %v3784
        %v3849 = vsub.f32 0.0, %v3785
        %v3850 = vsub.f32 0.0, %v3786
        %v3851 = vsub.f32 0.0, %v3787
        %v3852 = vsub.f32 0.0, %v3788
        %v3853 = vsub.f32 0.0, %v3789
        %v3854 = vsub.f32 0.0, %v3790
        %v3855 = vsub.f32 0.0, %v3791
        %v3856 = vsub.f32 0.0, %v3792
        %v3857 = vsub.f32 0.0, %v3793
        %v3858 = vsub.f32 0.0, %v3794
        %v3859 = vsub.f32 0.0, %v3795
        %v3860 = vsub.f32 0.0, %v3796
        %v3861 = vsub.f32 0.0, %v3797
        %v3862 = vsub.f32 0.0, %v3798
        %v3863 = vsub.f32 0.0, %v3799
        %v3864 = vsub.f32 0.0, %v3800
        %v3865 = vsub.f32 0.0, %v3801
        %v3866 = vsub.f32 0.0, %v3802
        %v3867 = vsub.f32 0.0, %v3803
        %v3868 = vsub.f32 0.0, %v3804
        %v3869 = vmul.f32 %v3805, 1.442695
        %v3870 = vpow.pop %v3869
        %v3871 = vmul.f32 %v3806, 1.442695
        %v3872 = vpow.pop %v3871
        %v3873 = vmul.f32 %v3807, 1.442695
        %v3874 = vpow.pop %v3873
        %v3875 = vmul.f32 %v3808, 1.442695
        %v3876 = vpow.pop %v3875
        %v3877 = vmul.f32 %v3809, 1.442695
        %v3878 = vpow.pop %v3877
        %v3879 = vmul.f32 %v3810, 1.442695
        %v3880 = vpow.pop %v3879
        %v3881 = vmul.f32 %v3811, 1.442695
        %v3882 = vpow.pop %v3881
        %v3883 = vmul.f32 %v3812, 1.442695
        %v3884 = vpow.pop %v3883
        %v3885 = vmul.f32 %v3813, 1.442695
        %v3886 = vpow.pop %v3885
        %v3887 = vmul.f32 %v3814, 1.442695
        %v3888 = vpow.pop %v3887
        %v3889 = vmul.f32 %v3815, 1.442695
        %v3890 = vpow.pop %v3889
        %v3891 = vmul.f32 %v3816, 1.442695
        %v3892 = vpow.pop %v3891
        %v3893 = vmul.f32 %v3817, 1.442695
        %v3894 = vpow.pop %v3893
        %v3895 = vmul.f32 %v3818, 1.442695
        %v3896 = vpow.pop %v3895
        %v3897 = vmul.f32 %v3819, 1.442695
        %v3898 = vpow.pop %v3897
        %v3899 = vmul.f32 %v3820, 1.442695
        %v3900 = vpow.pop %v3899
        %v3901 = vmul.f32 %v3821, 1.442695
        %v3902 = vpow.pop %v3901
        %v3903 = vmul.f32 %v3822, 1.442695
        %v3904 = vpow.pop %v3903
        %v3905 = vmul.f32 %v3823, 1.442695
        %v3906 = vpow.pop %v3905
        %v3907 = vmul.f32 %v3824, 1.442695
        %v3908 = vpow.pop %v3907
        %v3909 = vmul.f32 %v3825, 1.442695
        %v3910 = vpow.pop %v3909
        %v3911 = vmul.f32 %v3826, 1.442695
        %v3912 = vpow.pop %v3911
        %v3913 = vmul.f32 %v3827, 1.442695
        %v3914 = vpow.pop %v3913
        %v3915 = vmul.f32 %v3828, 1.442695
        %v3916 = vpow.pop %v3915
        %v3917 = vmul.f32 %v3829, 1.442695
        %v3918 = vpow.pop %v3917
        %v3919 = vmul.f32 %v3830, 1.442695
        %v3920 = vpow.pop %v3919
        %v3921 = vmul.f32 %v3831, 1.442695
        %v3922 = vpow.pop %v3921
        %v3923 = vmul.f32 %v3832, 1.442695
        %v3924 = vpow.pop %v3923
        %v3925 = vmul.f32 %v3833, 1.442695
        %v3926 = vpow.pop %v3925
        %v3927 = vmul.f32 %v3834, 1.442695
        %v3928 = vpow.pop %v3927
        %v3929 = vmul.f32 %v3835, 1.442695
        %v3930 = vpow.pop %v3929
        %v3931 = vmul.f32 %v3836, 1.442695
        %v3932 = vpow.pop %v3931
        %v3933 = vmul.f32 %v3837, 1.442695
        %v3934 = vpow.pop %v3933
        %v3935 = vmul.f32 %v3838, 1.442695
        %v3936 = vpow.pop %v3935
        %v3937 = vmul.f32 %v3839, 1.442695
        %v3938 = vpow.pop %v3937
        %v3939 = vmul.f32 %v3840, 1.442695
        %v3940 = vpow.pop %v3939
        %v3941 = vmul.f32 %v3841, 1.442695
        %v3942 = vpow.pop %v3941
        %v3943 = vmul.f32 %v3842, 1.442695
        %v3944 = vpow.pop %v3943
        %v3945 = vmul.f32 %v3843, 1.442695
        %v3946 = vpow.pop %v3945
        %v3947 = vmul.f32 %v3844, 1.442695
        %v3948 = vpow.pop %v3947
        %v3949 = vmul.f32 %v3845, 1.442695
        %v3950 = vpow.pop %v3949
        %v3951 = vmul.f32 %v3846, 1.442695
        %v3952 = vpow.pop %v3951
        %v3953 = vmul.f32 %v3847, 1.442695
        %v3954 = vpow.pop %v3953
        %v3955 = vmul.f32 %v3848, 1.442695
        %v3956 = vpow.pop %v3955
        %v3957 = vmul.f32 %v3849, 1.442695
        %v3958 = vpow.pop %v3957
        %v3959 = vmul.f32 %v3850, 1.442695
        %v3960 = vpow.pop %v3959
        %v3961 = vmul.f32 %v3851, 1.442695
        %v3962 = vpow.pop %v3961
        %v3963 = vmul.f32 %v3852, 1.442695
        %v3964 = vpow.pop %v3963
        %v3965 = vmul.f32 %v3853, 1.442695
        %v3966 = vpow.pop %v3965
        %v3967 = vmul.f32 %v3854, 1.442695
        %v3968 = vpow.pop %v3967
        %v3969 = vmul.f32 %v3855, 1.442695
        %v3970 = vpow.pop %v3969
        %v3971 = vmul.f32 %v3856, 1.442695
        %v3972 = vpow.pop %v3971
        %v3973 = vmul.f32 %v3857, 1.442695
        %v3974 = vpow.pop %v3973
        %v3975 = vmul.f32 %v3858, 1.442695
        %v3976 = vpow.pop %v3975
        %v3977 = vmul.f32 %v3859, 1.442695
        %v3978 = vpow.pop %v3977
        %v3979 = vmul.f32 %v3860, 1.442695
        %v3980 = vpow.pop %v3979
        %v3981 = vmul.f32 %v3861, 1.442695
        %v3982 = vpow.pop %v3981
        %v3983 = vmul.f32 %v3862, 1.442695
        %v3984 = vpow.pop %v3983
        %v3985 = vmul.f32 %v3863, 1.442695
        %v3986 = vpow.pop %v3985
        %v3987 = vmul.f32 %v3864, 1.442695
        %v3988 = vpow.pop %v3987
        %v3989 = vmul.f32 %v3865, 1.442695
        %v3990 = vpow.pop %v3989
        %v3991 = vmul.f32 %v3866, 1.442695
        %v3992 = vpow.pop %v3991
        %v3993 = vmul.f32 %v3867, 1.442695
        %v3994 = vpow.pop %v3993
        %v3995 = vmul.f32 %v3868, 1.442695
        %v3996 = vpow.pop %v3995
        %v3997 = vadd.f32 %v3870, 1.0
        %v3998 = vadd.f32 %v3872, 1.0
        %v3999 = vadd.f32 %v3874, 1.0
        %v4000 = vadd.f32 %v3876, 1.0
        %v4001 = vadd.f32 %v3878, 1.0
        %v4002 = vadd.f32 %v3880, 1.0
        %v4003 = vadd.f32 %v3882, 1.0
        %v4004 = vadd.f32 %v3884, 1.0
        %v4005 = vadd.f32 %v3886, 1.0
        %v4006 = vadd.f32 %v3888, 1.0
        %v4007 = vadd.f32 %v3890, 1.0
        %v4008 = vadd.f32 %v3892, 1.0
        %v4009 = vadd.f32 %v3894, 1.0
        %v4010 = vadd.f32 %v3896, 1.0
        %v4011 = vadd.f32 %v3898, 1.0
        %v4012 = vadd.f32 %v3900, 1.0
        %v4013 = vadd.f32 %v3902, 1.0
        %v4014 = vadd.f32 %v3904, 1.0
        %v4015 = vadd.f32 %v3906, 1.0
        %v4016 = vadd.f32 %v3908, 1.0
        %v4017 = vadd.f32 %v3910, 1.0
        %v4018 = vadd.f32 %v3912, 1.0
        %v4019 = vadd.f32 %v3914, 1.0
        %v4020 = vadd.f32 %v3916, 1.0
        %v4021 = vadd.f32 %v3918, 1.0
        %v4022 = vadd.f32 %v3920, 1.0
        %v4023 = vadd.f32 %v3922, 1.0
        %v4024 = vadd.f32 %v3924, 1.0
        %v4025 = vadd.f32 %v3926, 1.0
        %v4026 = vadd.f32 %v3928, 1.0
        %v4027 = vadd.f32 %v3930, 1.0
        %v4028 = vadd.f32 %v3932, 1.0
        %v4029 = vadd.f32 %v3934, 1.0
        %v4030 = vadd.f32 %v3936, 1.0
        %v4031 = vadd.f32 %v3938, 1.0
        %v4032 = vadd.f32 %v3940, 1.0
        %v4033 = vadd.f32 %v3942, 1.0
        %v4034 = vadd.f32 %v3944, 1.0
        %v4035 = vadd.f32 %v3946, 1.0
        %v4036 = vadd.f32 %v3948, 1.0
        %v4037 = vadd.f32 %v3950, 1.0
        %v4038 = vadd.f32 %v3952, 1.0
        %v4039 = vadd.f32 %v3954, 1.0
        %v4040 = vadd.f32 %v3956, 1.0
        %v4041 = vadd.f32 %v3958, 1.0
        %v4042 = vadd.f32 %v3960, 1.0
        %v4043 = vadd.f32 %v3962, 1.0
        %v4044 = vadd.f32 %v3964, 1.0
        %v4045 = vadd.f32 %v3966, 1.0
        %v4046 = vadd.f32 %v3968, 1.0
        %v4047 = vadd.f32 %v3970, 1.0
        %v4048 = vadd.f32 %v3972, 1.0
        %v4049 = vadd.f32 %v3974, 1.0
        %v4050 = vadd.f32 %v3976, 1.0
        %v4051 = vadd.f32 %v3978, 1.0
        %v4052 = vadd.f32 %v3980, 1.0
        %v4053 = vadd.f32 %v3982, 1.0
        %v4054 = vadd.f32 %v3984, 1.0
        %v4055 = vadd.f32 %v3986, 1.0
        %v4056 = vadd.f32 %v3988, 1.0
        %v4057 = vadd.f32 %v3990, 1.0
        %v4058 = vadd.f32 %v3992, 1.0
        %v4059 = vadd.f32 %v3994, 1.0
        %v4060 = vadd.f32 %v3996, 1.0
        %v4061 = vlog2.pop %v3997
        %v4062 = vmul.f32 %v4061, 0.6931472
        %v4063 = vlog2.pop %v3998
        %v4064 = vmul.f32 %v4063, 0.6931472
        %v4065 = vlog2.pop %v3999
        %v4066 = vmul.f32 %v4065, 0.6931472
        %v4067 = vlog2.pop %v4000
        %v4068 = vmul.f32 %v4067, 0.6931472
        %v4069 = vlog2.pop %v4001
        %v4070 = vmul.f32 %v4069, 0.6931472
        %v4071 = vlog2.pop %v4002
        %v4072 = vmul.f32 %v4071, 0.6931472
        %v4073 = vlog2.pop %v4003
        %v4074 = vmul.f32 %v4073, 0.6931472
        %v4075 = vlog2.pop %v4004
        %v4076 = vmul.f32 %v4075, 0.6931472
        %v4077 = vlog2.pop %v4005
        %v4078 = vmul.f32 %v4077, 0.6931472
        %v4079 = vlog2.pop %v4006
        %v4080 = vmul.f32 %v4079, 0.6931472
        %v4081 = vlog2.pop %v4007
        %v4082 = vmul.f32 %v4081, 0.6931472
        %v4083 = vlog2.pop %v4008
        %v4084 = vmul.f32 %v4083, 0.6931472
        %v4085 = vlog2.pop %v4009
        %v4086 = vmul.f32 %v4085, 0.6931472
        %v4087 = vlog2.pop %v4010
        %v4088 = vmul.f32 %v4087, 0.6931472
        %v4089 = vlog2.pop %v4011
        %v4090 = vmul.f32 %v4089, 0.6931472
        %v4091 = vlog2.pop %v4012
        %v4092 = vmul.f32 %v4091, 0.6931472
        %v4093 = vlog2.pop %v4013
        %v4094 = vmul.f32 %v4093, 0.6931472
        %v4095 = vlog2.pop %v4014
        %v4096 = vmul.f32 %v4095, 0.6931472
        %v4097 = vlog2.pop %v4015
        %v4098 = vmul.f32 %v4097, 0.6931472
        %v4099 = vlog2.pop %v4016
        %v4100 = vmul.f32 %v4099, 0.6931472
        %v4101 = vlog2.pop %v4017
        %v4102 = vmul.f32 %v4101, 0.6931472
        %v4103 = vlog2.pop %v4018
        %v4104 = vmul.f32 %v4103, 0.6931472
        %v4105 = vlog2.pop %v4019
        %v4106 = vmul.f32 %v4105, 0.6931472
        %v4107 = vlog2.pop %v4020
        %v4108 = vmul.f32 %v4107, 0.6931472
        %v4109 = vlog2.pop %v4021
        %v4110 = vmul.f32 %v4109, 0.6931472
        %v4111 = vlog2.pop %v4022
        %v4112 = vmul.f32 %v4111, 0.6931472
        %v4113 = vlog2.pop %v4023
        %v4114 = vmul.f32 %v4113, 0.6931472
        %v4115 = vlog2.pop %v4024
        %v4116 = vmul.f32 %v4115, 0.6931472
        %v4117 = vlog2.pop %v4025
        %v4118 = vmul.f32 %v4117, 0.6931472
        %v4119 = vlog2.pop %v4026
        %v4120 = vmul.f32 %v4119, 0.6931472
        %v4121 = vlog2.pop %v4027
        %v4122 = vmul.f32 %v4121, 0.6931472
        %v4123 = vlog2.pop %v4028
        %v4124 = vmul.f32 %v4123, 0.6931472
        %v4125 = vlog2.pop %v4029
        %v4126 = vmul.f32 %v4125, 0.6931472
        %v4127 = vlog2.pop %v4030
        %v4128 = vmul.f32 %v4127, 0.6931472
        %v4129 = vlog2.pop %v4031
        %v4130 = vmul.f32 %v4129, 0.6931472
        %v4131 = vlog2.pop %v4032
        %v4132 = vmul.f32 %v4131, 0.6931472
        %v4133 = vlog2.pop %v4033
        %v4134 = vmul.f32 %v4133, 0.6931472
        %v4135 = vlog2.pop %v4034
        %v4136 = vmul.f32 %v4135, 0.6931472
        %v4137 = vlog2.pop %v4035
        %v4138 = vmul.f32 %v4137, 0.6931472
        %v4139 = vlog2.pop %v4036
        %v4140 = vmul.f32 %v4139, 0.6931472
        %v4141 = vlog2.pop %v4037
        %v4142 = vmul.f32 %v4141, 0.6931472
        %v4143 = vlog2.pop %v4038
        %v4144 = vmul.f32 %v4143, 0.6931472
        %v4145 = vlog2.pop %v4039
        %v4146 = vmul.f32 %v4145, 0.6931472
        %v4147 = vlog2.pop %v4040
        %v4148 = vmul.f32 %v4147, 0.6931472
        %v4149 = vlog2.pop %v4041
        %v4150 = vmul.f32 %v4149, 0.6931472
        %v4151 = vlog2.pop %v4042
        %v4152 = vmul.f32 %v4151, 0.6931472
        %v4153 = vlog2.pop %v4043
        %v4154 = vmul.f32 %v4153, 0.6931472
        %v4155 = vlog2.pop %v4044
        %v4156 = vmul.f32 %v4155, 0.6931472
        %v4157 = vlog2.pop %v4045
        %v4158 = vmul.f32 %v4157, 0.6931472
        %v4159 = vlog2.pop %v4046
        %v4160 = vmul.f32 %v4159, 0.6931472
        %v4161 = vlog2.pop %v4047
        %v4162 = vmul.f32 %v4161, 0.6931472
        %v4163 = vlog2.pop %v4048
        %v4164 = vmul.f32 %v4163, 0.6931472
        %v4165 = vlog2.pop %v4049
        %v4166 = vmul.f32 %v4165, 0.6931472
        %v4167 = vlog2.pop %v4050
        %v4168 = vmul.f32 %v4167, 0.6931472
        %v4169 = vlog2.pop %v4051
        %v4170 = vmul.f32 %v4169, 0.6931472
        %v4171 = vlog2.pop %v4052
        %v4172 = vmul.f32 %v4171, 0.6931472
        %v4173 = vlog2.pop %v4053
        %v4174 = vmul.f32 %v4173, 0.6931472
        %v4175 = vlog2.pop %v4054
        %v4176 = vmul.f32 %v4175, 0.6931472
        %v4177 = vlog2.pop %v4055
        %v4178 = vmul.f32 %v4177, 0.6931472
        %v4179 = vlog2.pop %v4056
        %v4180 = vmul.f32 %v4179, 0.6931472
        %v4181 = vlog2.pop %v4057
        %v4182 = vmul.f32 %v4181, 0.6931472
        %v4183 = vlog2.pop %v4058
        %v4184 = vmul.f32 %v4183, 0.6931472
        %v4185 = vlog2.pop %v4059
        %v4186 = vmul.f32 %v4185, 0.6931472
        %v4187 = vlog2.pop %v4060
        %v4188 = vmul.f32 %v4187, 0.6931472
        %v4189 = vadd.f32 %v3677, %v4062
        %v4190 = vadd.f32 %v3678, %v4064
        %v4191 = vadd.f32 %v3679, %v4066
        %v4192 = vadd.f32 %v3680, %v4068
        %v4193 = vadd.f32 %v3681, %v4070
        %v4194 = vadd.f32 %v3682, %v4072
        %v4195 = vadd.f32 %v3683, %v4074
        %v4196 = vadd.f32 %v3684, %v4076
        %v4197 = vadd.f32 %v3685, %v4078
        %v4198 = vadd.f32 %v3686, %v4080
        %v4199 = vadd.f32 %v3687, %v4082
        %v4200 = vadd.f32 %v3688, %v4084
        %v4201 = vadd.f32 %v3689, %v4086
        %v4202 = vadd.f32 %v3690, %v4088
        %v4203 = vadd.f32 %v3691, %v4090
        %v4204 = vadd.f32 %v3692, %v4092
        %v4205 = vadd.f32 %v3693, %v4094
        %v4206 = vadd.f32 %v3694, %v4096
        %v4207 = vadd.f32 %v3695, %v4098
        %v4208 = vadd.f32 %v3696, %v4100
        %v4209 = vadd.f32 %v3697, %v4102
        %v4210 = vadd.f32 %v3698, %v4104
        %v4211 = vadd.f32 %v3699, %v4106
        %v4212 = vadd.f32 %v3700, %v4108
        %v4213 = vadd.f32 %v3701, %v4110
        %v4214 = vadd.f32 %v3702, %v4112
        %v4215 = vadd.f32 %v3703, %v4114
        %v4216 = vadd.f32 %v3704, %v4116
        %v4217 = vadd.f32 %v3705, %v4118
        %v4218 = vadd.f32 %v3706, %v4120
        %v4219 = vadd.f32 %v3707, %v4122
        %v4220 = vadd.f32 %v3708, %v4124
        %v4221 = vadd.f32 %v3709, %v4126
        %v4222 = vadd.f32 %v3710, %v4128
        %v4223 = vadd.f32 %v3711, %v4130
        %v4224 = vadd.f32 %v3712, %v4132
        %v4225 = vadd.f32 %v3713, %v4134
        %v4226 = vadd.f32 %v3714, %v4136
        %v4227 = vadd.f32 %v3715, %v4138
        %v4228 = vadd.f32 %v3716, %v4140
        %v4229 = vadd.f32 %v3717, %v4142
        %v4230 = vadd.f32 %v3718, %v4144
        %v4231 = vadd.f32 %v3719, %v4146
        %v4232 = vadd.f32 %v3720, %v4148
        %v4233 = vadd.f32 %v3721, %v4150
        %v4234 = vadd.f32 %v3722, %v4152
        %v4235 = vadd.f32 %v3723, %v4154
        %v4236 = vadd.f32 %v3724, %v4156
        %v4237 = vadd.f32 %v3725, %v4158
        %v4238 = vadd.f32 %v3726, %v4160
        %v4239 = vadd.f32 %v3727, %v4162
        %v4240 = vadd.f32 %v3728, %v4164
        %v4241 = vadd.f32 %v3729, %v4166
        %v4242 = vadd.f32 %v3730, %v4168
        %v4243 = vadd.f32 %v3731, %v4170
        %v4244 = vadd.f32 %v3732, %v4172
        %v4245 = vadd.f32 %v3733, %v4174
        %v4246 = vadd.f32 %v3734, %v4176
        %v4247 = vadd.f32 %v3735, %v4178
        %v4248 = vadd.f32 %v3736, %v4180
        %v4249 = vadd.f32 %v3737, %v4182
        %v4250 = vadd.f32 %v3738, %v4184
        %v4251 = vadd.f32 %v3739, %v4186
        %v4252 = vadd.f32 %v3740, %v4188
        %v4253 = vmul.f32 %v2909, %v4189
        %v4254 = vmul.f32 %v2910, %v4190
        %v4255 = vmul.f32 %v2911, %v4191
        %v4256 = vmul.f32 %v2912, %v4192
        %v4257 = vmul.f32 %v2913, %v4193
        %v4258 = vmul.f32 %v2914, %v4194
        %v4259 = vmul.f32 %v2915, %v4195
        %v4260 = vmul.f32 %v2916, %v4196
        %v4261 = vmul.f32 %v2917, %v4197
        %v4262 = vmul.f32 %v2918, %v4198
        %v4263 = vmul.f32 %v2919, %v4199
        %v4264 = vmul.f32 %v2920, %v4200
        %v4265 = vmul.f32 %v2921, %v4201
        %v4266 = vmul.f32 %v2922, %v4202
        %v4267 = vmul.f32 %v2923, %v4203
        %v4268 = vmul.f32 %v2924, %v4204
        %v4269 = vmul.f32 %v2925, %v4205
        %v4270 = vmul.f32 %v2926, %v4206
        %v4271 = vmul.f32 %v2927, %v4207
        %v4272 = vmul.f32 %v2928, %v4208
        %v4273 = vmul.f32 %v2929, %v4209
        %v4274 = vmul.f32 %v2930, %v4210
        %v4275 = vmul.f32 %v2931, %v4211
        %v4276 = vmul.f32 %v2932, %v4212
        %v4277 = vmul.f32 %v2933, %v4213
        %v4278 = vmul.f32 %v2934, %v4214
        %v4279 = vmul.f32 %v2935, %v4215
        %v4280 = vmul.f32 %v2936, %v4216
        %v4281 = vmul.f32 %v2937, %v4217
        %v4282 = vmul.f32 %v2938, %v4218
        %v4283 = vmul.f32 %v2939, %v4219
        %v4284 = vmul.f32 %v2940, %v4220
        %v4285 = vmul.f32 %v2941, %v4221
        %v4286 = vmul.f32 %v2942, %v4222
        %v4287 = vmul.f32 %v2943, %v4223
        %v4288 = vmul.f32 %v2944, %v4224
        %v4289 = vmul.f32 %v2945, %v4225
        %v4290 = vmul.f32 %v2946, %v4226
        %v4291 = vmul.f32 %v2947, %v4227
        %v4292 = vmul.f32 %v2948, %v4228
        %v4293 = vmul.f32 %v2949, %v4229
        %v4294 = vmul.f32 %v2950, %v4230
        %v4295 = vmul.f32 %v2951, %v4231
        %v4296 = vmul.f32 %v2952, %v4232
        %v4297 = vmul.f32 %v2953, %v4233
        %v4298 = vmul.f32 %v2954, %v4234
        %v4299 = vmul.f32 %v2955, %v4235
        %v4300 = vmul.f32 %v2956, %v4236
        %v4301 = vmul.f32 %v2957, %v4237
        %v4302 = vmul.f32 %v2958, %v4238
        %v4303 = vmul.f32 %v2959, %v4239
        %v4304 = vmul.f32 %v2960, %v4240
        %v4305 = vmul.f32 %v2961, %v4241
        %v4306 = vmul.f32 %v2962, %v4242
        %v4307 = vmul.f32 %v2963, %v4243
        %v4308 = vmul.f32 %v2964, %v4244
        %v4309 = vmul.f32 %v2965, %v4245
        %v4310 = vmul.f32 %v2966, %v4246
        %v4311 = vmul.f32 %v2967, %v4247
        %v4312 = vmul.f32 %v2968, %v4248
        %v4313 = vmul.f32 %v2969, %v4249
        %v4314 = vmul.f32 %v2970, %v4250
        %v4315 = vmul.f32 %v2971, %v4251
        %v4316 = vmul.f32 %v2972, %v4252
        %v4317 = vmul.f32 %v2521, 2.0
        %v4318 = vmul.f32 %v2522, 2.0
        %v4319 = vmul.f32 %v2523, 2.0
        %v4320 = vmul.f32 %v2524, 2.0
        %v4321 = vmul.f32 %v2525, 2.0
        %v4322 = vmul.f32 %v2526, 2.0
        %v4323 = vmul.f32 %v2527, 2.0
        %v4324 = vmul.f32 %v2528, 2.0
        %v4325 = vmul.f32 %v2529, 2.0
        %v4326 = vmul.f32 %v2530, 2.0
        %v4327 = vmul.f32 %v2531, 2.0
        %v4328 = vmul.f32 %v2532, 2.0
        %v4329 = vmul.f32 %v2533, 2.0
        %v4330 = vmul.f32 %v2534, 2.0
        %v4331 = vmul.f32 %v2535, 2.0
        %v4332 = vmul.f32 %v2536, 2.0
        %v4333 = vmul.f32 %v2537, 2.0
        %v4334 = vmul.f32 %v2538, 2.0
        %v4335 = vmul.f32 %v2539, 2.0
        %v4336 = vmul.f32 %v2540, 2.0
        %v4337 = vmul.f32 %v2541, 2.0
        %v4338 = vmul.f32 %v2542, 2.0
        %v4339 = vmul.f32 %v2543, 2.0
        %v4340 = vmul.f32 %v2544, 2.0
        %v4341 = vmul.f32 %v2545, 2.0
        %v4342 = vmul.f32 %v2546, 2.0
        %v4343 = vmul.f32 %v2547, 2.0
        %v4344 = vmul.f32 %v2548, 2.0
        %v4345 = vmul.f32 %v2549, 2.0
        %v4346 = vmul.f32 %v2550, 2.0
        %v4347 = vmul.f32 %v2551, 2.0
        %v4348 = vmul.f32 %v2552, 2.0
        %v4349 = vmul.f32 %v2553, 2.0
        %v4350 = vmul.f32 %v2554, 2.0
        %v4351 = vmul.f32 %v2555, 2.0
        %v4352 = vmul.f32 %v2556, 2.0
        %v4353 = vmul.f32 %v2557, 2.0
        %v4354 = vmul.f32 %v2558, 2.0
        %v4355 = vmul.f32 %v2559, 2.0
        %v4356 = vmul.f32 %v2560, 2.0
        %v4357 = vmul.f32 %v2561, 2.0
        %v4358 = vmul.f32 %v2562, 2.0
        %v4359 = vmul.f32 %v2563, 2.0
        %v4360 = vmul.f32 %v2564, 2.0
        %v4361 = vmul.f32 %v2565, 2.0
        %v4362 = vmul.f32 %v2566, 2.0
        %v4363 = vmul.f32 %v2567, 2.0
        %v4364 = vmul.f32 %v2568, 2.0
        %v4365 = vmul.f32 %v2569, 2.0
        %v4366 = vmul.f32 %v2570, 2.0
        %v4367 = vmul.f32 %v2571, 2.0
        %v4368 = vmul.f32 %v2572, 2.0
        %v4369 = vmul.f32 %v2573, 2.0
        %v4370 = vmul.f32 %v2574, 2.0
        %v4371 = vmul.f32 %v2575, 2.0
        %v4372 = vmul.f32 %v2576, 2.0
        %v4373 = vmul.f32 %v2577, 2.0
        %v4374 = vmul.f32 %v2578, 2.0
        %v4375 = vmul.f32 %v2579, 2.0
        %v4376 = vmul.f32 %v2580, 2.0
        %v4377 = vmul.f32 %v2581, 2.0
        %v4378 = vmul.f32 %v2582, 2.0
        %v4379 = vmul.f32 %v2583, 2.0
        %v4380 = vmul.f32 %v2584, 2.0
        %v4381 = vsub.f32 %v4317, 1.0
        %v4382 = vsub.f32 %v4318, 1.0
        %v4383 = vsub.f32 %v4319, 1.0
        %v4384 = vsub.f32 %v4320, 1.0
        %v4385 = vsub.f32 %v4321, 1.0
        %v4386 = vsub.f32 %v4322, 1.0
        %v4387 = vsub.f32 %v4323, 1.0
        %v4388 = vsub.f32 %v4324, 1.0
        %v4389 = vsub.f32 %v4325, 1.0
        %v4390 = vsub.f32 %v4326, 1.0
        %v4391 = vsub.f32 %v4327, 1.0
        %v4392 = vsub.f32 %v4328, 1.0
        %v4393 = vsub.f32 %v4329, 1.0
        %v4394 = vsub.f32 %v4330, 1.0
        %v4395 = vsub.f32 %v4331, 1.0
        %v4396 = vsub.f32 %v4332, 1.0
        %v4397 = vsub.f32 %v4333, 1.0
        %v4398 = vsub.f32 %v4334, 1.0
        %v4399 = vsub.f32 %v4335, 1.0
        %v4400 = vsub.f32 %v4336, 1.0
        %v4401 = vsub.f32 %v4337, 1.0
        %v4402 = vsub.f32 %v4338, 1.0
        %v4403 = vsub.f32 %v4339, 1.0
        %v4404 = vsub.f32 %v4340, 1.0
        %v4405 = vsub.f32 %v4341, 1.0
        %v4406 = vsub.f32 %v4342, 1.0
        %v4407 = vsub.f32 %v4343, 1.0
        %v4408 = vsub.f32 %v4344, 1.0
        %v4409 = vsub.f32 %v4345, 1.0
        %v4410 = vsub.f32 %v4346, 1.0
        %v4411 = vsub.f32 %v4347, 1.0
        %v4412 = vsub.f32 %v4348, 1.0
        %v4413 = vsub.f32 %v4349, 1.0
        %v4414 = vsub.f32 %v4350, 1.0
        %v4415 = vsub.f32 %v4351, 1.0
        %v4416 = vsub.f32 %v4352, 1.0
        %v4417 = vsub.f32 %v4353, 1.0
        %v4418 = vsub.f32 %v4354, 1.0
        %v4419 = vsub.f32 %v4355, 1.0
        %v4420 = vsub.f32 %v4356, 1.0
        %v4421 = vsub.f32 %v4357, 1.0
        %v4422 = vsub.f32 %v4358, 1.0
        %v4423 = vsub.f32 %v4359, 1.0
        %v4424 = vsub.f32 %v4360, 1.0
        %v4425 = vsub.f32 %v4361, 1.0
        %v4426 = vsub.f32 %v4362, 1.0
        %v4427 = vsub.f32 %v4363, 1.0
        %v4428 = vsub.f32 %v4364, 1.0
        %v4429 = vsub.f32 %v4365, 1.0
        %v4430 = vsub.f32 %v4366, 1.0
        %v4431 = vsub.f32 %v4367, 1.0
        %v4432 = vsub.f32 %v4368, 1.0
        %v4433 = vsub.f32 %v4369, 1.0
        %v4434 = vsub.f32 %v4370, 1.0
        %v4435 = vsub.f32 %v4371, 1.0
        %v4436 = vsub.f32 %v4372, 1.0
        %v4437 = vsub.f32 %v4373, 1.0
        %v4438 = vsub.f32 %v4374, 1.0
        %v4439 = vsub.f32 %v4375, 1.0
        %v4440 = vsub.f32 %v4376, 1.0
        %v4441 = vsub.f32 %v4377, 1.0
        %v4442 = vsub.f32 %v4378, 1.0
        %v4443 = vsub.f32 %v4379, 1.0
        %v4444 = vsub.f32 %v4380, 1.0
        %s4445 = sld [smem:[#allocation3 + $0x2]]
        %v4446 = vstv %s4445
        %v4447 = vmul.f32 %v4446, %v2521
        %v4448 = vmul.f32 %v4446, %v2522
        %v4449 = vmul.f32 %v4446, %v2523
        %v4450 = vmul.f32 %v4446, %v2524
        %v4451 = vmul.f32 %v4446, %v2525
        %v4452 = vmul.f32 %v4446, %v2526
        %v4453 = vmul.f32 %v4446, %v2527
        %v4454 = vmul.f32 %v4446, %v2528
        %v4455 = vmul.f32 %v4446, %v2529
        %v4456 = vmul.f32 %v4446, %v2530
        %v4457 = vmul.f32 %v4446, %v2531
        %v4458 = vmul.f32 %v4446, %v2532
        %v4459 = vmul.f32 %v4446, %v2533
        %v4460 = vmul.f32 %v4446, %v2534
        %v4461 = vmul.f32 %v4446, %v2535
        %v4462 = vmul.f32 %v4446, %v2536
        %v4463 = vmul.f32 %v4446, %v2537
        %v4464 = vmul.f32 %v4446, %v2538
        %v4465 = vmul.f32 %v4446, %v2539
        %v4466 = vmul.f32 %v4446, %v2540
        %v4467 = vmul.f32 %v4446, %v2541
        %v4468 = vmul.f32 %v4446, %v2542
        %v4469 = vmul.f32 %v4446, %v2543
        %v4470 = vmul.f32 %v4446, %v2544
        %v4471 = vmul.f32 %v4446, %v2545
        %v4472 = vmul.f32 %v4446, %v2546
        %v4473 = vmul.f32 %v4446, %v2547
        %v4474 = vmul.f32 %v4446, %v2548
        %v4475 = vmul.f32 %v4446, %v2549
        %v4476 = vmul.f32 %v4446, %v2550
        %v4477 = vmul.f32 %v4446, %v2551
        %v4478 = vmul.f32 %v4446, %v2552
        %v4479 = vmul.f32 %v4446, %v2553
        %v4480 = vmul.f32 %v4446, %v2554
        %v4481 = vmul.f32 %v4446, %v2555
        %v4482 = vmul.f32 %v4446, %v2556
        %v4483 = vmul.f32 %v4446, %v2557
        %v4484 = vmul.f32 %v4446, %v2558
        %v4485 = vmul.f32 %v4446, %v2559
        %v4486 = vmul.f32 %v4446, %v2560
        %v4487 = vmul.f32 %v4446, %v2561
        %v4488 = vmul.f32 %v4446, %v2562
        %v4489 = vmul.f32 %v4446, %v2563
        %v4490 = vmul.f32 %v4446, %v2564
        %v4491 = vmul.f32 %v4446, %v2565
        %v4492 = vmul.f32 %v4446, %v2566
        %v4493 = vmul.f32 %v4446, %v2567
        %v4494 = vmul.f32 %v4446, %v2568
        %v4495 = vmul.f32 %v4446, %v2569
        %v4496 = vmul.f32 %v4446, %v2570
        %v4497 = vmul.f32 %v4446, %v2571
        %v4498 = vmul.f32 %v4446, %v2572
        %v4499 = vmul.f32 %v4446, %v2573
        %v4500 = vmul.f32 %v4446, %v2574
        %v4501 = vmul.f32 %v4446, %v2575
        %v4502 = vmul.f32 %v4446, %v2576
        %v4503 = vmul.f32 %v4446, %v2577
        %v4504 = vmul.f32 %v4446, %v2578
        %v4505 = vmul.f32 %v4446, %v2579
        %v4506 = vmul.f32 %v4446, %v2580
        %v4507 = vmul.f32 %v4446, %v2581
        %v4508 = vmul.f32 %v4446, %v2582
        %v4509 = vmul.f32 %v4446, %v2583
        %v4510 = vmul.f32 %v4446, %v2584
        %s4511 = sld [smem:[#allocation3 + $0x3]]
        %v4512 = vsub.f32 1.0, %v2521
        %v4513 = vsub.f32 1.0, %v2522
        %v4514 = vsub.f32 1.0, %v2523
        %v4515 = vsub.f32 1.0, %v2524
        %v4516 = vsub.f32 1.0, %v2525
        %v4517 = vsub.f32 1.0, %v2526
        %v4518 = vsub.f32 1.0, %v2527
        %v4519 = vsub.f32 1.0, %v2528
        %v4520 = vsub.f32 1.0, %v2529
        %v4521 = vsub.f32 1.0, %v2530
        %v4522 = vsub.f32 1.0, %v2531
        %v4523 = vsub.f32 1.0, %v2532
        %v4524 = vsub.f32 1.0, %v2533
        %v4525 = vsub.f32 1.0, %v2534
        %v4526 = vsub.f32 1.0, %v2535
        %v4527 = vsub.f32 1.0, %v2536
        %v4528 = vsub.f32 1.0, %v2537
        %v4529 = vsub.f32 1.0, %v2538
        %v4530 = vsub.f32 1.0, %v2539
        %v4531 = vsub.f32 1.0, %v2540
        %v4532 = vsub.f32 1.0, %v2541
        %v4533 = vsub.f32 1.0, %v2542
        %v4534 = vsub.f32 1.0, %v2543
        %v4535 = vsub.f32 1.0, %v2544
        %v4536 = vsub.f32 1.0, %v2545
        %v4537 = vsub.f32 1.0, %v2546
        %v4538 = vsub.f32 1.0, %v2547
        %v4539 = vsub.f32 1.0, %v2548
        %v4540 = vsub.f32 1.0, %v2549
        %v4541 = vsub.f32 1.0, %v2550
        %v4542 = vsub.f32 1.0, %v2551
        %v4543 = vsub.f32 1.0, %v2552
        %v4544 = vsub.f32 1.0, %v2553
        %v4545 = vsub.f32 1.0, %v2554
        %v4546 = vsub.f32 1.0, %v2555
        %v4547 = vsub.f32 1.0, %v2556
        %v4548 = vsub.f32 1.0, %v2557
        %v4549 = vsub.f32 1.0, %v2558
        %v4550 = vsub.f32 1.0, %v2559
        %v4551 = vsub.f32 1.0, %v2560
        %v4552 = vsub.f32 1.0, %v2561
        %v4553 = vsub.f32 1.0, %v2562
        %v4554 = vsub.f32 1.0, %v2563
        %v4555 = vsub.f32 1.0, %v2564
        %v4556 = vsub.f32 1.0, %v2565
        %v4557 = vsub.f32 1.0, %v2566
        %v4558 = vsub.f32 1.0, %v2567
        %v4559 = vsub.f32 1.0, %v2568
        %v4560 = vsub.f32 1.0, %v2569
        %v4561 = vsub.f32 1.0, %v2570
        %v4562 = vsub.f32 1.0, %v2571
        %v4563 = vsub.f32 1.0, %v2572
        %v4564 = vsub.f32 1.0, %v2573
        %v4565 = vsub.f32 1.0, %v2574
        %v4566 = vsub.f32 1.0, %v2575
        %v4567 = vsub.f32 1.0, %v2576
        %v4568 = vsub.f32 1.0, %v2577
        %v4569 = vsub.f32 1.0, %v2578
        %v4570 = vsub.f32 1.0, %v2579
        %v4571 = vsub.f32 1.0, %v2580
        %v4572 = vsub.f32 1.0, %v2581
        %v4573 = vsub.f32 1.0, %v2582
        %v4574 = vsub.f32 1.0, %v2583
        %v4575 = vsub.f32 1.0, %v2584
        %v4576 = vstv %s4511
        %v4577 = vmul.f32 %v4576, %v4512
        %v4578 = vmul.f32 %v4576, %v4513
        %v4579 = vmul.f32 %v4576, %v4514
        %v4580 = vmul.f32 %v4576, %v4515
        %v4581 = vmul.f32 %v4576, %v4516
        %v4582 = vmul.f32 %v4576, %v4517
        %v4583 = vmul.f32 %v4576, %v4518
        %v4584 = vmul.f32 %v4576, %v4519
        %v4585 = vmul.f32 %v4576, %v4520
        %v4586 = vmul.f32 %v4576, %v4521
        %v4587 = vmul.f32 %v4576, %v4522
        %v4588 = vmul.f32 %v4576, %v4523
        %v4589 = vmul.f32 %v4576, %v4524
        %v4590 = vmul.f32 %v4576, %v4525
        %v4591 = vmul.f32 %v4576, %v4526
        %v4592 = vmul.f32 %v4576, %v4527
        %v4593 = vmul.f32 %v4576, %v4528
        %v4594 = vmul.f32 %v4576, %v4529
        %v4595 = vmul.f32 %v4576, %v4530
        %v4596 = vmul.f32 %v4576, %v4531
        %v4597 = vmul.f32 %v4576, %v4532
        %v4598 = vmul.f32 %v4576, %v4533
        %v4599 = vmul.f32 %v4576, %v4534
        %v4600 = vmul.f32 %v4576, %v4535
        %v4601 = vmul.f32 %v4576, %v4536
        %v4602 = vmul.f32 %v4576, %v4537
        %v4603 = vmul.f32 %v4576, %v4538
        %v4604 = vmul.f32 %v4576, %v4539
        %v4605 = vmul.f32 %v4576, %v4540
        %v4606 = vmul.f32 %v4576, %v4541
        %v4607 = vmul.f32 %v4576, %v4542
        %v4608 = vmul.f32 %v4576, %v4543
        %v4609 = vmul.f32 %v4576, %v4544
        %v4610 = vmul.f32 %v4576, %v4545
        %v4611 = vmul.f32 %v4576, %v4546
        %v4612 = vmul.f32 %v4576, %v4547
        %v4613 = vmul.f32 %v4576, %v4548
        %v4614 = vmul.f32 %v4576, %v4549
        %v4615 = vmul.f32 %v4576, %v4550
        %v4616 = vmul.f32 %v4576, %v4551
        %v4617 = vmul.f32 %v4576, %v4552
        %v4618 = vmul.f32 %v4576, %v4553
        %v4619 = vmul.f32 %v4576, %v4554
        %v4620 = vmul.f32 %v4576, %v4555
        %v4621 = vmul.f32 %v4576, %v4556
        %v4622 = vmul.f32 %v4576, %v4557
        %v4623 = vmul.f32 %v4576, %v4558
        %v4624 = vmul.f32 %v4576, %v4559
        %v4625 = vmul.f32 %v4576, %v4560
        %v4626 = vmul.f32 %v4576, %v4561
        %v4627 = vmul.f32 %v4576, %v4562
        %v4628 = vmul.f32 %v4576, %v4563
        %v4629 = vmul.f32 %v4576, %v4564
        %v4630 = vmul.f32 %v4576, %v4565
        %v4631 = vmul.f32 %v4576, %v4566
        %v4632 = vmul.f32 %v4576, %v4567
        %v4633 = vmul.f32 %v4576, %v4568
        %v4634 = vmul.f32 %v4576, %v4569
        %v4635 = vmul.f32 %v4576, %v4570
        %v4636 = vmul.f32 %v4576, %v4571
        %v4637 = vmul.f32 %v4576, %v4572
        %v4638 = vmul.f32 %v4576, %v4573
        %v4639 = vmul.f32 %v4576, %v4574
        %v4640 = vmul.f32 %v4576, %v4575
        %v4641 = vadd.f32 %v4447, %v4577
        %v4642 = vadd.f32 %v4448, %v4578
        %v4643 = vadd.f32 %v4449, %v4579
        %v4644 = vadd.f32 %v4450, %v4580
        %v4645 = vadd.f32 %v4451, %v4581
        %v4646 = vadd.f32 %v4452, %v4582
        %v4647 = vadd.f32 %v4453, %v4583
        %v4648 = vadd.f32 %v4454, %v4584
        %v4649 = vadd.f32 %v4455, %v4585
        %v4650 = vadd.f32 %v4456, %v4586
        %v4651 = vadd.f32 %v4457, %v4587
        %v4652 = vadd.f32 %v4458, %v4588
        %v4653 = vadd.f32 %v4459, %v4589
        %v4654 = vadd.f32 %v4460, %v4590
        %v4655 = vadd.f32 %v4461, %v4591
        %v4656 = vadd.f32 %v4462, %v4592
        %v4657 = vadd.f32 %v4463, %v4593
        %v4658 = vadd.f32 %v4464, %v4594
        %v4659 = vadd.f32 %v4465, %v4595
        %v4660 = vadd.f32 %v4466, %v4596
        %v4661 = vadd.f32 %v4467, %v4597
        %v4662 = vadd.f32 %v4468, %v4598
        %v4663 = vadd.f32 %v4469, %v4599
        %v4664 = vadd.f32 %v4470, %v4600
        %v4665 = vadd.f32 %v4471, %v4601
        %v4666 = vadd.f32 %v4472, %v4602
        %v4667 = vadd.f32 %v4473, %v4603
        %v4668 = vadd.f32 %v4474, %v4604
        %v4669 = vadd.f32 %v4475, %v4605
        %v4670 = vadd.f32 %v4476, %v4606
        %v4671 = vadd.f32 %v4477, %v4607
        %v4672 = vadd.f32 %v4478, %v4608
        %v4673 = vadd.f32 %v4479, %v4609
        %v4674 = vadd.f32 %v4480, %v4610
        %v4675 = vadd.f32 %v4481, %v4611
        %v4676 = vadd.f32 %v4482, %v4612
        %v4677 = vadd.f32 %v4483, %v4613
        %v4678 = vadd.f32 %v4484, %v4614
        %v4679 = vadd.f32 %v4485, %v4615
        %v4680 = vadd.f32 %v4486, %v4616
        %v4681 = vadd.f32 %v4487, %v4617
        %v4682 = vadd.f32 %v4488, %v4618
        %v4683 = vadd.f32 %v4489, %v4619
        %v4684 = vadd.f32 %v4490, %v4620
        %v4685 = vadd.f32 %v4491, %v4621
        %v4686 = vadd.f32 %v4492, %v4622
        %v4687 = vadd.f32 %v4493, %v4623
        %v4688 = vadd.f32 %v4494, %v4624
        %v4689 = vadd.f32 %v4495, %v4625
        %v4690 = vadd.f32 %v4496, %v4626
        %v4691 = vadd.f32 %v4497, %v4627
        %v4692 = vadd.f32 %v4498, %v4628
        %v4693 = vadd.f32 %v4499, %v4629
        %v4694 = vadd.f32 %v4500, %v4630
        %v4695 = vadd.f32 %v4501, %v4631
        %v4696 = vadd.f32 %v4502, %v4632
        %v4697 = vadd.f32 %v4503, %v4633
        %v4698 = vadd.f32 %v4504, %v4634
        %v4699 = vadd.f32 %v4505, %v4635
        %v4700 = vadd.f32 %v4506, %v4636
        %v4701 = vadd.f32 %v4507, %v4637
        %v4702 = vadd.f32 %v4508, %v4638
        %v4703 = vadd.f32 %v4509, %v4639
        %v4704 = vadd.f32 %v4510, %v4640
        %4769 = vrot.lane.b32.xlu0 %v4641, 127
        %v4770 = vpop.permute.xlu0 %4769
        %4771 = vrot.lane.b32.xlu0 %v4642, 127
        %v4772 = vpop.permute.xlu0 %4771
        %4773 = vrot.lane.b32.xlu0 %v4643, 127
        %v4774 = vpop.permute.xlu0 %4773
        %4775 = vrot.lane.b32.xlu0 %v4644, 127
        %v4776 = vpop.permute.xlu0 %4775
        %4777 = vrot.lane.b32.xlu0 %v4645, 127
        %v4778 = vpop.permute.xlu0 %4777
        %4779 = vrot.lane.b32.xlu0 %v4646, 127
        %v4780 = vpop.permute.xlu0 %4779
        %4781 = vrot.lane.b32.xlu0 %v4647, 127
        %v4782 = vpop.permute.xlu0 %4781
        %4783 = vrot.lane.b32.xlu0 %v4648, 127
        %v4784 = vpop.permute.xlu0 %4783
        %4785 = vrot.lane.b32.xlu0 %v4649, 127
        %v4786 = vpop.permute.xlu0 %4785
        %4787 = vrot.lane.b32.xlu0 %v4650, 127
        %v4788 = vpop.permute.xlu0 %4787
        %4789 = vrot.lane.b32.xlu0 %v4651, 127
        %v4790 = vpop.permute.xlu0 %4789
        %4791 = vrot.lane.b32.xlu0 %v4652, 127
        %v4792 = vpop.permute.xlu0 %4791
        %4793 = vrot.lane.b32.xlu0 %v4653, 127
        %v4794 = vpop.permute.xlu0 %4793
        %4795 = vrot.lane.b32.xlu0 %v4654, 127
        %v4796 = vpop.permute.xlu0 %4795
        %4797 = vrot.lane.b32.xlu0 %v4655, 127
        %v4798 = vpop.permute.xlu0 %4797
        %4799 = vrot.lane.b32.xlu0 %v4656, 127
        %v4800 = vpop.permute.xlu0 %4799
        %4801 = vrot.lane.b32.xlu0 %v4657, 127
        %v4802 = vpop.permute.xlu0 %4801
        %4803 = vrot.lane.b32.xlu0 %v4658, 127
        %v4804 = vpop.permute.xlu0 %4803
        %4805 = vrot.lane.b32.xlu0 %v4659, 127
        %v4806 = vpop.permute.xlu0 %4805
        %4807 = vrot.lane.b32.xlu0 %v4660, 127
        %v4808 = vpop.permute.xlu0 %4807
        %4809 = vrot.lane.b32.xlu0 %v4661, 127
        %v4810 = vpop.permute.xlu0 %4809
        %4811 = vrot.lane.b32.xlu0 %v4662, 127
        %v4812 = vpop.permute.xlu0 %4811
        %4813 = vrot.lane.b32.xlu0 %v4663, 127
        %v4814 = vpop.permute.xlu0 %4813
        %4815 = vrot.lane.b32.xlu0 %v4664, 127
        %v4816 = vpop.permute.xlu0 %4815
        %4817 = vrot.lane.b32.xlu0 %v4665, 127
        %v4818 = vpop.permute.xlu0 %4817
        %4819 = vrot.lane.b32.xlu0 %v4666, 127
        %v4820 = vpop.permute.xlu0 %4819
        %4821 = vrot.lane.b32.xlu0 %v4667, 127
        %v4822 = vpop.permute.xlu0 %4821
        %4823 = vrot.lane.b32.xlu0 %v4668, 127
        %v4824 = vpop.permute.xlu0 %4823
        %4825 = vrot.lane.b32.xlu0 %v4669, 127
        %v4826 = vpop.permute.xlu0 %4825
        %4827 = vrot.lane.b32.xlu0 %v4670, 127
        %v4828 = vpop.permute.xlu0 %4827
        %4829 = vrot.lane.b32.xlu0 %v4671, 127
        %v4830 = vpop.permute.xlu0 %4829
        %4831 = vrot.lane.b32.xlu0 %v4672, 127
        %v4832 = vpop.permute.xlu0 %4831
        %4833 = vrot.lane.b32.xlu0 %v4673, 127
        %v4834 = vpop.permute.xlu0 %4833
        %4835 = vrot.lane.b32.xlu0 %v4674, 127
        %v4836 = vpop.permute.xlu0 %4835
        %4837 = vrot.lane.b32.xlu0 %v4675, 127
        %v4838 = vpop.permute.xlu0 %4837
        %4839 = vrot.lane.b32.xlu0 %v4676, 127
        %v4840 = vpop.permute.xlu0 %4839
        %4841 = vrot.lane.b32.xlu0 %v4677, 127
        %v4842 = vpop.permute.xlu0 %4841
        %4843 = vrot.lane.b32.xlu0 %v4678, 127
        %v4844 = vpop.permute.xlu0 %4843
        %4845 = vrot.lane.b32.xlu0 %v4679, 127
        %v4846 = vpop.permute.xlu0 %4845
        %4847 = vrot.lane.b32.xlu0 %v4680, 127
        %v4848 = vpop.permute.xlu0 %4847
        %4849 = vrot.lane.b32.xlu0 %v4681, 127
        %v4850 = vpop.permute.xlu0 %4849
        %4851 = vrot.lane.b32.xlu0 %v4682, 127
        %v4852 = vpop.permute.xlu0 %4851
        %4853 = vrot.lane.b32.xlu0 %v4683, 127
        %v4854 = vpop.permute.xlu0 %4853
        %4855 = vrot.lane.b32.xlu0 %v4684, 127
        %v4856 = vpop.permute.xlu0 %4855
        %4857 = vrot.lane.b32.xlu0 %v4685, 127
        %v4858 = vpop.permute.xlu0 %4857
        %4859 = vrot.lane.b32.xlu0 %v4686, 127
        %v4860 = vpop.permute.xlu0 %4859
        %4861 = vrot.lane.b32.xlu0 %v4687, 127
        %v4862 = vpop.permute.xlu0 %4861
        %4863 = vrot.lane.b32.xlu0 %v4688, 127
        %v4864 = vpop.permute.xlu0 %4863
        %4865 = vrot.lane.b32.xlu0 %v4689, 127
        %v4866 = vpop.permute.xlu0 %4865
        %4867 = vrot.lane.b32.xlu0 %v4690, 127
        %v4868 = vpop.permute.xlu0 %4867
        %4869 = vrot.lane.b32.xlu0 %v4691, 127
        %v4870 = vpop.permute.xlu0 %4869
        %4871 = vrot.lane.b32.xlu0 %v4692, 127
        %v4872 = vpop.permute.xlu0 %4871
        %4873 = vrot.lane.b32.xlu0 %v4693, 127
        %v4874 = vpop.permute.xlu0 %4873
        %4875 = vrot.lane.b32.xlu0 %v4694, 127
        %v4876 = vpop.permute.xlu0 %4875
        %4877 = vrot.lane.b32.xlu0 %v4695, 127
        %v4878 = vpop.permute.xlu0 %4877
        %4879 = vrot.lane.b32.xlu0 %v4696, 127
        %v4880 = vpop.permute.xlu0 %4879
        %4881 = vrot.lane.b32.xlu0 %v4697, 127
        %v4882 = vpop.permute.xlu0 %4881
        %4883 = vrot.lane.b32.xlu0 %v4698, 127
        %v4884 = vpop.permute.xlu0 %4883
        %4885 = vrot.lane.b32.xlu0 %v4699, 127
        %v4886 = vpop.permute.xlu0 %4885
        %4887 = vrot.lane.b32.xlu0 %v4700, 127
        %v4888 = vpop.permute.xlu0 %4887
        %4889 = vrot.lane.b32.xlu0 %v4701, 127
        %v4890 = vpop.permute.xlu0 %4889
        %4891 = vrot.lane.b32.xlu0 %v4702, 127
        %v4892 = vpop.permute.xlu0 %4891
        %4893 = vrot.lane.b32.xlu0 %v4703, 127
        %v4894 = vpop.permute.xlu0 %4893
        %4895 = vrot.lane.b32.xlu0 %v4704, 127
        %v4896 = vpop.permute.xlu0 %4895
        %v4961 = vmul.f32 %v2521, %v4770
        %v4962 = vmul.f32 %v2522, %v4772
        %v4963 = vmul.f32 %v2523, %v4774
        %v4964 = vmul.f32 %v2524, %v4776
        %v4965 = vmul.f32 %v2525, %v4778
        %v4966 = vmul.f32 %v2526, %v4780
        %v4967 = vmul.f32 %v2527, %v4782
        %v4968 = vmul.f32 %v2528, %v4784
        %v4969 = vmul.f32 %v2529, %v4786
        %v4970 = vmul.f32 %v2530, %v4788
        %v4971 = vmul.f32 %v2531, %v4790
        %v4972 = vmul.f32 %v2532, %v4792
        %v4973 = vmul.f32 %v2533, %v4794
        %v4974 = vmul.f32 %v2534, %v4796
        %v4975 = vmul.f32 %v2535, %v4798
        %v4976 = vmul.f32 %v2536, %v4800
        %v4977 = vmul.f32 %v2537, %v4802
        %v4978 = vmul.f32 %v2538, %v4804
        %v4979 = vmul.f32 %v2539, %v4806
        %v4980 = vmul.f32 %v2540, %v4808
        %v4981 = vmul.f32 %v2541, %v4810
        %v4982 = vmul.f32 %v2542, %v4812
        %v4983 = vmul.f32 %v2543, %v4814
        %v4984 = vmul.f32 %v2544, %v4816
        %v4985 = vmul.f32 %v2545, %v4818
        %v4986 = vmul.f32 %v2546, %v4820
        %v4987 = vmul.f32 %v2547, %v4822
        %v4988 = vmul.f32 %v2548, %v4824
        %v4989 = vmul.f32 %v2549, %v4826
        %v4990 = vmul.f32 %v2550, %v4828
        %v4991 = vmul.f32 %v2551, %v4830
        %v4992 = vmul.f32 %v2552, %v4832
        %v4993 = vmul.f32 %v2553, %v4834
        %v4994 = vmul.f32 %v2554, %v4836
        %v4995 = vmul.f32 %v2555, %v4838
        %v4996 = vmul.f32 %v2556, %v4840
        %v4997 = vmul.f32 %v2557, %v4842
        %v4998 = vmul.f32 %v2558, %v4844
        %v4999 = vmul.f32 %v2559, %v4846
        %v5000 = vmul.f32 %v2560, %v4848
        %v5001 = vmul.f32 %v2561, %v4850
        %v5002 = vmul.f32 %v2562, %v4852
        %v5003 = vmul.f32 %v2563, %v4854
        %v5004 = vmul.f32 %v2564, %v4856
        %v5005 = vmul.f32 %v2565, %v4858
        %v5006 = vmul.f32 %v2566, %v4860
        %v5007 = vmul.f32 %v2567, %v4862
        %v5008 = vmul.f32 %v2568, %v4864
        %v5009 = vmul.f32 %v2569, %v4866
        %v5010 = vmul.f32 %v2570, %v4868
        %v5011 = vmul.f32 %v2571, %v4870
        %v5012 = vmul.f32 %v2572, %v4872
        %v5013 = vmul.f32 %v2573, %v4874
        %v5014 = vmul.f32 %v2574, %v4876
        %v5015 = vmul.f32 %v2575, %v4878
        %v5016 = vmul.f32 %v2576, %v4880
        %v5017 = vmul.f32 %v2577, %v4882
        %v5018 = vmul.f32 %v2578, %v4884
        %v5019 = vmul.f32 %v2579, %v4886
        %v5020 = vmul.f32 %v2580, %v4888
        %v5021 = vmul.f32 %v2581, %v4890
        %v5022 = vmul.f32 %v2582, %v4892
        %v5023 = vmul.f32 %v2583, %v4894
        %v5024 = vmul.f32 %v2584, %v4896
        %5025 = vrot.lane.b32.xlu0 %v3293, 126
        %v5026 = vpop.permute.xlu0 %5025
        %5027 = vrot.lane.b32.xlu0 %v3294, 126
        %v5028 = vpop.permute.xlu0 %5027
        %5029 = vrot.lane.b32.xlu0 %v3295, 126
        %v5030 = vpop.permute.xlu0 %5029
        %5031 = vrot.lane.b32.xlu0 %v3296, 126
        %v5032 = vpop.permute.xlu0 %5031
        %5033 = vrot.lane.b32.xlu0 %v3297, 126
        %v5034 = vpop.permute.xlu0 %5033
        %5035 = vrot.lane.b32.xlu0 %v3298, 126
        %v5036 = vpop.permute.xlu0 %5035
        %5037 = vrot.lane.b32.xlu0 %v3299, 126
        %v5038 = vpop.permute.xlu0 %5037
        %5039 = vrot.lane.b32.xlu0 %v3300, 126
        %v5040 = vpop.permute.xlu0 %5039
        %5041 = vrot.lane.b32.xlu0 %v3301, 126
        %v5042 = vpop.permute.xlu0 %5041
        %5043 = vrot.lane.b32.xlu0 %v3302, 126
        %v5044 = vpop.permute.xlu0 %5043
        %5045 = vrot.lane.b32.xlu0 %v3303, 126
        %v5046 = vpop.permute.xlu0 %5045
        %5047 = vrot.lane.b32.xlu0 %v3304, 126
        %v5048 = vpop.permute.xlu0 %5047
        %5049 = vrot.lane.b32.xlu0 %v3305, 126
        %v5050 = vpop.permute.xlu0 %5049
        %5051 = vrot.lane.b32.xlu0 %v3306, 126
        %v5052 = vpop.permute.xlu0 %5051
        %5053 = vrot.lane.b32.xlu0 %v3307, 126
        %v5054 = vpop.permute.xlu0 %5053
        %5055 = vrot.lane.b32.xlu0 %v3308, 126
        %v5056 = vpop.permute.xlu0 %5055
        %5057 = vrot.lane.b32.xlu0 %v3309, 126
        %v5058 = vpop.permute.xlu0 %5057
        %5059 = vrot.lane.b32.xlu0 %v3310, 126
        %v5060 = vpop.permute.xlu0 %5059
        %5061 = vrot.lane.b32.xlu0 %v3311, 126
        %v5062 = vpop.permute.xlu0 %5061
        %5063 = vrot.lane.b32.xlu0 %v3312, 126
        %v5064 = vpop.permute.xlu0 %5063
        %5065 = vrot.lane.b32.xlu0 %v3313, 126
        %v5066 = vpop.permute.xlu0 %5065
        %5067 = vrot.lane.b32.xlu0 %v3314, 126
        %v5068 = vpop.permute.xlu0 %5067
        %5069 = vrot.lane.b32.xlu0 %v3315, 126
        %v5070 = vpop.permute.xlu0 %5069
        %5071 = vrot.lane.b32.xlu0 %v3316, 126
        %v5072 = vpop.permute.xlu0 %5071
        %5073 = vrot.lane.b32.xlu0 %v3317, 126
        %v5074 = vpop.permute.xlu0 %5073
        %5075 = vrot.lane.b32.xlu0 %v3318, 126
        %v5076 = vpop.permute.xlu0 %5075
        %5077 = vrot.lane.b32.xlu0 %v3319, 126
        %v5078 = vpop.permute.xlu0 %5077
        %5079 = vrot.lane.b32.xlu0 %v3320, 126
        %v5080 = vpop.permute.xlu0 %5079
        %5081 = vrot.lane.b32.xlu0 %v3321, 126
        %v5082 = vpop.permute.xlu0 %5081
        %5083 = vrot.lane.b32.xlu0 %v3322, 126
        %v5084 = vpop.permute.xlu0 %5083
        %5085 = vrot.lane.b32.xlu0 %v3323, 126
        %v5086 = vpop.permute.xlu0 %5085
        %5087 = vrot.lane.b32.xlu0 %v3324, 126
        %v5088 = vpop.permute.xlu0 %5087
        %5089 = vrot.lane.b32.xlu0 %v3325, 126
        %v5090 = vpop.permute.xlu0 %5089
        %5091 = vrot.lane.b32.xlu0 %v3326, 126
        %v5092 = vpop.permute.xlu0 %5091
        %5093 = vrot.lane.b32.xlu0 %v3327, 126
        %v5094 = vpop.permute.xlu0 %5093
        %5095 = vrot.lane.b32.xlu0 %v3328, 126
        %v5096 = vpop.permute.xlu0 %5095
        %5097 = vrot.lane.b32.xlu0 %v3329, 126
        %v5098 = vpop.permute.xlu0 %5097
        %5099 = vrot.lane.b32.xlu0 %v3330, 126
        %v5100 = vpop.permute.xlu0 %5099
        %5101 = vrot.lane.b32.xlu0 %v3331, 126
        %v5102 = vpop.permute.xlu0 %5101
        %5103 = vrot.lane.b32.xlu0 %v3332, 126
        %v5104 = vpop.permute.xlu0 %5103
        %5105 = vrot.lane.b32.xlu0 %v3333, 126
        %v5106 = vpop.permute.xlu0 %5105
        %5107 = vrot.lane.b32.xlu0 %v3334, 126
        %v5108 = vpop.permute.xlu0 %5107
        %5109 = vrot.lane.b32.xlu0 %v3335, 126
        %v5110 = vpop.permute.xlu0 %5109
        %5111 = vrot.lane.b32.xlu0 %v3336, 126
        %v5112 = vpop.permute.xlu0 %5111
        %5113 = vrot.lane.b32.xlu0 %v3337, 126
        %v5114 = vpop.permute.xlu0 %5113
        %5115 = vrot.lane.b32.xlu0 %v3338, 126
        %v5116 = vpop.permute.xlu0 %5115
        %5117 = vrot.lane.b32.xlu0 %v3339, 126
        %v5118 = vpop.permute.xlu0 %5117
        %5119 = vrot.lane.b32.xlu0 %v3340, 126
        %v5120 = vpop.permute.xlu0 %5119
        %5121 = vrot.lane.b32.xlu0 %v3341, 126
        %v5122 = vpop.permute.xlu0 %5121
        %5123 = vrot.lane.b32.xlu0 %v3342, 126
        %v5124 = vpop.permute.xlu0 %5123
        %5125 = vrot.lane.b32.xlu0 %v3343, 126
        %v5126 = vpop.permute.xlu0 %5125
        %5127 = vrot.lane.b32.xlu0 %v3344, 126
        %v5128 = vpop.permute.xlu0 %5127
        %5129 = vrot.lane.b32.xlu0 %v3345, 126
        %v5130 = vpop.permute.xlu0 %5129
        %5131 = vrot.lane.b32.xlu0 %v3346, 126
        %v5132 = vpop.permute.xlu0 %5131
        %5133 = vrot.lane.b32.xlu0 %v3347, 126
        %v5134 = vpop.permute.xlu0 %5133
        %5135 = vrot.lane.b32.xlu0 %v3348, 126
        %v5136 = vpop.permute.xlu0 %5135
        %5137 = vrot.lane.b32.xlu0 %v3349, 126
        %v5138 = vpop.permute.xlu0 %5137
        %5139 = vrot.lane.b32.xlu0 %v3350, 126
        %v5140 = vpop.permute.xlu0 %5139
        %5141 = vrot.lane.b32.xlu0 %v3351, 126
        %v5142 = vpop.permute.xlu0 %5141
        %5143 = vrot.lane.b32.xlu0 %v3352, 126
        %v5144 = vpop.permute.xlu0 %5143
        %5145 = vrot.lane.b32.xlu0 %v3353, 126
        %v5146 = vpop.permute.xlu0 %5145
        %5147 = vrot.lane.b32.xlu0 %v3354, 126
        %v5148 = vpop.permute.xlu0 %5147
        %5149 = vrot.lane.b32.xlu0 %v3355, 126
        %v5150 = vpop.permute.xlu0 %5149
        %5151 = vrot.lane.b32.xlu0 %v3356, 126
        %v5152 = vpop.permute.xlu0 %5151
        %v5217 = vmul.f32 %v4381, %v5026
        %v5218 = vmul.f32 %v4382, %v5028
        %v5219 = vmul.f32 %v4383, %v5030
        %v5220 = vmul.f32 %v4384, %v5032
        %v5221 = vmul.f32 %v4385, %v5034
        %v5222 = vmul.f32 %v4386, %v5036
        %v5223 = vmul.f32 %v4387, %v5038
        %v5224 = vmul.f32 %v4388, %v5040
        %v5225 = vmul.f32 %v4389, %v5042
        %v5226 = vmul.f32 %v4390, %v5044
        %v5227 = vmul.f32 %v4391, %v5046
        %v5228 = vmul.f32 %v4392, %v5048
        %v5229 = vmul.f32 %v4393, %v5050
        %v5230 = vmul.f32 %v4394, %v5052
        %v5231 = vmul.f32 %v4395, %v5054
        %v5232 = vmul.f32 %v4396, %v5056
        %v5233 = vmul.f32 %v4397, %v5058
        %v5234 = vmul.f32 %v4398, %v5060
        %v5235 = vmul.f32 %v4399, %v5062
        %v5236 = vmul.f32 %v4400, %v5064
        %v5237 = vmul.f32 %v4401, %v5066
        %v5238 = vmul.f32 %v4402, %v5068
        %v5239 = vmul.f32 %v4403, %v5070
        %v5240 = vmul.f32 %v4404, %v5072
        %v5241 = vmul.f32 %v4405, %v5074
        %v5242 = vmul.f32 %v4406, %v5076
        %v5243 = vmul.f32 %v4407, %v5078
        %v5244 = vmul.f32 %v4408, %v5080
        %v5245 = vmul.f32 %v4409, %v5082
        %v5246 = vmul.f32 %v4410, %v5084
        %v5247 = vmul.f32 %v4411, %v5086
        %v5248 = vmul.f32 %v4412, %v5088
        %v5249 = vmul.f32 %v4413, %v5090
        %v5250 = vmul.f32 %v4414, %v5092
        %v5251 = vmul.f32 %v4415, %v5094
        %v5252 = vmul.f32 %v4416, %v5096
        %v5253 = vmul.f32 %v4417, %v5098
        %v5254 = vmul.f32 %v4418, %v5100
        %v5255 = vmul.f32 %v4419, %v5102
        %v5256 = vmul.f32 %v4420, %v5104
        %v5257 = vmul.f32 %v4421, %v5106
        %v5258 = vmul.f32 %v4422, %v5108
        %v5259 = vmul.f32 %v4423, %v5110
        %v5260 = vmul.f32 %v4424, %v5112
        %v5261 = vmul.f32 %v4425, %v5114
        %v5262 = vmul.f32 %v4426, %v5116
        %v5263 = vmul.f32 %v4427, %v5118
        %v5264 = vmul.f32 %v4428, %v5120
        %v5265 = vmul.f32 %v4429, %v5122
        %v5266 = vmul.f32 %v4430, %v5124
        %v5267 = vmul.f32 %v4431, %v5126
        %v5268 = vmul.f32 %v4432, %v5128
        %v5269 = vmul.f32 %v4433, %v5130
        %v5270 = vmul.f32 %v4434, %v5132
        %v5271 = vmul.f32 %v4435, %v5134
        %v5272 = vmul.f32 %v4436, %v5136
        %v5273 = vmul.f32 %v4437, %v5138
        %v5274 = vmul.f32 %v4438, %v5140
        %v5275 = vmul.f32 %v4439, %v5142
        %v5276 = vmul.f32 %v4440, %v5144
        %v5277 = vmul.f32 %v4441, %v5146
        %v5278 = vmul.f32 %v4442, %v5148
        %v5279 = vmul.f32 %v4443, %v5150
        %v5280 = vmul.f32 %v4444, %v5152
        %v5281 = vmax.f32 %v5217, 0.0
        %v5282 = vmax.f32 %v5218, 0.0
        %v5283 = vmax.f32 %v5219, 0.0
        %v5284 = vmax.f32 %v5220, 0.0
        %v5285 = vmax.f32 %v5221, 0.0
        %v5286 = vmax.f32 %v5222, 0.0
        %v5287 = vmax.f32 %v5223, 0.0
        %v5288 = vmax.f32 %v5224, 0.0
        %v5289 = vmax.f32 %v5225, 0.0
        %v5290 = vmax.f32 %v5226, 0.0
        %v5291 = vmax.f32 %v5227, 0.0
        %v5292 = vmax.f32 %v5228, 0.0
        %v5293 = vmax.f32 %v5229, 0.0
        %v5294 = vmax.f32 %v5230, 0.0
        %v5295 = vmax.f32 %v5231, 0.0
        %v5296 = vmax.f32 %v5232, 0.0
        %v5297 = vmax.f32 %v5233, 0.0
        %v5298 = vmax.f32 %v5234, 0.0
        %v5299 = vmax.f32 %v5235, 0.0
        %v5300 = vmax.f32 %v5236, 0.0
        %v5301 = vmax.f32 %v5237, 0.0
        %v5302 = vmax.f32 %v5238, 0.0
        %v5303 = vmax.f32 %v5239, 0.0
        %v5304 = vmax.f32 %v5240, 0.0
        %v5305 = vmax.f32 %v5241, 0.0
        %v5306 = vmax.f32 %v5242, 0.0
        %v5307 = vmax.f32 %v5243, 0.0
        %v5308 = vmax.f32 %v5244, 0.0
        %v5309 = vmax.f32 %v5245, 0.0
        %v5310 = vmax.f32 %v5246, 0.0
        %v5311 = vmax.f32 %v5247, 0.0
        %v5312 = vmax.f32 %v5248, 0.0
        %v5313 = vmax.f32 %v5249, 0.0
        %v5314 = vmax.f32 %v5250, 0.0
        %v5315 = vmax.f32 %v5251, 0.0
        %v5316 = vmax.f32 %v5252, 0.0
        %v5317 = vmax.f32 %v5253, 0.0
        %v5318 = vmax.f32 %v5254, 0.0
        %v5319 = vmax.f32 %v5255, 0.0
        %v5320 = vmax.f32 %v5256, 0.0
        %v5321 = vmax.f32 %v5257, 0.0
        %v5322 = vmax.f32 %v5258, 0.0
        %v5323 = vmax.f32 %v5259, 0.0
        %v5324 = vmax.f32 %v5260, 0.0
        %v5325 = vmax.f32 %v5261, 0.0
        %v5326 = vmax.f32 %v5262, 0.0
        %v5327 = vmax.f32 %v5263, 0.0
        %v5328 = vmax.f32 %v5264, 0.0
        %v5329 = vmax.f32 %v5265, 0.0
        %v5330 = vmax.f32 %v5266, 0.0
        %v5331 = vmax.f32 %v5267, 0.0
        %v5332 = vmax.f32 %v5268, 0.0
        %v5333 = vmax.f32 %v5269, 0.0
        %v5334 = vmax.f32 %v5270, 0.0
        %v5335 = vmax.f32 %v5271, 0.0
        %v5336 = vmax.f32 %v5272, 0.0
        %v5337 = vmax.f32 %v5273, 0.0
        %v5338 = vmax.f32 %v5274, 0.0
        %v5339 = vmax.f32 %v5275, 0.0
        %v5340 = vmax.f32 %v5276, 0.0
        %v5341 = vmax.f32 %v5277, 0.0
        %v5342 = vmax.f32 %v5278, 0.0
        %v5343 = vmax.f32 %v5279, 0.0
        %v5344 = vmax.f32 %v5280, 0.0
        %v5345 = vand.u32 2147483647, %v5217
        %v5346 = vand.u32 2147483647, %v5218
        %v5347 = vand.u32 2147483647, %v5219
        %v5348 = vand.u32 2147483647, %v5220
        %v5349 = vand.u32 2147483647, %v5221
        %v5350 = vand.u32 2147483647, %v5222
        %v5351 = vand.u32 2147483647, %v5223
        %v5352 = vand.u32 2147483647, %v5224
        %v5353 = vand.u32 2147483647, %v5225
        %v5354 = vand.u32 2147483647, %v5226
        %v5355 = vand.u32 2147483647, %v5227
        %v5356 = vand.u32 2147483647, %v5228
        %v5357 = vand.u32 2147483647, %v5229
        %v5358 = vand.u32 2147483647, %v5230
        %v5359 = vand.u32 2147483647, %v5231
        %v5360 = vand.u32 2147483647, %v5232
        %v5361 = vand.u32 2147483647, %v5233
        %v5362 = vand.u32 2147483647, %v5234
        %v5363 = vand.u32 2147483647, %v5235
        %v5364 = vand.u32 2147483647, %v5236
        %v5365 = vand.u32 2147483647, %v5237
        %v5366 = vand.u32 2147483647, %v5238
        %v5367 = vand.u32 2147483647, %v5239
        %v5368 = vand.u32 2147483647, %v5240
        %v5369 = vand.u32 2147483647, %v5241
        %v5370 = vand.u32 2147483647, %v5242
        %v5371 = vand.u32 2147483647, %v5243
        %v5372 = vand.u32 2147483647, %v5244
        %v5373 = vand.u32 2147483647, %v5245
        %v5374 = vand.u32 2147483647, %v5246
        %v5375 = vand.u32 2147483647, %v5247
        %v5376 = vand.u32 2147483647, %v5248
        %v5377 = vand.u32 2147483647, %v5249
        %v5378 = vand.u32 2147483647, %v5250
        %v5379 = vand.u32 2147483647, %v5251
        %v5380 = vand.u32 2147483647, %v5252
        %v5381 = vand.u32 2147483647, %v5253
        %v5382 = vand.u32 2147483647, %v5254
        %v5383 = vand.u32 2147483647, %v5255
        %v5384 = vand.u32 2147483647, %v5256
        %v5385 = vand.u32 2147483647, %v5257
        %v5386 = vand.u32 2147483647, %v5258
        %v5387 = vand.u32 2147483647, %v5259
        %v5388 = vand.u32 2147483647, %v5260
        %v5389 = vand.u32 2147483647, %v5261
        %v5390 = vand.u32 2147483647, %v5262
        %v5391 = vand.u32 2147483647, %v5263
        %v5392 = vand.u32 2147483647, %v5264
        %v5393 = vand.u32 2147483647, %v5265
        %v5394 = vand.u32 2147483647, %v5266
        %v5395 = vand.u32 2147483647, %v5267
        %v5396 = vand.u32 2147483647, %v5268
        %v5397 = vand.u32 2147483647, %v5269
        %v5398 = vand.u32 2147483647, %v5270
        %v5399 = vand.u32 2147483647, %v5271
        %v5400 = vand.u32 2147483647, %v5272
        %v5401 = vand.u32 2147483647, %v5273
        %v5402 = vand.u32 2147483647, %v5274
        %v5403 = vand.u32 2147483647, %v5275
        %v5404 = vand.u32 2147483647, %v5276
        %v5405 = vand.u32 2147483647, %v5277
        %v5406 = vand.u32 2147483647, %v5278
        %v5407 = vand.u32 2147483647, %v5279
        %v5408 = vand.u32 2147483647, %v5280
        %v5409 = vsub.f32 0.0, %v5345
        %v5410 = vsub.f32 0.0, %v5346
        %v5411 = vsub.f32 0.0, %v5347
        %v5412 = vsub.f32 0.0, %v5348
        %v5413 = vsub.f32 0.0, %v5349
        %v5414 = vsub.f32 0.0, %v5350
        %v5415 = vsub.f32 0.0, %v5351
        %v5416 = vsub.f32 0.0, %v5352
        %v5417 = vsub.f32 0.0, %v5353
        %v5418 = vsub.f32 0.0, %v5354
        %v5419 = vsub.f32 0.0, %v5355
        %v5420 = vsub.f32 0.0, %v5356
        %v5421 = vsub.f32 0.0, %v5357
        %v5422 = vsub.f32 0.0, %v5358
        %v5423 = vsub.f32 0.0, %v5359
        %v5424 = vsub.f32 0.0, %v5360
        %v5425 = vsub.f32 0.0, %v5361
        %v5426 = vsub.f32 0.0, %v5362
        %v5427 = vsub.f32 0.0, %v5363
        %v5428 = vsub.f32 0.0, %v5364
        %v5429 = vsub.f32 0.0, %v5365
        %v5430 = vsub.f32 0.0, %v5366
        %v5431 = vsub.f32 0.0, %v5367
        %v5432 = vsub.f32 0.0, %v5368
        %v5433 = vsub.f32 0.0, %v5369
        %v5434 = vsub.f32 0.0, %v5370
        %v5435 = vsub.f32 0.0, %v5371
        %v5436 = vsub.f32 0.0, %v5372
        %v5437 = vsub.f32 0.0, %v5373
        %v5438 = vsub.f32 0.0, %v5374
        %v5439 = vsub.f32 0.0, %v5375
        %v5440 = vsub.f32 0.0, %v5376
        %v5441 = vsub.f32 0.0, %v5377
        %v5442 = vsub.f32 0.0, %v5378
        %v5443 = vsub.f32 0.0, %v5379
        %v5444 = vsub.f32 0.0, %v5380
        %v5445 = vsub.f32 0.0, %v5381
        %v5446 = vsub.f32 0.0, %v5382
        %v5447 = vsub.f32 0.0, %v5383
        %v5448 = vsub.f32 0.0, %v5384
        %v5449 = vsub.f32 0.0, %v5385
        %v5450 = vsub.f32 0.0, %v5386
        %v5451 = vsub.f32 0.0, %v5387
        %v5452 = vsub.f32 0.0, %v5388
        %v5453 = vsub.f32 0.0, %v5389
        %v5454 = vsub.f32 0.0, %v5390
        %v5455 = vsub.f32 0.0, %v5391
        %v5456 = vsub.f32 0.0, %v5392
        %v5457 = vsub.f32 0.0, %v5393
        %v5458 = vsub.f32 0.0, %v5394
        %v5459 = vsub.f32 0.0, %v5395
        %v5460 = vsub.f32 0.0, %v5396
        %v5461 = vsub.f32 0.0, %v5397
        %v5462 = vsub.f32 0.0, %v5398
        %v5463 = vsub.f32 0.0, %v5399
        %v5464 = vsub.f32 0.0, %v5400
        %v5465 = vsub.f32 0.0, %v5401
        %v5466 = vsub.f32 0.0, %v5402
        %v5467 = vsub.f32 0.0, %v5403
        %v5468 = vsub.f32 0.0, %v5404
        %v5469 = vsub.f32 0.0, %v5405
        %v5470 = vsub.f32 0.0, %v5406
        %v5471 = vsub.f32 0.0, %v5407
        %v5472 = vsub.f32 0.0, %v5408
        %v5473 = vmul.f32 %v5409, 1.442695
        %v5474 = vpow.pop %v5473
        %v5475 = vmul.f32 %v5410, 1.442695
        %v5476 = vpow.pop %v5475
        %v5477 = vmul.f32 %v5411, 1.442695
        %v5478 = vpow.pop %v5477
        %v5479 = vmul.f32 %v5412, 1.442695
        %v5480 = vpow.pop %v5479
        %v5481 = vmul.f32 %v5413, 1.442695
        %v5482 = vpow.pop %v5481
        %v5483 = vmul.f32 %v5414, 1.442695
        %v5484 = vpow.pop %v5483
        %v5485 = vmul.f32 %v5415, 1.442695
        %v5486 = vpow.pop %v5485
        %v5487 = vmul.f32 %v5416, 1.442695
        %v5488 = vpow.pop %v5487
        %v5489 = vmul.f32 %v5417, 1.442695
        %v5490 = vpow.pop %v5489
        %v5491 = vmul.f32 %v5418, 1.442695
        %v5492 = vpow.pop %v5491
        %v5493 = vmul.f32 %v5419, 1.442695
        %v5494 = vpow.pop %v5493
        %v5495 = vmul.f32 %v5420, 1.442695
        %v5496 = vpow.pop %v5495
        %v5497 = vmul.f32 %v5421, 1.442695
        %v5498 = vpow.pop %v5497
        %v5499 = vmul.f32 %v5422, 1.442695
        %v5500 = vpow.pop %v5499
        %v5501 = vmul.f32 %v5423, 1.442695
        %v5502 = vpow.pop %v5501
        %v5503 = vmul.f32 %v5424, 1.442695
        %v5504 = vpow.pop %v5503
        %v5505 = vmul.f32 %v5425, 1.442695
        %v5506 = vpow.pop %v5505
        %v5507 = vmul.f32 %v5426, 1.442695
        %v5508 = vpow.pop %v5507
        %v5509 = vmul.f32 %v5427, 1.442695
        %v5510 = vpow.pop %v5509
        %v5511 = vmul.f32 %v5428, 1.442695
        %v5512 = vpow.pop %v5511
        %v5513 = vmul.f32 %v5429, 1.442695
        %v5514 = vpow.pop %v5513
        %v5515 = vmul.f32 %v5430, 1.442695
        %v5516 = vpow.pop %v5515
        %v5517 = vmul.f32 %v5431, 1.442695
        %v5518 = vpow.pop %v5517
        %v5519 = vmul.f32 %v5432, 1.442695
        %v5520 = vpow.pop %v5519
        %v5521 = vmul.f32 %v5433, 1.442695
        %v5522 = vpow.pop %v5521
        %v5523 = vmul.f32 %v5434, 1.442695
        %v5524 = vpow.pop %v5523
        %v5525 = vmul.f32 %v5435, 1.442695
        %v5526 = vpow.pop %v5525
        %v5527 = vmul.f32 %v5436, 1.442695
        %v5528 = vpow.pop %v5527
        %v5529 = vmul.f32 %v5437, 1.442695
        %v5530 = vpow.pop %v5529
        %v5531 = vmul.f32 %v5438, 1.442695
        %v5532 = vpow.pop %v5531
        %v5533 = vmul.f32 %v5439, 1.442695
        %v5534 = vpow.pop %v5533
        %v5535 = vmul.f32 %v5440, 1.442695
        %v5536 = vpow.pop %v5535
        %v5537 = vmul.f32 %v5441, 1.442695
        %v5538 = vpow.pop %v5537
        %v5539 = vmul.f32 %v5442, 1.442695
        %v5540 = vpow.pop %v5539
        %v5541 = vmul.f32 %v5443, 1.442695
        %v5542 = vpow.pop %v5541
        %v5543 = vmul.f32 %v5444, 1.442695
        %v5544 = vpow.pop %v5543
        %v5545 = vmul.f32 %v5445, 1.442695
        %v5546 = vpow.pop %v5545
        %v5547 = vmul.f32 %v5446, 1.442695
        %v5548 = vpow.pop %v5547
        %v5549 = vmul.f32 %v5447, 1.442695
        %v5550 = vpow.pop %v5549
        %v5551 = vmul.f32 %v5448, 1.442695
        %v5552 = vpow.pop %v5551
        %v5553 = vmul.f32 %v5449, 1.442695
        %v5554 = vpow.pop %v5553
        %v5555 = vmul.f32 %v5450, 1.442695
        %v5556 = vpow.pop %v5555
        %v5557 = vmul.f32 %v5451, 1.442695
        %v5558 = vpow.pop %v5557
        %v5559 = vmul.f32 %v5452, 1.442695
        %v5560 = vpow.pop %v5559
        %v5561 = vmul.f32 %v5453, 1.442695
        %v5562 = vpow.pop %v5561
        %v5563 = vmul.f32 %v5454, 1.442695
        %v5564 = vpow.pop %v5563
        %v5565 = vmul.f32 %v5455, 1.442695
        %v5566 = vpow.pop %v5565
        %v5567 = vmul.f32 %v5456, 1.442695
        %v5568 = vpow.pop %v5567
        %v5569 = vmul.f32 %v5457, 1.442695
        %v5570 = vpow.pop %v5569
        %v5571 = vmul.f32 %v5458, 1.442695
        %v5572 = vpow.pop %v5571
        %v5573 = vmul.f32 %v5459, 1.442695
        %v5574 = vpow.pop %v5573
        %v5575 = vmul.f32 %v5460, 1.442695
        %v5576 = vpow.pop %v5575
        %v5577 = vmul.f32 %v5461, 1.442695
        %v5578 = vpow.pop %v5577
        %v5579 = vmul.f32 %v5462, 1.442695
        %v5580 = vpow.pop %v5579
        %v5581 = vmul.f32 %v5463, 1.442695
        %v5582 = vpow.pop %v5581
        %v5583 = vmul.f32 %v5464, 1.442695
        %v5584 = vpow.pop %v5583
        %v5585 = vmul.f32 %v5465, 1.442695
        %v5586 = vpow.pop %v5585
        %v5587 = vmul.f32 %v5466, 1.442695
        %v5588 = vpow.pop %v5587
        %v5589 = vmul.f32 %v5467, 1.442695
        %v5590 = vpow.pop %v5589
        %v5591 = vmul.f32 %v5468, 1.442695
        %v5592 = vpow.pop %v5591
        %v5593 = vmul.f32 %v5469, 1.442695
        %v5594 = vpow.pop %v5593
        %v5595 = vmul.f32 %v5470, 1.442695
        %v5596 = vpow.pop %v5595
        %v5597 = vmul.f32 %v5471, 1.442695
        %v5598 = vpow.pop %v5597
        %v5599 = vmul.f32 %v5472, 1.442695
        %v5600 = vpow.pop %v5599
        %v5601 = vadd.f32 %v5474, 1.0
        %v5602 = vadd.f32 %v5476, 1.0
        %v5603 = vadd.f32 %v5478, 1.0
        %v5604 = vadd.f32 %v5480, 1.0
        %v5605 = vadd.f32 %v5482, 1.0
        %v5606 = vadd.f32 %v5484, 1.0
        %v5607 = vadd.f32 %v5486, 1.0
        %v5608 = vadd.f32 %v5488, 1.0
        %v5609 = vadd.f32 %v5490, 1.0
        %v5610 = vadd.f32 %v5492, 1.0
        %v5611 = vadd.f32 %v5494, 1.0
        %v5612 = vadd.f32 %v5496, 1.0
        %v5613 = vadd.f32 %v5498, 1.0
        %v5614 = vadd.f32 %v5500, 1.0
        %v5615 = vadd.f32 %v5502, 1.0
        %v5616 = vadd.f32 %v5504, 1.0
        %v5617 = vadd.f32 %v5506, 1.0
        %v5618 = vadd.f32 %v5508, 1.0
        %v5619 = vadd.f32 %v5510, 1.0
        %v5620 = vadd.f32 %v5512, 1.0
        %v5621 = vadd.f32 %v5514, 1.0
        %v5622 = vadd.f32 %v5516, 1.0
        %v5623 = vadd.f32 %v5518, 1.0
        %v5624 = vadd.f32 %v5520, 1.0
        %v5625 = vadd.f32 %v5522, 1.0
        %v5626 = vadd.f32 %v5524, 1.0
        %v5627 = vadd.f32 %v5526, 1.0
        %v5628 = vadd.f32 %v5528, 1.0
        %v5629 = vadd.f32 %v5530, 1.0
        %v5630 = vadd.f32 %v5532, 1.0
        %v5631 = vadd.f32 %v5534, 1.0
        %v5632 = vadd.f32 %v5536, 1.0
        %v5633 = vadd.f32 %v5538, 1.0
        %v5634 = vadd.f32 %v5540, 1.0
        %v5635 = vadd.f32 %v5542, 1.0
        %v5636 = vadd.f32 %v5544, 1.0
        %v5637 = vadd.f32 %v5546, 1.0
        %v5638 = vadd.f32 %v5548, 1.0
        %v5639 = vadd.f32 %v5550, 1.0
        %v5640 = vadd.f32 %v5552, 1.0
        %v5641 = vadd.f32 %v5554, 1.0
        %v5642 = vadd.f32 %v5556, 1.0
        %v5643 = vadd.f32 %v5558, 1.0
        %v5644 = vadd.f32 %v5560, 1.0
        %v5645 = vadd.f32 %v5562, 1.0
        %v5646 = vadd.f32 %v5564, 1.0
        %v5647 = vadd.f32 %v5566, 1.0
        %v5648 = vadd.f32 %v5568, 1.0
        %v5649 = vadd.f32 %v5570, 1.0
        %v5650 = vadd.f32 %v5572, 1.0
        %v5651 = vadd.f32 %v5574, 1.0
        %v5652 = vadd.f32 %v5576, 1.0
        %v5653 = vadd.f32 %v5578, 1.0
        %v5654 = vadd.f32 %v5580, 1.0
        %v5655 = vadd.f32 %v5582, 1.0
        %v5656 = vadd.f32 %v5584, 1.0
        %v5657 = vadd.f32 %v5586, 1.0
        %v5658 = vadd.f32 %v5588, 1.0
        %v5659 = vadd.f32 %v5590, 1.0
        %v5660 = vadd.f32 %v5592, 1.0
        %v5661 = vadd.f32 %v5594, 1.0
        %v5662 = vadd.f32 %v5596, 1.0
        %v5663 = vadd.f32 %v5598, 1.0
        %v5664 = vadd.f32 %v5600, 1.0
        %v5665 = vlog2.pop %v5601
        %v5666 = vmul.f32 %v5665, 0.6931472
        %v5667 = vlog2.pop %v5602
        %v5668 = vmul.f32 %v5667, 0.6931472
        %v5669 = vlog2.pop %v5603
        %v5670 = vmul.f32 %v5669, 0.6931472
        %v5671 = vlog2.pop %v5604
        %v5672 = vmul.f32 %v5671, 0.6931472
        %v5673 = vlog2.pop %v5605
        %v5674 = vmul.f32 %v5673, 0.6931472
        %v5675 = vlog2.pop %v5606
        %v5676 = vmul.f32 %v5675, 0.6931472
        %v5677 = vlog2.pop %v5607
        %v5678 = vmul.f32 %v5677, 0.6931472
        %v5679 = vlog2.pop %v5608
        %v5680 = vmul.f32 %v5679, 0.6931472
        %v5681 = vlog2.pop %v5609
        %v5682 = vmul.f32 %v5681, 0.6931472
        %v5683 = vlog2.pop %v5610
        %v5684 = vmul.f32 %v5683, 0.6931472
        %v5685 = vlog2.pop %v5611
        %v5686 = vmul.f32 %v5685, 0.6931472
        %v5687 = vlog2.pop %v5612
        %v5688 = vmul.f32 %v5687, 0.6931472
        %v5689 = vlog2.pop %v5613
        %v5690 = vmul.f32 %v5689, 0.6931472
        %v5691 = vlog2.pop %v5614
        %v5692 = vmul.f32 %v5691, 0.6931472
        %v5693 = vlog2.pop %v5615
        %v5694 = vmul.f32 %v5693, 0.6931472
        %v5695 = vlog2.pop %v5616
        %v5696 = vmul.f32 %v5695, 0.6931472
        %v5697 = vlog2.pop %v5617
        %v5698 = vmul.f32 %v5697, 0.6931472
        %v5699 = vlog2.pop %v5618
        %v5700 = vmul.f32 %v5699, 0.6931472
        %v5701 = vlog2.pop %v5619
        %v5702 = vmul.f32 %v5701, 0.6931472
        %v5703 = vlog2.pop %v5620
        %v5704 = vmul.f32 %v5703, 0.6931472
        %v5705 = vlog2.pop %v5621
        %v5706 = vmul.f32 %v5705, 0.6931472
        %v5707 = vlog2.pop %v5622
        %v5708 = vmul.f32 %v5707, 0.6931472
        %v5709 = vlog2.pop %v5623
        %v5710 = vmul.f32 %v5709, 0.6931472
        %v5711 = vlog2.pop %v5624
        %v5712 = vmul.f32 %v5711, 0.6931472
        %v5713 = vlog2.pop %v5625
        %v5714 = vmul.f32 %v5713, 0.6931472
        %v5715 = vlog2.pop %v5626
        %v5716 = vmul.f32 %v5715, 0.6931472
        %v5717 = vlog2.pop %v5627
        %v5718 = vmul.f32 %v5717, 0.6931472
        %v5719 = vlog2.pop %v5628
        %v5720 = vmul.f32 %v5719, 0.6931472
        %v5721 = vlog2.pop %v5629
        %v5722 = vmul.f32 %v5721, 0.6931472
        %v5723 = vlog2.pop %v5630
        %v5724 = vmul.f32 %v5723, 0.6931472
        %v5725 = vlog2.pop %v5631
        %v5726 = vmul.f32 %v5725, 0.6931472
        %v5727 = vlog2.pop %v5632
        %v5728 = vmul.f32 %v5727, 0.6931472
        %v5729 = vlog2.pop %v5633
        %v5730 = vmul.f32 %v5729, 0.6931472
        %v5731 = vlog2.pop %v5634
        %v5732 = vmul.f32 %v5731, 0.6931472
        %v5733 = vlog2.pop %v5635
        %v5734 = vmul.f32 %v5733, 0.6931472
        %v5735 = vlog2.pop %v5636
        %v5736 = vmul.f32 %v5735, 0.6931472
        %v5737 = vlog2.pop %v5637
        %v5738 = vmul.f32 %v5737, 0.6931472
        %v5739 = vlog2.pop %v5638
        %v5740 = vmul.f32 %v5739, 0.6931472
        %v5741 = vlog2.pop %v5639
        %v5742 = vmul.f32 %v5741, 0.6931472
        %v5743 = vlog2.pop %v5640
        %v5744 = vmul.f32 %v5743, 0.6931472
        %v5745 = vlog2.pop %v5641
        %v5746 = vmul.f32 %v5745, 0.6931472
        %v5747 = vlog2.pop %v5642
        %v5748 = vmul.f32 %v5747, 0.6931472
        %v5749 = vlog2.pop %v5643
        %v5750 = vmul.f32 %v5749, 0.6931472
        %v5751 = vlog2.pop %v5644
        %v5752 = vmul.f32 %v5751, 0.6931472
        %v5753 = vlog2.pop %v5645
        %v5754 = vmul.f32 %v5753, 0.6931472
        %v5755 = vlog2.pop %v5646
        %v5756 = vmul.f32 %v5755, 0.6931472
        %v5757 = vlog2.pop %v5647
        %v5758 = vmul.f32 %v5757, 0.6931472
        %v5759 = vlog2.pop %v5648
        %v5760 = vmul.f32 %v5759, 0.6931472
        %v5761 = vlog2.pop %v5649
        %v5762 = vmul.f32 %v5761, 0.6931472
        %v5763 = vlog2.pop %v5650
        %v5764 = vmul.f32 %v5763, 0.6931472
        %v5765 = vlog2.pop %v5651
        %v5766 = vmul.f32 %v5765, 0.6931472
        %v5767 = vlog2.pop %v5652
        %v5768 = vmul.f32 %v5767, 0.6931472
        %v5769 = vlog2.pop %v5653
        %v5770 = vmul.f32 %v5769, 0.6931472
        %v5771 = vlog2.pop %v5654
        %v5772 = vmul.f32 %v5771, 0.6931472
        %v5773 = vlog2.pop %v5655
        %v5774 = vmul.f32 %v5773, 0.6931472
        %v5775 = vlog2.pop %v5656
        %v5776 = vmul.f32 %v5775, 0.6931472
        %v5777 = vlog2.pop %v5657
        %v5778 = vmul.f32 %v5777, 0.6931472
        %v5779 = vlog2.pop %v5658
        %v5780 = vmul.f32 %v5779, 0.6931472
        %v5781 = vlog2.pop %v5659
        %v5782 = vmul.f32 %v5781, 0.6931472
        %v5783 = vlog2.pop %v5660
        %v5784 = vmul.f32 %v5783, 0.6931472
        %v5785 = vlog2.pop %v5661
        %v5786 = vmul.f32 %v5785, 0.6931472
        %v5787 = vlog2.pop %v5662
        %v5788 = vmul.f32 %v5787, 0.6931472
        %v5789 = vlog2.pop %v5663
        %v5790 = vmul.f32 %v5789, 0.6931472
        %v5791 = vlog2.pop %v5664
        %v5792 = vmul.f32 %v5791, 0.6931472
        %v5793 = vadd.f32 %v5281, %v5666
        %v5794 = vadd.f32 %v5282, %v5668
        %v5795 = vadd.f32 %v5283, %v5670
        %v5796 = vadd.f32 %v5284, %v5672
        %v5797 = vadd.f32 %v5285, %v5674
        %v5798 = vadd.f32 %v5286, %v5676
        %v5799 = vadd.f32 %v5287, %v5678
        %v5800 = vadd.f32 %v5288, %v5680
        %v5801 = vadd.f32 %v5289, %v5682
        %v5802 = vadd.f32 %v5290, %v5684
        %v5803 = vadd.f32 %v5291, %v5686
        %v5804 = vadd.f32 %v5292, %v5688
        %v5805 = vadd.f32 %v5293, %v5690
        %v5806 = vadd.f32 %v5294, %v5692
        %v5807 = vadd.f32 %v5295, %v5694
        %v5808 = vadd.f32 %v5296, %v5696
        %v5809 = vadd.f32 %v5297, %v5698
        %v5810 = vadd.f32 %v5298, %v5700
        %v5811 = vadd.f32 %v5299, %v5702
        %v5812 = vadd.f32 %v5300, %v5704
        %v5813 = vadd.f32 %v5301, %v5706
        %v5814 = vadd.f32 %v5302, %v5708
        %v5815 = vadd.f32 %v5303, %v5710
        %v5816 = vadd.f32 %v5304, %v5712
        %v5817 = vadd.f32 %v5305, %v5714
        %v5818 = vadd.f32 %v5306, %v5716
        %v5819 = vadd.f32 %v5307, %v5718
        %v5820 = vadd.f32 %v5308, %v5720
        %v5821 = vadd.f32 %v5309, %v5722
        %v5822 = vadd.f32 %v5310, %v5724
        %v5823 = vadd.f32 %v5311, %v5726
        %v5824 = vadd.f32 %v5312, %v5728
        %v5825 = vadd.f32 %v5313, %v5730
        %v5826 = vadd.f32 %v5314, %v5732
        %v5827 = vadd.f32 %v5315, %v5734
        %v5828 = vadd.f32 %v5316, %v5736
        %v5829 = vadd.f32 %v5317, %v5738
        %v5830 = vadd.f32 %v5318, %v5740
        %v5831 = vadd.f32 %v5319, %v5742
        %v5832 = vadd.f32 %v5320, %v5744
        %v5833 = vadd.f32 %v5321, %v5746
        %v5834 = vadd.f32 %v5322, %v5748
        %v5835 = vadd.f32 %v5323, %v5750
        %v5836 = vadd.f32 %v5324, %v5752
        %v5837 = vadd.f32 %v5325, %v5754
        %v5838 = vadd.f32 %v5326, %v5756
        %v5839 = vadd.f32 %v5327, %v5758
        %v5840 = vadd.f32 %v5328, %v5760
        %v5841 = vadd.f32 %v5329, %v5762
        %v5842 = vadd.f32 %v5330, %v5764
        %v5843 = vadd.f32 %v5331, %v5766
        %v5844 = vadd.f32 %v5332, %v5768
        %v5845 = vadd.f32 %v5333, %v5770
        %v5846 = vadd.f32 %v5334, %v5772
        %v5847 = vadd.f32 %v5335, %v5774
        %v5848 = vadd.f32 %v5336, %v5776
        %v5849 = vadd.f32 %v5337, %v5778
        %v5850 = vadd.f32 %v5338, %v5780
        %v5851 = vadd.f32 %v5339, %v5782
        %v5852 = vadd.f32 %v5340, %v5784
        %v5853 = vadd.f32 %v5341, %v5786
        %v5854 = vadd.f32 %v5342, %v5788
        %v5855 = vadd.f32 %v5343, %v5790
        %v5856 = vadd.f32 %v5344, %v5792
        %5921 = vrot.lane.b32.xlu0 %v5793, 127
        %v5922 = vpop.permute.xlu0 %5921
        %5923 = vrot.lane.b32.xlu0 %v5794, 127
        %v5924 = vpop.permute.xlu0 %5923
        %5925 = vrot.lane.b32.xlu0 %v5795, 127
        %v5926 = vpop.permute.xlu0 %5925
        %5927 = vrot.lane.b32.xlu0 %v5796, 127
        %v5928 = vpop.permute.xlu0 %5927
        %5929 = vrot.lane.b32.xlu0 %v5797, 127
        %v5930 = vpop.permute.xlu0 %5929
        %5931 = vrot.lane.b32.xlu0 %v5798, 127
        %v5932 = vpop.permute.xlu0 %5931
        %5933 = vrot.lane.b32.xlu0 %v5799, 127
        %v5934 = vpop.permute.xlu0 %5933
        %5935 = vrot.lane.b32.xlu0 %v5800, 127
        %v5936 = vpop.permute.xlu0 %5935
        %5937 = vrot.lane.b32.xlu0 %v5801, 127
        %v5938 = vpop.permute.xlu0 %5937
        %5939 = vrot.lane.b32.xlu0 %v5802, 127
        %v5940 = vpop.permute.xlu0 %5939
        %5941 = vrot.lane.b32.xlu0 %v5803, 127
        %v5942 = vpop.permute.xlu0 %5941
        %5943 = vrot.lane.b32.xlu0 %v5804, 127
        %v5944 = vpop.permute.xlu0 %5943
        %5945 = vrot.lane.b32.xlu0 %v5805, 127
        %v5946 = vpop.permute.xlu0 %5945
        %5947 = vrot.lane.b32.xlu0 %v5806, 127
        %v5948 = vpop.permute.xlu0 %5947
        %5949 = vrot.lane.b32.xlu0 %v5807, 127
        %v5950 = vpop.permute.xlu0 %5949
        %5951 = vrot.lane.b32.xlu0 %v5808, 127
        %v5952 = vpop.permute.xlu0 %5951
        %5953 = vrot.lane.b32.xlu0 %v5809, 127
        %v5954 = vpop.permute.xlu0 %5953
        %5955 = vrot.lane.b32.xlu0 %v5810, 127
        %v5956 = vpop.permute.xlu0 %5955
        %5957 = vrot.lane.b32.xlu0 %v5811, 127
        %v5958 = vpop.permute.xlu0 %5957
        %5959 = vrot.lane.b32.xlu0 %v5812, 127
        %v5960 = vpop.permute.xlu0 %5959
        %5961 = vrot.lane.b32.xlu0 %v5813, 127
        %v5962 = vpop.permute.xlu0 %5961
        %5963 = vrot.lane.b32.xlu0 %v5814, 127
        %v5964 = vpop.permute.xlu0 %5963
        %5965 = vrot.lane.b32.xlu0 %v5815, 127
        %v5966 = vpop.permute.xlu0 %5965
        %5967 = vrot.lane.b32.xlu0 %v5816, 127
        %v5968 = vpop.permute.xlu0 %5967
        %5969 = vrot.lane.b32.xlu0 %v5817, 127
        %v5970 = vpop.permute.xlu0 %5969
        %5971 = vrot.lane.b32.xlu0 %v5818, 127
        %v5972 = vpop.permute.xlu0 %5971
        %5973 = vrot.lane.b32.xlu0 %v5819, 127
        %v5974 = vpop.permute.xlu0 %5973
        %5975 = vrot.lane.b32.xlu0 %v5820, 127
        %v5976 = vpop.permute.xlu0 %5975
        %5977 = vrot.lane.b32.xlu0 %v5821, 127
        %v5978 = vpop.permute.xlu0 %5977
        %5979 = vrot.lane.b32.xlu0 %v5822, 127
        %v5980 = vpop.permute.xlu0 %5979
        %5981 = vrot.lane.b32.xlu0 %v5823, 127
        %v5982 = vpop.permute.xlu0 %5981
        %5983 = vrot.lane.b32.xlu0 %v5824, 127
        %v5984 = vpop.permute.xlu0 %5983
        %5985 = vrot.lane.b32.xlu0 %v5825, 127
        %v5986 = vpop.permute.xlu0 %5985
        %5987 = vrot.lane.b32.xlu0 %v5826, 127
        %v5988 = vpop.permute.xlu0 %5987
        %5989 = vrot.lane.b32.xlu0 %v5827, 127
        %v5990 = vpop.permute.xlu0 %5989
        %5991 = vrot.lane.b32.xlu0 %v5828, 127
        %v5992 = vpop.permute.xlu0 %5991
        %5993 = vrot.lane.b32.xlu0 %v5829, 127
        %v5994 = vpop.permute.xlu0 %5993
        %5995 = vrot.lane.b32.xlu0 %v5830, 127
        %v5996 = vpop.permute.xlu0 %5995
        %5997 = vrot.lane.b32.xlu0 %v5831, 127
        %v5998 = vpop.permute.xlu0 %5997
        %5999 = vrot.lane.b32.xlu0 %v5832, 127
        %v6000 = vpop.permute.xlu0 %5999
        %6001 = vrot.lane.b32.xlu0 %v5833, 127
        %v6002 = vpop.permute.xlu0 %6001
        %6003 = vrot.lane.b32.xlu0 %v5834, 127
        %v6004 = vpop.permute.xlu0 %6003
        %6005 = vrot.lane.b32.xlu0 %v5835, 127
        %v6006 = vpop.permute.xlu0 %6005
        %6007 = vrot.lane.b32.xlu0 %v5836, 127
        %v6008 = vpop.permute.xlu0 %6007
        %6009 = vrot.lane.b32.xlu0 %v5837, 127
        %v6010 = vpop.permute.xlu0 %6009
        %6011 = vrot.lane.b32.xlu0 %v5838, 127
        %v6012 = vpop.permute.xlu0 %6011
        %6013 = vrot.lane.b32.xlu0 %v5839, 127
        %v6014 = vpop.permute.xlu0 %6013
        %6015 = vrot.lane.b32.xlu0 %v5840, 127
        %v6016 = vpop.permute.xlu0 %6015
        %6017 = vrot.lane.b32.xlu0 %v5841, 127
        %v6018 = vpop.permute.xlu0 %6017
        %6019 = vrot.lane.b32.xlu0 %v5842, 127
        %v6020 = vpop.permute.xlu0 %6019
        %6021 = vrot.lane.b32.xlu0 %v5843, 127
        %v6022 = vpop.permute.xlu0 %6021
        %6023 = vrot.lane.b32.xlu0 %v5844, 127
        %v6024 = vpop.permute.xlu0 %6023
        %6025 = vrot.lane.b32.xlu0 %v5845, 127
        %v6026 = vpop.permute.xlu0 %6025
        %6027 = vrot.lane.b32.xlu0 %v5846, 127
        %v6028 = vpop.permute.xlu0 %6027
        %6029 = vrot.lane.b32.xlu0 %v5847, 127
        %v6030 = vpop.permute.xlu0 %6029
        %6031 = vrot.lane.b32.xlu0 %v5848, 127
        %v6032 = vpop.permute.xlu0 %6031
        %6033 = vrot.lane.b32.xlu0 %v5849, 127
        %v6034 = vpop.permute.xlu0 %6033
        %6035 = vrot.lane.b32.xlu0 %v5850, 127
        %v6036 = vpop.permute.xlu0 %6035
        %6037 = vrot.lane.b32.xlu0 %v5851, 127
        %v6038 = vpop.permute.xlu0 %6037
        %6039 = vrot.lane.b32.xlu0 %v5852, 127
        %v6040 = vpop.permute.xlu0 %6039
        %6041 = vrot.lane.b32.xlu0 %v5853, 127
        %v6042 = vpop.permute.xlu0 %6041
        %6043 = vrot.lane.b32.xlu0 %v5854, 127
        %v6044 = vpop.permute.xlu0 %6043
        %6045 = vrot.lane.b32.xlu0 %v5855, 127
        %v6046 = vpop.permute.xlu0 %6045
        %6047 = vrot.lane.b32.xlu0 %v5856, 127
        %v6048 = vpop.permute.xlu0 %6047
        %v6113 = vmul.f32 %v4961, %v5922
        %v6114 = vmul.f32 %v4962, %v5924
        %v6115 = vmul.f32 %v4963, %v5926
        %v6116 = vmul.f32 %v4964, %v5928
        %v6117 = vmul.f32 %v4965, %v5930
        %v6118 = vmul.f32 %v4966, %v5932
        %v6119 = vmul.f32 %v4967, %v5934
        %v6120 = vmul.f32 %v4968, %v5936
        %v6121 = vmul.f32 %v4969, %v5938
        %v6122 = vmul.f32 %v4970, %v5940
        %v6123 = vmul.f32 %v4971, %v5942
        %v6124 = vmul.f32 %v4972, %v5944
        %v6125 = vmul.f32 %v4973, %v5946
        %v6126 = vmul.f32 %v4974, %v5948
        %v6127 = vmul.f32 %v4975, %v5950
        %v6128 = vmul.f32 %v4976, %v5952
        %v6129 = vmul.f32 %v4977, %v5954
        %v6130 = vmul.f32 %v4978, %v5956
        %v6131 = vmul.f32 %v4979, %v5958
        %v6132 = vmul.f32 %v4980, %v5960
        %v6133 = vmul.f32 %v4981, %v5962
        %v6134 = vmul.f32 %v4982, %v5964
        %v6135 = vmul.f32 %v4983, %v5966
        %v6136 = vmul.f32 %v4984, %v5968
        %v6137 = vmul.f32 %v4985, %v5970
        %v6138 = vmul.f32 %v4986, %v5972
        %v6139 = vmul.f32 %v4987, %v5974
        %v6140 = vmul.f32 %v4988, %v5976
        %v6141 = vmul.f32 %v4989, %v5978
        %v6142 = vmul.f32 %v4990, %v5980
        %v6143 = vmul.f32 %v4991, %v5982
        %v6144 = vmul.f32 %v4992, %v5984
        %v6145 = vmul.f32 %v4993, %v5986
        %v6146 = vmul.f32 %v4994, %v5988
        %v6147 = vmul.f32 %v4995, %v5990
        %v6148 = vmul.f32 %v4996, %v5992
        %v6149 = vmul.f32 %v4997, %v5994
        %v6150 = vmul.f32 %v4998, %v5996
        %v6151 = vmul.f32 %v4999, %v5998
        %v6152 = vmul.f32 %v5000, %v6000
        %v6153 = vmul.f32 %v5001, %v6002
        %v6154 = vmul.f32 %v5002, %v6004
        %v6155 = vmul.f32 %v5003, %v6006
        %v6156 = vmul.f32 %v5004, %v6008
        %v6157 = vmul.f32 %v5005, %v6010
        %v6158 = vmul.f32 %v5006, %v6012
        %v6159 = vmul.f32 %v5007, %v6014
        %v6160 = vmul.f32 %v5008, %v6016
        %v6161 = vmul.f32 %v5009, %v6018
        %v6162 = vmul.f32 %v5010, %v6020
        %v6163 = vmul.f32 %v5011, %v6022
        %v6164 = vmul.f32 %v5012, %v6024
        %v6165 = vmul.f32 %v5013, %v6026
        %v6166 = vmul.f32 %v5014, %v6028
        %v6167 = vmul.f32 %v5015, %v6030
        %v6168 = vmul.f32 %v5016, %v6032
        %v6169 = vmul.f32 %v5017, %v6034
        %v6170 = vmul.f32 %v5018, %v6036
        %v6171 = vmul.f32 %v5019, %v6038
        %v6172 = vmul.f32 %v5020, %v6040
        %v6173 = vmul.f32 %v5021, %v6042
        %v6174 = vmul.f32 %v5022, %v6044
        %v6175 = vmul.f32 %v5023, %v6046
        %v6176 = vmul.f32 %v5024, %v6048
        %s6177 = sld [smem:[#allocation3 + $0x4]]
        %v6178 = vstv %s6177
        %v6179 = vmul.f32 %v6178, %v2521
        %v6180 = vmul.f32 %v6178, %v2522
        %v6181 = vmul.f32 %v6178, %v2523
        %v6182 = vmul.f32 %v6178, %v2524
        %v6183 = vmul.f32 %v6178, %v2525
        %v6184 = vmul.f32 %v6178, %v2526
        %v6185 = vmul.f32 %v6178, %v2527
        %v6186 = vmul.f32 %v6178, %v2528
        %v6187 = vmul.f32 %v6178, %v2529
        %v6188 = vmul.f32 %v6178, %v2530
        %v6189 = vmul.f32 %v6178, %v2531
        %v6190 = vmul.f32 %v6178, %v2532
        %v6191 = vmul.f32 %v6178, %v2533
        %v6192 = vmul.f32 %v6178, %v2534
        %v6193 = vmul.f32 %v6178, %v2535
        %v6194 = vmul.f32 %v6178, %v2536
        %v6195 = vmul.f32 %v6178, %v2537
        %v6196 = vmul.f32 %v6178, %v2538
        %v6197 = vmul.f32 %v6178, %v2539
        %v6198 = vmul.f32 %v6178, %v2540
        %v6199 = vmul.f32 %v6178, %v2541
        %v6200 = vmul.f32 %v6178, %v2542
        %v6201 = vmul.f32 %v6178, %v2543
        %v6202 = vmul.f32 %v6178, %v2544
        %v6203 = vmul.f32 %v6178, %v2545
        %v6204 = vmul.f32 %v6178, %v2546
        %v6205 = vmul.f32 %v6178, %v2547
        %v6206 = vmul.f32 %v6178, %v2548
        %v6207 = vmul.f32 %v6178, %v2549
        %v6208 = vmul.f32 %v6178, %v2550
        %v6209 = vmul.f32 %v6178, %v2551
        %v6210 = vmul.f32 %v6178, %v2552
        %v6211 = vmul.f32 %v6178, %v2553
        %v6212 = vmul.f32 %v6178, %v2554
        %v6213 = vmul.f32 %v6178, %v2555
        %v6214 = vmul.f32 %v6178, %v2556
        %v6215 = vmul.f32 %v6178, %v2557
        %v6216 = vmul.f32 %v6178, %v2558
        %v6217 = vmul.f32 %v6178, %v2559
        %v6218 = vmul.f32 %v6178, %v2560
        %v6219 = vmul.f32 %v6178, %v2561
        %v6220 = vmul.f32 %v6178, %v2562
        %v6221 = vmul.f32 %v6178, %v2563
        %v6222 = vmul.f32 %v6178, %v2564
        %v6223 = vmul.f32 %v6178, %v2565
        %v6224 = vmul.f32 %v6178, %v2566
        %v6225 = vmul.f32 %v6178, %v2567
        %v6226 = vmul.f32 %v6178, %v2568
        %v6227 = vmul.f32 %v6178, %v2569
        %v6228 = vmul.f32 %v6178, %v2570
        %v6229 = vmul.f32 %v6178, %v2571
        %v6230 = vmul.f32 %v6178, %v2572
        %v6231 = vmul.f32 %v6178, %v2573
        %v6232 = vmul.f32 %v6178, %v2574
        %v6233 = vmul.f32 %v6178, %v2575
        %v6234 = vmul.f32 %v6178, %v2576
        %v6235 = vmul.f32 %v6178, %v2577
        %v6236 = vmul.f32 %v6178, %v2578
        %v6237 = vmul.f32 %v6178, %v2579
        %v6238 = vmul.f32 %v6178, %v2580
        %v6239 = vmul.f32 %v6178, %v2581
        %v6240 = vmul.f32 %v6178, %v2582
        %v6241 = vmul.f32 %v6178, %v2583
        %v6242 = vmul.f32 %v6178, %v2584
        %s6243 = sld [smem:[#allocation3 + $0x5]]
        %v6244 = vstv %s6243
        %v6245 = vmul.f32 %v6244, %v4512
        %v6246 = vmul.f32 %v6244, %v4513
        %v6247 = vmul.f32 %v6244, %v4514
        %v6248 = vmul.f32 %v6244, %v4515
        %v6249 = vmul.f32 %v6244, %v4516
        %v6250 = vmul.f32 %v6244, %v4517
        %v6251 = vmul.f32 %v6244, %v4518
        %v6252 = vmul.f32 %v6244, %v4519
        %v6253 = vmul.f32 %v6244, %v4520
        %v6254 = vmul.f32 %v6244, %v4521
        %v6255 = vmul.f32 %v6244, %v4522
        %v6256 = vmul.f32 %v6244, %v4523
        %v6257 = vmul.f32 %v6244, %v4524
        %v6258 = vmul.f32 %v6244, %v4525
        %v6259 = vmul.f32 %v6244, %v4526
        %v6260 = vmul.f32 %v6244, %v4527
        %v6261 = vmul.f32 %v6244, %v4528
        %v6262 = vmul.f32 %v6244, %v4529
        %v6263 = vmul.f32 %v6244, %v4530
        %v6264 = vmul.f32 %v6244, %v4531
        %v6265 = vmul.f32 %v6244, %v4532
        %v6266 = vmul.f32 %v6244, %v4533
        %v6267 = vmul.f32 %v6244, %v4534
        %v6268 = vmul.f32 %v6244, %v4535
        %v6269 = vmul.f32 %v6244, %v4536
        %v6270 = vmul.f32 %v6244, %v4537
        %v6271 = vmul.f32 %v6244, %v4538
        %v6272 = vmul.f32 %v6244, %v4539
        %v6273 = vmul.f32 %v6244, %v4540
        %v6274 = vmul.f32 %v6244, %v4541
        %v6275 = vmul.f32 %v6244, %v4542
        %v6276 = vmul.f32 %v6244, %v4543
        %v6277 = vmul.f32 %v6244, %v4544
        %v6278 = vmul.f32 %v6244, %v4545
        %v6279 = vmul.f32 %v6244, %v4546
        %v6280 = vmul.f32 %v6244, %v4547
        %v6281 = vmul.f32 %v6244, %v4548
        %v6282 = vmul.f32 %v6244, %v4549
        %v6283 = vmul.f32 %v6244, %v4550
        %v6284 = vmul.f32 %v6244, %v4551
        %v6285 = vmul.f32 %v6244, %v4552
        %v6286 = vmul.f32 %v6244, %v4553
        %v6287 = vmul.f32 %v6244, %v4554
        %v6288 = vmul.f32 %v6244, %v4555
        %v6289 = vmul.f32 %v6244, %v4556
        %v6290 = vmul.f32 %v6244, %v4557
        %v6291 = vmul.f32 %v6244, %v4558
        %v6292 = vmul.f32 %v6244, %v4559
        %v6293 = vmul.f32 %v6244, %v4560
        %v6294 = vmul.f32 %v6244, %v4561
        %v6295 = vmul.f32 %v6244, %v4562
        %v6296 = vmul.f32 %v6244, %v4563
        %v6297 = vmul.f32 %v6244, %v4564
        %v6298 = vmul.f32 %v6244, %v4565
        %v6299 = vmul.f32 %v6244, %v4566
        %v6300 = vmul.f32 %v6244, %v4567
        %v6301 = vmul.f32 %v6244, %v4568
        %v6302 = vmul.f32 %v6244, %v4569
        %v6303 = vmul.f32 %v6244, %v4570
        %v6304 = vmul.f32 %v6244, %v4571
        %v6305 = vmul.f32 %v6244, %v4572
        %v6306 = vmul.f32 %v6244, %v4573
        %v6307 = vmul.f32 %v6244, %v4574
        %v6308 = vmul.f32 %v6244, %v4575
        %v6309 = vadd.f32 %v6179, %v6245
        %v6310 = vadd.f32 %v6180, %v6246
        %v6311 = vadd.f32 %v6181, %v6247
        %v6312 = vadd.f32 %v6182, %v6248
        %v6313 = vadd.f32 %v6183, %v6249
        %v6314 = vadd.f32 %v6184, %v6250
        %v6315 = vadd.f32 %v6185, %v6251
        %v6316 = vadd.f32 %v6186, %v6252
        %v6317 = vadd.f32 %v6187, %v6253
        %v6318 = vadd.f32 %v6188, %v6254
        %v6319 = vadd.f32 %v6189, %v6255
        %v6320 = vadd.f32 %v6190, %v6256
        %v6321 = vadd.f32 %v6191, %v6257
        %v6322 = vadd.f32 %v6192, %v6258
        %v6323 = vadd.f32 %v6193, %v6259
        %v6324 = vadd.f32 %v6194, %v6260
        %v6325 = vadd.f32 %v6195, %v6261
        %v6326 = vadd.f32 %v6196, %v6262
        %v6327 = vadd.f32 %v6197, %v6263
        %v6328 = vadd.f32 %v6198, %v6264
        %v6329 = vadd.f32 %v6199, %v6265
        %v6330 = vadd.f32 %v6200, %v6266
        %v6331 = vadd.f32 %v6201, %v6267
        %v6332 = vadd.f32 %v6202, %v6268
        %v6333 = vadd.f32 %v6203, %v6269
        %v6334 = vadd.f32 %v6204, %v6270
        %v6335 = vadd.f32 %v6205, %v6271
        %v6336 = vadd.f32 %v6206, %v6272
        %v6337 = vadd.f32 %v6207, %v6273
        %v6338 = vadd.f32 %v6208, %v6274
        %v6339 = vadd.f32 %v6209, %v6275
        %v6340 = vadd.f32 %v6210, %v6276
        %v6341 = vadd.f32 %v6211, %v6277
        %v6342 = vadd.f32 %v6212, %v6278
        %v6343 = vadd.f32 %v6213, %v6279
        %v6344 = vadd.f32 %v6214, %v6280
        %v6345 = vadd.f32 %v6215, %v6281
        %v6346 = vadd.f32 %v6216, %v6282
        %v6347 = vadd.f32 %v6217, %v6283
        %v6348 = vadd.f32 %v6218, %v6284
        %v6349 = vadd.f32 %v6219, %v6285
        %v6350 = vadd.f32 %v6220, %v6286
        %v6351 = vadd.f32 %v6221, %v6287
        %v6352 = vadd.f32 %v6222, %v6288
        %v6353 = vadd.f32 %v6223, %v6289
        %v6354 = vadd.f32 %v6224, %v6290
        %v6355 = vadd.f32 %v6225, %v6291
        %v6356 = vadd.f32 %v6226, %v6292
        %v6357 = vadd.f32 %v6227, %v6293
        %v6358 = vadd.f32 %v6228, %v6294
        %v6359 = vadd.f32 %v6229, %v6295
        %v6360 = vadd.f32 %v6230, %v6296
        %v6361 = vadd.f32 %v6231, %v6297
        %v6362 = vadd.f32 %v6232, %v6298
        %v6363 = vadd.f32 %v6233, %v6299
        %v6364 = vadd.f32 %v6234, %v6300
        %v6365 = vadd.f32 %v6235, %v6301
        %v6366 = vadd.f32 %v6236, %v6302
        %v6367 = vadd.f32 %v6237, %v6303
        %v6368 = vadd.f32 %v6238, %v6304
        %v6369 = vadd.f32 %v6239, %v6305
        %v6370 = vadd.f32 %v6240, %v6306
        %v6371 = vadd.f32 %v6241, %v6307
        %v6372 = vadd.f32 %v6242, %v6308
        %6437 = vrot.lane.b32.xlu0 %v6309, 127
        %v6438 = vpop.permute.xlu0 %6437
        %6439 = vrot.lane.b32.xlu0 %v6310, 127
        %v6440 = vpop.permute.xlu0 %6439
        %6441 = vrot.lane.b32.xlu0 %v6311, 127
        %v6442 = vpop.permute.xlu0 %6441
        %6443 = vrot.lane.b32.xlu0 %v6312, 127
        %v6444 = vpop.permute.xlu0 %6443
        %6445 = vrot.lane.b32.xlu0 %v6313, 127
        %v6446 = vpop.permute.xlu0 %6445
        %6447 = vrot.lane.b32.xlu0 %v6314, 127
        %v6448 = vpop.permute.xlu0 %6447
        %6449 = vrot.lane.b32.xlu0 %v6315, 127
        %v6450 = vpop.permute.xlu0 %6449
        %6451 = vrot.lane.b32.xlu0 %v6316, 127
        %v6452 = vpop.permute.xlu0 %6451
        %6453 = vrot.lane.b32.xlu0 %v6317, 127
        %v6454 = vpop.permute.xlu0 %6453
        %6455 = vrot.lane.b32.xlu0 %v6318, 127
        %v6456 = vpop.permute.xlu0 %6455
        %6457 = vrot.lane.b32.xlu0 %v6319, 127
        %v6458 = vpop.permute.xlu0 %6457
        %6459 = vrot.lane.b32.xlu0 %v6320, 127
        %v6460 = vpop.permute.xlu0 %6459
        %6461 = vrot.lane.b32.xlu0 %v6321, 127
        %v6462 = vpop.permute.xlu0 %6461
        %6463 = vrot.lane.b32.xlu0 %v6322, 127
        %v6464 = vpop.permute.xlu0 %6463
        %6465 = vrot.lane.b32.xlu0 %v6323, 127
        %v6466 = vpop.permute.xlu0 %6465
        %6467 = vrot.lane.b32.xlu0 %v6324, 127
        %v6468 = vpop.permute.xlu0 %6467
        %6469 = vrot.lane.b32.xlu0 %v6325, 127
        %v6470 = vpop.permute.xlu0 %6469
        %6471 = vrot.lane.b32.xlu0 %v6326, 127
        %v6472 = vpop.permute.xlu0 %6471
        %6473 = vrot.lane.b32.xlu0 %v6327, 127
        %v6474 = vpop.permute.xlu0 %6473
        %6475 = vrot.lane.b32.xlu0 %v6328, 127
        %v6476 = vpop.permute.xlu0 %6475
        %6477 = vrot.lane.b32.xlu0 %v6329, 127
        %v6478 = vpop.permute.xlu0 %6477
        %6479 = vrot.lane.b32.xlu0 %v6330, 127
        %v6480 = vpop.permute.xlu0 %6479
        %6481 = vrot.lane.b32.xlu0 %v6331, 127
        %v6482 = vpop.permute.xlu0 %6481
        %6483 = vrot.lane.b32.xlu0 %v6332, 127
        %v6484 = vpop.permute.xlu0 %6483
        %6485 = vrot.lane.b32.xlu0 %v6333, 127
        %v6486 = vpop.permute.xlu0 %6485
        %6487 = vrot.lane.b32.xlu0 %v6334, 127
        %v6488 = vpop.permute.xlu0 %6487
        %6489 = vrot.lane.b32.xlu0 %v6335, 127
        %v6490 = vpop.permute.xlu0 %6489
        %6491 = vrot.lane.b32.xlu0 %v6336, 127
        %v6492 = vpop.permute.xlu0 %6491
        %6493 = vrot.lane.b32.xlu0 %v6337, 127
        %v6494 = vpop.permute.xlu0 %6493
        %6495 = vrot.lane.b32.xlu0 %v6338, 127
        %v6496 = vpop.permute.xlu0 %6495
        %6497 = vrot.lane.b32.xlu0 %v6339, 127
        %v6498 = vpop.permute.xlu0 %6497
        %6499 = vrot.lane.b32.xlu0 %v6340, 127
        %v6500 = vpop.permute.xlu0 %6499
        %6501 = vrot.lane.b32.xlu0 %v6341, 127
        %v6502 = vpop.permute.xlu0 %6501
        %6503 = vrot.lane.b32.xlu0 %v6342, 127
        %v6504 = vpop.permute.xlu0 %6503
        %6505 = vrot.lane.b32.xlu0 %v6343, 127
        %v6506 = vpop.permute.xlu0 %6505
        %6507 = vrot.lane.b32.xlu0 %v6344, 127
        %v6508 = vpop.permute.xlu0 %6507
        %6509 = vrot.lane.b32.xlu0 %v6345, 127
        %v6510 = vpop.permute.xlu0 %6509
        %6511 = vrot.lane.b32.xlu0 %v6346, 127
        %v6512 = vpop.permute.xlu0 %6511
        %6513 = vrot.lane.b32.xlu0 %v6347, 127
        %v6514 = vpop.permute.xlu0 %6513
        %6515 = vrot.lane.b32.xlu0 %v6348, 127
        %v6516 = vpop.permute.xlu0 %6515
        %6517 = vrot.lane.b32.xlu0 %v6349, 127
        %v6518 = vpop.permute.xlu0 %6517
        %6519 = vrot.lane.b32.xlu0 %v6350, 127
        %v6520 = vpop.permute.xlu0 %6519
        %6521 = vrot.lane.b32.xlu0 %v6351, 127
        %v6522 = vpop.permute.xlu0 %6521
        %6523 = vrot.lane.b32.xlu0 %v6352, 127
        %v6524 = vpop.permute.xlu0 %6523
        %6525 = vrot.lane.b32.xlu0 %v6353, 127
        %v6526 = vpop.permute.xlu0 %6525
        %6527 = vrot.lane.b32.xlu0 %v6354, 127
        %v6528 = vpop.permute.xlu0 %6527
        %6529 = vrot.lane.b32.xlu0 %v6355, 127
        %v6530 = vpop.permute.xlu0 %6529
        %6531 = vrot.lane.b32.xlu0 %v6356, 127
        %v6532 = vpop.permute.xlu0 %6531
        %6533 = vrot.lane.b32.xlu0 %v6357, 127
        %v6534 = vpop.permute.xlu0 %6533
        %6535 = vrot.lane.b32.xlu0 %v6358, 127
        %v6536 = vpop.permute.xlu0 %6535
        %6537 = vrot.lane.b32.xlu0 %v6359, 127
        %v6538 = vpop.permute.xlu0 %6537
        %6539 = vrot.lane.b32.xlu0 %v6360, 127
        %v6540 = vpop.permute.xlu0 %6539
        %6541 = vrot.lane.b32.xlu0 %v6361, 127
        %v6542 = vpop.permute.xlu0 %6541
        %6543 = vrot.lane.b32.xlu0 %v6362, 127
        %v6544 = vpop.permute.xlu0 %6543
        %6545 = vrot.lane.b32.xlu0 %v6363, 127
        %v6546 = vpop.permute.xlu0 %6545
        %6547 = vrot.lane.b32.xlu0 %v6364, 127
        %v6548 = vpop.permute.xlu0 %6547
        %6549 = vrot.lane.b32.xlu0 %v6365, 127
        %v6550 = vpop.permute.xlu0 %6549
        %6551 = vrot.lane.b32.xlu0 %v6366, 127
        %v6552 = vpop.permute.xlu0 %6551
        %6553 = vrot.lane.b32.xlu0 %v6367, 127
        %v6554 = vpop.permute.xlu0 %6553
        %6555 = vrot.lane.b32.xlu0 %v6368, 127
        %v6556 = vpop.permute.xlu0 %6555
        %6557 = vrot.lane.b32.xlu0 %v6369, 127
        %v6558 = vpop.permute.xlu0 %6557
        %6559 = vrot.lane.b32.xlu0 %v6370, 127
        %v6560 = vpop.permute.xlu0 %6559
        %6561 = vrot.lane.b32.xlu0 %v6371, 127
        %v6562 = vpop.permute.xlu0 %6561
        %6563 = vrot.lane.b32.xlu0 %v6372, 127
        %v6564 = vpop.permute.xlu0 %6563
        %v6629 = vmul.f32 %v2713, %v6438
        %v6630 = vmul.f32 %v2714, %v6440
        %v6631 = vmul.f32 %v2715, %v6442
        %v6632 = vmul.f32 %v2716, %v6444
        %v6633 = vmul.f32 %v2717, %v6446
        %v6634 = vmul.f32 %v2718, %v6448
        %v6635 = vmul.f32 %v2719, %v6450
        %v6636 = vmul.f32 %v2720, %v6452
        %v6637 = vmul.f32 %v2721, %v6454
        %v6638 = vmul.f32 %v2722, %v6456
        %v6639 = vmul.f32 %v2723, %v6458
        %v6640 = vmul.f32 %v2724, %v6460
        %v6641 = vmul.f32 %v2725, %v6462
        %v6642 = vmul.f32 %v2726, %v6464
        %v6643 = vmul.f32 %v2727, %v6466
        %v6644 = vmul.f32 %v2728, %v6468
        %v6645 = vmul.f32 %v2729, %v6470
        %v6646 = vmul.f32 %v2730, %v6472
        %v6647 = vmul.f32 %v2731, %v6474
        %v6648 = vmul.f32 %v2732, %v6476
        %v6649 = vmul.f32 %v2733, %v6478
        %v6650 = vmul.f32 %v2734, %v6480
        %v6651 = vmul.f32 %v2735, %v6482
        %v6652 = vmul.f32 %v2736, %v6484
        %v6653 = vmul.f32 %v2737, %v6486
        %v6654 = vmul.f32 %v2738, %v6488
        %v6655 = vmul.f32 %v2739, %v6490
        %v6656 = vmul.f32 %v2740, %v6492
        %v6657 = vmul.f32 %v2741, %v6494
        %v6658 = vmul.f32 %v2742, %v6496
        %v6659 = vmul.f32 %v2743, %v6498
        %v6660 = vmul.f32 %v2744, %v6500
        %v6661 = vmul.f32 %v2745, %v6502
        %v6662 = vmul.f32 %v2746, %v6504
        %v6663 = vmul.f32 %v2747, %v6506
        %v6664 = vmul.f32 %v2748, %v6508
        %v6665 = vmul.f32 %v2749, %v6510
        %v6666 = vmul.f32 %v2750, %v6512
        %v6667 = vmul.f32 %v2751, %v6514
        %v6668 = vmul.f32 %v2752, %v6516
        %v6669 = vmul.f32 %v2753, %v6518
        %v6670 = vmul.f32 %v2754, %v6520
        %v6671 = vmul.f32 %v2755, %v6522
        %v6672 = vmul.f32 %v2756, %v6524
        %v6673 = vmul.f32 %v2757, %v6526
        %v6674 = vmul.f32 %v2758, %v6528
        %v6675 = vmul.f32 %v2759, %v6530
        %v6676 = vmul.f32 %v2760, %v6532
        %v6677 = vmul.f32 %v2761, %v6534
        %v6678 = vmul.f32 %v2762, %v6536
        %v6679 = vmul.f32 %v2763, %v6538
        %v6680 = vmul.f32 %v2764, %v6540
        %v6681 = vmul.f32 %v2765, %v6542
        %v6682 = vmul.f32 %v2766, %v6544
        %v6683 = vmul.f32 %v2767, %v6546
        %v6684 = vmul.f32 %v2768, %v6548
        %v6685 = vmul.f32 %v2769, %v6550
        %v6686 = vmul.f32 %v2770, %v6552
        %v6687 = vmul.f32 %v2771, %v6554
        %v6688 = vmul.f32 %v2772, %v6556
        %v6689 = vmul.f32 %v2773, %v6558
        %v6690 = vmul.f32 %v2774, %v6560
        %v6691 = vmul.f32 %v2775, %v6562
        %v6692 = vmul.f32 %v2776, %v6564
        %6693 = vrot.lane.b32.xlu0 %v3293, 124
        %v6694 = vpop.permute.xlu0 %6693
        %6695 = vrot.lane.b32.xlu0 %v3294, 124
        %v6696 = vpop.permute.xlu0 %6695
        %6697 = vrot.lane.b32.xlu0 %v3295, 124
        %v6698 = vpop.permute.xlu0 %6697
        %6699 = vrot.lane.b32.xlu0 %v3296, 124
        %v6700 = vpop.permute.xlu0 %6699
        %6701 = vrot.lane.b32.xlu0 %v3297, 124
        %v6702 = vpop.permute.xlu0 %6701
        %6703 = vrot.lane.b32.xlu0 %v3298, 124
        %v6704 = vpop.permute.xlu0 %6703
        %6705 = vrot.lane.b32.xlu0 %v3299, 124
        %v6706 = vpop.permute.xlu0 %6705
        %6707 = vrot.lane.b32.xlu0 %v3300, 124
        %v6708 = vpop.permute.xlu0 %6707
        %6709 = vrot.lane.b32.xlu0 %v3301, 124
        %v6710 = vpop.permute.xlu0 %6709
        %6711 = vrot.lane.b32.xlu0 %v3302, 124
        %v6712 = vpop.permute.xlu0 %6711
        %6713 = vrot.lane.b32.xlu0 %v3303, 124
        %v6714 = vpop.permute.xlu0 %6713
        %6715 = vrot.lane.b32.xlu0 %v3304, 124
        %v6716 = vpop.permute.xlu0 %6715
        %6717 = vrot.lane.b32.xlu0 %v3305, 124
        %v6718 = vpop.permute.xlu0 %6717
        %6719 = vrot.lane.b32.xlu0 %v3306, 124
        %v6720 = vpop.permute.xlu0 %6719
        %6721 = vrot.lane.b32.xlu0 %v3307, 124
        %v6722 = vpop.permute.xlu0 %6721
        %6723 = vrot.lane.b32.xlu0 %v3308, 124
        %v6724 = vpop.permute.xlu0 %6723
        %6725 = vrot.lane.b32.xlu0 %v3309, 124
        %v6726 = vpop.permute.xlu0 %6725
        %6727 = vrot.lane.b32.xlu0 %v3310, 124
        %v6728 = vpop.permute.xlu0 %6727
        %6729 = vrot.lane.b32.xlu0 %v3311, 124
        %v6730 = vpop.permute.xlu0 %6729
        %6731 = vrot.lane.b32.xlu0 %v3312, 124
        %v6732 = vpop.permute.xlu0 %6731
        %6733 = vrot.lane.b32.xlu0 %v3313, 124
        %v6734 = vpop.permute.xlu0 %6733
        %6735 = vrot.lane.b32.xlu0 %v3314, 124
        %v6736 = vpop.permute.xlu0 %6735
        %6737 = vrot.lane.b32.xlu0 %v3315, 124
        %v6738 = vpop.permute.xlu0 %6737
        %6739 = vrot.lane.b32.xlu0 %v3316, 124
        %v6740 = vpop.permute.xlu0 %6739
        %6741 = vrot.lane.b32.xlu0 %v3317, 124
        %v6742 = vpop.permute.xlu0 %6741
        %6743 = vrot.lane.b32.xlu0 %v3318, 124
        %v6744 = vpop.permute.xlu0 %6743
        %6745 = vrot.lane.b32.xlu0 %v3319, 124
        %v6746 = vpop.permute.xlu0 %6745
        %6747 = vrot.lane.b32.xlu0 %v3320, 124
        %v6748 = vpop.permute.xlu0 %6747
        %6749 = vrot.lane.b32.xlu0 %v3321, 124
        %v6750 = vpop.permute.xlu0 %6749
        %6751 = vrot.lane.b32.xlu0 %v3322, 124
        %v6752 = vpop.permute.xlu0 %6751
        %6753 = vrot.lane.b32.xlu0 %v3323, 124
        %v6754 = vpop.permute.xlu0 %6753
        %6755 = vrot.lane.b32.xlu0 %v3324, 124
        %v6756 = vpop.permute.xlu0 %6755
        %6757 = vrot.lane.b32.xlu0 %v3325, 124
        %v6758 = vpop.permute.xlu0 %6757
        %6759 = vrot.lane.b32.xlu0 %v3326, 124
        %v6760 = vpop.permute.xlu0 %6759
        %6761 = vrot.lane.b32.xlu0 %v3327, 124
        %v6762 = vpop.permute.xlu0 %6761
        %6763 = vrot.lane.b32.xlu0 %v3328, 124
        %v6764 = vpop.permute.xlu0 %6763
        %6765 = vrot.lane.b32.xlu0 %v3329, 124
        %v6766 = vpop.permute.xlu0 %6765
        %6767 = vrot.lane.b32.xlu0 %v3330, 124
        %v6768 = vpop.permute.xlu0 %6767
        %6769 = vrot.lane.b32.xlu0 %v3331, 124
        %v6770 = vpop.permute.xlu0 %6769
        %6771 = vrot.lane.b32.xlu0 %v3332, 124
        %v6772 = vpop.permute.xlu0 %6771
        %6773 = vrot.lane.b32.xlu0 %v3333, 124
        %v6774 = vpop.permute.xlu0 %6773
        %6775 = vrot.lane.b32.xlu0 %v3334, 124
        %v6776 = vpop.permute.xlu0 %6775
        %6777 = vrot.lane.b32.xlu0 %v3335, 124
        %v6778 = vpop.permute.xlu0 %6777
        %6779 = vrot.lane.b32.xlu0 %v3336, 124
        %v6780 = vpop.permute.xlu0 %6779
        %6781 = vrot.lane.b32.xlu0 %v3337, 124
        %v6782 = vpop.permute.xlu0 %6781
        %6783 = vrot.lane.b32.xlu0 %v3338, 124
        %v6784 = vpop.permute.xlu0 %6783
        %6785 = vrot.lane.b32.xlu0 %v3339, 124
        %v6786 = vpop.permute.xlu0 %6785
        %6787 = vrot.lane.b32.xlu0 %v3340, 124
        %v6788 = vpop.permute.xlu0 %6787
        %6789 = vrot.lane.b32.xlu0 %v3341, 124
        %v6790 = vpop.permute.xlu0 %6789
        %6791 = vrot.lane.b32.xlu0 %v3342, 124
        %v6792 = vpop.permute.xlu0 %6791
        %6793 = vrot.lane.b32.xlu0 %v3343, 124
        %v6794 = vpop.permute.xlu0 %6793
        %6795 = vrot.lane.b32.xlu0 %v3344, 124
        %v6796 = vpop.permute.xlu0 %6795
        %6797 = vrot.lane.b32.xlu0 %v3345, 124
        %v6798 = vpop.permute.xlu0 %6797
        %6799 = vrot.lane.b32.xlu0 %v3346, 124
        %v6800 = vpop.permute.xlu0 %6799
        %6801 = vrot.lane.b32.xlu0 %v3347, 124
        %v6802 = vpop.permute.xlu0 %6801
        %6803 = vrot.lane.b32.xlu0 %v3348, 124
        %v6804 = vpop.permute.xlu0 %6803
        %6805 = vrot.lane.b32.xlu0 %v3349, 124
        %v6806 = vpop.permute.xlu0 %6805
        %6807 = vrot.lane.b32.xlu0 %v3350, 124
        %v6808 = vpop.permute.xlu0 %6807
        %6809 = vrot.lane.b32.xlu0 %v3351, 124
        %v6810 = vpop.permute.xlu0 %6809
        %6811 = vrot.lane.b32.xlu0 %v3352, 124
        %v6812 = vpop.permute.xlu0 %6811
        %6813 = vrot.lane.b32.xlu0 %v3353, 124
        %v6814 = vpop.permute.xlu0 %6813
        %6815 = vrot.lane.b32.xlu0 %v3354, 124
        %v6816 = vpop.permute.xlu0 %6815
        %6817 = vrot.lane.b32.xlu0 %v3355, 124
        %v6818 = vpop.permute.xlu0 %6817
        %6819 = vrot.lane.b32.xlu0 %v3356, 124
        %v6820 = vpop.permute.xlu0 %6819
        %v6885 = vmul.f32 %v4381, %v6694
        %v6886 = vmul.f32 %v4382, %v6696
        %v6887 = vmul.f32 %v4383, %v6698
        %v6888 = vmul.f32 %v4384, %v6700
        %v6889 = vmul.f32 %v4385, %v6702
        %v6890 = vmul.f32 %v4386, %v6704
        %v6891 = vmul.f32 %v4387, %v6706
        %v6892 = vmul.f32 %v4388, %v6708
        %v6893 = vmul.f32 %v4389, %v6710
        %v6894 = vmul.f32 %v4390, %v6712
        %v6895 = vmul.f32 %v4391, %v6714
        %v6896 = vmul.f32 %v4392, %v6716
        %v6897 = vmul.f32 %v4393, %v6718
        %v6898 = vmul.f32 %v4394, %v6720
        %v6899 = vmul.f32 %v4395, %v6722
        %v6900 = vmul.f32 %v4396, %v6724
        %v6901 = vmul.f32 %v4397, %v6726
        %v6902 = vmul.f32 %v4398, %v6728
        %v6903 = vmul.f32 %v4399, %v6730
        %v6904 = vmul.f32 %v4400, %v6732
        %v6905 = vmul.f32 %v4401, %v6734
        %v6906 = vmul.f32 %v4402, %v6736
        %v6907 = vmul.f32 %v4403, %v6738
        %v6908 = vmul.f32 %v4404, %v6740
        %v6909 = vmul.f32 %v4405, %v6742
        %v6910 = vmul.f32 %v4406, %v6744
        %v6911 = vmul.f32 %v4407, %v6746
        %v6912 = vmul.f32 %v4408, %v6748
        %v6913 = vmul.f32 %v4409, %v6750
        %v6914 = vmul.f32 %v4410, %v6752
        %v6915 = vmul.f32 %v4411, %v6754
        %v6916 = vmul.f32 %v4412, %v6756
        %v6917 = vmul.f32 %v4413, %v6758
        %v6918 = vmul.f32 %v4414, %v6760
        %v6919 = vmul.f32 %v4415, %v6762
        %v6920 = vmul.f32 %v4416, %v6764
        %v6921 = vmul.f32 %v4417, %v6766
        %v6922 = vmul.f32 %v4418, %v6768
        %v6923 = vmul.f32 %v4419, %v6770
        %v6924 = vmul.f32 %v4420, %v6772
        %v6925 = vmul.f32 %v4421, %v6774
        %v6926 = vmul.f32 %v4422, %v6776
        %v6927 = vmul.f32 %v4423, %v6778
        %v6928 = vmul.f32 %v4424, %v6780
        %v6929 = vmul.f32 %v4425, %v6782
        %v6930 = vmul.f32 %v4426, %v6784
        %v6931 = vmul.f32 %v4427, %v6786
        %v6932 = vmul.f32 %v4428, %v6788
        %v6933 = vmul.f32 %v4429, %v6790
        %v6934 = vmul.f32 %v4430, %v6792
        %v6935 = vmul.f32 %v4431, %v6794
        %v6936 = vmul.f32 %v4432, %v6796
        %v6937 = vmul.f32 %v4433, %v6798
        %v6938 = vmul.f32 %v4434, %v6800
        %v6939 = vmul.f32 %v4435, %v6802
        %v6940 = vmul.f32 %v4436, %v6804
        %v6941 = vmul.f32 %v4437, %v6806
        %v6942 = vmul.f32 %v4438, %v6808
        %v6943 = vmul.f32 %v4439, %v6810
        %v6944 = vmul.f32 %v4440, %v6812
        %v6945 = vmul.f32 %v4441, %v6814
        %v6946 = vmul.f32 %v4442, %v6816
        %v6947 = vmul.f32 %v4443, %v6818
        %v6948 = vmul.f32 %v4444, %v6820
        %v6949 = vmax.f32 %v6885, 0.0
        %v6950 = vmax.f32 %v6886, 0.0
        %v6951 = vmax.f32 %v6887, 0.0
        %v6952 = vmax.f32 %v6888, 0.0
        %v6953 = vmax.f32 %v6889, 0.0
        %v6954 = vmax.f32 %v6890, 0.0
        %v6955 = vmax.f32 %v6891, 0.0
        %v6956 = vmax.f32 %v6892, 0.0
        %v6957 = vmax.f32 %v6893, 0.0
        %v6958 = vmax.f32 %v6894, 0.0
        %v6959 = vmax.f32 %v6895, 0.0
        %v6960 = vmax.f32 %v6896, 0.0
        %v6961 = vmax.f32 %v6897, 0.0
        %v6962 = vmax.f32 %v6898, 0.0
        %v6963 = vmax.f32 %v6899, 0.0
        %v6964 = vmax.f32 %v6900, 0.0
        %v6965 = vmax.f32 %v6901, 0.0
        %v6966 = vmax.f32 %v6902, 0.0
        %v6967 = vmax.f32 %v6903, 0.0
        %v6968 = vmax.f32 %v6904, 0.0
        %v6969 = vmax.f32 %v6905, 0.0
        %v6970 = vmax.f32 %v6906, 0.0
        %v6971 = vmax.f32 %v6907, 0.0
        %v6972 = vmax.f32 %v6908, 0.0
        %v6973 = vmax.f32 %v6909, 0.0
        %v6974 = vmax.f32 %v6910, 0.0
        %v6975 = vmax.f32 %v6911, 0.0
        %v6976 = vmax.f32 %v6912, 0.0
        %v6977 = vmax.f32 %v6913, 0.0
        %v6978 = vmax.f32 %v6914, 0.0
        %v6979 = vmax.f32 %v6915, 0.0
        %v6980 = vmax.f32 %v6916, 0.0
        %v6981 = vmax.f32 %v6917, 0.0
        %v6982 = vmax.f32 %v6918, 0.0
        %v6983 = vmax.f32 %v6919, 0.0
        %v6984 = vmax.f32 %v6920, 0.0
        %v6985 = vmax.f32 %v6921, 0.0
        %v6986 = vmax.f32 %v6922, 0.0
        %v6987 = vmax.f32 %v6923, 0.0
        %v6988 = vmax.f32 %v6924, 0.0
        %v6989 = vmax.f32 %v6925, 0.0
        %v6990 = vmax.f32 %v6926, 0.0
        %v6991 = vmax.f32 %v6927, 0.0
        %v6992 = vmax.f32 %v6928, 0.0
        %v6993 = vmax.f32 %v6929, 0.0
        %v6994 = vmax.f32 %v6930, 0.0
        %v6995 = vmax.f32 %v6931, 0.0
        %v6996 = vmax.f32 %v6932, 0.0
        %v6997 = vmax.f32 %v6933, 0.0
        %v6998 = vmax.f32 %v6934, 0.0
        %v6999 = vmax.f32 %v6935, 0.0
        %v7000 = vmax.f32 %v6936, 0.0
        %v7001 = vmax.f32 %v6937, 0.0
        %v7002 = vmax.f32 %v6938, 0.0
        %v7003 = vmax.f32 %v6939, 0.0
        %v7004 = vmax.f32 %v6940, 0.0
        %v7005 = vmax.f32 %v6941, 0.0
        %v7006 = vmax.f32 %v6942, 0.0
        %v7007 = vmax.f32 %v6943, 0.0
        %v7008 = vmax.f32 %v6944, 0.0
        %v7009 = vmax.f32 %v6945, 0.0
        %v7010 = vmax.f32 %v6946, 0.0
        %v7011 = vmax.f32 %v6947, 0.0
        %v7012 = vmax.f32 %v6948, 0.0
        %v7013 = vand.u32 2147483647, %v6885
        %v7014 = vand.u32 2147483647, %v6886
        %v7015 = vand.u32 2147483647, %v6887
        %v7016 = vand.u32 2147483647, %v6888
        %v7017 = vand.u32 2147483647, %v6889
        %v7018 = vand.u32 2147483647, %v6890
        %v7019 = vand.u32 2147483647, %v6891
        %v7020 = vand.u32 2147483647, %v6892
        %v7021 = vand.u32 2147483647, %v6893
        %v7022 = vand.u32 2147483647, %v6894
        %v7023 = vand.u32 2147483647, %v6895
        %v7024 = vand.u32 2147483647, %v6896
        %v7025 = vand.u32 2147483647, %v6897
        %v7026 = vand.u32 2147483647, %v6898
        %v7027 = vand.u32 2147483647, %v6899
        %v7028 = vand.u32 2147483647, %v6900
        %v7029 = vand.u32 2147483647, %v6901
        %v7030 = vand.u32 2147483647, %v6902
        %v7031 = vand.u32 2147483647, %v6903
        %v7032 = vand.u32 2147483647, %v6904
        %v7033 = vand.u32 2147483647, %v6905
        %v7034 = vand.u32 2147483647, %v6906
        %v7035 = vand.u32 2147483647, %v6907
        %v7036 = vand.u32 2147483647, %v6908
        %v7037 = vand.u32 2147483647, %v6909
        %v7038 = vand.u32 2147483647, %v6910
        %v7039 = vand.u32 2147483647, %v6911
        %v7040 = vand.u32 2147483647, %v6912
        %v7041 = vand.u32 2147483647, %v6913
        %v7042 = vand.u32 2147483647, %v6914
        %v7043 = vand.u32 2147483647, %v6915
        %v7044 = vand.u32 2147483647, %v6916
        %v7045 = vand.u32 2147483647, %v6917
        %v7046 = vand.u32 2147483647, %v6918
        %v7047 = vand.u32 2147483647, %v6919
        %v7048 = vand.u32 2147483647, %v6920
        %v7049 = vand.u32 2147483647, %v6921
        %v7050 = vand.u32 2147483647, %v6922
        %v7051 = vand.u32 2147483647, %v6923
        %v7052 = vand.u32 2147483647, %v6924
        %v7053 = vand.u32 2147483647, %v6925
        %v7054 = vand.u32 2147483647, %v6926
        %v7055 = vand.u32 2147483647, %v6927
        %v7056 = vand.u32 2147483647, %v6928
        %v7057 = vand.u32 2147483647, %v6929
        %v7058 = vand.u32 2147483647, %v6930
        %v7059 = vand.u32 2147483647, %v6931
        %v7060 = vand.u32 2147483647, %v6932
        %v7061 = vand.u32 2147483647, %v6933
        %v7062 = vand.u32 2147483647, %v6934
        %v7063 = vand.u32 2147483647, %v6935
        %v7064 = vand.u32 2147483647, %v6936
        %v7065 = vand.u32 2147483647, %v6937
        %v7066 = vand.u32 2147483647, %v6938
        %v7067 = vand.u32 2147483647, %v6939
        %v7068 = vand.u32 2147483647, %v6940
        %v7069 = vand.u32 2147483647, %v6941
        %v7070 = vand.u32 2147483647, %v6942
        %v7071 = vand.u32 2147483647, %v6943
        %v7072 = vand.u32 2147483647, %v6944
        %v7073 = vand.u32 2147483647, %v6945
        %v7074 = vand.u32 2147483647, %v6946
        %v7075 = vand.u32 2147483647, %v6947
        %v7076 = vand.u32 2147483647, %v6948
        %v7077 = vsub.f32 0.0, %v7013
        %v7078 = vsub.f32 0.0, %v7014
        %v7079 = vsub.f32 0.0, %v7015
        %v7080 = vsub.f32 0.0, %v7016
        %v7081 = vsub.f32 0.0, %v7017
        %v7082 = vsub.f32 0.0, %v7018
        %v7083 = vsub.f32 0.0, %v7019
        %v7084 = vsub.f32 0.0, %v7020
        %v7085 = vsub.f32 0.0, %v7021
        %v7086 = vsub.f32 0.0, %v7022
        %v7087 = vsub.f32 0.0, %v7023
        %v7088 = vsub.f32 0.0, %v7024
        %v7089 = vsub.f32 0.0, %v7025
        %v7090 = vsub.f32 0.0, %v7026
        %v7091 = vsub.f32 0.0, %v7027
        %v7092 = vsub.f32 0.0, %v7028
        %v7093 = vsub.f32 0.0, %v7029
        %v7094 = vsub.f32 0.0, %v7030
        %v7095 = vsub.f32 0.0, %v7031
        %v7096 = vsub.f32 0.0, %v7032
        %v7097 = vsub.f32 0.0, %v7033
        %v7098 = vsub.f32 0.0, %v7034
        %v7099 = vsub.f32 0.0, %v7035
        %v7100 = vsub.f32 0.0, %v7036
        %v7101 = vsub.f32 0.0, %v7037
        %v7102 = vsub.f32 0.0, %v7038
        %v7103 = vsub.f32 0.0, %v7039
        %v7104 = vsub.f32 0.0, %v7040
        %v7105 = vsub.f32 0.0, %v7041
        %v7106 = vsub.f32 0.0, %v7042
        %v7107 = vsub.f32 0.0, %v7043
        %v7108 = vsub.f32 0.0, %v7044
        %v7109 = vsub.f32 0.0, %v7045
        %v7110 = vsub.f32 0.0, %v7046
        %v7111 = vsub.f32 0.0, %v7047
        %v7112 = vsub.f32 0.0, %v7048
        %v7113 = vsub.f32 0.0, %v7049
        %v7114 = vsub.f32 0.0, %v7050
        %v7115 = vsub.f32 0.0, %v7051
        %v7116 = vsub.f32 0.0, %v7052
        %v7117 = vsub.f32 0.0, %v7053
        %v7118 = vsub.f32 0.0, %v7054
        %v7119 = vsub.f32 0.0, %v7055
        %v7120 = vsub.f32 0.0, %v7056
        %v7121 = vsub.f32 0.0, %v7057
        %v7122 = vsub.f32 0.0, %v7058
        %v7123 = vsub.f32 0.0, %v7059
        %v7124 = vsub.f32 0.0, %v7060
        %v7125 = vsub.f32 0.0, %v7061
        %v7126 = vsub.f32 0.0, %v7062
        %v7127 = vsub.f32 0.0, %v7063
        %v7128 = vsub.f32 0.0, %v7064
        %v7129 = vsub.f32 0.0, %v7065
        %v7130 = vsub.f32 0.0, %v7066
        %v7131 = vsub.f32 0.0, %v7067
        %v7132 = vsub.f32 0.0, %v7068
        %v7133 = vsub.f32 0.0, %v7069
        %v7134 = vsub.f32 0.0, %v7070
        %v7135 = vsub.f32 0.0, %v7071
        %v7136 = vsub.f32 0.0, %v7072
        %v7137 = vsub.f32 0.0, %v7073
        %v7138 = vsub.f32 0.0, %v7074
        %v7139 = vsub.f32 0.0, %v7075
        %v7140 = vsub.f32 0.0, %v7076
        %v7141 = vmul.f32 %v7077, 1.442695
        %v7142 = vpow.pop %v7141
        %v7143 = vmul.f32 %v7078, 1.442695
        %v7144 = vpow.pop %v7143
        %v7145 = vmul.f32 %v7079, 1.442695
        %v7146 = vpow.pop %v7145
        %v7147 = vmul.f32 %v7080, 1.442695
        %v7148 = vpow.pop %v7147
        %v7149 = vmul.f32 %v7081, 1.442695
        %v7150 = vpow.pop %v7149
        %v7151 = vmul.f32 %v7082, 1.442695
        %v7152 = vpow.pop %v7151
        %v7153 = vmul.f32 %v7083, 1.442695
        %v7154 = vpow.pop %v7153
        %v7155 = vmul.f32 %v7084, 1.442695
        %v7156 = vpow.pop %v7155
        %v7157 = vmul.f32 %v7085, 1.442695
        %v7158 = vpow.pop %v7157
        %v7159 = vmul.f32 %v7086, 1.442695
        %v7160 = vpow.pop %v7159
        %v7161 = vmul.f32 %v7087, 1.442695
        %v7162 = vpow.pop %v7161
        %v7163 = vmul.f32 %v7088, 1.442695
        %v7164 = vpow.pop %v7163
        %v7165 = vmul.f32 %v7089, 1.442695
        %v7166 = vpow.pop %v7165
        %v7167 = vmul.f32 %v7090, 1.442695
        %v7168 = vpow.pop %v7167
        %v7169 = vmul.f32 %v7091, 1.442695
        %v7170 = vpow.pop %v7169
        %v7171 = vmul.f32 %v7092, 1.442695
        %v7172 = vpow.pop %v7171
        %v7173 = vmul.f32 %v7093, 1.442695
        %v7174 = vpow.pop %v7173
        %v7175 = vmul.f32 %v7094, 1.442695
        %v7176 = vpow.pop %v7175
        %v7177 = vmul.f32 %v7095, 1.442695
        %v7178 = vpow.pop %v7177
        %v7179 = vmul.f32 %v7096, 1.442695
        %v7180 = vpow.pop %v7179
        %v7181 = vmul.f32 %v7097, 1.442695
        %v7182 = vpow.pop %v7181
        %v7183 = vmul.f32 %v7098, 1.442695
        %v7184 = vpow.pop %v7183
        %v7185 = vmul.f32 %v7099, 1.442695
        %v7186 = vpow.pop %v7185
        %v7187 = vmul.f32 %v7100, 1.442695
        %v7188 = vpow.pop %v7187
        %v7189 = vmul.f32 %v7101, 1.442695
        %v7190 = vpow.pop %v7189
        %v7191 = vmul.f32 %v7102, 1.442695
        %v7192 = vpow.pop %v7191
        %v7193 = vmul.f32 %v7103, 1.442695
        %v7194 = vpow.pop %v7193
        %v7195 = vmul.f32 %v7104, 1.442695
        %v7196 = vpow.pop %v7195
        %v7197 = vmul.f32 %v7105, 1.442695
        %v7198 = vpow.pop %v7197
        %v7199 = vmul.f32 %v7106, 1.442695
        %v7200 = vpow.pop %v7199
        %v7201 = vmul.f32 %v7107, 1.442695
        %v7202 = vpow.pop %v7201
        %v7203 = vmul.f32 %v7108, 1.442695
        %v7204 = vpow.pop %v7203
        %v7205 = vmul.f32 %v7109, 1.442695
        %v7206 = vpow.pop %v7205
        %v7207 = vmul.f32 %v7110, 1.442695
        %v7208 = vpow.pop %v7207
        %v7209 = vmul.f32 %v7111, 1.442695
        %v7210 = vpow.pop %v7209
        %v7211 = vmul.f32 %v7112, 1.442695
        %v7212 = vpow.pop %v7211
        %v7213 = vmul.f32 %v7113, 1.442695
        %v7214 = vpow.pop %v7213
        %v7215 = vmul.f32 %v7114, 1.442695
        %v7216 = vpow.pop %v7215
        %v7217 = vmul.f32 %v7115, 1.442695
        %v7218 = vpow.pop %v7217
        %v7219 = vmul.f32 %v7116, 1.442695
        %v7220 = vpow.pop %v7219
        %v7221 = vmul.f32 %v7117, 1.442695
        %v7222 = vpow.pop %v7221
        %v7223 = vmul.f32 %v7118, 1.442695
        %v7224 = vpow.pop %v7223
        %v7225 = vmul.f32 %v7119, 1.442695
        %v7226 = vpow.pop %v7225
        %v7227 = vmul.f32 %v7120, 1.442695
        %v7228 = vpow.pop %v7227
        %v7229 = vmul.f32 %v7121, 1.442695
        %v7230 = vpow.pop %v7229
        %v7231 = vmul.f32 %v7122, 1.442695
        %v7232 = vpow.pop %v7231
        %v7233 = vmul.f32 %v7123, 1.442695
        %v7234 = vpow.pop %v7233
        %v7235 = vmul.f32 %v7124, 1.442695
        %v7236 = vpow.pop %v7235
        %v7237 = vmul.f32 %v7125, 1.442695
        %v7238 = vpow.pop %v7237
        %v7239 = vmul.f32 %v7126, 1.442695
        %v7240 = vpow.pop %v7239
        %v7241 = vmul.f32 %v7127, 1.442695
        %v7242 = vpow.pop %v7241
        %v7243 = vmul.f32 %v7128, 1.442695
        %v7244 = vpow.pop %v7243
        %v7245 = vmul.f32 %v7129, 1.442695
        %v7246 = vpow.pop %v7245
        %v7247 = vmul.f32 %v7130, 1.442695
        %v7248 = vpow.pop %v7247
        %v7249 = vmul.f32 %v7131, 1.442695
        %v7250 = vpow.pop %v7249
        %v7251 = vmul.f32 %v7132, 1.442695
        %v7252 = vpow.pop %v7251
        %v7253 = vmul.f32 %v7133, 1.442695
        %v7254 = vpow.pop %v7253
        %v7255 = vmul.f32 %v7134, 1.442695
        %v7256 = vpow.pop %v7255
        %v7257 = vmul.f32 %v7135, 1.442695
        %v7258 = vpow.pop %v7257
        %v7259 = vmul.f32 %v7136, 1.442695
        %v7260 = vpow.pop %v7259
        %v7261 = vmul.f32 %v7137, 1.442695
        %v7262 = vpow.pop %v7261
        %v7263 = vmul.f32 %v7138, 1.442695
        %v7264 = vpow.pop %v7263
        %v7265 = vmul.f32 %v7139, 1.442695
        %v7266 = vpow.pop %v7265
        %v7267 = vmul.f32 %v7140, 1.442695
        %v7268 = vpow.pop %v7267
        %v7269 = vadd.f32 %v7142, 1.0
        %v7270 = vadd.f32 %v7144, 1.0
        %v7271 = vadd.f32 %v7146, 1.0
        %v7272 = vadd.f32 %v7148, 1.0
        %v7273 = vadd.f32 %v7150, 1.0
        %v7274 = vadd.f32 %v7152, 1.0
        %v7275 = vadd.f32 %v7154, 1.0
        %v7276 = vadd.f32 %v7156, 1.0
        %v7277 = vadd.f32 %v7158, 1.0
        %v7278 = vadd.f32 %v7160, 1.0
        %v7279 = vadd.f32 %v7162, 1.0
        %v7280 = vadd.f32 %v7164, 1.0
        %v7281 = vadd.f32 %v7166, 1.0
        %v7282 = vadd.f32 %v7168, 1.0
        %v7283 = vadd.f32 %v7170, 1.0
        %v7284 = vadd.f32 %v7172, 1.0
        %v7285 = vadd.f32 %v7174, 1.0
        %v7286 = vadd.f32 %v7176, 1.0
        %v7287 = vadd.f32 %v7178, 1.0
        %v7288 = vadd.f32 %v7180, 1.0
        %v7289 = vadd.f32 %v7182, 1.0
        %v7290 = vadd.f32 %v7184, 1.0
        %v7291 = vadd.f32 %v7186, 1.0
        %v7292 = vadd.f32 %v7188, 1.0
        %v7293 = vadd.f32 %v7190, 1.0
        %v7294 = vadd.f32 %v7192, 1.0
        %v7295 = vadd.f32 %v7194, 1.0
        %v7296 = vadd.f32 %v7196, 1.0
        %v7297 = vadd.f32 %v7198, 1.0
        %v7298 = vadd.f32 %v7200, 1.0
        %v7299 = vadd.f32 %v7202, 1.0
        %v7300 = vadd.f32 %v7204, 1.0
        %v7301 = vadd.f32 %v7206, 1.0
        %v7302 = vadd.f32 %v7208, 1.0
        %v7303 = vadd.f32 %v7210, 1.0
        %v7304 = vadd.f32 %v7212, 1.0
        %v7305 = vadd.f32 %v7214, 1.0
        %v7306 = vadd.f32 %v7216, 1.0
        %v7307 = vadd.f32 %v7218, 1.0
        %v7308 = vadd.f32 %v7220, 1.0
        %v7309 = vadd.f32 %v7222, 1.0
        %v7310 = vadd.f32 %v7224, 1.0
        %v7311 = vadd.f32 %v7226, 1.0
        %v7312 = vadd.f32 %v7228, 1.0
        %v7313 = vadd.f32 %v7230, 1.0
        %v7314 = vadd.f32 %v7232, 1.0
        %v7315 = vadd.f32 %v7234, 1.0
        %v7316 = vadd.f32 %v7236, 1.0
        %v7317 = vadd.f32 %v7238, 1.0
        %v7318 = vadd.f32 %v7240, 1.0
        %v7319 = vadd.f32 %v7242, 1.0
        %v7320 = vadd.f32 %v7244, 1.0
        %v7321 = vadd.f32 %v7246, 1.0
        %v7322 = vadd.f32 %v7248, 1.0
        %v7323 = vadd.f32 %v7250, 1.0
        %v7324 = vadd.f32 %v7252, 1.0
        %v7325 = vadd.f32 %v7254, 1.0
        %v7326 = vadd.f32 %v7256, 1.0
        %v7327 = vadd.f32 %v7258, 1.0
        %v7328 = vadd.f32 %v7260, 1.0
        %v7329 = vadd.f32 %v7262, 1.0
        %v7330 = vadd.f32 %v7264, 1.0
        %v7331 = vadd.f32 %v7266, 1.0
        %v7332 = vadd.f32 %v7268, 1.0
        %v7333 = vlog2.pop %v7269
        %v7334 = vmul.f32 %v7333, 0.6931472
        %v7335 = vlog2.pop %v7270
        %v7336 = vmul.f32 %v7335, 0.6931472
        %v7337 = vlog2.pop %v7271
        %v7338 = vmul.f32 %v7337, 0.6931472
        %v7339 = vlog2.pop %v7272
        %v7340 = vmul.f32 %v7339, 0.6931472
        %v7341 = vlog2.pop %v7273
        %v7342 = vmul.f32 %v7341, 0.6931472
        %v7343 = vlog2.pop %v7274
        %v7344 = vmul.f32 %v7343, 0.6931472
        %v7345 = vlog2.pop %v7275
        %v7346 = vmul.f32 %v7345, 0.6931472
        %v7347 = vlog2.pop %v7276
        %v7348 = vmul.f32 %v7347, 0.6931472
        %v7349 = vlog2.pop %v7277
        %v7350 = vmul.f32 %v7349, 0.6931472
        %v7351 = vlog2.pop %v7278
        %v7352 = vmul.f32 %v7351, 0.6931472
        %v7353 = vlog2.pop %v7279
        %v7354 = vmul.f32 %v7353, 0.6931472
        %v7355 = vlog2.pop %v7280
        %v7356 = vmul.f32 %v7355, 0.6931472
        %v7357 = vlog2.pop %v7281
        %v7358 = vmul.f32 %v7357, 0.6931472
        %v7359 = vlog2.pop %v7282
        %v7360 = vmul.f32 %v7359, 0.6931472
        %v7361 = vlog2.pop %v7283
        %v7362 = vmul.f32 %v7361, 0.6931472
        %v7363 = vlog2.pop %v7284
        %v7364 = vmul.f32 %v7363, 0.6931472
        %v7365 = vlog2.pop %v7285
        %v7366 = vmul.f32 %v7365, 0.6931472
        %v7367 = vlog2.pop %v7286
        %v7368 = vmul.f32 %v7367, 0.6931472
        %v7369 = vlog2.pop %v7287
        %v7370 = vmul.f32 %v7369, 0.6931472
        %v7371 = vlog2.pop %v7288
        %v7372 = vmul.f32 %v7371, 0.6931472
        %v7373 = vlog2.pop %v7289
        %v7374 = vmul.f32 %v7373, 0.6931472
        %v7375 = vlog2.pop %v7290
        %v7376 = vmul.f32 %v7375, 0.6931472
        %v7377 = vlog2.pop %v7291
        %v7378 = vmul.f32 %v7377, 0.6931472
        %v7379 = vlog2.pop %v7292
        %v7380 = vmul.f32 %v7379, 0.6931472
        %v7381 = vlog2.pop %v7293
        %v7382 = vmul.f32 %v7381, 0.6931472
        %v7383 = vlog2.pop %v7294
        %v7384 = vmul.f32 %v7383, 0.6931472
        %v7385 = vlog2.pop %v7295
        %v7386 = vmul.f32 %v7385, 0.6931472
        %v7387 = vlog2.pop %v7296
        %v7388 = vmul.f32 %v7387, 0.6931472
        %v7389 = vlog2.pop %v7297
        %v7390 = vmul.f32 %v7389, 0.6931472
        %v7391 = vlog2.pop %v7298
        %v7392 = vmul.f32 %v7391, 0.6931472
        %v7393 = vlog2.pop %v7299
        %v7394 = vmul.f32 %v7393, 0.6931472
        %v7395 = vlog2.pop %v7300
        %v7396 = vmul.f32 %v7395, 0.6931472
        %v7397 = vlog2.pop %v7301
        %v7398 = vmul.f32 %v7397, 0.6931472
        %v7399 = vlog2.pop %v7302
        %v7400 = vmul.f32 %v7399, 0.6931472
        %v7401 = vlog2.pop %v7303
        %v7402 = vmul.f32 %v7401, 0.6931472
        %v7403 = vlog2.pop %v7304
        %v7404 = vmul.f32 %v7403, 0.6931472
        %v7405 = vlog2.pop %v7305
        %v7406 = vmul.f32 %v7405, 0.6931472
        %v7407 = vlog2.pop %v7306
        %v7408 = vmul.f32 %v7407, 0.6931472
        %v7409 = vlog2.pop %v7307
        %v7410 = vmul.f32 %v7409, 0.6931472
        %v7411 = vlog2.pop %v7308
        %v7412 = vmul.f32 %v7411, 0.6931472
        %v7413 = vlog2.pop %v7309
        %v7414 = vmul.f32 %v7413, 0.6931472
        %v7415 = vlog2.pop %v7310
        %v7416 = vmul.f32 %v7415, 0.6931472
        %v7417 = vlog2.pop %v7311
        %v7418 = vmul.f32 %v7417, 0.6931472
        %v7419 = vlog2.pop %v7312
        %v7420 = vmul.f32 %v7419, 0.6931472
        %v7421 = vlog2.pop %v7313
        %v7422 = vmul.f32 %v7421, 0.6931472
        %v7423 = vlog2.pop %v7314
        %v7424 = vmul.f32 %v7423, 0.6931472
        %v7425 = vlog2.pop %v7315
        %v7426 = vmul.f32 %v7425, 0.6931472
        %v7427 = vlog2.pop %v7316
        %v7428 = vmul.f32 %v7427, 0.6931472
        %v7429 = vlog2.pop %v7317
        %v7430 = vmul.f32 %v7429, 0.6931472
        %v7431 = vlog2.pop %v7318
        %v7432 = vmul.f32 %v7431, 0.6931472
        %v7433 = vlog2.pop %v7319
        %v7434 = vmul.f32 %v7433, 0.6931472
        %v7435 = vlog2.pop %v7320
        %v7436 = vmul.f32 %v7435, 0.6931472
        %v7437 = vlog2.pop %v7321
        %v7438 = vmul.f32 %v7437, 0.6931472
        %v7439 = vlog2.pop %v7322
        %v7440 = vmul.f32 %v7439, 0.6931472
        %v7441 = vlog2.pop %v7323
        %v7442 = vmul.f32 %v7441, 0.6931472
        %v7443 = vlog2.pop %v7324
        %v7444 = vmul.f32 %v7443, 0.6931472
        %v7445 = vlog2.pop %v7325
        %v7446 = vmul.f32 %v7445, 0.6931472
        %v7447 = vlog2.pop %v7326
        %v7448 = vmul.f32 %v7447, 0.6931472
        %v7449 = vlog2.pop %v7327
        %v7450 = vmul.f32 %v7449, 0.6931472
        %v7451 = vlog2.pop %v7328
        %v7452 = vmul.f32 %v7451, 0.6931472
        %v7453 = vlog2.pop %v7329
        %v7454 = vmul.f32 %v7453, 0.6931472
        %v7455 = vlog2.pop %v7330
        %v7456 = vmul.f32 %v7455, 0.6931472
        %v7457 = vlog2.pop %v7331
        %v7458 = vmul.f32 %v7457, 0.6931472
        %v7459 = vlog2.pop %v7332
        %v7460 = vmul.f32 %v7459, 0.6931472
        %v7461 = vadd.f32 %v6949, %v7334
        %v7462 = vadd.f32 %v6950, %v7336
        %v7463 = vadd.f32 %v6951, %v7338
        %v7464 = vadd.f32 %v6952, %v7340
        %v7465 = vadd.f32 %v6953, %v7342
        %v7466 = vadd.f32 %v6954, %v7344
        %v7467 = vadd.f32 %v6955, %v7346
        %v7468 = vadd.f32 %v6956, %v7348
        %v7469 = vadd.f32 %v6957, %v7350
        %v7470 = vadd.f32 %v6958, %v7352
        %v7471 = vadd.f32 %v6959, %v7354
        %v7472 = vadd.f32 %v6960, %v7356
        %v7473 = vadd.f32 %v6961, %v7358
        %v7474 = vadd.f32 %v6962, %v7360
        %v7475 = vadd.f32 %v6963, %v7362
        %v7476 = vadd.f32 %v6964, %v7364
        %v7477 = vadd.f32 %v6965, %v7366
        %v7478 = vadd.f32 %v6966, %v7368
        %v7479 = vadd.f32 %v6967, %v7370
        %v7480 = vadd.f32 %v6968, %v7372
        %v7481 = vadd.f32 %v6969, %v7374
        %v7482 = vadd.f32 %v6970, %v7376
        %v7483 = vadd.f32 %v6971, %v7378
        %v7484 = vadd.f32 %v6972, %v7380
        %v7485 = vadd.f32 %v6973, %v7382
        %v7486 = vadd.f32 %v6974, %v7384
        %v7487 = vadd.f32 %v6975, %v7386
        %v7488 = vadd.f32 %v6976, %v7388
        %v7489 = vadd.f32 %v6977, %v7390
        %v7490 = vadd.f32 %v6978, %v7392
        %v7491 = vadd.f32 %v6979, %v7394
        %v7492 = vadd.f32 %v6980, %v7396
        %v7493 = vadd.f32 %v6981, %v7398
        %v7494 = vadd.f32 %v6982, %v7400
        %v7495 = vadd.f32 %v6983, %v7402
        %v7496 = vadd.f32 %v6984, %v7404
        %v7497 = vadd.f32 %v6985, %v7406
        %v7498 = vadd.f32 %v6986, %v7408
        %v7499 = vadd.f32 %v6987, %v7410
        %v7500 = vadd.f32 %v6988, %v7412
        %v7501 = vadd.f32 %v6989, %v7414
        %v7502 = vadd.f32 %v6990, %v7416
        %v7503 = vadd.f32 %v6991, %v7418
        %v7504 = vadd.f32 %v6992, %v7420
        %v7505 = vadd.f32 %v6993, %v7422
        %v7506 = vadd.f32 %v6994, %v7424
        %v7507 = vadd.f32 %v6995, %v7426
        %v7508 = vadd.f32 %v6996, %v7428
        %v7509 = vadd.f32 %v6997, %v7430
        %v7510 = vadd.f32 %v6998, %v7432
        %v7511 = vadd.f32 %v6999, %v7434
        %v7512 = vadd.f32 %v7000, %v7436
        %v7513 = vadd.f32 %v7001, %v7438
        %v7514 = vadd.f32 %v7002, %v7440
        %v7515 = vadd.f32 %v7003, %v7442
        %v7516 = vadd.f32 %v7004, %v7444
        %v7517 = vadd.f32 %v7005, %v7446
        %v7518 = vadd.f32 %v7006, %v7448
        %v7519 = vadd.f32 %v7007, %v7450
        %v7520 = vadd.f32 %v7008, %v7452
        %v7521 = vadd.f32 %v7009, %v7454
        %v7522 = vadd.f32 %v7010, %v7456
        %v7523 = vadd.f32 %v7011, %v7458
        %v7524 = vadd.f32 %v7012, %v7460
        %7589 = vrot.lane.b32.xlu0 %v7461, 127
        %v7590 = vpop.permute.xlu0 %7589
        %7591 = vrot.lane.b32.xlu0 %v7462, 127
        %v7592 = vpop.permute.xlu0 %7591
        %7593 = vrot.lane.b32.xlu0 %v7463, 127
        %v7594 = vpop.permute.xlu0 %7593
        %7595 = vrot.lane.b32.xlu0 %v7464, 127
        %v7596 = vpop.permute.xlu0 %7595
        %7597 = vrot.lane.b32.xlu0 %v7465, 127
        %v7598 = vpop.permute.xlu0 %7597
        %7599 = vrot.lane.b32.xlu0 %v7466, 127
        %v7600 = vpop.permute.xlu0 %7599
        %7601 = vrot.lane.b32.xlu0 %v7467, 127
        %v7602 = vpop.permute.xlu0 %7601
        %7603 = vrot.lane.b32.xlu0 %v7468, 127
        %v7604 = vpop.permute.xlu0 %7603
        %7605 = vrot.lane.b32.xlu0 %v7469, 127
        %v7606 = vpop.permute.xlu0 %7605
        %7607 = vrot.lane.b32.xlu0 %v7470, 127
        %v7608 = vpop.permute.xlu0 %7607
        %7609 = vrot.lane.b32.xlu0 %v7471, 127
        %v7610 = vpop.permute.xlu0 %7609
        %7611 = vrot.lane.b32.xlu0 %v7472, 127
        %v7612 = vpop.permute.xlu0 %7611
        %7613 = vrot.lane.b32.xlu0 %v7473, 127
        %v7614 = vpop.permute.xlu0 %7613
        %7615 = vrot.lane.b32.xlu0 %v7474, 127
        %v7616 = vpop.permute.xlu0 %7615
        %7617 = vrot.lane.b32.xlu0 %v7475, 127
        %v7618 = vpop.permute.xlu0 %7617
        %7619 = vrot.lane.b32.xlu0 %v7476, 127
        %v7620 = vpop.permute.xlu0 %7619
        %7621 = vrot.lane.b32.xlu0 %v7477, 127
        %v7622 = vpop.permute.xlu0 %7621
        %7623 = vrot.lane.b32.xlu0 %v7478, 127
        %v7624 = vpop.permute.xlu0 %7623
        %7625 = vrot.lane.b32.xlu0 %v7479, 127
        %v7626 = vpop.permute.xlu0 %7625
        %7627 = vrot.lane.b32.xlu0 %v7480, 127
        %v7628 = vpop.permute.xlu0 %7627
        %7629 = vrot.lane.b32.xlu0 %v7481, 127
        %v7630 = vpop.permute.xlu0 %7629
        %7631 = vrot.lane.b32.xlu0 %v7482, 127
        %v7632 = vpop.permute.xlu0 %7631
        %7633 = vrot.lane.b32.xlu0 %v7483, 127
        %v7634 = vpop.permute.xlu0 %7633
        %7635 = vrot.lane.b32.xlu0 %v7484, 127
        %v7636 = vpop.permute.xlu0 %7635
        %7637 = vrot.lane.b32.xlu0 %v7485, 127
        %v7638 = vpop.permute.xlu0 %7637
        %7639 = vrot.lane.b32.xlu0 %v7486, 127
        %v7640 = vpop.permute.xlu0 %7639
        %7641 = vrot.lane.b32.xlu0 %v7487, 127
        %v7642 = vpop.permute.xlu0 %7641
        %7643 = vrot.lane.b32.xlu0 %v7488, 127
        %v7644 = vpop.permute.xlu0 %7643
        %7645 = vrot.lane.b32.xlu0 %v7489, 127
        %v7646 = vpop.permute.xlu0 %7645
        %7647 = vrot.lane.b32.xlu0 %v7490, 127
        %v7648 = vpop.permute.xlu0 %7647
        %7649 = vrot.lane.b32.xlu0 %v7491, 127
        %v7650 = vpop.permute.xlu0 %7649
        %7651 = vrot.lane.b32.xlu0 %v7492, 127
        %v7652 = vpop.permute.xlu0 %7651
        %7653 = vrot.lane.b32.xlu0 %v7493, 127
        %v7654 = vpop.permute.xlu0 %7653
        %7655 = vrot.lane.b32.xlu0 %v7494, 127
        %v7656 = vpop.permute.xlu0 %7655
        %7657 = vrot.lane.b32.xlu0 %v7495, 127
        %v7658 = vpop.permute.xlu0 %7657
        %7659 = vrot.lane.b32.xlu0 %v7496, 127
        %v7660 = vpop.permute.xlu0 %7659
        %7661 = vrot.lane.b32.xlu0 %v7497, 127
        %v7662 = vpop.permute.xlu0 %7661
        %7663 = vrot.lane.b32.xlu0 %v7498, 127
        %v7664 = vpop.permute.xlu0 %7663
        %7665 = vrot.lane.b32.xlu0 %v7499, 127
        %v7666 = vpop.permute.xlu0 %7665
        %7667 = vrot.lane.b32.xlu0 %v7500, 127
        %v7668 = vpop.permute.xlu0 %7667
        %7669 = vrot.lane.b32.xlu0 %v7501, 127
        %v7670 = vpop.permute.xlu0 %7669
        %7671 = vrot.lane.b32.xlu0 %v7502, 127
        %v7672 = vpop.permute.xlu0 %7671
        %7673 = vrot.lane.b32.xlu0 %v7503, 127
        %v7674 = vpop.permute.xlu0 %7673
        %7675 = vrot.lane.b32.xlu0 %v7504, 127
        %v7676 = vpop.permute.xlu0 %7675
        %7677 = vrot.lane.b32.xlu0 %v7505, 127
        %v7678 = vpop.permute.xlu0 %7677
        %7679 = vrot.lane.b32.xlu0 %v7506, 127
        %v7680 = vpop.permute.xlu0 %7679
        %7681 = vrot.lane.b32.xlu0 %v7507, 127
        %v7682 = vpop.permute.xlu0 %7681
        %7683 = vrot.lane.b32.xlu0 %v7508, 127
        %v7684 = vpop.permute.xlu0 %7683
        %7685 = vrot.lane.b32.xlu0 %v7509, 127
        %v7686 = vpop.permute.xlu0 %7685
        %7687 = vrot.lane.b32.xlu0 %v7510, 127
        %v7688 = vpop.permute.xlu0 %7687
        %7689 = vrot.lane.b32.xlu0 %v7511, 127
        %v7690 = vpop.permute.xlu0 %7689
        %7691 = vrot.lane.b32.xlu0 %v7512, 127
        %v7692 = vpop.permute.xlu0 %7691
        %7693 = vrot.lane.b32.xlu0 %v7513, 127
        %v7694 = vpop.permute.xlu0 %7693
        %7695 = vrot.lane.b32.xlu0 %v7514, 127
        %v7696 = vpop.permute.xlu0 %7695
        %7697 = vrot.lane.b32.xlu0 %v7515, 127
        %v7698 = vpop.permute.xlu0 %7697
        %7699 = vrot.lane.b32.xlu0 %v7516, 127
        %v7700 = vpop.permute.xlu0 %7699
        %7701 = vrot.lane.b32.xlu0 %v7517, 127
        %v7702 = vpop.permute.xlu0 %7701
        %7703 = vrot.lane.b32.xlu0 %v7518, 127
        %v7704 = vpop.permute.xlu0 %7703
        %7705 = vrot.lane.b32.xlu0 %v7519, 127
        %v7706 = vpop.permute.xlu0 %7705
        %7707 = vrot.lane.b32.xlu0 %v7520, 127
        %v7708 = vpop.permute.xlu0 %7707
        %7709 = vrot.lane.b32.xlu0 %v7521, 127
        %v7710 = vpop.permute.xlu0 %7709
        %7711 = vrot.lane.b32.xlu0 %v7522, 127
        %v7712 = vpop.permute.xlu0 %7711
        %7713 = vrot.lane.b32.xlu0 %v7523, 127
        %v7714 = vpop.permute.xlu0 %7713
        %7715 = vrot.lane.b32.xlu0 %v7524, 127
        %v7716 = vpop.permute.xlu0 %7715
        %v7781 = vmul.f32 %v6629, %v7590
        %v7782 = vmul.f32 %v6630, %v7592
        %v7783 = vmul.f32 %v6631, %v7594
        %v7784 = vmul.f32 %v6632, %v7596
        %v7785 = vmul.f32 %v6633, %v7598
        %v7786 = vmul.f32 %v6634, %v7600
        %v7787 = vmul.f32 %v6635, %v7602
        %v7788 = vmul.f32 %v6636, %v7604
        %v7789 = vmul.f32 %v6637, %v7606
        %v7790 = vmul.f32 %v6638, %v7608
        %v7791 = vmul.f32 %v6639, %v7610
        %v7792 = vmul.f32 %v6640, %v7612
        %v7793 = vmul.f32 %v6641, %v7614
        %v7794 = vmul.f32 %v6642, %v7616
        %v7795 = vmul.f32 %v6643, %v7618
        %v7796 = vmul.f32 %v6644, %v7620
        %v7797 = vmul.f32 %v6645, %v7622
        %v7798 = vmul.f32 %v6646, %v7624
        %v7799 = vmul.f32 %v6647, %v7626
        %v7800 = vmul.f32 %v6648, %v7628
        %v7801 = vmul.f32 %v6649, %v7630
        %v7802 = vmul.f32 %v6650, %v7632
        %v7803 = vmul.f32 %v6651, %v7634
        %v7804 = vmul.f32 %v6652, %v7636
        %v7805 = vmul.f32 %v6653, %v7638
        %v7806 = vmul.f32 %v6654, %v7640
        %v7807 = vmul.f32 %v6655, %v7642
        %v7808 = vmul.f32 %v6656, %v7644
        %v7809 = vmul.f32 %v6657, %v7646
        %v7810 = vmul.f32 %v6658, %v7648
        %v7811 = vmul.f32 %v6659, %v7650
        %v7812 = vmul.f32 %v6660, %v7652
        %v7813 = vmul.f32 %v6661, %v7654
        %v7814 = vmul.f32 %v6662, %v7656
        %v7815 = vmul.f32 %v6663, %v7658
        %v7816 = vmul.f32 %v6664, %v7660
        %v7817 = vmul.f32 %v6665, %v7662
        %v7818 = vmul.f32 %v6666, %v7664
        %v7819 = vmul.f32 %v6667, %v7666
        %v7820 = vmul.f32 %v6668, %v7668
        %v7821 = vmul.f32 %v6669, %v7670
        %v7822 = vmul.f32 %v6670, %v7672
        %v7823 = vmul.f32 %v6671, %v7674
        %v7824 = vmul.f32 %v6672, %v7676
        %v7825 = vmul.f32 %v6673, %v7678
        %v7826 = vmul.f32 %v6674, %v7680
        %v7827 = vmul.f32 %v6675, %v7682
        %v7828 = vmul.f32 %v6676, %v7684
        %v7829 = vmul.f32 %v6677, %v7686
        %v7830 = vmul.f32 %v6678, %v7688
        %v7831 = vmul.f32 %v6679, %v7690
        %v7832 = vmul.f32 %v6680, %v7692
        %v7833 = vmul.f32 %v6681, %v7694
        %v7834 = vmul.f32 %v6682, %v7696
        %v7835 = vmul.f32 %v6683, %v7698
        %v7836 = vmul.f32 %v6684, %v7700
        %v7837 = vmul.f32 %v6685, %v7702
        %v7838 = vmul.f32 %v6686, %v7704
        %v7839 = vmul.f32 %v6687, %v7706
        %v7840 = vmul.f32 %v6688, %v7708
        %v7841 = vmul.f32 %v6689, %v7710
        %v7842 = vmul.f32 %v6690, %v7712
        %v7843 = vmul.f32 %v6691, %v7714
        %v7844 = vmul.f32 %v6692, %v7716
        %7909 = vrot.lane.b32.xlu0 %v6113, 1
        %v7910 = vpop.permute.xlu0 %7909
        %7911 = vrot.lane.b32.xlu0 %v6114, 1
        %v7912 = vpop.permute.xlu0 %7911
        %7913 = vrot.lane.b32.xlu0 %v6115, 1
        %v7914 = vpop.permute.xlu0 %7913
        %7915 = vrot.lane.b32.xlu0 %v6116, 1
        %v7916 = vpop.permute.xlu0 %7915
        %7917 = vrot.lane.b32.xlu0 %v6117, 1
        %v7918 = vpop.permute.xlu0 %7917
        %7919 = vrot.lane.b32.xlu0 %v6118, 1
        %v7920 = vpop.permute.xlu0 %7919
        %7921 = vrot.lane.b32.xlu0 %v6119, 1
        %v7922 = vpop.permute.xlu0 %7921
        %7923 = vrot.lane.b32.xlu0 %v6120, 1
        %v7924 = vpop.permute.xlu0 %7923
        %7925 = vrot.lane.b32.xlu0 %v6121, 1
        %v7926 = vpop.permute.xlu0 %7925
        %7927 = vrot.lane.b32.xlu0 %v6122, 1
        %v7928 = vpop.permute.xlu0 %7927
        %7929 = vrot.lane.b32.xlu0 %v6123, 1
        %v7930 = vpop.permute.xlu0 %7929
        %7931 = vrot.lane.b32.xlu0 %v6124, 1
        %v7932 = vpop.permute.xlu0 %7931
        %7933 = vrot.lane.b32.xlu0 %v6125, 1
        %v7934 = vpop.permute.xlu0 %7933
        %7935 = vrot.lane.b32.xlu0 %v6126, 1
        %v7936 = vpop.permute.xlu0 %7935
        %7937 = vrot.lane.b32.xlu0 %v6127, 1
        %v7938 = vpop.permute.xlu0 %7937
        %7939 = vrot.lane.b32.xlu0 %v6128, 1
        %v7940 = vpop.permute.xlu0 %7939
        %7941 = vrot.lane.b32.xlu0 %v6129, 1
        %v7942 = vpop.permute.xlu0 %7941
        %7943 = vrot.lane.b32.xlu0 %v6130, 1
        %v7944 = vpop.permute.xlu0 %7943
        %7945 = vrot.lane.b32.xlu0 %v6131, 1
        %v7946 = vpop.permute.xlu0 %7945
        %7947 = vrot.lane.b32.xlu0 %v6132, 1
        %v7948 = vpop.permute.xlu0 %7947
        %7949 = vrot.lane.b32.xlu0 %v6133, 1
        %v7950 = vpop.permute.xlu0 %7949
        %7951 = vrot.lane.b32.xlu0 %v6134, 1
        %v7952 = vpop.permute.xlu0 %7951
        %7953 = vrot.lane.b32.xlu0 %v6135, 1
        %v7954 = vpop.permute.xlu0 %7953
        %7955 = vrot.lane.b32.xlu0 %v6136, 1
        %v7956 = vpop.permute.xlu0 %7955
        %7957 = vrot.lane.b32.xlu0 %v6137, 1
        %v7958 = vpop.permute.xlu0 %7957
        %7959 = vrot.lane.b32.xlu0 %v6138, 1
        %v7960 = vpop.permute.xlu0 %7959
        %7961 = vrot.lane.b32.xlu0 %v6139, 1
        %v7962 = vpop.permute.xlu0 %7961
        %7963 = vrot.lane.b32.xlu0 %v6140, 1
        %v7964 = vpop.permute.xlu0 %7963
        %7965 = vrot.lane.b32.xlu0 %v6141, 1
        %v7966 = vpop.permute.xlu0 %7965
        %7967 = vrot.lane.b32.xlu0 %v6142, 1
        %v7968 = vpop.permute.xlu0 %7967
        %7969 = vrot.lane.b32.xlu0 %v6143, 1
        %v7970 = vpop.permute.xlu0 %7969
        %7971 = vrot.lane.b32.xlu0 %v6144, 1
        %v7972 = vpop.permute.xlu0 %7971
        %7973 = vrot.lane.b32.xlu0 %v6145, 1
        %v7974 = vpop.permute.xlu0 %7973
        %7975 = vrot.lane.b32.xlu0 %v6146, 1
        %v7976 = vpop.permute.xlu0 %7975
        %7977 = vrot.lane.b32.xlu0 %v6147, 1
        %v7978 = vpop.permute.xlu0 %7977
        %7979 = vrot.lane.b32.xlu0 %v6148, 1
        %v7980 = vpop.permute.xlu0 %7979
        %7981 = vrot.lane.b32.xlu0 %v6149, 1
        %v7982 = vpop.permute.xlu0 %7981
        %7983 = vrot.lane.b32.xlu0 %v6150, 1
        %v7984 = vpop.permute.xlu0 %7983
        %7985 = vrot.lane.b32.xlu0 %v6151, 1
        %v7986 = vpop.permute.xlu0 %7985
        %7987 = vrot.lane.b32.xlu0 %v6152, 1
        %v7988 = vpop.permute.xlu0 %7987
        %7989 = vrot.lane.b32.xlu0 %v6153, 1
        %v7990 = vpop.permute.xlu0 %7989
        %7991 = vrot.lane.b32.xlu0 %v6154, 1
        %v7992 = vpop.permute.xlu0 %7991
        %7993 = vrot.lane.b32.xlu0 %v6155, 1
        %v7994 = vpop.permute.xlu0 %7993
        %7995 = vrot.lane.b32.xlu0 %v6156, 1
        %v7996 = vpop.permute.xlu0 %7995
        %7997 = vrot.lane.b32.xlu0 %v6157, 1
        %v7998 = vpop.permute.xlu0 %7997
        %7999 = vrot.lane.b32.xlu0 %v6158, 1
        %v8000 = vpop.permute.xlu0 %7999
        %8001 = vrot.lane.b32.xlu0 %v6159, 1
        %v8002 = vpop.permute.xlu0 %8001
        %8003 = vrot.lane.b32.xlu0 %v6160, 1
        %v8004 = vpop.permute.xlu0 %8003
        %8005 = vrot.lane.b32.xlu0 %v6161, 1
        %v8006 = vpop.permute.xlu0 %8005
        %8007 = vrot.lane.b32.xlu0 %v6162, 1
        %v8008 = vpop.permute.xlu0 %8007
        %8009 = vrot.lane.b32.xlu0 %v6163, 1
        %v8010 = vpop.permute.xlu0 %8009
        %8011 = vrot.lane.b32.xlu0 %v6164, 1
        %v8012 = vpop.permute.xlu0 %8011
        %8013 = vrot.lane.b32.xlu0 %v6165, 1
        %v8014 = vpop.permute.xlu0 %8013
        %8015 = vrot.lane.b32.xlu0 %v6166, 1
        %v8016 = vpop.permute.xlu0 %8015
        %8017 = vrot.lane.b32.xlu0 %v6167, 1
        %v8018 = vpop.permute.xlu0 %8017
        %8019 = vrot.lane.b32.xlu0 %v6168, 1
        %v8020 = vpop.permute.xlu0 %8019
        %8021 = vrot.lane.b32.xlu0 %v6169, 1
        %v8022 = vpop.permute.xlu0 %8021
        %8023 = vrot.lane.b32.xlu0 %v6170, 1
        %v8024 = vpop.permute.xlu0 %8023
        %8025 = vrot.lane.b32.xlu0 %v6171, 1
        %v8026 = vpop.permute.xlu0 %8025
        %8027 = vrot.lane.b32.xlu0 %v6172, 1
        %v8028 = vpop.permute.xlu0 %8027
        %8029 = vrot.lane.b32.xlu0 %v6173, 1
        %v8030 = vpop.permute.xlu0 %8029
        %8031 = vrot.lane.b32.xlu0 %v6174, 1
        %v8032 = vpop.permute.xlu0 %8031
        %8033 = vrot.lane.b32.xlu0 %v6175, 1
        %v8034 = vpop.permute.xlu0 %8033
        %8035 = vrot.lane.b32.xlu0 %v6176, 1
        %v8036 = vpop.permute.xlu0 %8035
        %8165 = vrot.lane.b32.xlu0 %v7781, 2
        %v8166 = vpop.permute.xlu0 %8165
        %8167 = vrot.lane.b32.xlu0 %v7782, 2
        %v8168 = vpop.permute.xlu0 %8167
        %8169 = vrot.lane.b32.xlu0 %v7783, 2
        %v8170 = vpop.permute.xlu0 %8169
        %8171 = vrot.lane.b32.xlu0 %v7784, 2
        %v8172 = vpop.permute.xlu0 %8171
        %8173 = vrot.lane.b32.xlu0 %v7785, 2
        %v8174 = vpop.permute.xlu0 %8173
        %8175 = vrot.lane.b32.xlu0 %v7786, 2
        %v8176 = vpop.permute.xlu0 %8175
        %8177 = vrot.lane.b32.xlu0 %v7787, 2
        %v8178 = vpop.permute.xlu0 %8177
        %8179 = vrot.lane.b32.xlu0 %v7788, 2
        %v8180 = vpop.permute.xlu0 %8179
        %8181 = vrot.lane.b32.xlu0 %v7789, 2
        %v8182 = vpop.permute.xlu0 %8181
        %8183 = vrot.lane.b32.xlu0 %v7790, 2
        %v8184 = vpop.permute.xlu0 %8183
        %8185 = vrot.lane.b32.xlu0 %v7791, 2
        %v8186 = vpop.permute.xlu0 %8185
        %8187 = vrot.lane.b32.xlu0 %v7792, 2
        %v8188 = vpop.permute.xlu0 %8187
        %8189 = vrot.lane.b32.xlu0 %v7793, 2
        %v8190 = vpop.permute.xlu0 %8189
        %8191 = vrot.lane.b32.xlu0 %v7794, 2
        %v8192 = vpop.permute.xlu0 %8191
        %8193 = vrot.lane.b32.xlu0 %v7795, 2
        %v8194 = vpop.permute.xlu0 %8193
        %8195 = vrot.lane.b32.xlu0 %v7796, 2
        %v8196 = vpop.permute.xlu0 %8195
        %8197 = vrot.lane.b32.xlu0 %v7797, 2
        %v8198 = vpop.permute.xlu0 %8197
        %8199 = vrot.lane.b32.xlu0 %v7798, 2
        %v8200 = vpop.permute.xlu0 %8199
        %8201 = vrot.lane.b32.xlu0 %v7799, 2
        %v8202 = vpop.permute.xlu0 %8201
        %8203 = vrot.lane.b32.xlu0 %v7800, 2
        %v8204 = vpop.permute.xlu0 %8203
        %8205 = vrot.lane.b32.xlu0 %v7801, 2
        %v8206 = vpop.permute.xlu0 %8205
        %8207 = vrot.lane.b32.xlu0 %v7802, 2
        %v8208 = vpop.permute.xlu0 %8207
        %8209 = vrot.lane.b32.xlu0 %v7803, 2
        %v8210 = vpop.permute.xlu0 %8209
        %8211 = vrot.lane.b32.xlu0 %v7804, 2
        %v8212 = vpop.permute.xlu0 %8211
        %8213 = vrot.lane.b32.xlu0 %v7805, 2
        %v8214 = vpop.permute.xlu0 %8213
        %8215 = vrot.lane.b32.xlu0 %v7806, 2
        %v8216 = vpop.permute.xlu0 %8215
        %8217 = vrot.lane.b32.xlu0 %v7807, 2
        %v8218 = vpop.permute.xlu0 %8217
        %8219 = vrot.lane.b32.xlu0 %v7808, 2
        %v8220 = vpop.permute.xlu0 %8219
        %8221 = vrot.lane.b32.xlu0 %v7809, 2
        %v8222 = vpop.permute.xlu0 %8221
        %8223 = vrot.lane.b32.xlu0 %v7810, 2
        %v8224 = vpop.permute.xlu0 %8223
        %8225 = vrot.lane.b32.xlu0 %v7811, 2
        %v8226 = vpop.permute.xlu0 %8225
        %8227 = vrot.lane.b32.xlu0 %v7812, 2
        %v8228 = vpop.permute.xlu0 %8227
        %8229 = vrot.lane.b32.xlu0 %v7813, 2
        %v8230 = vpop.permute.xlu0 %8229
        %8231 = vrot.lane.b32.xlu0 %v7814, 2
        %v8232 = vpop.permute.xlu0 %8231
        %8233 = vrot.lane.b32.xlu0 %v7815, 2
        %v8234 = vpop.permute.xlu0 %8233
        %8235 = vrot.lane.b32.xlu0 %v7816, 2
        %v8236 = vpop.permute.xlu0 %8235
        %8237 = vrot.lane.b32.xlu0 %v7817, 2
        %v8238 = vpop.permute.xlu0 %8237
        %8239 = vrot.lane.b32.xlu0 %v7818, 2
        %v8240 = vpop.permute.xlu0 %8239
        %8241 = vrot.lane.b32.xlu0 %v7819, 2
        %v8242 = vpop.permute.xlu0 %8241
        %8243 = vrot.lane.b32.xlu0 %v7820, 2
        %v8244 = vpop.permute.xlu0 %8243
        %8245 = vrot.lane.b32.xlu0 %v7821, 2
        %v8246 = vpop.permute.xlu0 %8245
        %8247 = vrot.lane.b32.xlu0 %v7822, 2
        %v8248 = vpop.permute.xlu0 %8247
        %8249 = vrot.lane.b32.xlu0 %v7823, 2
        %v8250 = vpop.permute.xlu0 %8249
        %8251 = vrot.lane.b32.xlu0 %v7824, 2
        %v8252 = vpop.permute.xlu0 %8251
        %8253 = vrot.lane.b32.xlu0 %v7825, 2
        %v8254 = vpop.permute.xlu0 %8253
        %8255 = vrot.lane.b32.xlu0 %v7826, 2
        %v8256 = vpop.permute.xlu0 %8255
        %8257 = vrot.lane.b32.xlu0 %v7827, 2
        %v8258 = vpop.permute.xlu0 %8257
        %8259 = vrot.lane.b32.xlu0 %v7828, 2
        %v8260 = vpop.permute.xlu0 %8259
        %8261 = vrot.lane.b32.xlu0 %v7829, 2
        %v8262 = vpop.permute.xlu0 %8261
        %8263 = vrot.lane.b32.xlu0 %v7830, 2
        %v8264 = vpop.permute.xlu0 %8263
        %8265 = vrot.lane.b32.xlu0 %v7831, 2
        %v8266 = vpop.permute.xlu0 %8265
        %8267 = vrot.lane.b32.xlu0 %v7832, 2
        %v8268 = vpop.permute.xlu0 %8267
        %8269 = vrot.lane.b32.xlu0 %v7833, 2
        %v8270 = vpop.permute.xlu0 %8269
        %8271 = vrot.lane.b32.xlu0 %v7834, 2
        %v8272 = vpop.permute.xlu0 %8271
        %8273 = vrot.lane.b32.xlu0 %v7835, 2
        %v8274 = vpop.permute.xlu0 %8273
        %8275 = vrot.lane.b32.xlu0 %v7836, 2
        %v8276 = vpop.permute.xlu0 %8275
        %8277 = vrot.lane.b32.xlu0 %v7837, 2
        %v8278 = vpop.permute.xlu0 %8277
        %8279 = vrot.lane.b32.xlu0 %v7838, 2
        %v8280 = vpop.permute.xlu0 %8279
        %8281 = vrot.lane.b32.xlu0 %v7839, 2
        %v8282 = vpop.permute.xlu0 %8281
        %8283 = vrot.lane.b32.xlu0 %v7840, 2
        %v8284 = vpop.permute.xlu0 %8283
        %8285 = vrot.lane.b32.xlu0 %v7841, 2
        %v8286 = vpop.permute.xlu0 %8285
        %8287 = vrot.lane.b32.xlu0 %v7842, 2
        %v8288 = vpop.permute.xlu0 %8287
        %8289 = vrot.lane.b32.xlu0 %v7843, 2
        %v8290 = vpop.permute.xlu0 %8289
        %8291 = vrot.lane.b32.xlu0 %v7844, 2
        %v8292 = vpop.permute.xlu0 %8291
        %8421 = vrot.lane.b32.xlu0 %v2909, 3
        %v8422 = vpop.permute.xlu0 %8421
        %8423 = vrot.lane.b32.xlu0 %v2910, 3
        %v8424 = vpop.permute.xlu0 %8423
        %8425 = vrot.lane.b32.xlu0 %v2911, 3
        %v8426 = vpop.permute.xlu0 %8425
        %8427 = vrot.lane.b32.xlu0 %v2912, 3
        %v8428 = vpop.permute.xlu0 %8427
        %8429 = vrot.lane.b32.xlu0 %v2913, 3
        %v8430 = vpop.permute.xlu0 %8429
        %8431 = vrot.lane.b32.xlu0 %v2914, 3
        %v8432 = vpop.permute.xlu0 %8431
        %8433 = vrot.lane.b32.xlu0 %v2915, 3
        %v8434 = vpop.permute.xlu0 %8433
        %8435 = vrot.lane.b32.xlu0 %v2916, 3
        %v8436 = vpop.permute.xlu0 %8435
        %8437 = vrot.lane.b32.xlu0 %v2917, 3
        %v8438 = vpop.permute.xlu0 %8437
        %8439 = vrot.lane.b32.xlu0 %v2918, 3
        %v8440 = vpop.permute.xlu0 %8439
        %8441 = vrot.lane.b32.xlu0 %v2919, 3
        %v8442 = vpop.permute.xlu0 %8441
        %8443 = vrot.lane.b32.xlu0 %v2920, 3
        %v8444 = vpop.permute.xlu0 %8443
        %8445 = vrot.lane.b32.xlu0 %v2921, 3
        %v8446 = vpop.permute.xlu0 %8445
        %8447 = vrot.lane.b32.xlu0 %v2922, 3
        %v8448 = vpop.permute.xlu0 %8447
        %8449 = vrot.lane.b32.xlu0 %v2923, 3
        %v8450 = vpop.permute.xlu0 %8449
        %8451 = vrot.lane.b32.xlu0 %v2924, 3
        %v8452 = vpop.permute.xlu0 %8451
        %8453 = vrot.lane.b32.xlu0 %v2925, 3
        %v8454 = vpop.permute.xlu0 %8453
        %8455 = vrot.lane.b32.xlu0 %v2926, 3
        %v8456 = vpop.permute.xlu0 %8455
        %8457 = vrot.lane.b32.xlu0 %v2927, 3
        %v8458 = vpop.permute.xlu0 %8457
        %8459 = vrot.lane.b32.xlu0 %v2928, 3
        %v8460 = vpop.permute.xlu0 %8459
        %8461 = vrot.lane.b32.xlu0 %v2929, 3
        %v8462 = vpop.permute.xlu0 %8461
        %8463 = vrot.lane.b32.xlu0 %v2930, 3
        %v8464 = vpop.permute.xlu0 %8463
        %8465 = vrot.lane.b32.xlu0 %v2931, 3
        %v8466 = vpop.permute.xlu0 %8465
        %8467 = vrot.lane.b32.xlu0 %v2932, 3
        %v8468 = vpop.permute.xlu0 %8467
        %8469 = vrot.lane.b32.xlu0 %v2933, 3
        %v8470 = vpop.permute.xlu0 %8469
        %8471 = vrot.lane.b32.xlu0 %v2934, 3
        %v8472 = vpop.permute.xlu0 %8471
        %8473 = vrot.lane.b32.xlu0 %v2935, 3
        %v8474 = vpop.permute.xlu0 %8473
        %8475 = vrot.lane.b32.xlu0 %v2936, 3
        %v8476 = vpop.permute.xlu0 %8475
        %8477 = vrot.lane.b32.xlu0 %v2937, 3
        %v8478 = vpop.permute.xlu0 %8477
        %8479 = vrot.lane.b32.xlu0 %v2938, 3
        %v8480 = vpop.permute.xlu0 %8479
        %8481 = vrot.lane.b32.xlu0 %v2939, 3
        %v8482 = vpop.permute.xlu0 %8481
        %8483 = vrot.lane.b32.xlu0 %v2940, 3
        %v8484 = vpop.permute.xlu0 %8483
        %8485 = vrot.lane.b32.xlu0 %v2941, 3
        %v8486 = vpop.permute.xlu0 %8485
        %8487 = vrot.lane.b32.xlu0 %v2942, 3
        %v8488 = vpop.permute.xlu0 %8487
        %8489 = vrot.lane.b32.xlu0 %v2943, 3
        %v8490 = vpop.permute.xlu0 %8489
        %8491 = vrot.lane.b32.xlu0 %v2944, 3
        %v8492 = vpop.permute.xlu0 %8491
        %8493 = vrot.lane.b32.xlu0 %v2945, 3
        %v8494 = vpop.permute.xlu0 %8493
        %8495 = vrot.lane.b32.xlu0 %v2946, 3
        %v8496 = vpop.permute.xlu0 %8495
        %8497 = vrot.lane.b32.xlu0 %v2947, 3
        %v8498 = vpop.permute.xlu0 %8497
        %8499 = vrot.lane.b32.xlu0 %v2948, 3
        %v8500 = vpop.permute.xlu0 %8499
        %8501 = vrot.lane.b32.xlu0 %v2949, 3
        %v8502 = vpop.permute.xlu0 %8501
        %8503 = vrot.lane.b32.xlu0 %v2950, 3
        %v8504 = vpop.permute.xlu0 %8503
        %8505 = vrot.lane.b32.xlu0 %v2951, 3
        %v8506 = vpop.permute.xlu0 %8505
        %8507 = vrot.lane.b32.xlu0 %v2952, 3
        %v8508 = vpop.permute.xlu0 %8507
        %8509 = vrot.lane.b32.xlu0 %v2953, 3
        %v8510 = vpop.permute.xlu0 %8509
        %8511 = vrot.lane.b32.xlu0 %v2954, 3
        %v8512 = vpop.permute.xlu0 %8511
        %8513 = vrot.lane.b32.xlu0 %v2955, 3
        %v8514 = vpop.permute.xlu0 %8513
        %8515 = vrot.lane.b32.xlu0 %v2956, 3
        %v8516 = vpop.permute.xlu0 %8515
        %8517 = vrot.lane.b32.xlu0 %v2957, 3
        %v8518 = vpop.permute.xlu0 %8517
        %8519 = vrot.lane.b32.xlu0 %v2958, 3
        %v8520 = vpop.permute.xlu0 %8519
        %8521 = vrot.lane.b32.xlu0 %v2959, 3
        %v8522 = vpop.permute.xlu0 %8521
        %8523 = vrot.lane.b32.xlu0 %v2960, 3
        %v8524 = vpop.permute.xlu0 %8523
        %8525 = vrot.lane.b32.xlu0 %v2961, 3
        %v8526 = vpop.permute.xlu0 %8525
        %8527 = vrot.lane.b32.xlu0 %v2962, 3
        %v8528 = vpop.permute.xlu0 %8527
        %8529 = vrot.lane.b32.xlu0 %v2963, 3
        %v8530 = vpop.permute.xlu0 %8529
        %8531 = vrot.lane.b32.xlu0 %v2964, 3
        %v8532 = vpop.permute.xlu0 %8531
        %8533 = vrot.lane.b32.xlu0 %v2965, 3
        %v8534 = vpop.permute.xlu0 %8533
        %8535 = vrot.lane.b32.xlu0 %v2966, 3
        %v8536 = vpop.permute.xlu0 %8535
        %8537 = vrot.lane.b32.xlu0 %v2967, 3
        %v8538 = vpop.permute.xlu0 %8537
        %8539 = vrot.lane.b32.xlu0 %v2968, 3
        %v8540 = vpop.permute.xlu0 %8539
        %8541 = vrot.lane.b32.xlu0 %v2969, 3
        %v8542 = vpop.permute.xlu0 %8541
        %8543 = vrot.lane.b32.xlu0 %v2970, 3
        %v8544 = vpop.permute.xlu0 %8543
        %8545 = vrot.lane.b32.xlu0 %v2971, 3
        %v8546 = vpop.permute.xlu0 %8545
        %8547 = vrot.lane.b32.xlu0 %v2972, 3
        %v8548 = vpop.permute.xlu0 %8547
        %8677 = vrot.lane.b32.xlu0 %v4961, 4
        %v8678 = vpop.permute.xlu0 %8677
        %8679 = vrot.lane.b32.xlu0 %v4962, 4
        %v8680 = vpop.permute.xlu0 %8679
        %8681 = vrot.lane.b32.xlu0 %v4963, 4
        %v8682 = vpop.permute.xlu0 %8681
        %8683 = vrot.lane.b32.xlu0 %v4964, 4
        %v8684 = vpop.permute.xlu0 %8683
        %8685 = vrot.lane.b32.xlu0 %v4965, 4
        %v8686 = vpop.permute.xlu0 %8685
        %8687 = vrot.lane.b32.xlu0 %v4966, 4
        %v8688 = vpop.permute.xlu0 %8687
        %8689 = vrot.lane.b32.xlu0 %v4967, 4
        %v8690 = vpop.permute.xlu0 %8689
        %8691 = vrot.lane.b32.xlu0 %v4968, 4
        %v8692 = vpop.permute.xlu0 %8691
        %8693 = vrot.lane.b32.xlu0 %v4969, 4
        %v8694 = vpop.permute.xlu0 %8693
        %8695 = vrot.lane.b32.xlu0 %v4970, 4
        %v8696 = vpop.permute.xlu0 %8695
        %8697 = vrot.lane.b32.xlu0 %v4971, 4
        %v8698 = vpop.permute.xlu0 %8697
        %8699 = vrot.lane.b32.xlu0 %v4972, 4
        %v8700 = vpop.permute.xlu0 %8699
        %8701 = vrot.lane.b32.xlu0 %v4973, 4
        %v8702 = vpop.permute.xlu0 %8701
        %8703 = vrot.lane.b32.xlu0 %v4974, 4
        %v8704 = vpop.permute.xlu0 %8703
        %8705 = vrot.lane.b32.xlu0 %v4975, 4
        %v8706 = vpop.permute.xlu0 %8705
        %8707 = vrot.lane.b32.xlu0 %v4976, 4
        %v8708 = vpop.permute.xlu0 %8707
        %8709 = vrot.lane.b32.xlu0 %v4977, 4
        %v8710 = vpop.permute.xlu0 %8709
        %8711 = vrot.lane.b32.xlu0 %v4978, 4
        %v8712 = vpop.permute.xlu0 %8711
        %8713 = vrot.lane.b32.xlu0 %v4979, 4
        %v8714 = vpop.permute.xlu0 %8713
        %8715 = vrot.lane.b32.xlu0 %v4980, 4
        %v8716 = vpop.permute.xlu0 %8715
        %8717 = vrot.lane.b32.xlu0 %v4981, 4
        %v8718 = vpop.permute.xlu0 %8717
        %8719 = vrot.lane.b32.xlu0 %v4982, 4
        %v8720 = vpop.permute.xlu0 %8719
        %8721 = vrot.lane.b32.xlu0 %v4983, 4
        %v8722 = vpop.permute.xlu0 %8721
        %8723 = vrot.lane.b32.xlu0 %v4984, 4
        %v8724 = vpop.permute.xlu0 %8723
        %8725 = vrot.lane.b32.xlu0 %v4985, 4
        %v8726 = vpop.permute.xlu0 %8725
        %8727 = vrot.lane.b32.xlu0 %v4986, 4
        %v8728 = vpop.permute.xlu0 %8727
        %8729 = vrot.lane.b32.xlu0 %v4987, 4
        %v8730 = vpop.permute.xlu0 %8729
        %8731 = vrot.lane.b32.xlu0 %v4988, 4
        %v8732 = vpop.permute.xlu0 %8731
        %8733 = vrot.lane.b32.xlu0 %v4989, 4
        %v8734 = vpop.permute.xlu0 %8733
        %8735 = vrot.lane.b32.xlu0 %v4990, 4
        %v8736 = vpop.permute.xlu0 %8735
        %8737 = vrot.lane.b32.xlu0 %v4991, 4
        %v8738 = vpop.permute.xlu0 %8737
        %8739 = vrot.lane.b32.xlu0 %v4992, 4
        %v8740 = vpop.permute.xlu0 %8739
        %8741 = vrot.lane.b32.xlu0 %v4993, 4
        %v8742 = vpop.permute.xlu0 %8741
        %8743 = vrot.lane.b32.xlu0 %v4994, 4
        %v8744 = vpop.permute.xlu0 %8743
        %8745 = vrot.lane.b32.xlu0 %v4995, 4
        %v8746 = vpop.permute.xlu0 %8745
        %8747 = vrot.lane.b32.xlu0 %v4996, 4
        %v8748 = vpop.permute.xlu0 %8747
        %8749 = vrot.lane.b32.xlu0 %v4997, 4
        %v8750 = vpop.permute.xlu0 %8749
        %8751 = vrot.lane.b32.xlu0 %v4998, 4
        %v8752 = vpop.permute.xlu0 %8751
        %8753 = vrot.lane.b32.xlu0 %v4999, 4
        %v8754 = vpop.permute.xlu0 %8753
        %8755 = vrot.lane.b32.xlu0 %v5000, 4
        %v8756 = vpop.permute.xlu0 %8755
        %8757 = vrot.lane.b32.xlu0 %v5001, 4
        %v8758 = vpop.permute.xlu0 %8757
        %8759 = vrot.lane.b32.xlu0 %v5002, 4
        %v8760 = vpop.permute.xlu0 %8759
        %8761 = vrot.lane.b32.xlu0 %v5003, 4
        %v8762 = vpop.permute.xlu0 %8761
        %8763 = vrot.lane.b32.xlu0 %v5004, 4
        %v8764 = vpop.permute.xlu0 %8763
        %8765 = vrot.lane.b32.xlu0 %v5005, 4
        %v8766 = vpop.permute.xlu0 %8765
        %8767 = vrot.lane.b32.xlu0 %v5006, 4
        %v8768 = vpop.permute.xlu0 %8767
        %8769 = vrot.lane.b32.xlu0 %v5007, 4
        %v8770 = vpop.permute.xlu0 %8769
        %8771 = vrot.lane.b32.xlu0 %v5008, 4
        %v8772 = vpop.permute.xlu0 %8771
        %8773 = vrot.lane.b32.xlu0 %v5009, 4
        %v8774 = vpop.permute.xlu0 %8773
        %8775 = vrot.lane.b32.xlu0 %v5010, 4
        %v8776 = vpop.permute.xlu0 %8775
        %8777 = vrot.lane.b32.xlu0 %v5011, 4
        %v8778 = vpop.permute.xlu0 %8777
        %8779 = vrot.lane.b32.xlu0 %v5012, 4
        %v8780 = vpop.permute.xlu0 %8779
        %8781 = vrot.lane.b32.xlu0 %v5013, 4
        %v8782 = vpop.permute.xlu0 %8781
        %8783 = vrot.lane.b32.xlu0 %v5014, 4
        %v8784 = vpop.permute.xlu0 %8783
        %8785 = vrot.lane.b32.xlu0 %v5015, 4
        %v8786 = vpop.permute.xlu0 %8785
        %8787 = vrot.lane.b32.xlu0 %v5016, 4
        %v8788 = vpop.permute.xlu0 %8787
        %8789 = vrot.lane.b32.xlu0 %v5017, 4
        %v8790 = vpop.permute.xlu0 %8789
        %8791 = vrot.lane.b32.xlu0 %v5018, 4
        %v8792 = vpop.permute.xlu0 %8791
        %8793 = vrot.lane.b32.xlu0 %v5019, 4
        %v8794 = vpop.permute.xlu0 %8793
        %8795 = vrot.lane.b32.xlu0 %v5020, 4
        %v8796 = vpop.permute.xlu0 %8795
        %8797 = vrot.lane.b32.xlu0 %v5021, 4
        %v8798 = vpop.permute.xlu0 %8797
        %8799 = vrot.lane.b32.xlu0 %v5022, 4
        %v8800 = vpop.permute.xlu0 %8799
        %8801 = vrot.lane.b32.xlu0 %v5023, 4
        %v8802 = vpop.permute.xlu0 %8801
        %8803 = vrot.lane.b32.xlu0 %v5024, 4
        %v8804 = vpop.permute.xlu0 %8803
        %8933 = vrot.lane.b32.xlu0 %v6629, 5
        %v8934 = vpop.permute.xlu0 %8933
        %8935 = vrot.lane.b32.xlu0 %v6630, 5
        %v8936 = vpop.permute.xlu0 %8935
        %8937 = vrot.lane.b32.xlu0 %v6631, 5
        %v8938 = vpop.permute.xlu0 %8937
        %8939 = vrot.lane.b32.xlu0 %v6632, 5
        %v8940 = vpop.permute.xlu0 %8939
        %8941 = vrot.lane.b32.xlu0 %v6633, 5
        %v8942 = vpop.permute.xlu0 %8941
        %8943 = vrot.lane.b32.xlu0 %v6634, 5
        %v8944 = vpop.permute.xlu0 %8943
        %8945 = vrot.lane.b32.xlu0 %v6635, 5
        %v8946 = vpop.permute.xlu0 %8945
        %8947 = vrot.lane.b32.xlu0 %v6636, 5
        %v8948 = vpop.permute.xlu0 %8947
        %8949 = vrot.lane.b32.xlu0 %v6637, 5
        %v8950 = vpop.permute.xlu0 %8949
        %8951 = vrot.lane.b32.xlu0 %v6638, 5
        %v8952 = vpop.permute.xlu0 %8951
        %8953 = vrot.lane.b32.xlu0 %v6639, 5
        %v8954 = vpop.permute.xlu0 %8953
        %8955 = vrot.lane.b32.xlu0 %v6640, 5
        %v8956 = vpop.permute.xlu0 %8955
        %8957 = vrot.lane.b32.xlu0 %v6641, 5
        %v8958 = vpop.permute.xlu0 %8957
        %8959 = vrot.lane.b32.xlu0 %v6642, 5
        %v8960 = vpop.permute.xlu0 %8959
        %8961 = vrot.lane.b32.xlu0 %v6643, 5
        %v8962 = vpop.permute.xlu0 %8961
        %8963 = vrot.lane.b32.xlu0 %v6644, 5
        %v8964 = vpop.permute.xlu0 %8963
        %8965 = vrot.lane.b32.xlu0 %v6645, 5
        %v8966 = vpop.permute.xlu0 %8965
        %8967 = vrot.lane.b32.xlu0 %v6646, 5
        %v8968 = vpop.permute.xlu0 %8967
        %8969 = vrot.lane.b32.xlu0 %v6647, 5
        %v8970 = vpop.permute.xlu0 %8969
        %8971 = vrot.lane.b32.xlu0 %v6648, 5
        %v8972 = vpop.permute.xlu0 %8971
        %8973 = vrot.lane.b32.xlu0 %v6649, 5
        %v8974 = vpop.permute.xlu0 %8973
        %8975 = vrot.lane.b32.xlu0 %v6650, 5
        %v8976 = vpop.permute.xlu0 %8975
        %8977 = vrot.lane.b32.xlu0 %v6651, 5
        %v8978 = vpop.permute.xlu0 %8977
        %8979 = vrot.lane.b32.xlu0 %v6652, 5
        %v8980 = vpop.permute.xlu0 %8979
        %8981 = vrot.lane.b32.xlu0 %v6653, 5
        %v8982 = vpop.permute.xlu0 %8981
        %8983 = vrot.lane.b32.xlu0 %v6654, 5
        %v8984 = vpop.permute.xlu0 %8983
        %8985 = vrot.lane.b32.xlu0 %v6655, 5
        %v8986 = vpop.permute.xlu0 %8985
        %8987 = vrot.lane.b32.xlu0 %v6656, 5
        %v8988 = vpop.permute.xlu0 %8987
        %8989 = vrot.lane.b32.xlu0 %v6657, 5
        %v8990 = vpop.permute.xlu0 %8989
        %8991 = vrot.lane.b32.xlu0 %v6658, 5
        %v8992 = vpop.permute.xlu0 %8991
        %8993 = vrot.lane.b32.xlu0 %v6659, 5
        %v8994 = vpop.permute.xlu0 %8993
        %8995 = vrot.lane.b32.xlu0 %v6660, 5
        %v8996 = vpop.permute.xlu0 %8995
        %8997 = vrot.lane.b32.xlu0 %v6661, 5
        %v8998 = vpop.permute.xlu0 %8997
        %8999 = vrot.lane.b32.xlu0 %v6662, 5
        %v9000 = vpop.permute.xlu0 %8999
        %9001 = vrot.lane.b32.xlu0 %v6663, 5
        %v9002 = vpop.permute.xlu0 %9001
        %9003 = vrot.lane.b32.xlu0 %v6664, 5
        %v9004 = vpop.permute.xlu0 %9003
        %9005 = vrot.lane.b32.xlu0 %v6665, 5
        %v9006 = vpop.permute.xlu0 %9005
        %9007 = vrot.lane.b32.xlu0 %v6666, 5
        %v9008 = vpop.permute.xlu0 %9007
        %9009 = vrot.lane.b32.xlu0 %v6667, 5
        %v9010 = vpop.permute.xlu0 %9009
        %9011 = vrot.lane.b32.xlu0 %v6668, 5
        %v9012 = vpop.permute.xlu0 %9011
        %9013 = vrot.lane.b32.xlu0 %v6669, 5
        %v9014 = vpop.permute.xlu0 %9013
        %9015 = vrot.lane.b32.xlu0 %v6670, 5
        %v9016 = vpop.permute.xlu0 %9015
        %9017 = vrot.lane.b32.xlu0 %v6671, 5
        %v9018 = vpop.permute.xlu0 %9017
        %9019 = vrot.lane.b32.xlu0 %v6672, 5
        %v9020 = vpop.permute.xlu0 %9019
        %9021 = vrot.lane.b32.xlu0 %v6673, 5
        %v9022 = vpop.permute.xlu0 %9021
        %9023 = vrot.lane.b32.xlu0 %v6674, 5
        %v9024 = vpop.permute.xlu0 %9023
        %9025 = vrot.lane.b32.xlu0 %v6675, 5
        %v9026 = vpop.permute.xlu0 %9025
        %9027 = vrot.lane.b32.xlu0 %v6676, 5
        %v9028 = vpop.permute.xlu0 %9027
        %9029 = vrot.lane.b32.xlu0 %v6677, 5
        %v9030 = vpop.permute.xlu0 %9029
        %9031 = vrot.lane.b32.xlu0 %v6678, 5
        %v9032 = vpop.permute.xlu0 %9031
        %9033 = vrot.lane.b32.xlu0 %v6679, 5
        %v9034 = vpop.permute.xlu0 %9033
        %9035 = vrot.lane.b32.xlu0 %v6680, 5
        %v9036 = vpop.permute.xlu0 %9035
        %9037 = vrot.lane.b32.xlu0 %v6681, 5
        %v9038 = vpop.permute.xlu0 %9037
        %9039 = vrot.lane.b32.xlu0 %v6682, 5
        %v9040 = vpop.permute.xlu0 %9039
        %9041 = vrot.lane.b32.xlu0 %v6683, 5
        %v9042 = vpop.permute.xlu0 %9041
        %9043 = vrot.lane.b32.xlu0 %v6684, 5
        %v9044 = vpop.permute.xlu0 %9043
        %9045 = vrot.lane.b32.xlu0 %v6685, 5
        %v9046 = vpop.permute.xlu0 %9045
        %9047 = vrot.lane.b32.xlu0 %v6686, 5
        %v9048 = vpop.permute.xlu0 %9047
        %9049 = vrot.lane.b32.xlu0 %v6687, 5
        %v9050 = vpop.permute.xlu0 %9049
        %9051 = vrot.lane.b32.xlu0 %v6688, 5
        %v9052 = vpop.permute.xlu0 %9051
        %9053 = vrot.lane.b32.xlu0 %v6689, 5
        %v9054 = vpop.permute.xlu0 %9053
        %9055 = vrot.lane.b32.xlu0 %v6690, 5
        %v9056 = vpop.permute.xlu0 %9055
        %9057 = vrot.lane.b32.xlu0 %v6691, 5
        %v9058 = vpop.permute.xlu0 %9057
        %9059 = vrot.lane.b32.xlu0 %v6692, 5
        %v9060 = vpop.permute.xlu0 %9059
        %vm9125 = vcmask 7168
        %v9126 = vsel %vm9125, %v4253, %v7910
        %v9127 = vsel %vm9125, %v4254, %v7912
        %v9128 = vsel %vm9125, %v4255, %v7914
        %v9129 = vsel %vm9125, %v4256, %v7916
        %v9130 = vsel %vm9125, %v4257, %v7918
        %v9131 = vsel %vm9125, %v4258, %v7920
        %v9132 = vsel %vm9125, %v4259, %v7922
        %v9133 = vsel %vm9125, %v4260, %v7924
        %v9134 = vsel %vm9125, %v4261, %v7926
        %v9135 = vsel %vm9125, %v4262, %v7928
        %v9136 = vsel %vm9125, %v4263, %v7930
        %v9137 = vsel %vm9125, %v4264, %v7932
        %v9138 = vsel %vm9125, %v4265, %v7934
        %v9139 = vsel %vm9125, %v4266, %v7936
        %v9140 = vsel %vm9125, %v4267, %v7938
        %v9141 = vsel %vm9125, %v4268, %v7940
        %v9142 = vsel %vm9125, %v4269, %v7942
        %v9143 = vsel %vm9125, %v4270, %v7944
        %v9144 = vsel %vm9125, %v4271, %v7946
        %v9145 = vsel %vm9125, %v4272, %v7948
        %v9146 = vsel %vm9125, %v4273, %v7950
        %v9147 = vsel %vm9125, %v4274, %v7952
        %v9148 = vsel %vm9125, %v4275, %v7954
        %v9149 = vsel %vm9125, %v4276, %v7956
        %v9150 = vsel %vm9125, %v4277, %v7958
        %v9151 = vsel %vm9125, %v4278, %v7960
        %v9152 = vsel %vm9125, %v4279, %v7962
        %v9153 = vsel %vm9125, %v4280, %v7964
        %v9154 = vsel %vm9125, %v4281, %v7966
        %v9155 = vsel %vm9125, %v4282, %v7968
        %v9156 = vsel %vm9125, %v4283, %v7970
        %v9157 = vsel %vm9125, %v4284, %v7972
        %v9158 = vsel %vm9125, %v4285, %v7974
        %v9159 = vsel %vm9125, %v4286, %v7976
        %v9160 = vsel %vm9125, %v4287, %v7978
        %v9161 = vsel %vm9125, %v4288, %v7980
        %v9162 = vsel %vm9125, %v4289, %v7982
        %v9163 = vsel %vm9125, %v4290, %v7984
        %v9164 = vsel %vm9125, %v4291, %v7986
        %v9165 = vsel %vm9125, %v4292, %v7988
        %v9166 = vsel %vm9125, %v4293, %v7990
        %v9167 = vsel %vm9125, %v4294, %v7992
        %v9168 = vsel %vm9125, %v4295, %v7994
        %v9169 = vsel %vm9125, %v4296, %v7996
        %v9170 = vsel %vm9125, %v4297, %v7998
        %v9171 = vsel %vm9125, %v4298, %v8000
        %v9172 = vsel %vm9125, %v4299, %v8002
        %v9173 = vsel %vm9125, %v4300, %v8004
        %v9174 = vsel %vm9125, %v4301, %v8006
        %v9175 = vsel %vm9125, %v4302, %v8008
        %v9176 = vsel %vm9125, %v4303, %v8010
        %v9177 = vsel %vm9125, %v4304, %v8012
        %v9178 = vsel %vm9125, %v4305, %v8014
        %v9179 = vsel %vm9125, %v4306, %v8016
        %v9180 = vsel %vm9125, %v4307, %v8018
        %v9181 = vsel %vm9125, %v4308, %v8020
        %v9182 = vsel %vm9125, %v4309, %v8022
        %v9183 = vsel %vm9125, %v4310, %v8024
        %v9184 = vsel %vm9125, %v4311, %v8026
        %v9185 = vsel %vm9125, %v4312, %v8028
        %v9186 = vsel %vm9125, %v4313, %v8030
        %v9187 = vsel %vm9125, %v4314, %v8032
        %v9188 = vsel %vm9125, %v4315, %v8034
        %v9189 = vsel %vm9125, %v4316, %v8036
        %vm9190 = vcmask 15360
        %v9191 = vsel %vm9190, %v9126, %v8166
        %v9192 = vsel %vm9190, %v9127, %v8168
        %v9193 = vsel %vm9190, %v9128, %v8170
        %v9194 = vsel %vm9190, %v9129, %v8172
        %v9195 = vsel %vm9190, %v9130, %v8174
        %v9196 = vsel %vm9190, %v9131, %v8176
        %v9197 = vsel %vm9190, %v9132, %v8178
        %v9198 = vsel %vm9190, %v9133, %v8180
        %v9199 = vsel %vm9190, %v9134, %v8182
        %v9200 = vsel %vm9190, %v9135, %v8184
        %v9201 = vsel %vm9190, %v9136, %v8186
        %v9202 = vsel %vm9190, %v9137, %v8188
        %v9203 = vsel %vm9190, %v9138, %v8190
        %v9204 = vsel %vm9190, %v9139, %v8192
        %v9205 = vsel %vm9190, %v9140, %v8194
        %v9206 = vsel %vm9190, %v9141, %v8196
        %v9207 = vsel %vm9190, %v9142, %v8198
        %v9208 = vsel %vm9190, %v9143, %v8200
        %v9209 = vsel %vm9190, %v9144, %v8202
        %v9210 = vsel %vm9190, %v9145, %v8204
        %v9211 = vsel %vm9190, %v9146, %v8206
        %v9212 = vsel %vm9190, %v9147, %v8208
        %v9213 = vsel %vm9190, %v9148, %v8210
        %v9214 = vsel %vm9190, %v9149, %v8212
        %v9215 = vsel %vm9190, %v9150, %v8214
        %v9216 = vsel %vm9190, %v9151, %v8216
        %v9217 = vsel %vm9190, %v9152, %v8218
        %v9218 = vsel %vm9190, %v9153, %v8220
        %v9219 = vsel %vm9190, %v9154, %v8222
        %v9220 = vsel %vm9190, %v9155, %v8224
        %v9221 = vsel %vm9190, %v9156, %v8226
        %v9222 = vsel %vm9190, %v9157, %v8228
        %v9223 = vsel %vm9190, %v9158, %v8230
        %v9224 = vsel %vm9190, %v9159, %v8232
        %v9225 = vsel %vm9190, %v9160, %v8234
        %v9226 = vsel %vm9190, %v9161, %v8236
        %v9227 = vsel %vm9190, %v9162, %v8238
        %v9228 = vsel %vm9190, %v9163, %v8240
        %v9229 = vsel %vm9190, %v9164, %v8242
        %v9230 = vsel %vm9190, %v9165, %v8244
        %v9231 = vsel %vm9190, %v9166, %v8246
        %v9232 = vsel %vm9190, %v9167, %v8248
        %v9233 = vsel %vm9190, %v9168, %v8250
        %v9234 = vsel %vm9190, %v9169, %v8252
        %v9235 = vsel %vm9190, %v9170, %v8254
        %v9236 = vsel %vm9190, %v9171, %v8256
        %v9237 = vsel %vm9190, %v9172, %v8258
        %v9238 = vsel %vm9190, %v9173, %v8260
        %v9239 = vsel %vm9190, %v9174, %v8262
        %v9240 = vsel %vm9190, %v9175, %v8264
        %v9241 = vsel %vm9190, %v9176, %v8266
        %v9242 = vsel %vm9190, %v9177, %v8268
        %v9243 = vsel %vm9190, %v9178, %v8270
        %v9244 = vsel %vm9190, %v9179, %v8272
        %v9245 = vsel %vm9190, %v9180, %v8274
        %v9246 = vsel %vm9190, %v9181, %v8276
        %v9247 = vsel %vm9190, %v9182, %v8278
        %v9248 = vsel %vm9190, %v9183, %v8280
        %v9249 = vsel %vm9190, %v9184, %v8282
        %v9250 = vsel %vm9190, %v9185, %v8284
        %v9251 = vsel %vm9190, %v9186, %v8286
        %v9252 = vsel %vm9190, %v9187, %v8288
        %v9253 = vsel %vm9190, %v9188, %v8290
        %v9254 = vsel %vm9190, %v9189, %v8292
        %vm9255 = vcmask 23552
        %v9256 = vsel %vm9255, %v9191, %v8422
        %v9257 = vsel %vm9255, %v9192, %v8424
        %v9258 = vsel %vm9255, %v9193, %v8426
        %v9259 = vsel %vm9255, %v9194, %v8428
        %v9260 = vsel %vm9255, %v9195, %v8430
        %v9261 = vsel %vm9255, %v9196, %v8432
        %v9262 = vsel %vm9255, %v9197, %v8434
        %v9263 = vsel %vm9255, %v9198, %v8436
        %v9264 = vsel %vm9255, %v9199, %v8438
        %v9265 = vsel %vm9255, %v9200, %v8440
        %v9266 = vsel %vm9255, %v9201, %v8442
        %v9267 = vsel %vm9255, %v9202, %v8444
        %v9268 = vsel %vm9255, %v9203, %v8446
        %v9269 = vsel %vm9255, %v9204, %v8448
        %v9270 = vsel %vm9255, %v9205, %v8450
        %v9271 = vsel %vm9255, %v9206, %v8452
        %v9272 = vsel %vm9255, %v9207, %v8454
        %v9273 = vsel %vm9255, %v9208, %v8456
        %v9274 = vsel %vm9255, %v9209, %v8458
        %v9275 = vsel %vm9255, %v9210, %v8460
        %v9276 = vsel %vm9255, %v9211, %v8462
        %v9277 = vsel %vm9255, %v9212, %v8464
        %v9278 = vsel %vm9255, %v9213, %v8466
        %v9279 = vsel %vm9255, %v9214, %v8468
        %v9280 = vsel %vm9255, %v9215, %v8470
        %v9281 = vsel %vm9255, %v9216, %v8472
        %v9282 = vsel %vm9255, %v9217, %v8474
        %v9283 = vsel %vm9255, %v9218, %v8476
        %v9284 = vsel %vm9255, %v9219, %v8478
        %v9285 = vsel %vm9255, %v9220, %v8480
        %v9286 = vsel %vm9255, %v9221, %v8482
        %v9287 = vsel %vm9255, %v9222, %v8484
        %v9288 = vsel %vm9255, %v9223, %v8486
        %v9289 = vsel %vm9255, %v9224, %v8488
        %v9290 = vsel %vm9255, %v9225, %v8490
        %v9291 = vsel %vm9255, %v9226, %v8492
        %v9292 = vsel %vm9255, %v9227, %v8494
        %v9293 = vsel %vm9255, %v9228, %v8496
        %v9294 = vsel %vm9255, %v9229, %v8498
        %v9295 = vsel %vm9255, %v9230, %v8500
        %v9296 = vsel %vm9255, %v9231, %v8502
        %v9297 = vsel %vm9255, %v9232, %v8504
        %v9298 = vsel %vm9255, %v9233, %v8506
        %v9299 = vsel %vm9255, %v9234, %v8508
        %v9300 = vsel %vm9255, %v9235, %v8510
        %v9301 = vsel %vm9255, %v9236, %v8512
        %v9302 = vsel %vm9255, %v9237, %v8514
        %v9303 = vsel %vm9255, %v9238, %v8516
        %v9304 = vsel %vm9255, %v9239, %v8518
        %v9305 = vsel %vm9255, %v9240, %v8520
        %v9306 = vsel %vm9255, %v9241, %v8522
        %v9307 = vsel %vm9255, %v9242, %v8524
        %v9308 = vsel %vm9255, %v9243, %v8526
        %v9309 = vsel %vm9255, %v9244, %v8528
        %v9310 = vsel %vm9255, %v9245, %v8530
        %v9311 = vsel %vm9255, %v9246, %v8532
        %v9312 = vsel %vm9255, %v9247, %v8534
        %v9313 = vsel %vm9255, %v9248, %v8536
        %v9314 = vsel %vm9255, %v9249, %v8538
        %v9315 = vsel %vm9255, %v9250, %v8540
        %v9316 = vsel %vm9255, %v9251, %v8542
        %v9317 = vsel %vm9255, %v9252, %v8544
        %v9318 = vsel %vm9255, %v9253, %v8546
        %v9319 = vsel %vm9255, %v9254, %v8548
        %vm9320 = vcmask 31744
        %v9321 = vsel %vm9320, %v9256, %v8678
        %v9322 = vsel %vm9320, %v9257, %v8680
        %v9323 = vsel %vm9320, %v9258, %v8682
        %v9324 = vsel %vm9320, %v9259, %v8684
        %v9325 = vsel %vm9320, %v9260, %v8686
        %v9326 = vsel %vm9320, %v9261, %v8688
        %v9327 = vsel %vm9320, %v9262, %v8690
        %v9328 = vsel %vm9320, %v9263, %v8692
        %v9329 = vsel %vm9320, %v9264, %v8694
        %v9330 = vsel %vm9320, %v9265, %v8696
        %v9331 = vsel %vm9320, %v9266, %v8698
        %v9332 = vsel %vm9320, %v9267, %v8700
        %v9333 = vsel %vm9320, %v9268, %v8702
        %v9334 = vsel %vm9320, %v9269, %v8704
        %v9335 = vsel %vm9320, %v9270, %v8706
        %v9336 = vsel %vm9320, %v9271, %v8708
        %v9337 = vsel %vm9320, %v9272, %v8710
        %v9338 = vsel %vm9320, %v9273, %v8712
        %v9339 = vsel %vm9320, %v9274, %v8714
        %v9340 = vsel %vm9320, %v9275, %v8716
        %v9341 = vsel %vm9320, %v9276, %v8718
        %v9342 = vsel %vm9320, %v9277, %v8720
        %v9343 = vsel %vm9320, %v9278, %v8722
        %v9344 = vsel %vm9320, %v9279, %v8724
        %v9345 = vsel %vm9320, %v9280, %v8726
        %v9346 = vsel %vm9320, %v9281, %v8728
        %v9347 = vsel %vm9320, %v9282, %v8730
        %v9348 = vsel %vm9320, %v9283, %v8732
        %v9349 = vsel %vm9320, %v9284, %v8734
        %v9350 = vsel %vm9320, %v9285, %v8736
        %v9351 = vsel %vm9320, %v9286, %v8738
        %v9352 = vsel %vm9320, %v9287, %v8740
        %v9353 = vsel %vm9320, %v9288, %v8742
        %v9354 = vsel %vm9320, %v9289, %v8744
        %v9355 = vsel %vm9320, %v9290, %v8746
        %v9356 = vsel %vm9320, %v9291, %v8748
        %v9357 = vsel %vm9320, %v9292, %v8750
        %v9358 = vsel %vm9320, %v9293, %v8752
        %v9359 = vsel %vm9320, %v9294, %v8754
        %v9360 = vsel %vm9320, %v9295, %v8756
        %v9361 = vsel %vm9320, %v9296, %v8758
        %v9362 = vsel %vm9320, %v9297, %v8760
        %v9363 = vsel %vm9320, %v9298, %v8762
        %v9364 = vsel %vm9320, %v9299, %v8764
        %v9365 = vsel %vm9320, %v9300, %v8766
        %v9366 = vsel %vm9320, %v9301, %v8768
        %v9367 = vsel %vm9320, %v9302, %v8770
        %v9368 = vsel %vm9320, %v9303, %v8772
        %v9369 = vsel %vm9320, %v9304, %v8774
        %v9370 = vsel %vm9320, %v9305, %v8776
        %v9371 = vsel %vm9320, %v9306, %v8778
        %v9372 = vsel %vm9320, %v9307, %v8780
        %v9373 = vsel %vm9320, %v9308, %v8782
        %v9374 = vsel %vm9320, %v9309, %v8784
        %v9375 = vsel %vm9320, %v9310, %v8786
        %v9376 = vsel %vm9320, %v9311, %v8788
        %v9377 = vsel %vm9320, %v9312, %v8790
        %v9378 = vsel %vm9320, %v9313, %v8792
        %v9379 = vsel %vm9320, %v9314, %v8794
        %v9380 = vsel %vm9320, %v9315, %v8796
        %v9381 = vsel %vm9320, %v9316, %v8798
        %v9382 = vsel %vm9320, %v9317, %v8800
        %v9383 = vsel %vm9320, %v9318, %v8802
        %v9384 = vsel %vm9320, %v9319, %v8804
        %vm9385 = vcmask 39936
        %v9386 = vsel %vm9385, %v9321, %v8934
        %v9387 = vsel %vm9385, %v9322, %v8936
        %v9388 = vsel %vm9385, %v9323, %v8938
        %v9389 = vsel %vm9385, %v9324, %v8940
        %v9390 = vsel %vm9385, %v9325, %v8942
        %v9391 = vsel %vm9385, %v9326, %v8944
        %v9392 = vsel %vm9385, %v9327, %v8946
        %v9393 = vsel %vm9385, %v9328, %v8948
        %v9394 = vsel %vm9385, %v9329, %v8950
        %v9395 = vsel %vm9385, %v9330, %v8952
        %v9396 = vsel %vm9385, %v9331, %v8954
        %v9397 = vsel %vm9385, %v9332, %v8956
        %v9398 = vsel %vm9385, %v9333, %v8958
        %v9399 = vsel %vm9385, %v9334, %v8960
        %v9400 = vsel %vm9385, %v9335, %v8962
        %v9401 = vsel %vm9385, %v9336, %v8964
        %v9402 = vsel %vm9385, %v9337, %v8966
        %v9403 = vsel %vm9385, %v9338, %v8968
        %v9404 = vsel %vm9385, %v9339, %v8970
        %v9405 = vsel %vm9385, %v9340, %v8972
        %v9406 = vsel %vm9385, %v9341, %v8974
        %v9407 = vsel %vm9385, %v9342, %v8976
        %v9408 = vsel %vm9385, %v9343, %v8978
        %v9409 = vsel %vm9385, %v9344, %v8980
        %v9410 = vsel %vm9385, %v9345, %v8982
        %v9411 = vsel %vm9385, %v9346, %v8984
        %v9412 = vsel %vm9385, %v9347, %v8986
        %v9413 = vsel %vm9385, %v9348, %v8988
        %v9414 = vsel %vm9385, %v9349, %v8990
        %v9415 = vsel %vm9385, %v9350, %v8992
        %v9416 = vsel %vm9385, %v9351, %v8994
        %v9417 = vsel %vm9385, %v9352, %v8996
        %v9418 = vsel %vm9385, %v9353, %v8998
        %v9419 = vsel %vm9385, %v9354, %v9000
        %v9420 = vsel %vm9385, %v9355, %v9002
        %v9421 = vsel %vm9385, %v9356, %v9004
        %v9422 = vsel %vm9385, %v9357, %v9006
        %v9423 = vsel %vm9385, %v9358, %v9008
        %v9424 = vsel %vm9385, %v9359, %v9010
        %v9425 = vsel %vm9385, %v9360, %v9012
        %v9426 = vsel %vm9385, %v9361, %v9014
        %v9427 = vsel %vm9385, %v9362, %v9016
        %v9428 = vsel %vm9385, %v9363, %v9018
        %v9429 = vsel %vm9385, %v9364, %v9020
        %v9430 = vsel %vm9385, %v9365, %v9022
        %v9431 = vsel %vm9385, %v9366, %v9024
        %v9432 = vsel %vm9385, %v9367, %v9026
        %v9433 = vsel %vm9385, %v9368, %v9028
        %v9434 = vsel %vm9385, %v9369, %v9030
        %v9435 = vsel %vm9385, %v9370, %v9032
        %v9436 = vsel %vm9385, %v9371, %v9034
        %v9437 = vsel %vm9385, %v9372, %v9036
        %v9438 = vsel %vm9385, %v9373, %v9038
        %v9439 = vsel %vm9385, %v9374, %v9040
        %v9440 = vsel %vm9385, %v9375, %v9042
        %v9441 = vsel %vm9385, %v9376, %v9044
        %v9442 = vsel %vm9385, %v9377, %v9046
        %v9443 = vsel %vm9385, %v9378, %v9048
        %v9444 = vsel %vm9385, %v9379, %v9050
        %v9445 = vsel %vm9385, %v9380, %v9052
        %v9446 = vsel %vm9385, %v9381, %v9054
        %v9447 = vsel %vm9385, %v9382, %v9056
        %v9448 = vsel %vm9385, %v9383, %v9058
        %v9449 = vsel %vm9385, %v9384, %v9060
        %v9450 = vld [vmem:[#allocation2] sm:$0x1]
        %vm9451 = vcmask 48128
        %v9452 = vsel %vm9451, %v9386, 0.0
        %v9453 = vsel %vm9451, %v9387, 0.0
        %v9454 = vadd.f32 %v9452, %v9453
        %v9455 = vsel %vm9451, %v9388, 0.0
        %v9456 = vadd.f32 %v9454, %v9455
        %v9457 = vsel %vm9451, %v9389, 0.0
        %v9458 = vadd.f32 %v9456, %v9457
        %v9459 = vsel %vm9451, %v9390, 0.0
        %v9460 = vadd.f32 %v9458, %v9459
        %v9461 = vsel %vm9451, %v9391, 0.0
        %v9462 = vadd.f32 %v9460, %v9461
        %v9463 = vsel %vm9451, %v9392, 0.0
        %v9464 = vadd.f32 %v9462, %v9463
        %v9465 = vsel %vm9451, %v9393, 0.0
        %v9466 = vadd.f32 %v9464, %v9465
        %v9467 = vsel %vm9451, %v9394, 0.0
        %v9468 = vadd.f32 %v9466, %v9467
        %v9469 = vsel %vm9451, %v9395, 0.0
        %v9470 = vadd.f32 %v9468, %v9469
        %v9471 = vsel %vm9451, %v9396, 0.0
        %v9472 = vadd.f32 %v9470, %v9471
        %v9473 = vsel %vm9451, %v9397, 0.0
        %v9474 = vadd.f32 %v9472, %v9473
        %v9475 = vsel %vm9451, %v9398, 0.0
        %v9476 = vadd.f32 %v9474, %v9475
        %v9477 = vsel %vm9451, %v9399, 0.0
        %v9478 = vadd.f32 %v9476, %v9477
        %v9479 = vsel %vm9451, %v9400, 0.0
        %v9480 = vadd.f32 %v9478, %v9479
        %v9481 = vsel %vm9451, %v9401, 0.0
        %v9482 = vadd.f32 %v9480, %v9481
        %v9483 = vsel %vm9451, %v9402, 0.0
        %v9484 = vadd.f32 %v9482, %v9483
        %v9485 = vsel %vm9451, %v9403, 0.0
        %v9486 = vadd.f32 %v9484, %v9485
        %v9487 = vsel %vm9451, %v9404, 0.0
        %v9488 = vadd.f32 %v9486, %v9487
        %v9489 = vsel %vm9451, %v9405, 0.0
        %v9490 = vadd.f32 %v9488, %v9489
        %v9491 = vsel %vm9451, %v9406, 0.0
        %v9492 = vadd.f32 %v9490, %v9491
        %v9493 = vsel %vm9451, %v9407, 0.0
        %v9494 = vadd.f32 %v9492, %v9493
        %v9495 = vsel %vm9451, %v9408, 0.0
        %v9496 = vadd.f32 %v9494, %v9495
        %v9497 = vsel %vm9451, %v9409, 0.0
        %v9498 = vadd.f32 %v9496, %v9497
        %v9499 = vsel %vm9451, %v9410, 0.0
        %v9500 = vadd.f32 %v9498, %v9499
        %v9501 = vsel %vm9451, %v9411, 0.0
        %v9502 = vadd.f32 %v9500, %v9501
        %v9503 = vsel %vm9451, %v9412, 0.0
        %v9504 = vadd.f32 %v9502, %v9503
        %v9505 = vsel %vm9451, %v9413, 0.0
        %v9506 = vadd.f32 %v9504, %v9505
        %v9507 = vsel %vm9451, %v9414, 0.0
        %v9508 = vadd.f32 %v9506, %v9507
        %v9509 = vsel %vm9451, %v9415, 0.0
        %v9510 = vadd.f32 %v9508, %v9509
        %v9511 = vsel %vm9451, %v9416, 0.0
        %v9512 = vadd.f32 %v9510, %v9511
        %v9513 = vsel %vm9451, %v9417, 0.0
        %v9514 = vadd.f32 %v9512, %v9513
        %v9515 = vsel %vm9451, %v9418, 0.0
        %v9516 = vadd.f32 %v9514, %v9515
        %v9517 = vsel %vm9451, %v9419, 0.0
        %v9518 = vadd.f32 %v9516, %v9517
        %v9519 = vsel %vm9451, %v9420, 0.0
        %v9520 = vadd.f32 %v9518, %v9519
        %v9521 = vsel %vm9451, %v9421, 0.0
        %v9522 = vadd.f32 %v9520, %v9521
        %v9523 = vsel %vm9451, %v9422, 0.0
        %v9524 = vadd.f32 %v9522, %v9523
        %v9525 = vsel %vm9451, %v9423, 0.0
        %v9526 = vadd.f32 %v9524, %v9525
        %v9527 = vsel %vm9451, %v9424, 0.0
        %v9528 = vadd.f32 %v9526, %v9527
        %v9529 = vsel %vm9451, %v9425, 0.0
        %v9530 = vadd.f32 %v9528, %v9529
        %v9531 = vsel %vm9451, %v9426, 0.0
        %v9532 = vadd.f32 %v9530, %v9531
        %v9533 = vsel %vm9451, %v9427, 0.0
        %v9534 = vadd.f32 %v9532, %v9533
        %v9535 = vsel %vm9451, %v9428, 0.0
        %v9536 = vadd.f32 %v9534, %v9535
        %v9537 = vsel %vm9451, %v9429, 0.0
        %v9538 = vadd.f32 %v9536, %v9537
        %v9539 = vsel %vm9451, %v9430, 0.0
        %v9540 = vadd.f32 %v9538, %v9539
        %v9541 = vsel %vm9451, %v9431, 0.0
        %v9542 = vadd.f32 %v9540, %v9541
        %v9543 = vsel %vm9451, %v9432, 0.0
        %v9544 = vadd.f32 %v9542, %v9543
        %v9545 = vsel %vm9451, %v9433, 0.0
        %v9546 = vadd.f32 %v9544, %v9545
        %v9547 = vsel %vm9451, %v9434, 0.0
        %v9548 = vadd.f32 %v9546, %v9547
        %v9549 = vsel %vm9451, %v9435, 0.0
        %v9550 = vadd.f32 %v9548, %v9549
        %v9551 = vsel %vm9451, %v9436, 0.0
        %v9552 = vadd.f32 %v9550, %v9551
        %v9553 = vsel %vm9451, %v9437, 0.0
        %v9554 = vadd.f32 %v9552, %v9553
        %v9555 = vsel %vm9451, %v9438, 0.0
        %v9556 = vadd.f32 %v9554, %v9555
        %v9557 = vsel %vm9451, %v9439, 0.0
        %v9558 = vadd.f32 %v9556, %v9557
        %v9559 = vsel %vm9451, %v9440, 0.0
        %v9560 = vadd.f32 %v9558, %v9559
        %v9561 = vsel %vm9451, %v9441, 0.0
        %v9562 = vadd.f32 %v9560, %v9561
        %v9563 = vsel %vm9451, %v9442, 0.0
        %v9564 = vadd.f32 %v9562, %v9563
        %v9565 = vsel %vm9451, %v9443, 0.0
        %v9566 = vadd.f32 %v9564, %v9565
        %v9567 = vsel %vm9451, %v9444, 0.0
        %v9568 = vadd.f32 %v9566, %v9567
        %v9569 = vsel %vm9451, %v9445, 0.0
        %v9570 = vadd.f32 %v9568, %v9569
        %v9571 = vsel %vm9451, %v9446, 0.0
        %v9572 = vadd.f32 %v9570, %v9571
        %v9573 = vsel %vm9451, %v9447, 0.0
        %v9574 = vadd.f32 %v9572, %v9573
        %v9575 = vsel %vm9451, %v9448, 0.0
        %v9576 = vadd.f32 %v9574, %v9575
        %v9577 = vsel %vm9451, %v9449, 0.0
        %v9578 = vadd.f32 %v9576, %v9577
        %v9579 = vrot.slane %v9578, 4
        %v9580 = vadd.f32 %v9578, %v9579
        %v9581 = vrot.slane %v9580, 2
        %v9582 = vadd.f32 %v9580, %v9581
        %v9583 = vrot.slane %v9582, 1
        %v9584 = vadd.f32 %v9582, %v9583
        %v9585 = vadd.f32 %v9450, %v9584
        %vm9586 = vcmask 40960
        %9587 = vst.msk [vmem:[#allocation2] sm:$0x1] %vm9586, %v9585
        %p9588 = scmp.eq.s32.totalorder %s27, 3
        // Predicated region
        $region57: #{tpu_custom_call.1} parent=47 // pred_check
          %p9589 = pneg %p9588
        $region58: #{tpu_custom_call.1} parent=47 // pred_check_branch
          %9591 = sbr.rel (%p9589) target = $region60
        $region59: #{tpu_custom_call.1} parent=47 // pred_region
          %9592 = vst [vmem:[%s334] sm:$0xff] 0.0
          %v9593 = vld [vmem:[#allocation2] sm:$0x1]
          %9594 = vst.msk [vmem:[%s334] sm:$0x1] %vm9586, %v9593
        $region60: #{tpu_custom_call.1} parent=47 // pred_fallthru
          _
        %s9595 = sand.u32 %s207, 1
        %s9596 = scalar_lea.sflag [#allocation4], %s9595
        %s9597 = sand.u32 %s207, 1
        %s9598 = smul.addr %s9597, 8
        %s9599 = scalar_lea.vmem [#allocation6], %s9598
        // Predicated region
        $region61: #{tpu_custom_call.1} parent=47 // pred_check
          %p9600 = pneg %p217
        $region62: #{tpu_custom_call.1} parent=47 // pred_check_branch
          %9602 = sbr.rel (%p9600) target = $region64
        $region63: #{tpu_custom_call.1} parent=47 // pred_region
          %s9604 = ssub.s32 128, 128
          %9605 = vsyncadd %s9596, %s9604
          %s9606 = smul.addr %s26, 128
          %s9607 = scalar_lea.hbm %s7, %s9606
          %s9609 = sshll.u32 %s9599, 4
          %s9610 = int_to_ptr.vmem [resolvable:$true] %s9609
          %9612 = dma.vmem_to_hbm [thread:$0]  %s9610, 128, %s9607, %s9596
        $region64: #{tpu_custom_call.1} parent=47 // pred_fallthru
          _
      $region48: #{tpu_custom_call.1} parent=5 // pred_fallthru
        _
      %p9613 = scmp.le.s32.totalorder 2, %s17
      // Predicated region
      $region65: #{tpu_custom_call.1} parent=5 // pred_check
        %p9614 = pneg %p9613
      $region66: #{tpu_custom_call.1} parent=5 // pred_check_branch
        %9616 = sbr.rel (%p9614) target = $region68
      $region67: #{tpu_custom_call.1} parent=5 // pred_region
        %s9617 = ssub.s32 %s17, 2
        // Predicated region
        $region69: #{tpu_custom_call.1} parent=67 // pred_check
          %p9618 = pneg %p223
        $region70: #{tpu_custom_call.1} parent=67 // pred_check_branch
          %9620 = sbr.rel (%p9618) target = $region72
        $region71: #{tpu_custom_call.1} parent=67 // pred_region
          %s9621 = sand.u32 %s208, 1
          %s9622 = scalar_lea.sflag [#allocation4], %s9621
          %s9623 = sand.u32 %s208, 1
          %s9624 = smul.addr %s9623, 8
          %s9625 = scalar_lea.vmem [#allocation6], %s9624
          %9626 = dma.done %s9622, 128
        $region72: #{tpu_custom_call.1} parent=67 // pred_fallthru
          _
      $region68: #{tpu_custom_call.1} parent=5 // pred_fallthru
        _
    $region6: #{tpu_custom_call.1} parent=1 // loop_footer
      %s21 = sadd.s32 1, %s17
    $region7: #{tpu_custom_call.1} parent=1 // loop_footer_branch
      %16 = sbr.rel target = $region3
    $region8: #{tpu_custom_call.1} parent=1 // loop_exit
      _
    %9627 = vsyncpa [#allocation4], 1
    %s9628 = scalar_lea.sflag [#allocation4], 1
    %9629 = vsyncpa %s9628, 1
    %9630 = vsyncpa [#allocation5], 1
    %s9631 = scalar_lea.sflag [#allocation5], 1
    %9632 = vsyncpa %s9631, 1

</llo_original>
